<compile_context>
chip_gen: v5e
topology: v5e:2x2
jax: 0.10.0
libtpu: 0.0.40
codegen_flags: <defaults>
</compile_context>

<pallas_src>
import functools

import jax
import jax.numpy as jnp
from jax import lax
from jax.experimental import pallas as pl
from jax.experimental.pallas import tpu as pltpu

# ---------------- scaled-down BERT config ----------------
VOCAB = 128
HIDDEN = 128
NUM_LAYERS = 2
NUM_HEADS = 4
HEAD_DIM = HIDDEN // NUM_HEADS
INTERMEDIATE = 4 * HIDDEN
MAX_POS = 32
NUM_LABELS = 5
LN_EPS = 1e-12


# ---------------- fused forward kernel (one grid step per batch tile) ----------------
def _bert_kernel(
    emb_ref, mask_ref, emb_ln_g, emb_ln_b,
    wqkv, bqkv, wao, bao, ln1_g, ln1_b,
    wff1, bff1, wff2, bff2, ln2_g, ln2_b,
    pool_w, pool_b, cls1_w, cls1_b, cls2_w, cls2_b,
    out_ref,
    *, num_layers, num_heads, head_dim, block_b, seq_len):
    f32 = jnp.float32
    bf16 = jnp.bfloat16
    Bt, S = block_b, seq_len
    H = num_heads * head_dim
    R = Bt * S                      # flattened rows fed to every row-wise matmul
    scale = 1.0 / float(head_dim) ** 0.5

    def ln(y, g, b):
        # layernorm with the residual add already folded into `y` by the caller
        mean = jnp.mean(y, axis=-1, keepdims=True)
        c = y - mean
        var = jnp.mean(c * c, axis=-1, keepdims=True)
        return c * lax.rsqrt(var + LN_EPS) * g + b

    def mm(a, w):
        # bf16 MXU inputs, f32 accumulation
        return jnp.dot(a.astype(bf16), w, preferred_element_type=f32)

    def gelu(y):
        # TODO(synk): HF BERT uses exact erf-GELU; tanh approximation used here.
        c = 0.7978845608028654  # sqrt(2/pi)
        return 0.5 * y * (1.0 + jnp.tanh(c * (y + 0.044715 * y * y * y)))

    # (Bt, S, H) -> (Bt*S, H): QKV/AO/FFN/head matmuls all see R rows.
    x = emb_ref[...].reshape(R, H)
    bias = mask_ref[...]            # (Bt, 1, S) additive attention mask

    # embedding LayerNorm (embedding dropout is identity in eval mode)
    h = ln(x, emb_ln_g[...], emb_ln_b[...])

    for l in range(num_layers):
        # fused Q/K/V projection: (R, H) @ (H, 3H); single bf16 cast of the result
        qkv = (mm(h, wqkv[l]) + bqkv[l]).astype(bf16)      # (R, 3H) bf16
        q = qkv[:, 0:H]
        k = qkv[:, H:2 * H]
        v = qkv[:, 2 * H:3 * H]

        # multi-head attention, batched over the Bt sequences of this tile
        ctx_parts = []
        for n in range(num_heads):
            lo = n * head_dim
            qh = q[:, lo:lo + head_dim].reshape(Bt, S, head_dim)
            kh = k[:, lo:lo + head_dim].reshape(Bt, S, head_dim)
            vh = v[:, lo:lo + head_dim].reshape(Bt, S, head_dim)
            # Q @ K^T as one batched dot_general over the Bt sequences
            s = jnp.einsum('bqd,bkd->bqk', qh, kh,
                           preferred_element_type=f32) * scale + bias
            s = s - jnp.max(s, axis=-1, keepdims=True)
            p = jnp.exp(s)
            p = p * pl.reciprocal(jnp.sum(p, axis=-1, keepdims=True), approx=True)
            ctx_parts.append(
                jnp.einsum('bqk,bkd->bqd', p.astype(bf16), vh,
                           preferred_element_type=f32).reshape(R, head_dim))
        ctx = jnp.concatenate(ctx_parts, axis=-1)          # (R, H)

        # attention output projection + residual + LN (residual fused into LN input)
        attn_out = mm(ctx, wao[l]) + bao[l]
        h1 = ln(attn_out + h, ln1_g[l], ln1_b[l])

        # FFN: GELU(h1 @ W1 + b1) @ W2 + b2, then residual + LN
        ff = gelu(mm(h1, wff1[l]) + bff1[l])
        ff = mm(ff, wff2[l]) + bff2[l]
        h = ln(ff + h1, ln2_g[l], ln2_b[l])

    # Pooler: dense + tanh on the [CLS] token of every sequence in the tile
    # (BertForSequenceClassification.classifier is Identity; its dropout is identity).
    cls_tok = h.reshape(Bt, S, H)[:, 0, :]                 # (Bt, H)
    pooled = jnp.tanh(mm(cls_tok, pool_w[...]) + pool_b[...])
    # Custom head: Linear -> Tanh -> Dropout(0.25, identity) -> Linear(num_labels)
    x1 = jnp.tanh(mm(pooled, cls1_w[...]) + cls1_b[...])
    logits = mm(x1, cls2_w[...]) + cls2_b[...]             # (Bt, 128); cols >= 5 zero pad
    out_ref[0] = logits.astype(out_ref.dtype)


# ---------------- wrapper (embedding gathers + single pallas_call) ----------------
def bert_classifier_forward(params, input_ids, attention_mask, *, block_b=None):
    B, S = input_ids.shape

    if block_b is None:
        # Target ~256 rows per grid step (fills the 256-row MXU on v6e/v7x; v5e's
        # 128-row MXU is fully fed too), but keep >= 2 grid steps when possible so
        # the "parallel" batch axis can be sharded across v7x's 2 TensorCores.
        block_b = max(1, min(B, max(1, 256 // S)))
        if B // block_b < 2:
            block_b = max(1, block_b // 2)
        while B % block_b:
            block_b -= 1
    assert B % block_b == 0
    grid_b = B // block_b

    # Embeddings (frozen in the PyTorch module; plain-JAX gathers outside the kernel).
    emb = (params["word_emb"][input_ids]
           + params["pos_emb"][jnp.arange(S)][None, :, :]
           + params["type_emb"][0][None, None, :]).astype(jnp.float32)

    # Extended attention mask: (1 - mask) * -10000, added to attention scores.
    mask_bias = ((1.0 - attention_mask.astype(jnp.float32)) * -10000.0)[:, None, :]  # (B,1,S)

    weight_args = (
        params["emb_ln_g"], params["emb_ln_b"],
        params["wqkv"], params["bqkv"], params["wao"], params["bao"],
        params["ln1_g"], params["ln1_b"],
        params["wff1"], params["bff1"], params["wff2"], params["bff2"],
        params["ln2_g"], params["ln2_b"],
        params["pool_w"], params["pool_b"],
        params["cls1_w"], params["cls1_b"],
        params["cls2_w"], params["cls2_b"],
    )

    def _resident_spec(arr):
        # Full-array block, constant index_map -> DMA'd into VMEM once, stays resident.
        # TODO(synk): at real BERT-base scale switch to per-layer streaming (layer grid
        # axis marked "arbitrary") + explicit vmem_limit_bytes; not needed at ~0.9 MB.
        shape = tuple(arr.shape)
        nd = len(shape)
        return pl.BlockSpec(shape, lambda b, _n=nd: (0,) * _n)

    in_specs = ([pl.BlockSpec((block_b, S, HIDDEN), lambda b: (b, 0, 0)),
                 pl.BlockSpec((block_b, 1, S), lambda b: (b, 0, 0))]
                + [_resident_spec(w) for w in weight_args])

    out = pl.pallas_call(
        functools.partial(_bert_kernel, num_layers=NUM_LAYERS,
                          num_heads=NUM_HEADS, head_dim=HEAD_DIM,
                          block_b=block_b, seq_len=S),
        out_shape=jax.ShapeDtypeStruct((grid_b, block_b, HIDDEN), jnp.float32),
        grid=(grid_b,),
        in_specs=in_specs,
        out_specs=pl.BlockSpec((1, block_b, HIDDEN), lambda b: (b, 0, 0)),
        compiler_params=pltpu.CompilerParams(
            dimension_semantics=("parallel",)),
    )(emb, mask_bias, *weight_args)

    # drop the zero padding of the lane-dense head output
    return out.reshape(B, HIDDEN)[:, :NUM_LABELS]


# ---------------- deterministic parameter init ----------------
def init_params(key):
    keys = iter(jax.random.split(key, 16))

    def nrm(shape, dtype=jnp.float32):
        return (0.02 * jax.random.normal(next(keys), shape, jnp.float32)).astype(dtype)

    L, H, I = NUM_LAYERS, HIDDEN, INTERMEDIATE
    bf16 = jnp.bfloat16

    cls2_w = jnp.zeros((H, H), jnp.float32).at[:, :NUM_LABELS].set(
        nrm((H, NUM_LABELS)))

    params = {
        # frozen embeddings (f32, gathered outside the kernel)
        "word_emb": nrm((VOCAB, H)),
        "pos_emb": nrm((MAX_POS, H)),
        "type_emb": nrm((2, H)),
        "emb_ln_g": jnp.ones((1, H), jnp.float32),
        "emb_ln_b": jnp.zeros((1, H), jnp.float32),
        # per-layer stacked weights; Q/K/V fused along the output dim; matmul weights bf16
        "wqkv": nrm((L, H, 3 * H), bf16),
        "bqkv": jnp.zeros((L, 1, 3 * H), jnp.float32),
        "wao": nrm((L, H, H), bf16),
        "bao": jnp.zeros((L, 1, H), jnp.float32),
        "ln1_g": jnp.ones((L, 1, H), jnp.float32),
        "ln1_b": jnp.zeros((L, 1, H), jnp.float32),
        "wff1": nrm((L, H, I), bf16),
        "bff1": jnp.zeros((L, 1, I), jnp.float32),
        "wff2": nrm((L, I, H), bf16),
        "bff2": jnp.zeros((L, 1, H), jnp.float32),
        "ln2_g": jnp.ones((L, 1, H), jnp.float32),
        "ln2_b": jnp.zeros((L, 1, H), jnp.float32),
        # pooler + custom classifier head (cls2 zero-padded to 128 lanes)
        "pool_w": nrm((H, H), bf16),
        "pool_b": jnp.zeros((1, H), jnp.float32),
        "cls1_w": nrm((H, H), bf16),
        "cls1_b": jnp.zeros((1, H), jnp.float32),
        "cls2_w": cls2_w.astype(bf16),
        "cls2_b": jnp.zeros((1, H), jnp.float32),
    }
    return params


if __name__ == "__main__":
    B, S = 8, 16
    key = jax.random.PRNGKey(0)
    k_params, k_ids = jax.random.split(key)

    params = init_params(k_params)
    input_ids = jax.random.randint(k_ids, (B, S), 0, VOCAB, dtype=jnp.int32)
    # varying amounts of padding per sequence
    lengths = jnp.array([16, 12, 16, 9, 16, 7, 11, 16], jnp.int32)
    attention_mask = (jnp.arange(S)[None, :] < lengths[:, None]).astype(jnp.int32)

    logits = jax.jit(bert_classifier_forward)(params, input_ids, attention_mask)
    logits = jax.block_until_ready(logits)

    assert logits.shape == (B, NUM_LABELS), logits.shape
    assert bool(jnp.all(jnp.isfinite(logits)))
    print("KERNEL_OK")
</pallas_src>

<mosaic_0001>
module attributes {stable_mosaic.version = 11 : i64} {
  func.func @_bert_kernel(%arg0: i32, %arg1: memref<4x16x128xf32, #tpu.memory_space<vmem>>, %arg2: memref<4x1x16xf32, #tpu.memory_space<vmem>>, %arg3: memref<1x128xf32, #tpu.memory_space<vmem>>, %arg4: memref<1x128xf32, #tpu.memory_space<vmem>>, %arg5: memref<2x128x384xbf16, #tpu.memory_space<vmem>>, %arg6: memref<2x1x384xf32, #tpu.memory_space<vmem>>, %arg7: memref<2x128x128xbf16, #tpu.memory_space<vmem>>, %arg8: memref<2x1x128xf32, #tpu.memory_space<vmem>>, %arg9: memref<2x1x128xf32, #tpu.memory_space<vmem>>, %arg10: memref<2x1x128xf32, #tpu.memory_space<vmem>>, %arg11: memref<2x128x512xbf16, #tpu.memory_space<vmem>>, %arg12: memref<2x1x512xf32, #tpu.memory_space<vmem>>, %arg13: memref<2x512x128xbf16, #tpu.memory_space<vmem>>, %arg14: memref<2x1x128xf32, #tpu.memory_space<vmem>>, %arg15: memref<2x1x128xf32, #tpu.memory_space<vmem>>, %arg16: memref<2x1x128xf32, #tpu.memory_space<vmem>>, %arg17: memref<128x128xbf16, #tpu.memory_space<vmem>>, %arg18: memref<1x128xf32, #tpu.memory_space<vmem>>, %arg19: memref<128x128xbf16, #tpu.memory_space<vmem>>, %arg20: memref<1x128xf32, #tpu.memory_space<vmem>>, %arg21: memref<128x128xbf16, #tpu.memory_space<vmem>>, %arg22: memref<1x128xf32, #tpu.memory_space<vmem>>, %arg23: memref<1x4x128xf32, #tpu.memory_space<vmem>>) attributes {dimension_semantics = [#tpu.dimension_semantics<parallel>], iteration_bounds = array<i64: 2>, scalar_prefetch = 0 : i64, scratch_operands = 0 : i64, tpu.core_type = #tpu.core_type<tc>, window_params = [{transform_indices = @transform_0, window_bounds = array<i64: 4, 16, 128>}, {transform_indices = @transform_1, window_bounds = array<i64: 4, 1, 16>}, {pipeline_mode = #tpu.pipeline_mode<synchronous>, transform_indices = @transform_2, window_bounds = array<i64: 1, 128>}, {pipeline_mode = #tpu.pipeline_mode<synchronous>, transform_indices = @transform_3, window_bounds = array<i64: 1, 128>}, {pipeline_mode = #tpu.pipeline_mode<synchronous>, transform_indices = @transform_4, window_bounds = array<i64: 2, 128, 384>}, {pipeline_mode = #tpu.pipeline_mode<synchronous>, transform_indices = @transform_5, window_bounds = array<i64: 2, 1, 384>}, {pipeline_mode = #tpu.pipeline_mode<synchronous>, transform_indices = @transform_6, window_bounds = array<i64: 2, 128, 128>}, {pipeline_mode = #tpu.pipeline_mode<synchronous>, transform_indices = @transform_7, window_bounds = array<i64: 2, 1, 128>}, {pipeline_mode = #tpu.pipeline_mode<synchronous>, transform_indices = @transform_8, window_bounds = array<i64: 2, 1, 128>}, {pipeline_mode = #tpu.pipeline_mode<synchronous>, transform_indices = @transform_9, window_bounds = array<i64: 2, 1, 128>}, {pipeline_mode = #tpu.pipeline_mode<synchronous>, transform_indices = @transform_10, window_bounds = array<i64: 2, 128, 512>}, {pipeline_mode = #tpu.pipeline_mode<synchronous>, transform_indices = @transform_11, window_bounds = array<i64: 2, 1, 512>}, {pipeline_mode = #tpu.pipeline_mode<synchronous>, transform_indices = @transform_12, window_bounds = array<i64: 2, 512, 128>}, {pipeline_mode = #tpu.pipeline_mode<synchronous>, transform_indices = @transform_13, window_bounds = array<i64: 2, 1, 128>}, {pipeline_mode = #tpu.pipeline_mode<synchronous>, transform_indices = @transform_14, window_bounds = array<i64: 2, 1, 128>}, {pipeline_mode = #tpu.pipeline_mode<synchronous>, transform_indices = @transform_15, window_bounds = array<i64: 2, 1, 128>}, {pipeline_mode = #tpu.pipeline_mode<synchronous>, transform_indices = @transform_16, window_bounds = array<i64: 128, 128>}, {pipeline_mode = #tpu.pipeline_mode<synchronous>, transform_indices = @transform_17, window_bounds = array<i64: 1, 128>}, {pipeline_mode = #tpu.pipeline_mode<synchronous>, transform_indices = @transform_18, window_bounds = array<i64: 128, 128>}, {pipeline_mode = #tpu.pipeline_mode<synchronous>, transform_indices = @transform_19, window_bounds = array<i64: 1, 128>}, {pipeline_mode = #tpu.pipeline_mode<synchronous>, transform_indices = @transform_20, window_bounds = array<i64: 128, 128>}, {pipeline_mode = #tpu.pipeline_mode<synchronous>, transform_indices = @transform_21, window_bounds = array<i64: 1, 128>}, {transform_indices = @transform_22, window_bounds = array<i64: 1, 4, 128>}]} {
    %c0 = arith.constant 0 : index
    %c0_0 = arith.constant 0 : index
    %c0_1 = arith.constant 0 : index
    %0 = vector.load %arg1[%c0, %c0_0, %c0_1] : memref<4x16x128xf32, #tpu.memory_space<vmem>>, vector<4x16x128xf32>
    %1 = vector.shape_cast %0 : vector<4x16x128xf32> to vector<64x128xf32>
    %c0_2 = arith.constant 0 : index
    %c0_3 = arith.constant 0 : index
    %c0_4 = arith.constant 0 : index
    %2 = vector.load %arg2[%c0_2, %c0_3, %c0_4] : memref<4x1x16xf32, #tpu.memory_space<vmem>>, vector<4x1x16xf32>
    %c0_5 = arith.constant 0 : index
    %c0_6 = arith.constant 0 : index
    %3 = vector.load %arg3[%c0_5, %c0_6] : memref<1x128xf32, #tpu.memory_space<vmem>>, vector<1x128xf32>
    %c0_7 = arith.constant 0 : index
    %c0_8 = arith.constant 0 : index
    %4 = vector.load %arg4[%c0_7, %c0_8] : memref<1x128xf32, #tpu.memory_space<vmem>>, vector<1x128xf32>
    %cst = arith.constant dense<0.000000e+00> : vector<64xf32>
    %5 = vector.multi_reduction <add>, %1, %cst [1] : vector<64x128xf32> to vector<64xf32>
    %6 = vector.shape_cast %5 : vector<64xf32> to vector<64x1xf32>
    %cst_9 = arith.constant 1.280000e+02 : f32
    %7 = vector.broadcast %cst_9 : f32 to vector<64x1xf32>
    %8 = arith.divf %6, %7 : vector<64x1xf32>
    %9 = vector.broadcast %8 : vector<64x1xf32> to vector<64x128xf32>
    %10 = arith.subf %1, %9 : vector<64x128xf32>
    %11 = arith.mulf %10, %10 : vector<64x128xf32>
    %cst_10 = arith.constant dense<0.000000e+00> : vector<64xf32>
    %12 = vector.multi_reduction <add>, %11, %cst_10 [1] : vector<64x128xf32> to vector<64xf32>
    %13 = vector.shape_cast %12 : vector<64xf32> to vector<64x1xf32>
    %cst_11 = arith.constant 1.280000e+02 : f32
    %14 = vector.broadcast %cst_11 : f32 to vector<64x1xf32>
    %15 = arith.divf %13, %14 : vector<64x1xf32>
    %cst_12 = arith.constant 9.99999996E-13 : f32
    %16 = vector.broadcast %cst_12 : f32 to vector<64x1xf32>
    %17 = arith.addf %15, %16 : vector<64x1xf32>
    %18 = math.rsqrt %17 : vector<64x1xf32>
    %19 = vector.broadcast %18 : vector<64x1xf32> to vector<64x128xf32>
    %20 = arith.mulf %10, %19 : vector<64x128xf32>
    %21 = vector.broadcast %3 : vector<1x128xf32> to vector<64x128xf32>
    %22 = arith.mulf %20, %21 : vector<64x128xf32>
    %23 = vector.broadcast %4 : vector<1x128xf32> to vector<64x128xf32>
    %24 = arith.addf %22, %23 : vector<64x128xf32>
    %c0_13 = arith.constant 0 : index
    %c0_14 = arith.constant 0 : index
    %c0_15 = arith.constant 0 : index
    %25 = vector.load %arg5[%c0_13, %c0_14, %c0_15] : memref<2x128x384xbf16, #tpu.memory_space<vmem>>, vector<1x128x384xbf16>
    %26 = vector.shape_cast %25 : vector<1x128x384xbf16> to vector<128x384xbf16>
    %27 = arith.truncf %24 : vector<64x128xf32> to vector<64x128xbf16>
    %cst_16 = arith.constant dense<0.000000e+00> : vector<64x384xf32>
    %28 = tpu.matmul %27, %26, %cst_16 {dimension_numbers = #tpu.dot_dimension_numbers<[1], [0], [0], [1], [0, 0, 1, 1], [], []>} : vector<64x128xbf16>, vector<128x384xbf16>, vector<64x384xf32> -> vector<64x384xf32>
    %c0_17 = arith.constant 0 : index
    %c0_18 = arith.constant 0 : index
    %c0_19 = arith.constant 0 : index
    %29 = vector.load %arg6[%c0_17, %c0_18, %c0_19] : memref<2x1x384xf32, #tpu.memory_space<vmem>>, vector<1x1x384xf32>
    %30 = vector.shape_cast %29 : vector<1x1x384xf32> to vector<1x384xf32>
    %31 = vector.broadcast %30 : vector<1x384xf32> to vector<64x384xf32>
    %32 = arith.addf %28, %31 : vector<64x384xf32>
    %33 = arith.truncf %32 : vector<64x384xf32> to vector<64x384xbf16>
    %34 = vector.extract_strided_slice %33 {offsets = [0, 0], sizes = [64, 128], strides = [1, 1]} : vector<64x384xbf16> to vector<64x128xbf16>
    %35 = vector.extract_strided_slice %33 {offsets = [0, 128], sizes = [64, 128], strides = [1, 1]} : vector<64x384xbf16> to vector<64x128xbf16>
    %36 = vector.extract_strided_slice %33 {offsets = [0, 256], sizes = [64, 128], strides = [1, 1]} : vector<64x384xbf16> to vector<64x128xbf16>
    %37 = vector.extract_strided_slice %34 {offsets = [0, 0], sizes = [64, 32], strides = [1, 1]} : vector<64x128xbf16> to vector<64x32xbf16>
    %38 = vector.shape_cast %37 : vector<64x32xbf16> to vector<4x16x32xbf16>
    %39 = vector.extract_strided_slice %35 {offsets = [0, 0], sizes = [64, 32], strides = [1, 1]} : vector<64x128xbf16> to vector<64x32xbf16>
    %40 = vector.shape_cast %39 : vector<64x32xbf16> to vector<4x16x32xbf16>
    %41 = vector.extract_strided_slice %36 {offsets = [0, 0], sizes = [64, 32], strides = [1, 1]} : vector<64x128xbf16> to vector<64x32xbf16>
    %42 = vector.shape_cast %41 : vector<64x32xbf16> to vector<4x16x32xbf16>
    "tpu.trace_start"() <{level = 10 : i32, message = "bqd,bkd->bqk"}> : () -> ()
    %cst_20 = arith.constant dense<0.000000e+00> : vector<4x16x16xf32>
    %43 = tpu.matmul %38, %40, %cst_20 {dimension_numbers = #tpu.dot_dimension_numbers<[2], [2], [1], [1], [0, 0, 0, 1, 1, 1], [0], [0]>} : vector<4x16x32xbf16>, vector<4x16x32xbf16>, vector<4x16x16xf32> -> vector<4x16x16xf32>
    "tpu.trace_stop"() : () -> ()
    %cst_21 = arith.constant 0.176776692 : f32
    %44 = vector.broadcast %cst_21 : f32 to vector<4x16x16xf32>
    %45 = arith.mulf %43, %44 : vector<4x16x16xf32>
    %46 = vector.broadcast %2 : vector<4x1x16xf32> to vector<4x16x16xf32>
    %47 = arith.addf %45, %46 : vector<4x16x16xf32>
    %cst_22 = arith.constant dense<0xFF800000> : vector<4x16xf32>
    %48 = vector.multi_reduction <maximumf>, %47, %cst_22 [2] : vector<4x16x16xf32> to vector<4x16xf32>
    %49 = vector.shape_cast %48 : vector<4x16xf32> to vector<4x16x1xf32>
    %50 = vector.broadcast %49 : vector<4x16x1xf32> to vector<4x16x16xf32>
    %51 = arith.subf %47, %50 : vector<4x16x16xf32>
    %52 = math.exp %51 : vector<4x16x16xf32>
    %cst_23 = arith.constant dense<0.000000e+00> : vector<4x16xf32>
    %53 = vector.multi_reduction <add>, %52, %cst_23 [2] : vector<4x16x16xf32> to vector<4x16xf32>
    %54 = vector.shape_cast %53 : vector<4x16xf32> to vector<4x16x1xf32>
    %55 = tpu.reciprocal %54 {approx = true} : vector<4x16x1xf32> -> vector<4x16x1xf32>
    %56 = vector.broadcast %55 : vector<4x16x1xf32> to vector<4x16x16xf32>
    %57 = arith.mulf %52, %56 : vector<4x16x16xf32>
    %58 = arith.truncf %57 : vector<4x16x16xf32> to vector<4x16x16xbf16>
    "tpu.trace_start"() <{level = 10 : i32, message = "bqk,bkd->bqd"}> : () -> ()
    %cst_24 = arith.constant dense<0.000000e+00> : vector<4x16x32xf32>
    %59 = tpu.matmul %58, %42, %cst_24 {dimension_numbers = #tpu.dot_dimension_numbers<[2], [1], [1], [2], [0, 0, 0, 1, 1, 2], [0], [0]>} : vector<4x16x16xbf16>, vector<4x16x32xbf16>, vector<4x16x32xf32> -> vector<4x16x32xf32>
    "tpu.trace_stop"() : () -> ()
    %60 = vector.shape_cast %59 : vector<4x16x32xf32> to vector<64x32xf32>
    %61 = vector.extract_strided_slice %34 {offsets = [0, 32], sizes = [64, 32], strides = [1, 1]} : vector<64x128xbf16> to vector<64x32xbf16>
    %62 = vector.shape_cast %61 : vector<64x32xbf16> to vector<4x16x32xbf16>
    %63 = vector.extract_strided_slice %35 {offsets = [0, 32], sizes = [64, 32], strides = [1, 1]} : vector<64x128xbf16> to vector<64x32xbf16>
    %64 = vector.shape_cast %63 : vector<64x32xbf16> to vector<4x16x32xbf16>
    %65 = vector.extract_strided_slice %36 {offsets = [0, 32], sizes = [64, 32], strides = [1, 1]} : vector<64x128xbf16> to vector<64x32xbf16>
    %66 = vector.shape_cast %65 : vector<64x32xbf16> to vector<4x16x32xbf16>
    "tpu.trace_start"() <{level = 10 : i32, message = "bqd,bkd->bqk"}> : () -> ()
    %cst_25 = arith.constant dense<0.000000e+00> : vector<4x16x16xf32>
    %67 = tpu.matmul %62, %64, %cst_25 {dimension_numbers = #tpu.dot_dimension_numbers<[2], [2], [1], [1], [0, 0, 0, 1, 1, 1], [0], [0]>} : vector<4x16x32xbf16>, vector<4x16x32xbf16>, vector<4x16x16xf32> -> vector<4x16x16xf32>
    "tpu.trace_stop"() : () -> ()
    %cst_26 = arith.constant 0.176776692 : f32
    %68 = vector.broadcast %cst_26 : f32 to vector<4x16x16xf32>
    %69 = arith.mulf %67, %68 : vector<4x16x16xf32>
    %70 = vector.broadcast %2 : vector<4x1x16xf32> to vector<4x16x16xf32>
    %71 = arith.addf %69, %70 : vector<4x16x16xf32>
    %cst_27 = arith.constant dense<0xFF800000> : vector<4x16xf32>
    %72 = vector.multi_reduction <maximumf>, %71, %cst_27 [2] : vector<4x16x16xf32> to vector<4x16xf32>
    %73 = vector.shape_cast %72 : vector<4x16xf32> to vector<4x16x1xf32>
    %74 = vector.broadcast %73 : vector<4x16x1xf32> to vector<4x16x16xf32>
    %75 = arith.subf %71, %74 : vector<4x16x16xf32>
    %76 = math.exp %75 : vector<4x16x16xf32>
    %cst_28 = arith.constant dense<0.000000e+00> : vector<4x16xf32>
    %77 = vector.multi_reduction <add>, %76, %cst_28 [2] : vector<4x16x16xf32> to vector<4x16xf32>
    %78 = vector.shape_cast %77 : vector<4x16xf32> to vector<4x16x1xf32>
    %79 = tpu.reciprocal %78 {approx = true} : vector<4x16x1xf32> -> vector<4x16x1xf32>
    %80 = vector.broadcast %79 : vector<4x16x1xf32> to vector<4x16x16xf32>
    %81 = arith.mulf %76, %80 : vector<4x16x16xf32>
    %82 = arith.truncf %81 : vector<4x16x16xf32> to vector<4x16x16xbf16>
    "tpu.trace_start"() <{level = 10 : i32, message = "bqk,bkd->bqd"}> : () -> ()
    %cst_29 = arith.constant dense<0.000000e+00> : vector<4x16x32xf32>
    %83 = tpu.matmul %82, %66, %cst_29 {dimension_numbers = #tpu.dot_dimension_numbers<[2], [1], [1], [2], [0, 0, 0, 1, 1, 2], [0], [0]>} : vector<4x16x16xbf16>, vector<4x16x32xbf16>, vector<4x16x32xf32> -> vector<4x16x32xf32>
    "tpu.trace_stop"() : () -> ()
    %84 = vector.shape_cast %83 : vector<4x16x32xf32> to vector<64x32xf32>
    %85 = vector.extract_strided_slice %34 {offsets = [0, 64], sizes = [64, 32], strides = [1, 1]} : vector<64x128xbf16> to vector<64x32xbf16>
    %86 = vector.shape_cast %85 : vector<64x32xbf16> to vector<4x16x32xbf16>
    %87 = vector.extract_strided_slice %35 {offsets = [0, 64], sizes = [64, 32], strides = [1, 1]} : vector<64x128xbf16> to vector<64x32xbf16>
    %88 = vector.shape_cast %87 : vector<64x32xbf16> to vector<4x16x32xbf16>
    %89 = vector.extract_strided_slice %36 {offsets = [0, 64], sizes = [64, 32], strides = [1, 1]} : vector<64x128xbf16> to vector<64x32xbf16>
    %90 = vector.shape_cast %89 : vector<64x32xbf16> to vector<4x16x32xbf16>
    "tpu.trace_start"() <{level = 10 : i32, message = "bqd,bkd->bqk"}> : () -> ()
    %cst_30 = arith.constant dense<0.000000e+00> : vector<4x16x16xf32>
    %91 = tpu.matmul %86, %88, %cst_30 {dimension_numbers = #tpu.dot_dimension_numbers<[2], [2], [1], [1], [0, 0, 0, 1, 1, 1], [0], [0]>} : vector<4x16x32xbf16>, vector<4x16x32xbf16>, vector<4x16x16xf32> -> vector<4x16x16xf32>
    "tpu.trace_stop"() : () -> ()
    %cst_31 = arith.constant 0.176776692 : f32
    %92 = vector.broadcast %cst_31 : f32 to vector<4x16x16xf32>
    %93 = arith.mulf %91, %92 : vector<4x16x16xf32>
    %94 = vector.broadcast %2 : vector<4x1x16xf32> to vector<4x16x16xf32>
    %95 = arith.addf %93, %94 : vector<4x16x16xf32>
    %cst_32 = arith.constant dense<0xFF800000> : vector<4x16xf32>
    %96 = vector.multi_reduction <maximumf>, %95, %cst_32 [2] : vector<4x16x16xf32> to vector<4x16xf32>
    %97 = vector.shape_cast %96 : vector<4x16xf32> to vector<4x16x1xf32>
    %98 = vector.broadcast %97 : vector<4x16x1xf32> to vector<4x16x16xf32>
    %99 = arith.subf %95, %98 : vector<4x16x16xf32>
    %100 = math.exp %99 : vector<4x16x16xf32>
    %cst_33 = arith.constant dense<0.000000e+00> : vector<4x16xf32>
    %101 = vector.multi_reduction <add>, %100, %cst_33 [2] : vector<4x16x16xf32> to vector<4x16xf32>
    %102 = vector.shape_cast %101 : vector<4x16xf32> to vector<4x16x1xf32>
    %103 = tpu.reciprocal %102 {approx = true} : vector<4x16x1xf32> -> vector<4x16x1xf32>
    %104 = vector.broadcast %103 : vector<4x16x1xf32> to vector<4x16x16xf32>
    %105 = arith.mulf %100, %104 : vector<4x16x16xf32>
    %106 = arith.truncf %105 : vector<4x16x16xf32> to vector<4x16x16xbf16>
    "tpu.trace_start"() <{level = 10 : i32, message = "bqk,bkd->bqd"}> : () -> ()
    %cst_34 = arith.constant dense<0.000000e+00> : vector<4x16x32xf32>
    %107 = tpu.matmul %106, %90, %cst_34 {dimension_numbers = #tpu.dot_dimension_numbers<[2], [1], [1], [2], [0, 0, 0, 1, 1, 2], [0], [0]>} : vector<4x16x16xbf16>, vector<4x16x32xbf16>, vector<4x16x32xf32> -> vector<4x16x32xf32>
    "tpu.trace_stop"() : () -> ()
    %108 = vector.shape_cast %107 : vector<4x16x32xf32> to vector<64x32xf32>
    %109 = vector.extract_strided_slice %34 {offsets = [0, 96], sizes = [64, 32], strides = [1, 1]} : vector<64x128xbf16> to vector<64x32xbf16>
    %110 = vector.shape_cast %109 : vector<64x32xbf16> to vector<4x16x32xbf16>
    %111 = vector.extract_strided_slice %35 {offsets = [0, 96], sizes = [64, 32], strides = [1, 1]} : vector<64x128xbf16> to vector<64x32xbf16>
    %112 = vector.shape_cast %111 : vector<64x32xbf16> to vector<4x16x32xbf16>
    %113 = vector.extract_strided_slice %36 {offsets = [0, 96], sizes = [64, 32], strides = [1, 1]} : vector<64x128xbf16> to vector<64x32xbf16>
    %114 = vector.shape_cast %113 : vector<64x32xbf16> to vector<4x16x32xbf16>
    "tpu.trace_start"() <{level = 10 : i32, message = "bqd,bkd->bqk"}> : () -> ()
    %cst_35 = arith.constant dense<0.000000e+00> : vector<4x16x16xf32>
    %115 = tpu.matmul %110, %112, %cst_35 {dimension_numbers = #tpu.dot_dimension_numbers<[2], [2], [1], [1], [0, 0, 0, 1, 1, 1], [0], [0]>} : vector<4x16x32xbf16>, vector<4x16x32xbf16>, vector<4x16x16xf32> -> vector<4x16x16xf32>
    "tpu.trace_stop"() : () -> ()
    %cst_36 = arith.constant 0.176776692 : f32
    %116 = vector.broadcast %cst_36 : f32 to vector<4x16x16xf32>
    %117 = arith.mulf %115, %116 : vector<4x16x16xf32>
    %118 = vector.broadcast %2 : vector<4x1x16xf32> to vector<4x16x16xf32>
    %119 = arith.addf %117, %118 : vector<4x16x16xf32>
    %cst_37 = arith.constant dense<0xFF800000> : vector<4x16xf32>
    %120 = vector.multi_reduction <maximumf>, %119, %cst_37 [2] : vector<4x16x16xf32> to vector<4x16xf32>
    %121 = vector.shape_cast %120 : vector<4x16xf32> to vector<4x16x1xf32>
    %122 = vector.broadcast %121 : vector<4x16x1xf32> to vector<4x16x16xf32>
    %123 = arith.subf %119, %122 : vector<4x16x16xf32>
    %124 = math.exp %123 : vector<4x16x16xf32>
    %cst_38 = arith.constant dense<0.000000e+00> : vector<4x16xf32>
    %125 = vector.multi_reduction <add>, %124, %cst_38 [2] : vector<4x16x16xf32> to vector<4x16xf32>
    %126 = vector.shape_cast %125 : vector<4x16xf32> to vector<4x16x1xf32>
    %127 = tpu.reciprocal %126 {approx = true} : vector<4x16x1xf32> -> vector<4x16x1xf32>
    %128 = vector.broadcast %127 : vector<4x16x1xf32> to vector<4x16x16xf32>
    %129 = arith.mulf %124, %128 : vector<4x16x16xf32>
    %130 = arith.truncf %129 : vector<4x16x16xf32> to vector<4x16x16xbf16>
    "tpu.trace_start"() <{level = 10 : i32, message = "bqk,bkd->bqd"}> : () -> ()
    %cst_39 = arith.constant dense<0.000000e+00> : vector<4x16x32xf32>
    %131 = tpu.matmul %130, %114, %cst_39 {dimension_numbers = #tpu.dot_dimension_numbers<[2], [1], [1], [2], [0, 0, 0, 1, 1, 2], [0], [0]>} : vector<4x16x16xbf16>, vector<4x16x32xbf16>, vector<4x16x32xf32> -> vector<4x16x32xf32>
    "tpu.trace_stop"() : () -> ()
    %132 = vector.shape_cast %131 : vector<4x16x32xf32> to vector<64x32xf32>
    %133 = tpu.concatenate %60, %84, %108, %132 in 1 : vector<64x32xf32>, vector<64x32xf32>, vector<64x32xf32>, vector<64x32xf32> -> vector<64x128xf32>
    %c0_40 = arith.constant 0 : index
    %c0_41 = arith.constant 0 : index
    %c0_42 = arith.constant 0 : index
    %134 = vector.load %arg7[%c0_40, %c0_41, %c0_42] : memref<2x128x128xbf16, #tpu.memory_space<vmem>>, vector<1x128x128xbf16>
    %135 = vector.shape_cast %134 : vector<1x128x128xbf16> to vector<128x128xbf16>
    %136 = arith.truncf %133 : vector<64x128xf32> to vector<64x128xbf16>
    %cst_43 = arith.constant dense<0.000000e+00> : vector<64x128xf32>
    %137 = tpu.matmul %136, %135, %cst_43 {dimension_numbers = #tpu.dot_dimension_numbers<[1], [0], [0], [1], [0, 0, 1, 1], [], []>} : vector<64x128xbf16>, vector<128x128xbf16>, vector<64x128xf32> -> vector<64x128xf32>
    %c0_44 = arith.constant 0 : index
    %c0_45 = arith.constant 0 : index
    %c0_46 = arith.constant 0 : index
    %138 = vector.load %arg8[%c0_44, %c0_45, %c0_46] : memref<2x1x128xf32, #tpu.memory_space<vmem>>, vector<1x1x128xf32>
    %139 = vector.shape_cast %138 : vector<1x1x128xf32> to vector<1x128xf32>
    %140 = vector.broadcast %139 : vector<1x128xf32> to vector<64x128xf32>
    %141 = arith.addf %137, %140 : vector<64x128xf32>
    %142 = arith.addf %141, %24 : vector<64x128xf32>
    %c0_47 = arith.constant 0 : index
    %c0_48 = arith.constant 0 : index
    %c0_49 = arith.constant 0 : index
    %143 = vector.load %arg9[%c0_47, %c0_48, %c0_49] : memref<2x1x128xf32, #tpu.memory_space<vmem>>, vector<1x1x128xf32>
    %144 = vector.shape_cast %143 : vector<1x1x128xf32> to vector<1x128xf32>
    %c0_50 = arith.constant 0 : index
    %c0_51 = arith.constant 0 : index
    %c0_52 = arith.constant 0 : index
    %145 = vector.load %arg10[%c0_50, %c0_51, %c0_52] : memref<2x1x128xf32, #tpu.memory_space<vmem>>, vector<1x1x128xf32>
    %146 = vector.shape_cast %145 : vector<1x1x128xf32> to vector<1x128xf32>
    %cst_53 = arith.constant dense<0.000000e+00> : vector<64xf32>
    %147 = vector.multi_reduction <add>, %142, %cst_53 [1] : vector<64x128xf32> to vector<64xf32>
    %148 = vector.shape_cast %147 : vector<64xf32> to vector<64x1xf32>
    %cst_54 = arith.constant 1.280000e+02 : f32
    %149 = vector.broadcast %cst_54 : f32 to vector<64x1xf32>
    %150 = arith.divf %148, %149 : vector<64x1xf32>
    %151 = vector.broadcast %150 : vector<64x1xf32> to vector<64x128xf32>
    %152 = arith.subf %142, %151 : vector<64x128xf32>
    %153 = arith.mulf %152, %152 : vector<64x128xf32>
    %cst_55 = arith.constant dense<0.000000e+00> : vector<64xf32>
    %154 = vector.multi_reduction <add>, %153, %cst_55 [1] : vector<64x128xf32> to vector<64xf32>
    %155 = vector.shape_cast %154 : vector<64xf32> to vector<64x1xf32>
    %cst_56 = arith.constant 1.280000e+02 : f32
    %156 = vector.broadcast %cst_56 : f32 to vector<64x1xf32>
    %157 = arith.divf %155, %156 : vector<64x1xf32>
    %cst_57 = arith.constant 9.99999996E-13 : f32
    %158 = vector.broadcast %cst_57 : f32 to vector<64x1xf32>
    %159 = arith.addf %157, %158 : vector<64x1xf32>
    %160 = math.rsqrt %159 : vector<64x1xf32>
    %161 = vector.broadcast %160 : vector<64x1xf32> to vector<64x128xf32>
    %162 = arith.mulf %152, %161 : vector<64x128xf32>
    %163 = vector.broadcast %144 : vector<1x128xf32> to vector<64x128xf32>
    %164 = arith.mulf %162, %163 : vector<64x128xf32>
    %165 = vector.broadcast %146 : vector<1x128xf32> to vector<64x128xf32>
    %166 = arith.addf %164, %165 : vector<64x128xf32>
    %c0_58 = arith.constant 0 : index
    %c0_59 = arith.constant 0 : index
    %c0_60 = arith.constant 0 : index
    %167 = vector.load %arg11[%c0_58, %c0_59, %c0_60] : memref<2x128x512xbf16, #tpu.memory_space<vmem>>, vector<1x128x512xbf16>
    %168 = vector.shape_cast %167 : vector<1x128x512xbf16> to vector<128x512xbf16>
    %169 = arith.truncf %166 : vector<64x128xf32> to vector<64x128xbf16>
    %cst_61 = arith.constant dense<0.000000e+00> : vector<64x512xf32>
    %170 = tpu.matmul %169, %168, %cst_61 {dimension_numbers = #tpu.dot_dimension_numbers<[1], [0], [0], [1], [0, 0, 1, 1], [], []>} : vector<64x128xbf16>, vector<128x512xbf16>, vector<64x512xf32> -> vector<64x512xf32>
    %c0_62 = arith.constant 0 : index
    %c0_63 = arith.constant 0 : index
    %c0_64 = arith.constant 0 : index
    %171 = vector.load %arg12[%c0_62, %c0_63, %c0_64] : memref<2x1x512xf32, #tpu.memory_space<vmem>>, vector<1x1x512xf32>
    %172 = vector.shape_cast %171 : vector<1x1x512xf32> to vector<1x512xf32>
    %173 = vector.broadcast %172 : vector<1x512xf32> to vector<64x512xf32>
    %174 = arith.addf %170, %173 : vector<64x512xf32>
    %cst_65 = arith.constant 5.000000e-01 : f32
    %175 = vector.broadcast %cst_65 : f32 to vector<64x512xf32>
    %176 = arith.mulf %175, %174 : vector<64x512xf32>
    %cst_66 = arith.constant 4.471500e-02 : f32
    %177 = vector.broadcast %cst_66 : f32 to vector<64x512xf32>
    %178 = arith.mulf %177, %174 : vector<64x512xf32>
    %179 = arith.mulf %178, %174 : vector<64x512xf32>
    %180 = arith.mulf %179, %174 : vector<64x512xf32>
    %181 = arith.addf %174, %180 : vector<64x512xf32>
    %cst_67 = arith.constant 0.797884583 : f32
    %182 = vector.broadcast %cst_67 : f32 to vector<64x512xf32>
    %183 = arith.mulf %182, %181 : vector<64x512xf32>
    %184 = math.tanh %183 : vector<64x512xf32>
    %cst_68 = arith.constant 1.000000e+00 : f32
    %185 = vector.broadcast %cst_68 : f32 to vector<64x512xf32>
    %186 = arith.addf %185, %184 : vector<64x512xf32>
    %187 = arith.mulf %176, %186 : vector<64x512xf32>
    %c0_69 = arith.constant 0 : index
    %c0_70 = arith.constant 0 : index
    %c0_71 = arith.constant 0 : index
    %188 = vector.load %arg13[%c0_69, %c0_70, %c0_71] : memref<2x512x128xbf16, #tpu.memory_space<vmem>>, vector<1x512x128xbf16>
    %189 = vector.shape_cast %188 : vector<1x512x128xbf16> to vector<512x128xbf16>
    %190 = arith.truncf %187 : vector<64x512xf32> to vector<64x512xbf16>
    %cst_72 = arith.constant dense<0.000000e+00> : vector<64x128xf32>
    %191 = tpu.matmul %190, %189, %cst_72 {dimension_numbers = #tpu.dot_dimension_numbers<[1], [0], [0], [1], [0, 0, 1, 1], [], []>} : vector<64x512xbf16>, vector<512x128xbf16>, vector<64x128xf32> -> vector<64x128xf32>
    %c0_73 = arith.constant 0 : index
    %c0_74 = arith.constant 0 : index
    %c0_75 = arith.constant 0 : index
    %192 = vector.load %arg14[%c0_73, %c0_74, %c0_75] : memref<2x1x128xf32, #tpu.memory_space<vmem>>, vector<1x1x128xf32>
    %193 = vector.shape_cast %192 : vector<1x1x128xf32> to vector<1x128xf32>
    %194 = vector.broadcast %193 : vector<1x128xf32> to vector<64x128xf32>
    %195 = arith.addf %191, %194 : vector<64x128xf32>
    %196 = arith.addf %195, %166 : vector<64x128xf32>
    %c0_76 = arith.constant 0 : index
    %c0_77 = arith.constant 0 : index
    %c0_78 = arith.constant 0 : index
    %197 = vector.load %arg15[%c0_76, %c0_77, %c0_78] : memref<2x1x128xf32, #tpu.memory_space<vmem>>, vector<1x1x128xf32>
    %198 = vector.shape_cast %197 : vector<1x1x128xf32> to vector<1x128xf32>
    %c0_79 = arith.constant 0 : index
    %c0_80 = arith.constant 0 : index
    %c0_81 = arith.constant 0 : index
    %199 = vector.load %arg16[%c0_79, %c0_80, %c0_81] : memref<2x1x128xf32, #tpu.memory_space<vmem>>, vector<1x1x128xf32>
    %200 = vector.shape_cast %199 : vector<1x1x128xf32> to vector<1x128xf32>
    %cst_82 = arith.constant dense<0.000000e+00> : vector<64xf32>
    %201 = vector.multi_reduction <add>, %196, %cst_82 [1] : vector<64x128xf32> to vector<64xf32>
    %202 = vector.shape_cast %201 : vector<64xf32> to vector<64x1xf32>
    %cst_83 = arith.constant 1.280000e+02 : f32
    %203 = vector.broadcast %cst_83 : f32 to vector<64x1xf32>
    %204 = arith.divf %202, %203 : vector<64x1xf32>
    %205 = vector.broadcast %204 : vector<64x1xf32> to vector<64x128xf32>
    %206 = arith.subf %196, %205 : vector<64x128xf32>
    %207 = arith.mulf %206, %206 : vector<64x128xf32>
    %cst_84 = arith.constant dense<0.000000e+00> : vector<64xf32>
    %208 = vector.multi_reduction <add>, %207, %cst_84 [1] : vector<64x128xf32> to vector<64xf32>
    %209 = vector.shape_cast %208 : vector<64xf32> to vector<64x1xf32>
    %cst_85 = arith.constant 1.280000e+02 : f32
    %210 = vector.broadcast %cst_85 : f32 to vector<64x1xf32>
    %211 = arith.divf %209, %210 : vector<64x1xf32>
    %cst_86 = arith.constant 9.99999996E-13 : f32
    %212 = vector.broadcast %cst_86 : f32 to vector<64x1xf32>
    %213 = arith.addf %211, %212 : vector<64x1xf32>
    %214 = math.rsqrt %213 : vector<64x1xf32>
    %215 = vector.broadcast %214 : vector<64x1xf32> to vector<64x128xf32>
    %216 = arith.mulf %206, %215 : vector<64x128xf32>
    %217 = vector.broadcast %198 : vector<1x128xf32> to vector<64x128xf32>
    %218 = arith.mulf %216, %217 : vector<64x128xf32>
    %219 = vector.broadcast %200 : vector<1x128xf32> to vector<64x128xf32>
    %220 = arith.addf %218, %219 : vector<64x128xf32>
    %c1 = arith.constant 1 : index
    %c0_87 = arith.constant 0 : index
    %c0_88 = arith.constant 0 : index
    %221 = vector.load %arg5[%c1, %c0_87, %c0_88] : memref<2x128x384xbf16, #tpu.memory_space<vmem>>, vector<1x128x384xbf16>
    %222 = vector.shape_cast %221 : vector<1x128x384xbf16> to vector<128x384xbf16>
    %223 = arith.truncf %220 : vector<64x128xf32> to vector<64x128xbf16>
    %cst_89 = arith.constant dense<0.000000e+00> : vector<64x384xf32>
    %224 = tpu.matmul %223, %222, %cst_89 {dimension_numbers = #tpu.dot_dimension_numbers<[1], [0], [0], [1], [0, 0, 1, 1], [], []>} : vector<64x128xbf16>, vector<128x384xbf16>, vector<64x384xf32> -> vector<64x384xf32>
    %c1_90 = arith.constant 1 : index
    %c0_91 = arith.constant 0 : index
    %c0_92 = arith.constant 0 : index
    %225 = vector.load %arg6[%c1_90, %c0_91, %c0_92] : memref<2x1x384xf32, #tpu.memory_space<vmem>>, vector<1x1x384xf32>
    %226 = vector.shape_cast %225 : vector<1x1x384xf32> to vector<1x384xf32>
    %227 = vector.broadcast %226 : vector<1x384xf32> to vector<64x384xf32>
    %228 = arith.addf %224, %227 : vector<64x384xf32>
    %229 = arith.truncf %228 : vector<64x384xf32> to vector<64x384xbf16>
    %230 = vector.extract_strided_slice %229 {offsets = [0, 0], sizes = [64, 128], strides = [1, 1]} : vector<64x384xbf16> to vector<64x128xbf16>
    %231 = vector.extract_strided_slice %229 {offsets = [0, 128], sizes = [64, 128], strides = [1, 1]} : vector<64x384xbf16> to vector<64x128xbf16>
    %232 = vector.extract_strided_slice %229 {offsets = [0, 256], sizes = [64, 128], strides = [1, 1]} : vector<64x384xbf16> to vector<64x128xbf16>
    %233 = vector.extract_strided_slice %230 {offsets = [0, 0], sizes = [64, 32], strides = [1, 1]} : vector<64x128xbf16> to vector<64x32xbf16>
    %234 = vector.shape_cast %233 : vector<64x32xbf16> to vector<4x16x32xbf16>
    %235 = vector.extract_strided_slice %231 {offsets = [0, 0], sizes = [64, 32], strides = [1, 1]} : vector<64x128xbf16> to vector<64x32xbf16>
    %236 = vector.shape_cast %235 : vector<64x32xbf16> to vector<4x16x32xbf16>
    %237 = vector.extract_strided_slice %232 {offsets = [0, 0], sizes = [64, 32], strides = [1, 1]} : vector<64x128xbf16> to vector<64x32xbf16>
    %238 = vector.shape_cast %237 : vector<64x32xbf16> to vector<4x16x32xbf16>
    "tpu.trace_start"() <{level = 10 : i32, message = "bqd,bkd->bqk"}> : () -> ()
    %cst_93 = arith.constant dense<0.000000e+00> : vector<4x16x16xf32>
    %239 = tpu.matmul %234, %236, %cst_93 {dimension_numbers = #tpu.dot_dimension_numbers<[2], [2], [1], [1], [0, 0, 0, 1, 1, 1], [0], [0]>} : vector<4x16x32xbf16>, vector<4x16x32xbf16>, vector<4x16x16xf32> -> vector<4x16x16xf32>
    "tpu.trace_stop"() : () -> ()
    %cst_94 = arith.constant 0.176776692 : f32
    %240 = vector.broadcast %cst_94 : f32 to vector<4x16x16xf32>
    %241 = arith.mulf %239, %240 : vector<4x16x16xf32>
    %242 = vector.broadcast %2 : vector<4x1x16xf32> to vector<4x16x16xf32>
    %243 = arith.addf %241, %242 : vector<4x16x16xf32>
    %cst_95 = arith.constant dense<0xFF800000> : vector<4x16xf32>
    %244 = vector.multi_reduction <maximumf>, %243, %cst_95 [2] : vector<4x16x16xf32> to vector<4x16xf32>
    %245 = vector.shape_cast %244 : vector<4x16xf32> to vector<4x16x1xf32>
    %246 = vector.broadcast %245 : vector<4x16x1xf32> to vector<4x16x16xf32>
    %247 = arith.subf %243, %246 : vector<4x16x16xf32>
    %248 = math.exp %247 : vector<4x16x16xf32>
    %cst_96 = arith.constant dense<0.000000e+00> : vector<4x16xf32>
    %249 = vector.multi_reduction <add>, %248, %cst_96 [2] : vector<4x16x16xf32> to vector<4x16xf32>
    %250 = vector.shape_cast %249 : vector<4x16xf32> to vector<4x16x1xf32>
    %251 = tpu.reciprocal %250 {approx = true} : vector<4x16x1xf32> -> vector<4x16x1xf32>
    %252 = vector.broadcast %251 : vector<4x16x1xf32> to vector<4x16x16xf32>
    %253 = arith.mulf %248, %252 : vector<4x16x16xf32>
    %254 = arith.truncf %253 : vector<4x16x16xf32> to vector<4x16x16xbf16>
    "tpu.trace_start"() <{level = 10 : i32, message = "bqk,bkd->bqd"}> : () -> ()
    %cst_97 = arith.constant dense<0.000000e+00> : vector<4x16x32xf32>
    %255 = tpu.matmul %254, %238, %cst_97 {dimension_numbers = #tpu.dot_dimension_numbers<[2], [1], [1], [2], [0, 0, 0, 1, 1, 2], [0], [0]>} : vector<4x16x16xbf16>, vector<4x16x32xbf16>, vector<4x16x32xf32> -> vector<4x16x32xf32>
    "tpu.trace_stop"() : () -> ()
    %256 = vector.shape_cast %255 : vector<4x16x32xf32> to vector<64x32xf32>
    %257 = vector.extract_strided_slice %230 {offsets = [0, 32], sizes = [64, 32], strides = [1, 1]} : vector<64x128xbf16> to vector<64x32xbf16>
    %258 = vector.shape_cast %257 : vector<64x32xbf16> to vector<4x16x32xbf16>
    %259 = vector.extract_strided_slice %231 {offsets = [0, 32], sizes = [64, 32], strides = [1, 1]} : vector<64x128xbf16> to vector<64x32xbf16>
    %260 = vector.shape_cast %259 : vector<64x32xbf16> to vector<4x16x32xbf16>
    %261 = vector.extract_strided_slice %232 {offsets = [0, 32], sizes = [64, 32], strides = [1, 1]} : vector<64x128xbf16> to vector<64x32xbf16>
    %262 = vector.shape_cast %261 : vector<64x32xbf16> to vector<4x16x32xbf16>
    "tpu.trace_start"() <{level = 10 : i32, message = "bqd,bkd->bqk"}> : () -> ()
    %cst_98 = arith.constant dense<0.000000e+00> : vector<4x16x16xf32>
    %263 = tpu.matmul %258, %260, %cst_98 {dimension_numbers = #tpu.dot_dimension_numbers<[2], [2], [1], [1], [0, 0, 0, 1, 1, 1], [0], [0]>} : vector<4x16x32xbf16>, vector<4x16x32xbf16>, vector<4x16x16xf32> -> vector<4x16x16xf32>
    "tpu.trace_stop"() : () -> ()
    %cst_99 = arith.constant 0.176776692 : f32
    %264 = vector.broadcast %cst_99 : f32 to vector<4x16x16xf32>
    %265 = arith.mulf %263, %264 : vector<4x16x16xf32>
    %266 = vector.broadcast %2 : vector<4x1x16xf32> to vector<4x16x16xf32>
    %267 = arith.addf %265, %266 : vector<4x16x16xf32>
    %cst_100 = arith.constant dense<0xFF800000> : vector<4x16xf32>
    %268 = vector.multi_reduction <maximumf>, %267, %cst_100 [2] : vector<4x16x16xf32> to vector<4x16xf32>
    %269 = vector.shape_cast %268 : vector<4x16xf32> to vector<4x16x1xf32>
    %270 = vector.broadcast %269 : vector<4x16x1xf32> to vector<4x16x16xf32>
    %271 = arith.subf %267, %270 : vector<4x16x16xf32>
    %272 = math.exp %271 : vector<4x16x16xf32>
    %cst_101 = arith.constant dense<0.000000e+00> : vector<4x16xf32>
    %273 = vector.multi_reduction <add>, %272, %cst_101 [2] : vector<4x16x16xf32> to vector<4x16xf32>
    %274 = vector.shape_cast %273 : vector<4x16xf32> to vector<4x16x1xf32>
    %275 = tpu.reciprocal %274 {approx = true} : vector<4x16x1xf32> -> vector<4x16x1xf32>
    %276 = vector.broadcast %275 : vector<4x16x1xf32> to vector<4x16x16xf32>
    %277 = arith.mulf %272, %276 : vector<4x16x16xf32>
    %278 = arith.truncf %277 : vector<4x16x16xf32> to vector<4x16x16xbf16>
    "tpu.trace_start"() <{level = 10 : i32, message = "bqk,bkd->bqd"}> : () -> ()
    %cst_102 = arith.constant dense<0.000000e+00> : vector<4x16x32xf32>
    %279 = tpu.matmul %278, %262, %cst_102 {dimension_numbers = #tpu.dot_dimension_numbers<[2], [1], [1], [2], [0, 0, 0, 1, 1, 2], [0], [0]>} : vector<4x16x16xbf16>, vector<4x16x32xbf16>, vector<4x16x32xf32> -> vector<4x16x32xf32>
    "tpu.trace_stop"() : () -> ()
    %280 = vector.shape_cast %279 : vector<4x16x32xf32> to vector<64x32xf32>
    %281 = vector.extract_strided_slice %230 {offsets = [0, 64], sizes = [64, 32], strides = [1, 1]} : vector<64x128xbf16> to vector<64x32xbf16>
    %282 = vector.shape_cast %281 : vector<64x32xbf16> to vector<4x16x32xbf16>
    %283 = vector.extract_strided_slice %231 {offsets = [0, 64], sizes = [64, 32], strides = [1, 1]} : vector<64x128xbf16> to vector<64x32xbf16>
    %284 = vector.shape_cast %283 : vector<64x32xbf16> to vector<4x16x32xbf16>
    %285 = vector.extract_strided_slice %232 {offsets = [0, 64], sizes = [64, 32], strides = [1, 1]} : vector<64x128xbf16> to vector<64x32xbf16>
    %286 = vector.shape_cast %285 : vector<64x32xbf16> to vector<4x16x32xbf16>
    "tpu.trace_start"() <{level = 10 : i32, message = "bqd,bkd->bqk"}> : () -> ()
    %cst_103 = arith.constant dense<0.000000e+00> : vector<4x16x16xf32>
    %287 = tpu.matmul %282, %284, %cst_103 {dimension_numbers = #tpu.dot_dimension_numbers<[2], [2], [1], [1], [0, 0, 0, 1, 1, 1], [0], [0]>} : vector<4x16x32xbf16>, vector<4x16x32xbf16>, vector<4x16x16xf32> -> vector<4x16x16xf32>
    "tpu.trace_stop"() : () -> ()
    %cst_104 = arith.constant 0.176776692 : f32
    %288 = vector.broadcast %cst_104 : f32 to vector<4x16x16xf32>
    %289 = arith.mulf %287, %288 : vector<4x16x16xf32>
    %290 = vector.broadcast %2 : vector<4x1x16xf32> to vector<4x16x16xf32>
    %291 = arith.addf %289, %290 : vector<4x16x16xf32>
    %cst_105 = arith.constant dense<0xFF800000> : vector<4x16xf32>
    %292 = vector.multi_reduction <maximumf>, %291, %cst_105 [2] : vector<4x16x16xf32> to vector<4x16xf32>
    %293 = vector.shape_cast %292 : vector<4x16xf32> to vector<4x16x1xf32>
    %294 = vector.broadcast %293 : vector<4x16x1xf32> to vector<4x16x16xf32>
    %295 = arith.subf %291, %294 : vector<4x16x16xf32>
    %296 = math.exp %295 : vector<4x16x16xf32>
    %cst_106 = arith.constant dense<0.000000e+00> : vector<4x16xf32>
    %297 = vector.multi_reduction <add>, %296, %cst_106 [2] : vector<4x16x16xf32> to vector<4x16xf32>
    %298 = vector.shape_cast %297 : vector<4x16xf32> to vector<4x16x1xf32>
    %299 = tpu.reciprocal %298 {approx = true} : vector<4x16x1xf32> -> vector<4x16x1xf32>
    %300 = vector.broadcast %299 : vector<4x16x1xf32> to vector<4x16x16xf32>
    %301 = arith.mulf %296, %300 : vector<4x16x16xf32>
    %302 = arith.truncf %301 : vector<4x16x16xf32> to vector<4x16x16xbf16>
    "tpu.trace_start"() <{level = 10 : i32, message = "bqk,bkd->bqd"}> : () -> ()
    %cst_107 = arith.constant dense<0.000000e+00> : vector<4x16x32xf32>
    %303 = tpu.matmul %302, %286, %cst_107 {dimension_numbers = #tpu.dot_dimension_numbers<[2], [1], [1], [2], [0, 0, 0, 1, 1, 2], [0], [0]>} : vector<4x16x16xbf16>, vector<4x16x32xbf16>, vector<4x16x32xf32> -> vector<4x16x32xf32>
    "tpu.trace_stop"() : () -> ()
    %304 = vector.shape_cast %303 : vector<4x16x32xf32> to vector<64x32xf32>
    %305 = vector.extract_strided_slice %230 {offsets = [0, 96], sizes = [64, 32], strides = [1, 1]} : vector<64x128xbf16> to vector<64x32xbf16>
    %306 = vector.shape_cast %305 : vector<64x32xbf16> to vector<4x16x32xbf16>
    %307 = vector.extract_strided_slice %231 {offsets = [0, 96], sizes = [64, 32], strides = [1, 1]} : vector<64x128xbf16> to vector<64x32xbf16>
    %308 = vector.shape_cast %307 : vector<64x32xbf16> to vector<4x16x32xbf16>
    %309 = vector.extract_strided_slice %232 {offsets = [0, 96], sizes = [64, 32], strides = [1, 1]} : vector<64x128xbf16> to vector<64x32xbf16>
    %310 = vector.shape_cast %309 : vector<64x32xbf16> to vector<4x16x32xbf16>
    "tpu.trace_start"() <{level = 10 : i32, message = "bqd,bkd->bqk"}> : () -> ()
    %cst_108 = arith.constant dense<0.000000e+00> : vector<4x16x16xf32>
    %311 = tpu.matmul %306, %308, %cst_108 {dimension_numbers = #tpu.dot_dimension_numbers<[2], [2], [1], [1], [0, 0, 0, 1, 1, 1], [0], [0]>} : vector<4x16x32xbf16>, vector<4x16x32xbf16>, vector<4x16x16xf32> -> vector<4x16x16xf32>
    "tpu.trace_stop"() : () -> ()
    %cst_109 = arith.constant 0.176776692 : f32
    %312 = vector.broadcast %cst_109 : f32 to vector<4x16x16xf32>
    %313 = arith.mulf %311, %312 : vector<4x16x16xf32>
    %314 = vector.broadcast %2 : vector<4x1x16xf32> to vector<4x16x16xf32>
    %315 = arith.addf %313, %314 : vector<4x16x16xf32>
    %cst_110 = arith.constant dense<0xFF800000> : vector<4x16xf32>
    %316 = vector.multi_reduction <maximumf>, %315, %cst_110 [2] : vector<4x16x16xf32> to vector<4x16xf32>
    %317 = vector.shape_cast %316 : vector<4x16xf32> to vector<4x16x1xf32>
    %318 = vector.broadcast %317 : vector<4x16x1xf32> to vector<4x16x16xf32>
    %319 = arith.subf %315, %318 : vector<4x16x16xf32>
    %320 = math.exp %319 : vector<4x16x16xf32>
    %cst_111 = arith.constant dense<0.000000e+00> : vector<4x16xf32>
    %321 = vector.multi_reduction <add>, %320, %cst_111 [2] : vector<4x16x16xf32> to vector<4x16xf32>
    %322 = vector.shape_cast %321 : vector<4x16xf32> to vector<4x16x1xf32>
    %323 = tpu.reciprocal %322 {approx = true} : vector<4x16x1xf32> -> vector<4x16x1xf32>
    %324 = vector.broadcast %323 : vector<4x16x1xf32> to vector<4x16x16xf32>
    %325 = arith.mulf %320, %324 : vector<4x16x16xf32>
    %326 = arith.truncf %325 : vector<4x16x16xf32> to vector<4x16x16xbf16>
    "tpu.trace_start"() <{level = 10 : i32, message = "bqk,bkd->bqd"}> : () -> ()
    %cst_112 = arith.constant dense<0.000000e+00> : vector<4x16x32xf32>
    %327 = tpu.matmul %326, %310, %cst_112 {dimension_numbers = #tpu.dot_dimension_numbers<[2], [1], [1], [2], [0, 0, 0, 1, 1, 2], [0], [0]>} : vector<4x16x16xbf16>, vector<4x16x32xbf16>, vector<4x16x32xf32> -> vector<4x16x32xf32>
    "tpu.trace_stop"() : () -> ()
    %328 = vector.shape_cast %327 : vector<4x16x32xf32> to vector<64x32xf32>
    %329 = tpu.concatenate %256, %280, %304, %328 in 1 : vector<64x32xf32>, vector<64x32xf32>, vector<64x32xf32>, vector<64x32xf32> -> vector<64x128xf32>
    %c1_113 = arith.constant 1 : index
    %c0_114 = arith.constant 0 : index
    %c0_115 = arith.constant 0 : index
    %330 = vector.load %arg7[%c1_113, %c0_114, %c0_115] : memref<2x128x128xbf16, #tpu.memory_space<vmem>>, vector<1x128x128xbf16>
    %331 = vector.shape_cast %330 : vector<1x128x128xbf16> to vector<128x128xbf16>
    %332 = arith.truncf %329 : vector<64x128xf32> to vector<64x128xbf16>
    %cst_116 = arith.constant dense<0.000000e+00> : vector<64x128xf32>
    %333 = tpu.matmul %332, %331, %cst_116 {dimension_numbers = #tpu.dot_dimension_numbers<[1], [0], [0], [1], [0, 0, 1, 1], [], []>} : vector<64x128xbf16>, vector<128x128xbf16>, vector<64x128xf32> -> vector<64x128xf32>
    %c1_117 = arith.constant 1 : index
    %c0_118 = arith.constant 0 : index
    %c0_119 = arith.constant 0 : index
    %334 = vector.load %arg8[%c1_117, %c0_118, %c0_119] : memref<2x1x128xf32, #tpu.memory_space<vmem>>, vector<1x1x128xf32>
    %335 = vector.shape_cast %334 : vector<1x1x128xf32> to vector<1x128xf32>
    %336 = vector.broadcast %335 : vector<1x128xf32> to vector<64x128xf32>
    %337 = arith.addf %333, %336 : vector<64x128xf32>
    %338 = arith.addf %337, %220 : vector<64x128xf32>
    %c1_120 = arith.constant 1 : index
    %c0_121 = arith.constant 0 : index
    %c0_122 = arith.constant 0 : index
    %339 = vector.load %arg9[%c1_120, %c0_121, %c0_122] : memref<2x1x128xf32, #tpu.memory_space<vmem>>, vector<1x1x128xf32>
    %340 = vector.shape_cast %339 : vector<1x1x128xf32> to vector<1x128xf32>
    %c1_123 = arith.constant 1 : index
    %c0_124 = arith.constant 0 : index
    %c0_125 = arith.constant 0 : index
    %341 = vector.load %arg10[%c1_123, %c0_124, %c0_125] : memref<2x1x128xf32, #tpu.memory_space<vmem>>, vector<1x1x128xf32>
    %342 = vector.shape_cast %341 : vector<1x1x128xf32> to vector<1x128xf32>
    %cst_126 = arith.constant dense<0.000000e+00> : vector<64xf32>
    %343 = vector.multi_reduction <add>, %338, %cst_126 [1] : vector<64x128xf32> to vector<64xf32>
    %344 = vector.shape_cast %343 : vector<64xf32> to vector<64x1xf32>
    %cst_127 = arith.constant 1.280000e+02 : f32
    %345 = vector.broadcast %cst_127 : f32 to vector<64x1xf32>
    %346 = arith.divf %344, %345 : vector<64x1xf32>
    %347 = vector.broadcast %346 : vector<64x1xf32> to vector<64x128xf32>
    %348 = arith.subf %338, %347 : vector<64x128xf32>
    %349 = arith.mulf %348, %348 : vector<64x128xf32>
    %cst_128 = arith.constant dense<0.000000e+00> : vector<64xf32>
    %350 = vector.multi_reduction <add>, %349, %cst_128 [1] : vector<64x128xf32> to vector<64xf32>
    %351 = vector.shape_cast %350 : vector<64xf32> to vector<64x1xf32>
    %cst_129 = arith.constant 1.280000e+02 : f32
    %352 = vector.broadcast %cst_129 : f32 to vector<64x1xf32>
    %353 = arith.divf %351, %352 : vector<64x1xf32>
    %cst_130 = arith.constant 9.99999996E-13 : f32
    %354 = vector.broadcast %cst_130 : f32 to vector<64x1xf32>
    %355 = arith.addf %353, %354 : vector<64x1xf32>
    %356 = math.rsqrt %355 : vector<64x1xf32>
    %357 = vector.broadcast %356 : vector<64x1xf32> to vector<64x128xf32>
    %358 = arith.mulf %348, %357 : vector<64x128xf32>
    %359 = vector.broadcast %340 : vector<1x128xf32> to vector<64x128xf32>
    %360 = arith.mulf %358, %359 : vector<64x128xf32>
    %361 = vector.broadcast %342 : vector<1x128xf32> to vector<64x128xf32>
    %362 = arith.addf %360, %361 : vector<64x128xf32>
    %c1_131 = arith.constant 1 : index
    %c0_132 = arith.constant 0 : index
    %c0_133 = arith.constant 0 : index
    %363 = vector.load %arg11[%c1_131, %c0_132, %c0_133] : memref<2x128x512xbf16, #tpu.memory_space<vmem>>, vector<1x128x512xbf16>
    %364 = vector.shape_cast %363 : vector<1x128x512xbf16> to vector<128x512xbf16>
    %365 = arith.truncf %362 : vector<64x128xf32> to vector<64x128xbf16>
    %cst_134 = arith.constant dense<0.000000e+00> : vector<64x512xf32>
    %366 = tpu.matmul %365, %364, %cst_134 {dimension_numbers = #tpu.dot_dimension_numbers<[1], [0], [0], [1], [0, 0, 1, 1], [], []>} : vector<64x128xbf16>, vector<128x512xbf16>, vector<64x512xf32> -> vector<64x512xf32>
    %c1_135 = arith.constant 1 : index
    %c0_136 = arith.constant 0 : index
    %c0_137 = arith.constant 0 : index
    %367 = vector.load %arg12[%c1_135, %c0_136, %c0_137] : memref<2x1x512xf32, #tpu.memory_space<vmem>>, vector<1x1x512xf32>
    %368 = vector.shape_cast %367 : vector<1x1x512xf32> to vector<1x512xf32>
    %369 = vector.broadcast %368 : vector<1x512xf32> to vector<64x512xf32>
    %370 = arith.addf %366, %369 : vector<64x512xf32>
    %cst_138 = arith.constant 5.000000e-01 : f32
    %371 = vector.broadcast %cst_138 : f32 to vector<64x512xf32>
    %372 = arith.mulf %371, %370 : vector<64x512xf32>
    %cst_139 = arith.constant 4.471500e-02 : f32
    %373 = vector.broadcast %cst_139 : f32 to vector<64x512xf32>
    %374 = arith.mulf %373, %370 : vector<64x512xf32>
    %375 = arith.mulf %374, %370 : vector<64x512xf32>
    %376 = arith.mulf %375, %370 : vector<64x512xf32>
    %377 = arith.addf %370, %376 : vector<64x512xf32>
    %cst_140 = arith.constant 0.797884583 : f32
    %378 = vector.broadcast %cst_140 : f32 to vector<64x512xf32>
    %379 = arith.mulf %378, %377 : vector<64x512xf32>
    %380 = math.tanh %379 : vector<64x512xf32>
    %cst_141 = arith.constant 1.000000e+00 : f32
    %381 = vector.broadcast %cst_141 : f32 to vector<64x512xf32>
    %382 = arith.addf %381, %380 : vector<64x512xf32>
    %383 = arith.mulf %372, %382 : vector<64x512xf32>
    %c1_142 = arith.constant 1 : index
    %c0_143 = arith.constant 0 : index
    %c0_144 = arith.constant 0 : index
    %384 = vector.load %arg13[%c1_142, %c0_143, %c0_144] : memref<2x512x128xbf16, #tpu.memory_space<vmem>>, vector<1x512x128xbf16>
    %385 = vector.shape_cast %384 : vector<1x512x128xbf16> to vector<512x128xbf16>
    %386 = arith.truncf %383 : vector<64x512xf32> to vector<64x512xbf16>
    %cst_145 = arith.constant dense<0.000000e+00> : vector<64x128xf32>
    %387 = tpu.matmul %386, %385, %cst_145 {dimension_numbers = #tpu.dot_dimension_numbers<[1], [0], [0], [1], [0, 0, 1, 1], [], []>} : vector<64x512xbf16>, vector<512x128xbf16>, vector<64x128xf32> -> vector<64x128xf32>
    %c1_146 = arith.constant 1 : index
    %c0_147 = arith.constant 0 : index
    %c0_148 = arith.constant 0 : index
    %388 = vector.load %arg14[%c1_146, %c0_147, %c0_148] : memref<2x1x128xf32, #tpu.memory_space<vmem>>, vector<1x1x128xf32>
    %389 = vector.shape_cast %388 : vector<1x1x128xf32> to vector<1x128xf32>
    %390 = vector.broadcast %389 : vector<1x128xf32> to vector<64x128xf32>
    %391 = arith.addf %387, %390 : vector<64x128xf32>
    %392 = arith.addf %391, %362 : vector<64x128xf32>
    %c1_149 = arith.constant 1 : index
    %c0_150 = arith.constant 0 : index
    %c0_151 = arith.constant 0 : index
    %393 = vector.load %arg15[%c1_149, %c0_150, %c0_151] : memref<2x1x128xf32, #tpu.memory_space<vmem>>, vector<1x1x128xf32>
    %394 = vector.shape_cast %393 : vector<1x1x128xf32> to vector<1x128xf32>
    %c1_152 = arith.constant 1 : index
    %c0_153 = arith.constant 0 : index
    %c0_154 = arith.constant 0 : index
    %395 = vector.load %arg16[%c1_152, %c0_153, %c0_154] : memref<2x1x128xf32, #tpu.memory_space<vmem>>, vector<1x1x128xf32>
    %396 = vector.shape_cast %395 : vector<1x1x128xf32> to vector<1x128xf32>
    %cst_155 = arith.constant dense<0.000000e+00> : vector<64xf32>
    %397 = vector.multi_reduction <add>, %392, %cst_155 [1] : vector<64x128xf32> to vector<64xf32>
    %398 = vector.shape_cast %397 : vector<64xf32> to vector<64x1xf32>
    %cst_156 = arith.constant 1.280000e+02 : f32
    %399 = vector.broadcast %cst_156 : f32 to vector<64x1xf32>
    %400 = arith.divf %398, %399 : vector<64x1xf32>
    %401 = vector.broadcast %400 : vector<64x1xf32> to vector<64x128xf32>
    %402 = arith.subf %392, %401 : vector<64x128xf32>
    %403 = arith.mulf %402, %402 : vector<64x128xf32>
    %cst_157 = arith.constant dense<0.000000e+00> : vector<64xf32>
    %404 = vector.multi_reduction <add>, %403, %cst_157 [1] : vector<64x128xf32> to vector<64xf32>
    %405 = vector.shape_cast %404 : vector<64xf32> to vector<64x1xf32>
    %cst_158 = arith.constant 1.280000e+02 : f32
    %406 = vector.broadcast %cst_158 : f32 to vector<64x1xf32>
    %407 = arith.divf %405, %406 : vector<64x1xf32>
    %cst_159 = arith.constant 9.99999996E-13 : f32
    %408 = vector.broadcast %cst_159 : f32 to vector<64x1xf32>
    %409 = arith.addf %407, %408 : vector<64x1xf32>
    %410 = math.rsqrt %409 : vector<64x1xf32>
    %411 = vector.broadcast %410 : vector<64x1xf32> to vector<64x128xf32>
    %412 = arith.mulf %402, %411 : vector<64x128xf32>
    %413 = vector.broadcast %394 : vector<1x128xf32> to vector<64x128xf32>
    %414 = arith.mulf %412, %413 : vector<64x128xf32>
    %415 = vector.broadcast %396 : vector<1x128xf32> to vector<64x128xf32>
    %416 = arith.addf %414, %415 : vector<64x128xf32>
    %417 = vector.shape_cast %416 : vector<64x128xf32> to vector<4x16x128xf32>
    %418 = vector.extract_strided_slice %417 {offsets = [0, 0, 0], sizes = [4, 1, 128], strides = [1, 1, 1]} : vector<4x16x128xf32> to vector<4x1x128xf32>
    %419 = vector.shape_cast %418 : vector<4x1x128xf32> to vector<4x128xf32>
    %c0_160 = arith.constant 0 : index
    %c0_161 = arith.constant 0 : index
    %420 = vector.load %arg17[%c0_160, %c0_161] : memref<128x128xbf16, #tpu.memory_space<vmem>>, vector<128x128xbf16>
    %421 = arith.truncf %419 : vector<4x128xf32> to vector<4x128xbf16>
    %cst_162 = arith.constant dense<0.000000e+00> : vector<4x128xf32>
    %422 = tpu.matmul %421, %420, %cst_162 {dimension_numbers = #tpu.dot_dimension_numbers<[1], [0], [0], [1], [0, 0, 1, 1], [], []>} : vector<4x128xbf16>, vector<128x128xbf16>, vector<4x128xf32> -> vector<4x128xf32>
    %c0_163 = arith.constant 0 : index
    %c0_164 = arith.constant 0 : index
    %423 = vector.load %arg18[%c0_163, %c0_164] : memref<1x128xf32, #tpu.memory_space<vmem>>, vector<1x128xf32>
    %424 = vector.broadcast %423 : vector<1x128xf32> to vector<4x128xf32>
    %425 = arith.addf %422, %424 : vector<4x128xf32>
    %426 = math.tanh %425 : vector<4x128xf32>
    %c0_165 = arith.constant 0 : index
    %c0_166 = arith.constant 0 : index
    %427 = vector.load %arg19[%c0_165, %c0_166] : memref<128x128xbf16, #tpu.memory_space<vmem>>, vector<128x128xbf16>
    %428 = arith.truncf %426 : vector<4x128xf32> to vector<4x128xbf16>
    %cst_167 = arith.constant dense<0.000000e+00> : vector<4x128xf32>
    %429 = tpu.matmul %428, %427, %cst_167 {dimension_numbers = #tpu.dot_dimension_numbers<[1], [0], [0], [1], [0, 0, 1, 1], [], []>} : vector<4x128xbf16>, vector<128x128xbf16>, vector<4x128xf32> -> vector<4x128xf32>
    %c0_168 = arith.constant 0 : index
    %c0_169 = arith.constant 0 : index
    %430 = vector.load %arg20[%c0_168, %c0_169] : memref<1x128xf32, #tpu.memory_space<vmem>>, vector<1x128xf32>
    %431 = vector.broadcast %430 : vector<1x128xf32> to vector<4x128xf32>
    %432 = arith.addf %429, %431 : vector<4x128xf32>
    %433 = math.tanh %432 : vector<4x128xf32>
    %c0_170 = arith.constant 0 : index
    %c0_171 = arith.constant 0 : index
    %434 = vector.load %arg21[%c0_170, %c0_171] : memref<128x128xbf16, #tpu.memory_space<vmem>>, vector<128x128xbf16>
    %435 = arith.truncf %433 : vector<4x128xf32> to vector<4x128xbf16>
    %cst_172 = arith.constant dense<0.000000e+00> : vector<4x128xf32>
    %436 = tpu.matmul %435, %434, %cst_172 {dimension_numbers = #tpu.dot_dimension_numbers<[1], [0], [0], [1], [0, 0, 1, 1], [], []>} : vector<4x128xbf16>, vector<128x128xbf16>, vector<4x128xf32> -> vector<4x128xf32>
    %c0_173 = arith.constant 0 : index
    %c0_174 = arith.constant 0 : index
    %437 = vector.load %arg22[%c0_173, %c0_174] : memref<1x128xf32, #tpu.memory_space<vmem>>, vector<1x128xf32>
    %438 = vector.broadcast %437 : vector<1x128xf32> to vector<4x128xf32>
    %439 = arith.addf %436, %438 : vector<4x128xf32>
    %c0_175 = arith.constant 0 : index
    %c0_176 = arith.constant 0 : index
    %c0_177 = arith.constant 0 : index
    %440 = vector.load %arg23[%c0_175, %c0_176, %c0_177] : memref<1x4x128xf32, #tpu.memory_space<vmem>>, vector<1x4x128xf32>
    %441 = vector.shape_cast %440 : vector<1x4x128xf32> to vector<4x128xf32>
    %442 = vector.shape_cast %439 : vector<4x128xf32> to vector<1x4x128xf32>
    tpu.vector_store %arg23[%c0_175, %c0_176, %c0_177], %442 {strides = array<i32>} : memref<1x4x128xf32, #tpu.memory_space<vmem>>, vector<1x4x128xf32>,
    return
  }
  func.func @transform_0(%arg0: i32) -> (i32, i32, i32) {
    %c0_i32 = arith.constant 0 : i32
    %c0_i32_0 = arith.constant 0 : i32
    %c0_i32_1 = arith.constant 0 : i32
    return %arg0, %c0_i32, %c0_i32_0 : i32, i32, i32
  }
  func.func @transform_1(%arg0: i32) -> (i32, i32, i32) {
    %c0_i32 = arith.constant 0 : i32
    %c0_i32_0 = arith.constant 0 : i32
    %c0_i32_1 = arith.constant 0 : i32
    return %arg0, %c0_i32, %c0_i32_0 : i32, i32, i32
  }
  func.func @transform_2(%arg0: i32) -> (i32, i32) {
    %c0_i32 = arith.constant 0 : i32
    %c0_i32_0 = arith.constant 0 : i32
    %c0_i32_1 = arith.constant 0 : i32
    return %c0_i32, %c0_i32_0 : i32, i32
  }
  func.func @transform_3(%arg0: i32) -> (i32, i32) {
    %c0_i32 = arith.constant 0 : i32
    %c0_i32_0 = arith.constant 0 : i32
    %c0_i32_1 = arith.constant 0 : i32
    return %c0_i32, %c0_i32_0 : i32, i32
  }
  func.func @transform_4(%arg0: i32) -> (i32, i32, i32) {
    %c0_i32 = arith.constant 0 : i32
    %c0_i32_0 = arith.constant 0 : i32
    %c0_i32_1 = arith.constant 0 : i32
    %c0_i32_2 = arith.constant 0 : i32
    return %c0_i32, %c0_i32_0, %c0_i32_1 : i32, i32, i32
  }
  func.func @transform_5(%arg0: i32) -> (i32, i32, i32) {
    %c0_i32 = arith.constant 0 : i32
    %c0_i32_0 = arith.constant 0 : i32
    %c0_i32_1 = arith.constant 0 : i32
    %c0_i32_2 = arith.constant 0 : i32
    return %c0_i32, %c0_i32_0, %c0_i32_1 : i32, i32, i32
  }
  func.func @transform_6(%arg0: i32) -> (i32, i32, i32) {
    %c0_i32 = arith.constant 0 : i32
    %c0_i32_0 = arith.constant 0 : i32
    %c0_i32_1 = arith.constant 0 : i32
    %c0_i32_2 = arith.constant 0 : i32
    return %c0_i32, %c0_i32_0, %c0_i32_1 : i32, i32, i32
  }
  func.func @transform_7(%arg0: i32) -> (i32, i32, i32) {
    %c0_i32 = arith.constant 0 : i32
    %c0_i32_0 = arith.constant 0 : i32
    %c0_i32_1 = arith.constant 0 : i32
    %c0_i32_2 = arith.constant 0 : i32
    return %c0_i32, %c0_i32_0, %c0_i32_1 : i32, i32, i32
  }
  func.func @transform_8(%arg0: i32) -> (i32, i32, i32) {
    %c0_i32 = arith.constant 0 : i32
    %c0_i32_0 = arith.constant 0 : i32
    %c0_i32_1 = arith.constant 0 : i32
    %c0_i32_2 = arith.constant 0 : i32
    return %c0_i32, %c0_i32_0, %c0_i32_1 : i32, i32, i32
  }
  func.func @transform_9(%arg0: i32) -> (i32, i32, i32) {
    %c0_i32 = arith.constant 0 : i32
    %c0_i32_0 = arith.constant 0 : i32
    %c0_i32_1 = arith.constant 0 : i32
    %c0_i32_2 = arith.constant 0 : i32
    return %c0_i32, %c0_i32_0, %c0_i32_1 : i32, i32, i32
  }
  func.func @transform_10(%arg0: i32) -> (i32, i32, i32) {
    %c0_i32 = arith.constant 0 : i32
    %c0_i32_0 = arith.constant 0 : i32
    %c0_i32_1 = arith.constant 0 : i32
    %c0_i32_2 = arith.constant 0 : i32
    return %c0_i32, %c0_i32_0, %c0_i32_1 : i32, i32, i32
  }
  func.func @transform_11(%arg0: i32) -> (i32, i32, i32) {
    %c0_i32 = arith.constant 0 : i32
    %c0_i32_0 = arith.constant 0 : i32
    %c0_i32_1 = arith.constant 0 : i32
    %c0_i32_2 = arith.constant 0 : i32
    return %c0_i32, %c0_i32_0, %c0_i32_1 : i32, i32, i32
  }
  func.func @transform_12(%arg0: i32) -> (i32, i32, i32) {
    %c0_i32 = arith.constant 0 : i32
    %c0_i32_0 = arith.constant 0 : i32
    %c0_i32_1 = arith.constant 0 : i32
    %c0_i32_2 = arith.constant 0 : i32
    return %c0_i32, %c0_i32_0, %c0_i32_1 : i32, i32, i32
  }
  func.func @transform_13(%arg0: i32) -> (i32, i32, i32) {
    %c0_i32 = arith.constant 0 : i32
    %c0_i32_0 = arith.constant 0 : i32
    %c0_i32_1 = arith.constant 0 : i32
    %c0_i32_2 = arith.constant 0 : i32
    return %c0_i32, %c0_i32_0, %c0_i32_1 : i32, i32, i32
  }
  func.func @transform_14(%arg0: i32) -> (i32, i32, i32) {
    %c0_i32 = arith.constant 0 : i32
    %c0_i32_0 = arith.constant 0 : i32
    %c0_i32_1 = arith.constant 0 : i32
    %c0_i32_2 = arith.constant 0 : i32
    return %c0_i32, %c0_i32_0, %c0_i32_1 : i32, i32, i32
  }
  func.func @transform_15(%arg0: i32) -> (i32, i32, i32) {
    %c0_i32 = arith.constant 0 : i32
    %c0_i32_0 = arith.constant 0 : i32
    %c0_i32_1 = arith.constant 0 : i32
    %c0_i32_2 = arith.constant 0 : i32
    return %c0_i32, %c0_i32_0, %c0_i32_1 : i32, i32, i32
  }
  func.func @transform_16(%arg0: i32) -> (i32, i32) {
    %c0_i32 = arith.constant 0 : i32
    %c0_i32_0 = arith.constant 0 : i32
    %c0_i32_1 = arith.constant 0 : i32
    return %c0_i32, %c0_i32_0 : i32, i32
  }
  func.func @transform_17(%arg0: i32) -> (i32, i32) {
    %c0_i32 = arith.constant 0 : i32
    %c0_i32_0 = arith.constant 0 : i32
    %c0_i32_1 = arith.constant 0 : i32
    return %c0_i32, %c0_i32_0 : i32, i32
  }
  func.func @transform_18(%arg0: i32) -> (i32, i32) {
    %c0_i32 = arith.constant 0 : i32
    %c0_i32_0 = arith.constant 0 : i32
    %c0_i32_1 = arith.constant 0 : i32
    return %c0_i32, %c0_i32_0 : i32, i32
  }
  func.func @transform_19(%arg0: i32) -> (i32, i32) {
    %c0_i32 = arith.constant 0 : i32
    %c0_i32_0 = arith.constant 0 : i32
    %c0_i32_1 = arith.constant 0 : i32
    return %c0_i32, %c0_i32_0 : i32, i32
  }
  func.func @transform_20(%arg0: i32) -> (i32, i32) {
    %c0_i32 = arith.constant 0 : i32
    %c0_i32_0 = arith.constant 0 : i32
    %c0_i32_1 = arith.constant 0 : i32
    return %c0_i32, %c0_i32_0 : i32, i32
  }
  func.func @transform_21(%arg0: i32) -> (i32, i32) {
    %c0_i32 = arith.constant 0 : i32
    %c0_i32_0 = arith.constant 0 : i32
    %c0_i32_1 = arith.constant 0 : i32
    return %c0_i32, %c0_i32_0 : i32, i32
  }
  func.func @transform_22(%arg0: i32) -> (i32, i32, i32) {
    %c0_i32 = arith.constant 0 : i32
    %c0_i32_0 = arith.constant 0 : i32
    %c0_i32_1 = arith.constant 0 : i32
    return %arg0, %c0_i32, %c0_i32_0 : i32, i32, i32
  }
}

</mosaic_0001>

<llo_original>
// kernel: bert_classifier_forward.1
$region0: #{bert_classifier_forward.1}
  #allocation0 [shape = 'u32[]', space=smem, size = 0x4, offset = 0x4, fixed_abs, tag = 'smem constant byte address 0x4 - core index']
  #allocation1 [shape = 'u32[72,128]{1,0:T(1,128)}', space=vmem, size = 0x9000, scoped, tag = 'internal scratch']
  %s0 = inlined_call_operand.vmem [shape: f32[8,16,128], index: 0, kind: input, shape index: {}]
  %s1 = inlined_call_operand.vmem [shape: f32[8,1,16], index: 1, kind: input, shape index: {}]
  %s2 = inlined_call_operand.vmem [shape: f32[1,128], index: 2, kind: input, shape index: {}]
  %s3 = inlined_call_operand.vmem [shape: f32[1,128], index: 3, kind: input, shape index: {}]
  %s4 = inlined_call_operand.vmem [shape: bf16[2,128,384], index: 4, kind: input, shape index: {}]
  %s5 = inlined_call_operand.vmem [shape: f32[2,1,384], index: 5, kind: input, shape index: {}]
  %s6 = inlined_call_operand.vmem [shape: bf16[2,128,128], index: 6, kind: input, shape index: {}]
  %s7 = inlined_call_operand.vmem [shape: f32[2,1,128], index: 7, kind: input, shape index: {}]
  %s8 = inlined_call_operand.vmem [shape: f32[2,1,128], index: 8, kind: input, shape index: {}]
  %s9 = inlined_call_operand.vmem [shape: f32[2,1,128], index: 9, kind: input, shape index: {}]
  %s10 = inlined_call_operand.vmem [shape: bf16[2,128,512], index: 10, kind: input, shape index: {}]
  %s11 = inlined_call_operand.vmem [shape: f32[2,1,512], index: 11, kind: input, shape index: {}]
  %s12 = inlined_call_operand.vmem [shape: bf16[2,512,128], index: 12, kind: input, shape index: {}]
  %s13 = inlined_call_operand.vmem [shape: f32[2,1,128], index: 13, kind: input, shape index: {}]
  %s14 = inlined_call_operand.vmem [shape: f32[2,1,128], index: 14, kind: input, shape index: {}]
  %s15 = inlined_call_operand.vmem [shape: f32[2,1,128], index: 15, kind: input, shape index: {}]
  %s16 = inlined_call_operand.hbm [shape: bf16[128,128], index: 16, kind: input, shape index: {}]
  %s17 = inlined_call_operand.vmem [shape: f32[1,128], index: 17, kind: input, shape index: {}]
  %s18 = inlined_call_operand.hbm [shape: bf16[128,128], index: 18, kind: input, shape index: {}]
  %s19 = inlined_call_operand.vmem [shape: f32[1,128], index: 19, kind: input, shape index: {}]
  %s20 = inlined_call_operand.hbm [shape: bf16[128,128], index: 20, kind: input, shape index: {}]
  %s21 = inlined_call_operand.vmem [shape: f32[1,128], index: 21, kind: input, shape index: {}]
  %s22 = inlined_call_operand.hbm [shape: f32[2,4,128], index: 22, kind: output, shape index: {}]
  %s23 = sld [smem:[#allocation0]]
  $region133: #{bert_classifier_forward.1} parent=0
    _
  %s25 = ssub.s32 1, %s23
  %s26 = scalar_select 0, %s25, %s23
  $region1: #{bert_classifier_forward.1} parent=0
    #allocation2 [shape = 'u8[32768]{0}', space=vmem, size = 0x8000, scoped, tag = 'input window, operand 16, single buffered']
    #allocation3 [shape = 's32[2]{0}', space=sflag, size = 0x8, scoped, tag = 'scoped memory for bert_classifier_forward.1']
    #allocation4 [shape = 's32[2]{0}', space=sflag, size = 0x8, scoped, tag = 'scoped memory for bert_classifier_forward.1']
    #allocation5 [shape = 'u8[32768]{0}', space=vmem, size = 0x8000, scoped, tag = 'input window, operand 18, single buffered']
    #allocation6 [shape = 's32[1]{0}', space=sflag, size = 0x4, scoped, tag = 'scoped memory for bert_classifier_forward.1']
    #allocation7 [shape = 'u8[32768]{0}', space=vmem, size = 0x8000, scoped, tag = 'input window, operand 20, single buffered']
    #allocation8 [shape = 'u8[4096]{0}', space=vmem, size = 0x1000, scoped, tag = 'output window, operand 0']
    %27 = vsyncpa [#allocation3], 0
    %28 = vsyncpa [#allocation6], 0
    %29 = vsyncpa [#allocation4], 0
    %s30 = scalar_lea.sflag [#allocation4], 1
    %31 = vsyncpa %s30, 0
    loop: start=0, step=1, limit=4
    $region2: #{bert_classifier_forward.1} parent=1 // loop_pre_header
      _
    $region3: #{bert_classifier_forward.1} parent=1 // loop_header
      %s33 = sphi 0, %s37
      %p34 = scmp.ge.s32.totalorder %s33, 4
      %s43 = sphi 0, %s45
      %s46 = sphi 0, %s43
      %s47 = sphi 0, %s46
      %s63 = sphi 0, %s47
      %s69 = sphi 0, %s71
      %s72 = sphi 0, %s69
      %s73 = sphi 0, %s72
      %s89 = sphi 0, %s73
      %s93 = sphi 0, %s93
      %s95 = sphi 0, %s93
      %s96 = sphi 0, %s95
      %s110 = sphi 0, %s96
      %s114 = sphi 0, %s114
      %s116 = sphi 0, %s114
      %s117 = sphi 0, %s116
      %s131 = sphi 0, %s117
      %s135 = sphi 0, %s135
      %s137 = sphi 0, %s135
      %s138 = sphi 0, %s137
      %s152 = sphi 0, %s138
      %s156 = sphi 0, %s156
      %s158 = sphi 0, %s156
      %s159 = sphi 0, %s158
      %s173 = sphi 0, %s159
      %s177 = sphi 0, %s177
      %s179 = sphi 0, %s177
      %s180 = sphi 0, %s179
      %s194 = sphi 0, %s180
      %s198 = sphi 0, %s198
      %s200 = sphi 0, %s198
      %s201 = sphi 0, %s200
      %s215 = sphi 0, %s201
      %s219 = sphi 0, %s219
      %s221 = sphi 0, %s219
      %s222 = sphi 0, %s221
      %s236 = sphi 0, %s222
      %s240 = sphi 0, %s240
      %s242 = sphi 0, %s240
      %s243 = sphi 0, %s242
      %s257 = sphi 0, %s243
      %s261 = sphi 0, %s261
      %s263 = sphi 0, %s261
      %s264 = sphi 0, %s263
      %s278 = sphi 0, %s264
      %s282 = sphi 0, %s282
      %s284 = sphi 0, %s282
      %s285 = sphi 0, %s284
      %s299 = sphi 0, %s285
      %s303 = sphi 0, %s303
      %s305 = sphi 0, %s303
      %s306 = sphi 0, %s305
      %s320 = sphi 0, %s306
      %s324 = sphi 0, %s324
      %s326 = sphi 0, %s324
      %s327 = sphi 0, %s326
      %s341 = sphi 0, %s327
      %s345 = sphi 0, %s345
      %s347 = sphi 0, %s345
      %s348 = sphi 0, %s347
      %s362 = sphi 0, %s348
      %s366 = sphi 0, %s366
      %s368 = sphi 0, %s366
      %s369 = sphi 0, %s368
      %s383 = sphi 0, %s369
      %s387 = sphi 0, %s387
      %s389 = sphi 0, %s387
      %s390 = sphi 0, %s389
      %s404 = sphi 0, %s390
      %s408 = sphi 0, %s408
      %s410 = sphi 0, %s408
      %s411 = sphi 0, %s410
      %s425 = sphi 0, %s411
      %s429 = sphi 0, %s429
      %s431 = sphi 0, %s429
      %s432 = sphi 0, %s431
      %s446 = sphi 0, %s432
      %s450 = sphi 0, %s450
      %s452 = sphi 0, %s450
      %s453 = sphi 0, %s452
      %s467 = sphi 0, %s453
      %s471 = sphi 0, %s471
      %s473 = sphi 0, %s471
      %s474 = sphi 0, %s473
      %s488 = sphi 0, %s474
      %s492 = sphi 0, %s492
      %s494 = sphi 0, %s492
      %s495 = sphi 0, %s494
      %s509 = sphi 0, %s495
      %s515 = sphi 0, %s517
      %s518 = sphi 0, %s515
      %s519 = sphi 0, %s518
      %s535 = sphi 0, %s519
    $region4: #{bert_classifier_forward.1} parent=1 // loop_header_branch
      %36 = sbr.rel (%p34) target = $region8
    $region5: #{bert_classifier_forward.1} parent=1 // loop_body
      %s38 = ssub.s32 %s33, 1
      %s39 = ssub.s32 %s33, 2
      %s40 = sadd.s32 %s33, 1
      %s41 = ssub.s32 %s33, %s40
      %p42 = scmp.eq.s32.totalorder %s41, 0
      %s44 = sadd.s32 %s43, 1
      %s45 = scalar_select %p42, %s43, %s44
      %p48 = pneg %p42
      %p49 = scmp.eq.s32.totalorder %s33, 1
      %p50 = por %p48, %p49
      %p51 = scmp.ne.s32.totalorder %s43, %s46
      %p52 = scmp.eq.s32.totalorder %s33, 0
      %p53 = por %p51, %p52
      %p54 = scmp.ne.s32.totalorder %s43, %s46
      %p55 = scmp.eq.s32.totalorder %s38, 1
      %p56 = por %p54, %p55
      %p57 = scmp.ne.s32.totalorder %s46, %s47
      %p58 = scmp.eq.s32.totalorder %s38, 0
      %p59 = por %p57, %p58
      %p60 = scmp.ne.s32.totalorder %s46, %s47
      %p61 = scmp.eq.s32.totalorder %s39, 1
      %p62 = por %p60, %p61
      %p64 = scmp.ne.s32.totalorder %s47, %s63
      %p65 = scmp.eq.s32.totalorder %s39, 0
      %p66 = por %p64, %p65
      %s67 = ssub.s32 %s33, %s40
      %p68 = scmp.eq.s32.totalorder %s67, 0
      %s70 = sadd.s32 %s69, 1
      %s71 = scalar_select %p68, %s69, %s70
      %p74 = pneg %p68
      %p75 = scmp.eq.s32.totalorder %s33, 1
      %p76 = por %p74, %p75
      %p77 = scmp.ne.s32.totalorder %s69, %s72
      %p78 = scmp.eq.s32.totalorder %s33, 0
      %p79 = por %p77, %p78
      %p80 = scmp.ne.s32.totalorder %s69, %s72
      %p81 = scmp.eq.s32.totalorder %s38, 1
      %p82 = por %p80, %p81
      %p83 = scmp.ne.s32.totalorder %s72, %s73
      %p84 = scmp.eq.s32.totalorder %s38, 0
      %p85 = por %p83, %p84
      %p86 = scmp.ne.s32.totalorder %s72, %s73
      %p87 = scmp.eq.s32.totalorder %s39, 1
      %p88 = por %p86, %p87
      %p90 = scmp.ne.s32.totalorder %s73, %s89
      %p91 = scmp.eq.s32.totalorder %s39, 0
      %p92 = por %p90, %p91
      %s94 = sadd.s32 %s93, 1
      %p97 = scmp.eq.s32.totalorder %s33, 1
      %p98 = scmp.ne.s32.totalorder %s93, %s95
      %p99 = scmp.eq.s32.totalorder %s33, 0
      %p100 = por %p98, %p99
      %p101 = scmp.ne.s32.totalorder %s93, %s95
      %p102 = scmp.eq.s32.totalorder %s38, 1
      %p103 = por %p101, %p102
      %p104 = scmp.ne.s32.totalorder %s95, %s96
      %p105 = scmp.eq.s32.totalorder %s38, 0
      %p106 = por %p104, %p105
      %p107 = scmp.ne.s32.totalorder %s95, %s96
      %p108 = scmp.eq.s32.totalorder %s39, 1
      %p109 = por %p107, %p108
      %p111 = scmp.ne.s32.totalorder %s96, %s110
      %p112 = scmp.eq.s32.totalorder %s39, 0
      %p113 = por %p111, %p112
      %s115 = sadd.s32 %s114, 1
      %p118 = scmp.eq.s32.totalorder %s33, 1
      %p119 = scmp.ne.s32.totalorder %s114, %s116
      %p120 = scmp.eq.s32.totalorder %s33, 0
      %p121 = por %p119, %p120
      %p122 = scmp.ne.s32.totalorder %s114, %s116
      %p123 = scmp.eq.s32.totalorder %s38, 1
      %p124 = por %p122, %p123
      %p125 = scmp.ne.s32.totalorder %s116, %s117
      %p126 = scmp.eq.s32.totalorder %s38, 0
      %p127 = por %p125, %p126
      %p128 = scmp.ne.s32.totalorder %s116, %s117
      %p129 = scmp.eq.s32.totalorder %s39, 1
      %p130 = por %p128, %p129
      %p132 = scmp.ne.s32.totalorder %s117, %s131
      %p133 = scmp.eq.s32.totalorder %s39, 0
      %p134 = por %p132, %p133
      %s136 = sadd.s32 %s135, 1
      %p139 = scmp.eq.s32.totalorder %s33, 1
      %p140 = scmp.ne.s32.totalorder %s135, %s137
      %p141 = scmp.eq.s32.totalorder %s33, 0
      %p142 = por %p140, %p141
      %p143 = scmp.ne.s32.totalorder %s135, %s137
      %p144 = scmp.eq.s32.totalorder %s38, 1
      %p145 = por %p143, %p144
      %p146 = scmp.ne.s32.totalorder %s137, %s138
      %p147 = scmp.eq.s32.totalorder %s38, 0
      %p148 = por %p146, %p147
      %p149 = scmp.ne.s32.totalorder %s137, %s138
      %p150 = scmp.eq.s32.totalorder %s39, 1
      %p151 = por %p149, %p150
      %p153 = scmp.ne.s32.totalorder %s138, %s152
      %p154 = scmp.eq.s32.totalorder %s39, 0
      %p155 = por %p153, %p154
      %s157 = sadd.s32 %s156, 1
      %p160 = scmp.eq.s32.totalorder %s33, 1
      %p161 = scmp.ne.s32.totalorder %s156, %s158
      %p162 = scmp.eq.s32.totalorder %s33, 0
      %p163 = por %p161, %p162
      %p164 = scmp.ne.s32.totalorder %s156, %s158
      %p165 = scmp.eq.s32.totalorder %s38, 1
      %p166 = por %p164, %p165
      %p167 = scmp.ne.s32.totalorder %s158, %s159
      %p168 = scmp.eq.s32.totalorder %s38, 0
      %p169 = por %p167, %p168
      %p170 = scmp.ne.s32.totalorder %s158, %s159
      %p171 = scmp.eq.s32.totalorder %s39, 1
      %p172 = por %p170, %p171
      %p174 = scmp.ne.s32.totalorder %s159, %s173
      %p175 = scmp.eq.s32.totalorder %s39, 0
      %p176 = por %p174, %p175
      %s178 = sadd.s32 %s177, 1
      %p181 = scmp.eq.s32.totalorder %s33, 1
      %p182 = scmp.ne.s32.totalorder %s177, %s179
      %p183 = scmp.eq.s32.totalorder %s33, 0
      %p184 = por %p182, %p183
      %p185 = scmp.ne.s32.totalorder %s177, %s179
      %p186 = scmp.eq.s32.totalorder %s38, 1
      %p187 = por %p185, %p186
      %p188 = scmp.ne.s32.totalorder %s179, %s180
      %p189 = scmp.eq.s32.totalorder %s38, 0
      %p190 = por %p188, %p189
      %p191 = scmp.ne.s32.totalorder %s179, %s180
      %p192 = scmp.eq.s32.totalorder %s39, 1
      %p193 = por %p191, %p192
      %p195 = scmp.ne.s32.totalorder %s180, %s194
      %p196 = scmp.eq.s32.totalorder %s39, 0
      %p197 = por %p195, %p196
      %s199 = sadd.s32 %s198, 1
      %p202 = scmp.eq.s32.totalorder %s33, 1
      %p203 = scmp.ne.s32.totalorder %s198, %s200
      %p204 = scmp.eq.s32.totalorder %s33, 0
      %p205 = por %p203, %p204
      %p206 = scmp.ne.s32.totalorder %s198, %s200
      %p207 = scmp.eq.s32.totalorder %s38, 1
      %p208 = por %p206, %p207
      %p209 = scmp.ne.s32.totalorder %s200, %s201
      %p210 = scmp.eq.s32.totalorder %s38, 0
      %p211 = por %p209, %p210
      %p212 = scmp.ne.s32.totalorder %s200, %s201
      %p213 = scmp.eq.s32.totalorder %s39, 1
      %p214 = por %p212, %p213
      %p216 = scmp.ne.s32.totalorder %s201, %s215
      %p217 = scmp.eq.s32.totalorder %s39, 0
      %p218 = por %p216, %p217
      %s220 = sadd.s32 %s219, 1
      %p223 = scmp.eq.s32.totalorder %s33, 1
      %p224 = scmp.ne.s32.totalorder %s219, %s221
      %p225 = scmp.eq.s32.totalorder %s33, 0
      %p226 = por %p224, %p225
      %p227 = scmp.ne.s32.totalorder %s219, %s221
      %p228 = scmp.eq.s32.totalorder %s38, 1
      %p229 = por %p227, %p228
      %p230 = scmp.ne.s32.totalorder %s221, %s222
      %p231 = scmp.eq.s32.totalorder %s38, 0
      %p232 = por %p230, %p231
      %p233 = scmp.ne.s32.totalorder %s221, %s222
      %p234 = scmp.eq.s32.totalorder %s39, 1
      %p235 = por %p233, %p234
      %p237 = scmp.ne.s32.totalorder %s222, %s236
      %p238 = scmp.eq.s32.totalorder %s39, 0
      %p239 = por %p237, %p238
      %s241 = sadd.s32 %s240, 1
      %p244 = scmp.eq.s32.totalorder %s33, 1
      %p245 = scmp.ne.s32.totalorder %s240, %s242
      %p246 = scmp.eq.s32.totalorder %s33, 0
      %p247 = por %p245, %p246
      %p248 = scmp.ne.s32.totalorder %s240, %s242
      %p249 = scmp.eq.s32.totalorder %s38, 1
      %p250 = por %p248, %p249
      %p251 = scmp.ne.s32.totalorder %s242, %s243
      %p252 = scmp.eq.s32.totalorder %s38, 0
      %p253 = por %p251, %p252
      %p254 = scmp.ne.s32.totalorder %s242, %s243
      %p255 = scmp.eq.s32.totalorder %s39, 1
      %p256 = por %p254, %p255
      %p258 = scmp.ne.s32.totalorder %s243, %s257
      %p259 = scmp.eq.s32.totalorder %s39, 0
      %p260 = por %p258, %p259
      %s262 = sadd.s32 %s261, 1
      %p265 = scmp.eq.s32.totalorder %s33, 1
      %p266 = scmp.ne.s32.totalorder %s261, %s263
      %p267 = scmp.eq.s32.totalorder %s33, 0
      %p268 = por %p266, %p267
      %p269 = scmp.ne.s32.totalorder %s261, %s263
      %p270 = scmp.eq.s32.totalorder %s38, 1
      %p271 = por %p269, %p270
      %p272 = scmp.ne.s32.totalorder %s263, %s264
      %p273 = scmp.eq.s32.totalorder %s38, 0
      %p274 = por %p272, %p273
      %p275 = scmp.ne.s32.totalorder %s263, %s264
      %p276 = scmp.eq.s32.totalorder %s39, 1
      %p277 = por %p275, %p276
      %p279 = scmp.ne.s32.totalorder %s264, %s278
      %p280 = scmp.eq.s32.totalorder %s39, 0
      %p281 = por %p279, %p280
      %s283 = sadd.s32 %s282, 1
      %p286 = scmp.eq.s32.totalorder %s33, 1
      %p287 = scmp.ne.s32.totalorder %s282, %s284
      %p288 = scmp.eq.s32.totalorder %s33, 0
      %p289 = por %p287, %p288
      %p290 = scmp.ne.s32.totalorder %s282, %s284
      %p291 = scmp.eq.s32.totalorder %s38, 1
      %p292 = por %p290, %p291
      %p293 = scmp.ne.s32.totalorder %s284, %s285
      %p294 = scmp.eq.s32.totalorder %s38, 0
      %p295 = por %p293, %p294
      %p296 = scmp.ne.s32.totalorder %s284, %s285
      %p297 = scmp.eq.s32.totalorder %s39, 1
      %p298 = por %p296, %p297
      %p300 = scmp.ne.s32.totalorder %s285, %s299
      %p301 = scmp.eq.s32.totalorder %s39, 0
      %p302 = por %p300, %p301
      %s304 = sadd.s32 %s303, 1
      %p307 = scmp.eq.s32.totalorder %s33, 1
      %p308 = scmp.ne.s32.totalorder %s303, %s305
      %p309 = scmp.eq.s32.totalorder %s33, 0
      %p310 = por %p308, %p309
      %p311 = scmp.ne.s32.totalorder %s303, %s305
      %p312 = scmp.eq.s32.totalorder %s38, 1
      %p313 = por %p311, %p312
      %p314 = scmp.ne.s32.totalorder %s305, %s306
      %p315 = scmp.eq.s32.totalorder %s38, 0
      %p316 = por %p314, %p315
      %p317 = scmp.ne.s32.totalorder %s305, %s306
      %p318 = scmp.eq.s32.totalorder %s39, 1
      %p319 = por %p317, %p318
      %p321 = scmp.ne.s32.totalorder %s306, %s320
      %p322 = scmp.eq.s32.totalorder %s39, 0
      %p323 = por %p321, %p322
      %s325 = sadd.s32 %s324, 1
      %p328 = scmp.eq.s32.totalorder %s33, 1
      %p329 = scmp.ne.s32.totalorder %s324, %s326
      %p330 = scmp.eq.s32.totalorder %s33, 0
      %p331 = por %p329, %p330
      %p332 = scmp.ne.s32.totalorder %s324, %s326
      %p333 = scmp.eq.s32.totalorder %s38, 1
      %p334 = por %p332, %p333
      %p335 = scmp.ne.s32.totalorder %s326, %s327
      %p336 = scmp.eq.s32.totalorder %s38, 0
      %p337 = por %p335, %p336
      %p338 = scmp.ne.s32.totalorder %s326, %s327
      %p339 = scmp.eq.s32.totalorder %s39, 1
      %p340 = por %p338, %p339
      %p342 = scmp.ne.s32.totalorder %s327, %s341
      %p343 = scmp.eq.s32.totalorder %s39, 0
      %p344 = por %p342, %p343
      %s346 = sadd.s32 %s345, 1
      %p349 = scmp.eq.s32.totalorder %s33, 1
      %p350 = scmp.ne.s32.totalorder %s345, %s347
      %p351 = scmp.eq.s32.totalorder %s33, 0
      %p352 = por %p350, %p351
      %p353 = scmp.ne.s32.totalorder %s345, %s347
      %p354 = scmp.eq.s32.totalorder %s38, 1
      %p355 = por %p353, %p354
      %p356 = scmp.ne.s32.totalorder %s347, %s348
      %p357 = scmp.eq.s32.totalorder %s38, 0
      %p358 = por %p356, %p357
      %p359 = scmp.ne.s32.totalorder %s347, %s348
      %p360 = scmp.eq.s32.totalorder %s39, 1
      %p361 = por %p359, %p360
      %p363 = scmp.ne.s32.totalorder %s348, %s362
      %p364 = scmp.eq.s32.totalorder %s39, 0
      %p365 = por %p363, %p364
      %s367 = sadd.s32 %s366, 1
      %p370 = scmp.eq.s32.totalorder %s33, 1
      %p371 = scmp.ne.s32.totalorder %s366, %s368
      %p372 = scmp.eq.s32.totalorder %s33, 0
      %p373 = por %p371, %p372
      %p374 = scmp.ne.s32.totalorder %s366, %s368
      %p375 = scmp.eq.s32.totalorder %s38, 1
      %p376 = por %p374, %p375
      %p377 = scmp.ne.s32.totalorder %s368, %s369
      %p378 = scmp.eq.s32.totalorder %s38, 0
      %p379 = por %p377, %p378
      %p380 = scmp.ne.s32.totalorder %s368, %s369
      %p381 = scmp.eq.s32.totalorder %s39, 1
      %p382 = por %p380, %p381
      %p384 = scmp.ne.s32.totalorder %s369, %s383
      %p385 = scmp.eq.s32.totalorder %s39, 0
      %p386 = por %p384, %p385
      %s388 = sadd.s32 %s387, 1
      %p391 = scmp.eq.s32.totalorder %s33, 1
      %p392 = scmp.ne.s32.totalorder %s387, %s389
      %p393 = scmp.eq.s32.totalorder %s33, 0
      %p394 = por %p392, %p393
      %p395 = scmp.ne.s32.totalorder %s387, %s389
      %p396 = scmp.eq.s32.totalorder %s38, 1
      %p397 = por %p395, %p396
      %p398 = scmp.ne.s32.totalorder %s389, %s390
      %p399 = scmp.eq.s32.totalorder %s38, 0
      %p400 = por %p398, %p399
      %p401 = scmp.ne.s32.totalorder %s389, %s390
      %p402 = scmp.eq.s32.totalorder %s39, 1
      %p403 = por %p401, %p402
      %p405 = scmp.ne.s32.totalorder %s390, %s404
      %p406 = scmp.eq.s32.totalorder %s39, 0
      %p407 = por %p405, %p406
      %s409 = sadd.s32 %s408, 1
      %p412 = scmp.eq.s32.totalorder %s33, 1
      %p413 = scmp.ne.s32.totalorder %s408, %s410
      %p414 = scmp.eq.s32.totalorder %s33, 0
      %p415 = por %p413, %p414
      %p416 = scmp.ne.s32.totalorder %s408, %s410
      %p417 = scmp.eq.s32.totalorder %s38, 1
      %p418 = por %p416, %p417
      %p419 = scmp.ne.s32.totalorder %s410, %s411
      %p420 = scmp.eq.s32.totalorder %s38, 0
      %p421 = por %p419, %p420
      %p422 = scmp.ne.s32.totalorder %s410, %s411
      %p423 = scmp.eq.s32.totalorder %s39, 1
      %p424 = por %p422, %p423
      %p426 = scmp.ne.s32.totalorder %s411, %s425
      %p427 = scmp.eq.s32.totalorder %s39, 0
      %p428 = por %p426, %p427
      %s430 = sadd.s32 %s429, 1
      %p433 = scmp.eq.s32.totalorder %s33, 1
      %p434 = scmp.ne.s32.totalorder %s429, %s431
      %p435 = scmp.eq.s32.totalorder %s33, 0
      %p436 = por %p434, %p435
      %p437 = scmp.ne.s32.totalorder %s429, %s431
      %p438 = scmp.eq.s32.totalorder %s38, 1
      %p439 = por %p437, %p438
      %p440 = scmp.ne.s32.totalorder %s431, %s432
      %p441 = scmp.eq.s32.totalorder %s38, 0
      %p442 = por %p440, %p441
      %p443 = scmp.ne.s32.totalorder %s431, %s432
      %p444 = scmp.eq.s32.totalorder %s39, 1
      %p445 = por %p443, %p444
      %p447 = scmp.ne.s32.totalorder %s432, %s446
      %p448 = scmp.eq.s32.totalorder %s39, 0
      %p449 = por %p447, %p448
      %s451 = sadd.s32 %s450, 1
      %p454 = scmp.eq.s32.totalorder %s33, 1
      %p455 = scmp.ne.s32.totalorder %s450, %s452
      %p456 = scmp.eq.s32.totalorder %s33, 0
      %p457 = por %p455, %p456
      %p458 = scmp.ne.s32.totalorder %s450, %s452
      %p459 = scmp.eq.s32.totalorder %s38, 1
      %p460 = por %p458, %p459
      %p461 = scmp.ne.s32.totalorder %s452, %s453
      %p462 = scmp.eq.s32.totalorder %s38, 0
      %p463 = por %p461, %p462
      %p464 = scmp.ne.s32.totalorder %s452, %s453
      %p465 = scmp.eq.s32.totalorder %s39, 1
      %p466 = por %p464, %p465
      %p468 = scmp.ne.s32.totalorder %s453, %s467
      %p469 = scmp.eq.s32.totalorder %s39, 0
      %p470 = por %p468, %p469
      %s472 = sadd.s32 %s471, 1
      %p475 = scmp.eq.s32.totalorder %s33, 1
      %p476 = scmp.ne.s32.totalorder %s471, %s473
      %p477 = scmp.eq.s32.totalorder %s33, 0
      %p478 = por %p476, %p477
      %p479 = scmp.ne.s32.totalorder %s471, %s473
      %p480 = scmp.eq.s32.totalorder %s38, 1
      %p481 = por %p479, %p480
      %p482 = scmp.ne.s32.totalorder %s473, %s474
      %p483 = scmp.eq.s32.totalorder %s38, 0
      %p484 = por %p482, %p483
      %p485 = scmp.ne.s32.totalorder %s473, %s474
      %p486 = scmp.eq.s32.totalorder %s39, 1
      %p487 = por %p485, %p486
      %p489 = scmp.ne.s32.totalorder %s474, %s488
      %p490 = scmp.eq.s32.totalorder %s39, 0
      %p491 = por %p489, %p490
      %s493 = sadd.s32 %s492, 1
      %p496 = scmp.eq.s32.totalorder %s33, 1
      %p497 = scmp.ne.s32.totalorder %s492, %s494
      %p498 = scmp.eq.s32.totalorder %s33, 0
      %p499 = por %p497, %p498
      %p500 = scmp.ne.s32.totalorder %s492, %s494
      %p501 = scmp.eq.s32.totalorder %s38, 1
      %p502 = por %p500, %p501
      %p503 = scmp.ne.s32.totalorder %s494, %s495
      %p504 = scmp.eq.s32.totalorder %s38, 0
      %p505 = por %p503, %p504
      %p506 = scmp.ne.s32.totalorder %s494, %s495
      %p507 = scmp.eq.s32.totalorder %s39, 1
      %p508 = por %p506, %p507
      %p510 = scmp.ne.s32.totalorder %s495, %s509
      %p511 = scmp.eq.s32.totalorder %s39, 0
      %p512 = por %p510, %p511
      %s513 = ssub.s32 %s33, %s40
      %p514 = scmp.eq.s32.totalorder %s513, 0
      %s516 = sadd.s32 %s515, 1
      %s517 = scalar_select %p514, %s515, %s516
      %p520 = pneg %p514
      %p521 = scmp.eq.s32.totalorder %s33, 1
      %p522 = por %p520, %p521
      %p523 = scmp.ne.s32.totalorder %s515, %s518
      %p524 = scmp.eq.s32.totalorder %s33, 0
      %p525 = por %p523, %p524
      %p526 = scmp.ne.s32.totalorder %s515, %s518
      %p527 = scmp.eq.s32.totalorder %s38, 1
      %p528 = por %p526, %p527
      %p529 = scmp.ne.s32.totalorder %s518, %s519
      %p530 = scmp.eq.s32.totalorder %s38, 0
      %p531 = por %p529, %p530
      %p532 = scmp.ne.s32.totalorder %s518, %s519
      %p533 = scmp.eq.s32.totalorder %s39, 1
      %p534 = por %p532, %p533
      %p536 = scmp.ne.s32.totalorder %s519, %s535
      %p537 = scmp.eq.s32.totalorder %s39, 0
      %p538 = por %p536, %p537
      %p539 = scmp.le.s32.totalorder 1, %s33
      %p540 = scmp.lt.s32.totalorder %s33, 3
      %p541 = pnand %p539, %p540
      %p542 = pneg %p541
      // Predicated region
      $region9: #{bert_classifier_forward.1} parent=5 // pred_check
        _
      $region10: #{bert_classifier_forward.1} parent=5 // pred_check_branch
        %544 = sbr.rel (%p541) target = $region12
      $region11: #{bert_classifier_forward.1} parent=5 // pred_region
        %s545 = ssub.s32 %s33, 1
        // Predicated region
        $region13: #{bert_classifier_forward.1} parent=11 // pred_check
          %p546 = pneg %p106
        $region14: #{bert_classifier_forward.1} parent=11 // pred_check_branch
          %548 = sbr.rel (%p546) target = $region16
        $region15: #{bert_classifier_forward.1} parent=11 // pred_region
          _
        $region16: #{bert_classifier_forward.1} parent=11 // pred_fallthru
          _
        // Predicated region
        $region17: #{bert_classifier_forward.1} parent=11 // pred_check
          %p549 = pneg %p127
        $region18: #{bert_classifier_forward.1} parent=11 // pred_check_branch
          %551 = sbr.rel (%p549) target = $region20
        $region19: #{bert_classifier_forward.1} parent=11 // pred_region
          _
        $region20: #{bert_classifier_forward.1} parent=11 // pred_fallthru
          _
        // Predicated region
        $region21: #{bert_classifier_forward.1} parent=11 // pred_check
          %p552 = pneg %p148
        $region22: #{bert_classifier_forward.1} parent=11 // pred_check_branch
          %554 = sbr.rel (%p552) target = $region24
        $region23: #{bert_classifier_forward.1} parent=11 // pred_region
          _
        $region24: #{bert_classifier_forward.1} parent=11 // pred_fallthru
          _
        // Predicated region
        $region25: #{bert_classifier_forward.1} parent=11 // pred_check
          %p555 = pneg %p169
        $region26: #{bert_classifier_forward.1} parent=11 // pred_check_branch
          %557 = sbr.rel (%p555) target = $region28
        $region27: #{bert_classifier_forward.1} parent=11 // pred_region
          _
        $region28: #{bert_classifier_forward.1} parent=11 // pred_fallthru
          _
        // Predicated region
        $region29: #{bert_classifier_forward.1} parent=11 // pred_check
          %p558 = pneg %p190
        $region30: #{bert_classifier_forward.1} parent=11 // pred_check_branch
          %560 = sbr.rel (%p558) target = $region32
        $region31: #{bert_classifier_forward.1} parent=11 // pred_region
          _
        $region32: #{bert_classifier_forward.1} parent=11 // pred_fallthru
          _
        // Predicated region
        $region33: #{bert_classifier_forward.1} parent=11 // pred_check
          %p561 = pneg %p211
        $region34: #{bert_classifier_forward.1} parent=11 // pred_check_branch
          %563 = sbr.rel (%p561) target = $region36
        $region35: #{bert_classifier_forward.1} parent=11 // pred_region
          _
        $region36: #{bert_classifier_forward.1} parent=11 // pred_fallthru
          _
        // Predicated region
        $region37: #{bert_classifier_forward.1} parent=11 // pred_check
          %p564 = pneg %p232
        $region38: #{bert_classifier_forward.1} parent=11 // pred_check_branch
          %566 = sbr.rel (%p564) target = $region40
        $region39: #{bert_classifier_forward.1} parent=11 // pred_region
          _
        $region40: #{bert_classifier_forward.1} parent=11 // pred_fallthru
          _
        // Predicated region
        $region41: #{bert_classifier_forward.1} parent=11 // pred_check
          %p567 = pneg %p253
        $region42: #{bert_classifier_forward.1} parent=11 // pred_check_branch
          %569 = sbr.rel (%p567) target = $region44
        $region43: #{bert_classifier_forward.1} parent=11 // pred_region
          _
        $region44: #{bert_classifier_forward.1} parent=11 // pred_fallthru
          _
        // Predicated region
        $region45: #{bert_classifier_forward.1} parent=11 // pred_check
          %p570 = pneg %p274
        $region46: #{bert_classifier_forward.1} parent=11 // pred_check_branch
          %572 = sbr.rel (%p570) target = $region48
        $region47: #{bert_classifier_forward.1} parent=11 // pred_region
          _
        $region48: #{bert_classifier_forward.1} parent=11 // pred_fallthru
          _
        // Predicated region
        $region49: #{bert_classifier_forward.1} parent=11 // pred_check
          %p573 = pneg %p295
        $region50: #{bert_classifier_forward.1} parent=11 // pred_check_branch
          %575 = sbr.rel (%p573) target = $region52
        $region51: #{bert_classifier_forward.1} parent=11 // pred_region
          _
        $region52: #{bert_classifier_forward.1} parent=11 // pred_fallthru
          _
        // Predicated region
        $region53: #{bert_classifier_forward.1} parent=11 // pred_check
          %p576 = pneg %p316
        $region54: #{bert_classifier_forward.1} parent=11 // pred_check_branch
          %578 = sbr.rel (%p576) target = $region56
        $region55: #{bert_classifier_forward.1} parent=11 // pred_region
          _
        $region56: #{bert_classifier_forward.1} parent=11 // pred_fallthru
          _
        // Predicated region
        $region57: #{bert_classifier_forward.1} parent=11 // pred_check
          %p579 = pneg %p337
        $region58: #{bert_classifier_forward.1} parent=11 // pred_check_branch
          %581 = sbr.rel (%p579) target = $region60
        $region59: #{bert_classifier_forward.1} parent=11 // pred_region
          _
        $region60: #{bert_classifier_forward.1} parent=11 // pred_fallthru
          _
        // Predicated region
        $region61: #{bert_classifier_forward.1} parent=11 // pred_check
          %p582 = pneg %p358
        $region62: #{bert_classifier_forward.1} parent=11 // pred_check_branch
          %584 = sbr.rel (%p582) target = $region64
        $region63: #{bert_classifier_forward.1} parent=11 // pred_region
          _
        $region64: #{bert_classifier_forward.1} parent=11 // pred_fallthru
          _
        // Predicated region
        $region65: #{bert_classifier_forward.1} parent=11 // pred_check
          %p585 = pneg %p379
        $region66: #{bert_classifier_forward.1} parent=11 // pred_check_branch
          %587 = sbr.rel (%p585) target = $region68
        $region67: #{bert_classifier_forward.1} parent=11 // pred_region
          _
        $region68: #{bert_classifier_forward.1} parent=11 // pred_fallthru
          _
        // Predicated region
        $region69: #{bert_classifier_forward.1} parent=11 // pred_check
          %p588 = pneg %p400
        $region70: #{bert_classifier_forward.1} parent=11 // pred_check_branch
          %590 = sbr.rel (%p588) target = $region72
        $region71: #{bert_classifier_forward.1} parent=11 // pred_region
          %592 = vsyncadd [#allocation3], 0
          %s593 = sshll.u32 %s16, 4
          %s594 = int_to_ptr.hbm [resolvable:$true] %s593
          %s595 = sshll.u32 [#allocation2], 4
          %s596 = int_to_ptr.vmem [resolvable:$true] %s595
          %601 = dma.hbm_to_vmem [thread:$0]  %s594, 1024, %s596, [#allocation3], 64, 64, 4
        $region72: #{bert_classifier_forward.1} parent=11 // pred_fallthru
          _
        // Predicated region
        $region73: #{bert_classifier_forward.1} parent=11 // pred_check
          %p602 = pneg %p421
        $region74: #{bert_classifier_forward.1} parent=11 // pred_check_branch
          %604 = sbr.rel (%p602) target = $region76
        $region75: #{bert_classifier_forward.1} parent=11 // pred_region
          _
        $region76: #{bert_classifier_forward.1} parent=11 // pred_fallthru
          _
        // Predicated region
        $region77: #{bert_classifier_forward.1} parent=11 // pred_check
          %p605 = pneg %p442
        $region78: #{bert_classifier_forward.1} parent=11 // pred_check_branch
          %607 = sbr.rel (%p605) target = $region80
        $region79: #{bert_classifier_forward.1} parent=11 // pred_region
          %609 = vsyncadd [#allocation6], 0
          %s610 = sshll.u32 %s18, 4
          %s611 = int_to_ptr.hbm [resolvable:$true] %s610
          %s612 = sshll.u32 [#allocation5], 4
          %s613 = int_to_ptr.vmem [resolvable:$true] %s612
          %618 = dma.hbm_to_vmem [thread:$0]  %s611, 1024, %s613, [#allocation6], 64, 64, 4
        $region80: #{bert_classifier_forward.1} parent=11 // pred_fallthru
          _
        // Predicated region
        $region81: #{bert_classifier_forward.1} parent=11 // pred_check
          %p619 = pneg %p463
        $region82: #{bert_classifier_forward.1} parent=11 // pred_check_branch
          %621 = sbr.rel (%p619) target = $region84
        $region83: #{bert_classifier_forward.1} parent=11 // pred_region
          _
        $region84: #{bert_classifier_forward.1} parent=11 // pred_fallthru
          _
        // Predicated region
        $region85: #{bert_classifier_forward.1} parent=11 // pred_check
          %p622 = pneg %p484
        $region86: #{bert_classifier_forward.1} parent=11 // pred_check_branch
          %624 = sbr.rel (%p622) target = $region88
        $region87: #{bert_classifier_forward.1} parent=11 // pred_region
          %626 = vsyncadd [#allocation6], 0
          %s627 = sshll.u32 %s20, 4
          %s628 = int_to_ptr.hbm [resolvable:$true] %s627
          %s629 = sshll.u32 [#allocation7], 4
          %s630 = int_to_ptr.vmem [resolvable:$true] %s629
          %635 = dma.hbm_to_vmem [thread:$0]  %s628, 1024, %s630, [#allocation6], 64, 64, 4
        $region88: #{bert_classifier_forward.1} parent=11 // pred_fallthru
          _
        // Predicated region
        $region89: #{bert_classifier_forward.1} parent=11 // pred_check
          %p636 = pneg %p505
        $region90: #{bert_classifier_forward.1} parent=11 // pred_check_branch
          %638 = sbr.rel (%p636) target = $region92
        $region91: #{bert_classifier_forward.1} parent=11 // pred_region
          _
        $region92: #{bert_classifier_forward.1} parent=11 // pred_fallthru
          _
      $region12: #{bert_classifier_forward.1} parent=5 // pred_fallthru
        _
      %p639 = scmp.lt.s32.totalorder %s33, 2
      // Predicated region
      $region93: #{bert_classifier_forward.1} parent=5 // pred_check
        %p640 = pneg %p639
      $region94: #{bert_classifier_forward.1} parent=5 // pred_check_branch
        %642 = sbr.rel (%p640) target = $region96
      $region95: #{bert_classifier_forward.1} parent=5 // pred_region
        // Predicated region
        $region97: #{bert_classifier_forward.1} parent=95 // pred_check
          %p643 = pneg %p53
        $region98: #{bert_classifier_forward.1} parent=95 // pred_check_branch
          %645 = sbr.rel (%p643) target = $region100
        $region99: #{bert_classifier_forward.1} parent=95 // pred_region
          %s646 = smul.u32 4, %s33
          %p647 = scmp.lt.s32.totalorder %s646, 7
          %s648 = scalar_select %p647, %s646, 7
          %s649 = smul.addr %s648, 2
          %s650 = smul.addr %s649, 8
          %s651 = scalar_lea.vmem %s0, %s650
          %s652 = smul.u32 4, %s33
        $region100: #{bert_classifier_forward.1} parent=95 // pred_fallthru
          _
        // Predicated region
        $region101: #{bert_classifier_forward.1} parent=95 // pred_check
          %p653 = pneg %p79
        $region102: #{bert_classifier_forward.1} parent=95 // pred_check_branch
          %655 = sbr.rel (%p653) target = $region104
        $region103: #{bert_classifier_forward.1} parent=95 // pred_region
          %s656 = smul.u32 4, %s33
          %p657 = scmp.lt.s32.totalorder %s656, 7
          %s658 = scalar_select %p657, %s656, 7
          %s659 = scalar_lea.vmem %s1, %s658
          %s660 = smul.u32 4, %s33
        $region104: #{bert_classifier_forward.1} parent=95 // pred_fallthru
          _
      $region96: #{bert_classifier_forward.1} parent=5 // pred_fallthru
        _
      %p661 = scmp.le.s32.totalorder 1, %s33
      %p662 = scmp.lt.s32.totalorder %s33, 3
      %p663 = pnand %p661, %p662
      %p664 = pneg %p663
      // Predicated region
      $region105: #{bert_classifier_forward.1} parent=5 // pred_check
        _
      $region106: #{bert_classifier_forward.1} parent=5 // pred_check_branch
        %666 = sbr.rel (%p663) target = $region108
      $region107: #{bert_classifier_forward.1} parent=5 // pred_region
        %s667 = ssub.s32 %s33, 1
        // Predicated region
        $region109: #{bert_classifier_forward.1} parent=107 // pred_check
          %p668 = pneg %p400
        $region110: #{bert_classifier_forward.1} parent=107 // pred_check_branch
          %670 = sbr.rel (%p668) target = $region112
        $region111: #{bert_classifier_forward.1} parent=107 // pred_region
          %672 = dma.done [#allocation3], 1024
        $region112: #{bert_classifier_forward.1} parent=107 // pred_fallthru
          _
        // Predicated region
        $region113: #{bert_classifier_forward.1} parent=107 // pred_check
          %p673 = pneg %p442
        $region114: #{bert_classifier_forward.1} parent=107 // pred_check_branch
          %675 = sbr.rel (%p673) target = $region116
        $region115: #{bert_classifier_forward.1} parent=107 // pred_region
          %677 = dma.done [#allocation6], 1024
        $region116: #{bert_classifier_forward.1} parent=107 // pred_fallthru
          _
        // Predicated region
        $region117: #{bert_classifier_forward.1} parent=107 // pred_check
          %p678 = pneg %p484
        $region118: #{bert_classifier_forward.1} parent=107 // pred_check_branch
          %680 = sbr.rel (%p678) target = $region120
        $region119: #{bert_classifier_forward.1} parent=107 // pred_region
          %682 = dma.done [#allocation6], 1024
        $region120: #{bert_classifier_forward.1} parent=107 // pred_fallthru
          _
        %s683 = smul.u32 4, %s38
        %p684 = scmp.lt.s32.totalorder %s683, 7
        %s685 = scalar_select %p684, %s683, 7
        %s686 = smul.addr %s685, 2
        %s687 = smul.addr %s686, 8
        %s688 = scalar_lea.vmem %s0, %s687
        %p689 = pneg %p59
        %p690 = pneg %p56
        %s691 = smul.u32 4, %s38
        %p692 = scmp.lt.s32.totalorder %s691, 7
        %s693 = scalar_select %p692, %s691, 7
        %s694 = scalar_lea.vmem %s1, %s693
        %p695 = pneg %p85
        %p696 = pneg %p82
        %p697 = pneg %p106
        %p698 = pneg %p103
        %p699 = pneg %p127
        %p700 = pneg %p124
        %p701 = pneg %p148
        %p702 = pneg %p145
        %p703 = pneg %p169
        %p704 = pneg %p166
        %p705 = pneg %p190
        %p706 = pneg %p187
        %p707 = pneg %p211
        %p708 = pneg %p208
        %p709 = pneg %p232
        %p710 = pneg %p229
        %p711 = pneg %p253
        %p712 = pneg %p250
        %p713 = pneg %p274
        %p714 = pneg %p271
        %p715 = pneg %p295
        %p716 = pneg %p292
        %p717 = pneg %p316
        %p718 = pneg %p313
        %p719 = pneg %p337
        %p720 = pneg %p334
        %p721 = pneg %p358
        %p722 = pneg %p355
        %p723 = pneg %p379
        %p724 = pneg %p376
        %p725 = pneg %p400
        %p726 = pneg %p397
        %p727 = pneg %p421
        %p728 = pneg %p418
        %p729 = pneg %p442
        %p730 = pneg %p439
        %p731 = pneg %p463
        %p732 = pneg %p460
        %p733 = pneg %p484
        %p734 = pneg %p481
        %p735 = pneg %p505
        %p736 = pneg %p502
        %p737 = pneg %p531
        %p738 = pneg %p528
        %s739 = sand.u32 %s518, 1
        %s740 = scalar_lea.sflag [#allocation4], %s739
        %s741 = sand.u32 %s518, 1
        %s742 = smul.addr %s741, 4
        %s743 = scalar_lea.vmem [#allocation8], %s742
        %s744 = smul.u32 4, %s38
        %p745 = scmp.lt.s32.totalorder %s744, 7
        %s746 = scalar_select %p745, %s744, 7
        %s747 = smul.addr %s746, 2
        %s748 = smul.addr %s747, 8
        %s749 = scalar_lea.vmem %s0, %s748
        %s750 = smul.u32 4, %s38
        %s751 = smul.u32 4, %s38
        %p752 = scmp.lt.s32.totalorder %s751, 7
        %s753 = scalar_select %p752, %s751, 7
        %s754 = scalar_lea.vmem %s1, %s753
        %s755 = smul.u32 4, %s38
        %v757 = vld [vmem:[%s749] sm:$0xff]
        %v758 = vld [vmem:[%s749 + $0x8] sm:$0xff]
        %v759 = vld [vmem:[%s749 + $0x10] sm:$0xff]
        %v760 = vld [vmem:[%s749 + $0x18] sm:$0xff]
        %v761 = vld [vmem:[%s749 + $0x20] sm:$0xff]
        %v762 = vld [vmem:[%s749 + $0x28] sm:$0xff]
        %v763 = vld [vmem:[%s749 + $0x30] sm:$0xff]
        %v764 = vld [vmem:[%s749 + $0x38] sm:$0xff]
        %v765 = vld [vmem:[%s754] sm:$0x1]
        %v766 = vld [vmem:[%s754 + $0x1] sm:$0x1]
        %v767 = vld [vmem:[%s754 + $0x2] sm:$0x1]
        %v768 = vld [vmem:[%s754 + $0x3] sm:$0x1]
        %v769 = vld [vmem:[%s2] sm:$0x1]
        %v770 = vld [vmem:[%s3] sm:$0x1]
        %771 = vadd.xlane.f32.xlu0 %v757
        %v772 = vpop.xlane.xlu0 %771
        %773 = vadd.xlane.f32.xlu0 %v758
        %v774 = vpop.xlane.xlu0 %773
        %775 = vadd.xlane.f32.xlu0 %v759
        %v776 = vpop.xlane.xlu0 %775
        %777 = vadd.xlane.f32.xlu0 %v760
        %v778 = vpop.xlane.xlu0 %777
        %779 = vadd.xlane.f32.xlu0 %v761
        %v780 = vpop.xlane.xlu0 %779
        %781 = vadd.xlane.f32.xlu0 %v762
        %v782 = vpop.xlane.xlu0 %781
        %783 = vadd.xlane.f32.xlu0 %v763
        %v784 = vpop.xlane.xlu0 %783
        %785 = vadd.xlane.f32.xlu0 %v764
        %v786 = vpop.xlane.xlu0 %785
        %v787 = vrcp.pop 128.0
        %v788 = vmul.f32 128.0, %v787
        %v789 = vsub.f32 1.0, %v788
        %v790 = vmul.f32 %v787, %v789
        %v791 = vadd.f32 %v787, %v790
        %vm792 = vweird.f32 %v787
        %v793 = vsel %vm792, %v787, %v791
        %v794 = vmul.f32 %v772, %v793
        %v795 = vmul.f32 %v774, %v793
        %v796 = vmul.f32 %v776, %v793
        %v797 = vmul.f32 %v778, %v793
        %v798 = vmul.f32 %v780, %v793
        %v799 = vmul.f32 %v782, %v793
        %v800 = vmul.f32 %v784, %v793
        %v801 = vmul.f32 %v786, %v793
        %v802 = vsub.f32 %v757, %v794
        %v803 = vsub.f32 %v758, %v795
        %v804 = vsub.f32 %v759, %v796
        %v805 = vsub.f32 %v760, %v797
        %v806 = vsub.f32 %v761, %v798
        %v807 = vsub.f32 %v762, %v799
        %v808 = vsub.f32 %v763, %v800
        %v809 = vsub.f32 %v764, %v801
        %v810 = vmul.f32 %v802, %v802
        %v811 = vmul.f32 %v803, %v803
        %v812 = vmul.f32 %v804, %v804
        %v813 = vmul.f32 %v805, %v805
        %v814 = vmul.f32 %v806, %v806
        %v815 = vmul.f32 %v807, %v807
        %v816 = vmul.f32 %v808, %v808
        %v817 = vmul.f32 %v809, %v809
        %818 = vadd.xlane.f32.xlu0 %v810
        %v819 = vpop.xlane.xlu0 %818
        %820 = vadd.xlane.f32.xlu0 %v811
        %v821 = vpop.xlane.xlu0 %820
        %822 = vadd.xlane.f32.xlu0 %v812
        %v823 = vpop.xlane.xlu0 %822
        %824 = vadd.xlane.f32.xlu0 %v813
        %v825 = vpop.xlane.xlu0 %824
        %826 = vadd.xlane.f32.xlu0 %v814
        %v827 = vpop.xlane.xlu0 %826
        %828 = vadd.xlane.f32.xlu0 %v815
        %v829 = vpop.xlane.xlu0 %828
        %830 = vadd.xlane.f32.xlu0 %v816
        %v831 = vpop.xlane.xlu0 %830
        %832 = vadd.xlane.f32.xlu0 %v817
        %v833 = vpop.xlane.xlu0 %832
        %v834 = vmul.f32 %v819, %v793
        %v835 = vmul.f32 %v821, %v793
        %v836 = vmul.f32 %v823, %v793
        %v837 = vmul.f32 %v825, %v793
        %v838 = vmul.f32 %v827, %v793
        %v839 = vmul.f32 %v829, %v793
        %v840 = vmul.f32 %v831, %v793
        %v841 = vmul.f32 %v833, %v793
        %v842 = vadd.f32 %v834, 1e-12
        %v843 = vadd.f32 %v835, 1e-12
        %v844 = vadd.f32 %v836, 1e-12
        %v845 = vadd.f32 %v837, 1e-12
        %v846 = vadd.f32 %v838, 1e-12
        %v847 = vadd.f32 %v839, 1e-12
        %v848 = vadd.f32 %v840, 1e-12
        %v849 = vadd.f32 %v841, 1e-12
        %v850 = vrsqrt.pop %v842
        %v851 = vmul.f32 %v850, %v842
        %v852 = vmul.f32 %v851, %v850
        %v853 = vmul.f32 0.5, %v852
        %v854 = vsub.f32 1.5, %v853
        %v855 = vmul.f32 %v850, %v854
        %vm856 = vweird.f32 %v842
        %vm857 = vweird.f32 %v850
        %vm858 = vmor %vm856, %vm857
        %v859 = vsel %vm858, %v850, %v855
        %v860 = vrsqrt.pop %v843
        %v861 = vmul.f32 %v860, %v843
        %v862 = vmul.f32 %v861, %v860
        %v863 = vmul.f32 0.5, %v862
        %v864 = vsub.f32 1.5, %v863
        %v865 = vmul.f32 %v860, %v864
        %vm866 = vweird.f32 %v843
        %vm867 = vweird.f32 %v860
        %vm868 = vmor %vm866, %vm867
        %v869 = vsel %vm868, %v860, %v865
        %v870 = vrsqrt.pop %v844
        %v871 = vmul.f32 %v870, %v844
        %v872 = vmul.f32 %v871, %v870
        %v873 = vmul.f32 0.5, %v872
        %v874 = vsub.f32 1.5, %v873
        %v875 = vmul.f32 %v870, %v874
        %vm876 = vweird.f32 %v844
        %vm877 = vweird.f32 %v870
        %vm878 = vmor %vm876, %vm877
        %v879 = vsel %vm878, %v870, %v875
        %v880 = vrsqrt.pop %v845
        %v881 = vmul.f32 %v880, %v845
        %v882 = vmul.f32 %v881, %v880
        %v883 = vmul.f32 0.5, %v882
        %v884 = vsub.f32 1.5, %v883
        %v885 = vmul.f32 %v880, %v884
        %vm886 = vweird.f32 %v845
        %vm887 = vweird.f32 %v880
        %vm888 = vmor %vm886, %vm887
        %v889 = vsel %vm888, %v880, %v885
        %v890 = vrsqrt.pop %v846
        %v891 = vmul.f32 %v890, %v846
        %v892 = vmul.f32 %v891, %v890
        %v893 = vmul.f32 0.5, %v892
        %v894 = vsub.f32 1.5, %v893
        %v895 = vmul.f32 %v890, %v894
        %vm896 = vweird.f32 %v846
        %vm897 = vweird.f32 %v890
        %vm898 = vmor %vm896, %vm897
        %v899 = vsel %vm898, %v890, %v895
        %v900 = vrsqrt.pop %v847
        %v901 = vmul.f32 %v900, %v847
        %v902 = vmul.f32 %v901, %v900
        %v903 = vmul.f32 0.5, %v902
        %v904 = vsub.f32 1.5, %v903
        %v905 = vmul.f32 %v900, %v904
        %vm906 = vweird.f32 %v847
        %vm907 = vweird.f32 %v900
        %vm908 = vmor %vm906, %vm907
        %v909 = vsel %vm908, %v900, %v905
        %v910 = vrsqrt.pop %v848
        %v911 = vmul.f32 %v910, %v848
        %v912 = vmul.f32 %v911, %v910
        %v913 = vmul.f32 0.5, %v912
        %v914 = vsub.f32 1.5, %v913
        %v915 = vmul.f32 %v910, %v914
        %vm916 = vweird.f32 %v848
        %vm917 = vweird.f32 %v910
        %vm918 = vmor %vm916, %vm917
        %v919 = vsel %vm918, %v910, %v915
        %v920 = vrsqrt.pop %v849
        %v921 = vmul.f32 %v920, %v849
        %v922 = vmul.f32 %v921, %v920
        %v923 = vmul.f32 0.5, %v922
        %v924 = vsub.f32 1.5, %v923
        %v925 = vmul.f32 %v920, %v924
        %vm926 = vweird.f32 %v849
        %vm927 = vweird.f32 %v920
        %vm928 = vmor %vm926, %vm927
        %v929 = vsel %vm928, %v920, %v925
        %v930 = vmul.f32 %v802, %v859
        %v931 = vmul.f32 %v803, %v869
        %v932 = vmul.f32 %v804, %v879
        %v933 = vmul.f32 %v805, %v889
        %v934 = vmul.f32 %v806, %v899
        %v935 = vmul.f32 %v807, %v909
        %v936 = vmul.f32 %v808, %v919
        %v937 = vmul.f32 %v809, %v929
        %v939 = vperm.slane %v769, 0
        %v941 = vmul.f32 %v930, %v939
        %v942 = vmul.f32 %v931, %v939
        %v943 = vmul.f32 %v932, %v939
        %v944 = vmul.f32 %v933, %v939
        %v945 = vmul.f32 %v934, %v939
        %v946 = vmul.f32 %v935, %v939
        %v947 = vmul.f32 %v936, %v939
        %v948 = vmul.f32 %v937, %v939
        %v950 = vperm.slane %v770, 0
        %v952 = vadd.f32 %v941, %v950
        %v953 = vadd.f32 %v942, %v950
        %v954 = vadd.f32 %v943, %v950
        %v955 = vadd.f32 %v944, %v950
        %v956 = vadd.f32 %v945, %v950
        %v957 = vadd.f32 %v946, %v950
        %v958 = vadd.f32 %v947, %v950
        %v959 = vadd.f32 %v948, %v950
        %v960 = vld [vmem:[%s4] sm:$0xff]
        %v961 = vld [vmem:[%s4 + $0x8] sm:$0xf]
        %v962 = vld [vmem:[%s4 + $0xc] sm:$0xff]
        %v963 = vld [vmem:[%s4 + $0x14] sm:$0xf]
        %v964 = vld [vmem:[%s4 + $0x18] sm:$0xff]
        %v965 = vld [vmem:[%s4 + $0x20] sm:$0xf]
        %v966 = vld [vmem:[%s4 + $0x24] sm:$0xff]
        %v967 = vld [vmem:[%s4 + $0x2c] sm:$0xf]
        %v968 = vld [vmem:[%s4 + $0x30] sm:$0xff]
        %v969 = vld [vmem:[%s4 + $0x38] sm:$0xf]
        %v970 = vld [vmem:[%s4 + $0x3c] sm:$0xff]
        %v971 = vld [vmem:[%s4 + $0x44] sm:$0xf]
        %v972 = vld [vmem:[%s4 + $0x48] sm:$0xff]
        %v973 = vld [vmem:[%s4 + $0x50] sm:$0xf]
        %v974 = vld [vmem:[%s4 + $0x54] sm:$0xff]
        %v975 = vld [vmem:[%s4 + $0x5c] sm:$0xf]
        %v976 = vld [vmem:[%s4 + $0x60] sm:$0xff]
        %v977 = vld [vmem:[%s4 + $0x68] sm:$0xf]
        %v978 = vld [vmem:[%s4 + $0x6c] sm:$0xff]
        %v979 = vld [vmem:[%s4 + $0x74] sm:$0xf]
        %v980 = vld [vmem:[%s4 + $0x78] sm:$0xff]
        %v981 = vld [vmem:[%s4 + $0x80] sm:$0xf]
        %v982 = vld [vmem:[%s4 + $0x84] sm:$0xff]
        %v983 = vld [vmem:[%s4 + $0x8c] sm:$0xf]
        %v984 = vld [vmem:[%s4 + $0x90] sm:$0xff]
        %v985 = vld [vmem:[%s4 + $0x98] sm:$0xf]
        %v986 = vld [vmem:[%s4 + $0x9c] sm:$0xff]
        %v987 = vld [vmem:[%s4 + $0xa4] sm:$0xf]
        %v988 = vld [vmem:[%s4 + $0xa8] sm:$0xff]
        %v989 = vld [vmem:[%s4 + $0xb0] sm:$0xf]
        %v990 = vld [vmem:[%s4 + $0xb4] sm:$0xff]
        %v991 = vld [vmem:[%s4 + $0xbc] sm:$0xf]
        %v992 = vpack.c.bf16 %v953, %v952
        %v993 = vpack.c.bf16 %v955, %v954
        %v994 = vpack.c.bf16 %v957, %v956
        %v995 = vpack.c.bf16 %v959, %v958
        %v996 = vld [vmem:[%s5] sm:$0x7]
        %v998 = vperm.slane %v996, 0
        %v999 = vperm.slane %v996, 1
        %v1000 = vperm.slane %v996, 2
        %v1036 = vunpack.c.l.b16 %v960
        %v1037 = vunpack.c.h.b16 %v960
        %v1038 = vunpack.c.l.b16 %v961
        %v1039 = vunpack.c.l.b16 %v962
        %v1040 = vunpack.c.h.b16 %v962
        %v1041 = vunpack.c.l.b16 %v963
        %v1042 = vunpack.c.l.b16 %v964
        %v1043 = vunpack.c.h.b16 %v964
        %v1044 = vunpack.c.l.b16 %v965
        %v1045 = vunpack.c.l.b16 %v966
        %v1046 = vunpack.c.h.b16 %v966
        %v1047 = vunpack.c.l.b16 %v967
        %v1048 = vunpack.c.l.b16 %v968
        %v1049 = vunpack.c.h.b16 %v968
        %v1050 = vunpack.c.l.b16 %v969
        %v1051 = vunpack.c.l.b16 %v970
        %v1052 = vunpack.c.h.b16 %v970
        %v1053 = vunpack.c.l.b16 %v971
        %v1054 = vunpack.c.l.b16 %v972
        %v1055 = vunpack.c.h.b16 %v972
        %v1056 = vunpack.c.l.b16 %v973
        %v1057 = vunpack.c.l.b16 %v974
        %v1058 = vunpack.c.h.b16 %v974
        %v1059 = vunpack.c.l.b16 %v975
        %v1060 = vunpack.c.l.b16 %v976
        %v1061 = vunpack.c.h.b16 %v976
        %v1062 = vunpack.c.l.b16 %v977
        %v1063 = vunpack.c.l.b16 %v978
        %v1064 = vunpack.c.h.b16 %v978
        %v1065 = vunpack.c.l.b16 %v979
        %v1066 = vunpack.c.l.b16 %v980
        %v1067 = vunpack.c.h.b16 %v980
        %v1068 = vunpack.c.l.b16 %v981
        %v1069 = vunpack.c.l.b16 %v982
        %v1070 = vunpack.c.h.b16 %v982
        %v1071 = vunpack.c.l.b16 %v983
        %v1072 = vunpack.c.l.b16 %v984
        %v1073 = vunpack.c.h.b16 %v984
        %v1074 = vunpack.c.l.b16 %v985
        %v1075 = vunpack.c.l.b16 %v986
        %v1076 = vunpack.c.h.b16 %v986
        %v1077 = vunpack.c.l.b16 %v987
        %v1078 = vunpack.c.l.b16 %v988
        %v1079 = vunpack.c.h.b16 %v988
        %v1080 = vunpack.c.l.b16 %v989
        %v1081 = vunpack.c.l.b16 %v990
        %v1082 = vunpack.c.h.b16 %v990
        %v1083 = vunpack.c.l.b16 %v991
        %v1084 = vpack.c.b16 %v1039, %v1036
        %v1085 = vpack.c.b16 %v1040, %v1037
        %v1086 = vpack.c.b16 %v1041, %v1038
        %v1087 = vpack.c.b16 %v1045, %v1042
        %v1088 = vpack.c.b16 %v1046, %v1043
        %v1089 = vpack.c.b16 %v1047, %v1044
        %v1090 = vpack.c.b16 %v1051, %v1048
        %v1091 = vpack.c.b16 %v1052, %v1049
        %v1092 = vpack.c.b16 %v1053, %v1050
        %v1093 = vpack.c.b16 %v1057, %v1054
        %v1094 = vpack.c.b16 %v1058, %v1055
        %v1095 = vpack.c.b16 %v1059, %v1056
        %v1096 = vpack.c.b16 %v1063, %v1060
        %v1097 = vpack.c.b16 %v1064, %v1061
        %v1098 = vpack.c.b16 %v1065, %v1062
        %v1099 = vpack.c.b16 %v1069, %v1066
        %v1100 = vpack.c.b16 %v1070, %v1067
        %v1101 = vpack.c.b16 %v1071, %v1068
        %v1102 = vpack.c.b16 %v1075, %v1072
        %v1103 = vpack.c.b16 %v1076, %v1073
        %v1104 = vpack.c.b16 %v1077, %v1074
        %v1105 = vpack.c.b16 %v1081, %v1078
        %v1106 = vpack.c.b16 %v1082, %v1079
        %v1107 = vpack.c.b16 %v1083, %v1080
        %1132 = vmatpush.bf16.msra.mxu0 %v1105
        %1133 = vmatpush.bf16.msra.mxu0 %v1102
        %1134 = vmatpush.bf16.msra.mxu0 %v1099
        %1135 = vmatpush.bf16.msra.mxu0 %v1096
        %1136 = vmatpush.bf16.msra.mxu0 %v1093
        %1137 = vmatpush.bf16.msra.mxu0 %v1090
        %1138 = vmatpush.bf16.msra.mxu0 %v1087
        %1139 = vmatpush.bf16.msra.mxu0 %v1084
        %1140 = vmatmul.bf16.gmra.mxu0 %v992
        %v1141 = vpop.f32.mrf.mxu0
        %v1142 = vadd.f32 %v998, %v1141
        %v1143 = vpop.f32.mrf.mxu0
        %v1144 = vadd.f32 %v998, %v1143
        %1145 = vmatmul.bf16.gmra.mxu0 %v993
        %v1146 = vpop.f32.mrf.mxu0
        %v1147 = vadd.f32 %v998, %v1146
        %v1148 = vpop.f32.mrf.mxu0
        %v1149 = vadd.f32 %v998, %v1148
        %1150 = vmatmul.bf16.gmra.mxu0 %v994
        %v1151 = vpop.f32.mrf.mxu0
        %v1152 = vadd.f32 %v998, %v1151
        %v1153 = vpop.f32.mrf.mxu0
        %v1154 = vadd.f32 %v998, %v1153
        %1155 = vmatmul.bf16.gmra.mxu0 %v995
        %v1156 = vpop.f32.mrf.mxu0
        %v1157 = vadd.f32 %v998, %v1156
        %v1158 = vpop.f32.mrf.mxu0
        %v1159 = vadd.f32 %v998, %v1158
        %1160 = vdwg.mxu0
        %1161 = vmatpush.bf16.msra.mxu0 %v1106
        %1162 = vmatpush.bf16.msra.mxu0 %v1103
        %1163 = vmatpush.bf16.msra.mxu0 %v1100
        %1164 = vmatpush.bf16.msra.mxu0 %v1097
        %1165 = vmatpush.bf16.msra.mxu0 %v1094
        %1166 = vmatpush.bf16.msra.mxu0 %v1091
        %1167 = vmatpush.bf16.msra.mxu0 %v1088
        %1168 = vmatpush.bf16.msra.mxu0 %v1085
        %1169 = vmatmul.bf16.gmra.mxu0 %v992
        %v1170 = vpop.f32.mrf.mxu0
        %v1171 = vadd.f32 %v999, %v1170
        %v1172 = vpop.f32.mrf.mxu0
        %v1173 = vadd.f32 %v999, %v1172
        %1174 = vmatmul.bf16.gmra.mxu0 %v993
        %v1175 = vpop.f32.mrf.mxu0
        %v1176 = vadd.f32 %v999, %v1175
        %v1177 = vpop.f32.mrf.mxu0
        %v1178 = vadd.f32 %v999, %v1177
        %1179 = vmatmul.bf16.gmra.mxu0 %v994
        %v1180 = vpop.f32.mrf.mxu0
        %v1181 = vadd.f32 %v999, %v1180
        %v1182 = vpop.f32.mrf.mxu0
        %v1183 = vadd.f32 %v999, %v1182
        %1184 = vmatmul.bf16.gmra.mxu0 %v995
        %v1185 = vpop.f32.mrf.mxu0
        %v1186 = vadd.f32 %v999, %v1185
        %v1187 = vpop.f32.mrf.mxu0
        %v1188 = vadd.f32 %v999, %v1187
        %1189 = vdwg.mxu0
        %1190 = vmatpush.bf16.msra.mxu0 %v1107
        %1191 = vmatpush.bf16.msra.mxu0 %v1104
        %1192 = vmatpush.bf16.msra.mxu0 %v1101
        %1193 = vmatpush.bf16.msra.mxu0 %v1098
        %1194 = vmatpush.bf16.msra.mxu0 %v1095
        %1195 = vmatpush.bf16.msra.mxu0 %v1092
        %1196 = vmatpush.bf16.msra.mxu0 %v1089
        %1197 = vmatpush.bf16.msra.mxu0 %v1086
        %1198 = vmatmul.bf16.gmra.mxu0 %v992
        %v1199 = vpop.f32.mrf.mxu0
        %v1200 = vadd.f32 %v1000, %v1199
        %v1201 = vpop.f32.mrf.mxu0
        %v1202 = vadd.f32 %v1000, %v1201
        %1203 = vmatmul.bf16.gmra.mxu0 %v993
        %v1204 = vpop.f32.mrf.mxu0
        %v1205 = vadd.f32 %v1000, %v1204
        %v1206 = vpop.f32.mrf.mxu0
        %v1207 = vadd.f32 %v1000, %v1206
        %1208 = vmatmul.bf16.gmra.mxu0 %v994
        %v1209 = vpop.f32.mrf.mxu0
        %v1210 = vadd.f32 %v1000, %v1209
        %v1211 = vpop.f32.mrf.mxu0
        %v1212 = vadd.f32 %v1000, %v1211
        %1213 = vmatmul.bf16.gmra.mxu0 %v995
        %v1214 = vpop.f32.mrf.mxu0
        %v1215 = vadd.f32 %v1000, %v1214
        %v1216 = vpop.f32.mrf.mxu0
        %v1217 = vadd.f32 %v1000, %v1216
        %1218 = vdwg.mxu0
        %v1219 = vpack.c.bf16 %v1171, %v1142
        %v1220 = vpack.c.bf16 %v1200, %v1200
        %v1221 = vpack.c.bf16 %v1173, %v1144
        %v1222 = vpack.c.bf16 %v1202, %v1202
        %v1223 = vpack.c.bf16 %v1176, %v1147
        %v1224 = vpack.c.bf16 %v1205, %v1205
        %v1225 = vpack.c.bf16 %v1178, %v1149
        %v1226 = vpack.c.bf16 %v1207, %v1207
        %v1227 = vpack.c.bf16 %v1181, %v1152
        %v1228 = vpack.c.bf16 %v1210, %v1210
        %v1229 = vpack.c.bf16 %v1183, %v1154
        %v1230 = vpack.c.bf16 %v1212, %v1212
        %v1231 = vpack.c.bf16 %v1186, %v1157
        %v1232 = vpack.c.bf16 %v1215, %v1215
        %v1233 = vpack.c.bf16 %v1188, %v1159
        %v1234 = vpack.c.bf16 %v1217, %v1217
        %v1243 = vrot.slane %v1219, 4
        %v1244 = vrot.slane %v1221, 4
        %v1245 = vrot.slane %v1223, 4
        %v1246 = vrot.slane %v1225, 4
        %v1247 = vrot.slane %v1227, 4
        %v1248 = vrot.slane %v1229, 4
        %v1249 = vrot.slane %v1231, 4
        %v1250 = vrot.slane %v1233, 4
        %v1251 = vunpack.c.l.b16 %v1219
        %v1252 = vunpack.c.l.b16 %v1221
        %v1253 = vpack.c.b16 %v1252, %v1251
        %v1254 = vunpack.c.l.b16 %v1243
        %v1255 = vunpack.c.l.b16 %v1244
        %v1256 = vpack.c.b16 %v1255, %v1254
        %vm1257 = vcmask 261120
        %v1259 = vsel %vm1257, %v1253, 0
        %v1262 = vsel %vm1257, %v1256, 0
        %1264 = vmatpush.bf16.xpose.msra.mxu0 0
        %1265 = vmatpush.bf16.xpose.msra.mxu0 0
        %1266 = vmatpush.bf16.xpose.msra.mxu0 0
        %1267 = vmatpush.bf16.xpose.msra.mxu0 0
        %1268 = vmatpush.bf16.xpose.msra.mxu0 0
        %1269 = vmatpush.bf16.xpose.msra.mxu0 0
        %1270 = vmatpush.bf16.xpose.msra.mxu0 0
        %1271 = vmatpush.bf16.xpose.msra.mxu0 %v1262
        %1272 = vmatmul.bf16.gmra.mxu0 %v1259
        %v1273 = vpop.f32.mrf.mxu0
        %v1274 = vadd.f32 0.0, %v1273
        %v1275 = vpop.f32.mrf.mxu0
        %v1276 = vadd.f32 0.0, %v1275
        %1277 = vdwg.mxu0
        %v1278 = vunpack.c.l.b16 %v1223
        %v1279 = vunpack.c.l.b16 %v1225
        %v1280 = vpack.c.b16 %v1279, %v1278
        %v1281 = vunpack.c.l.b16 %v1245
        %v1282 = vunpack.c.l.b16 %v1246
        %v1283 = vpack.c.b16 %v1282, %v1281
        %v1285 = vsel %vm1257, %v1280, 0
        %v1288 = vsel %vm1257, %v1283, 0
        %1290 = vmatpush.bf16.xpose.msra.mxu0 0
        %1291 = vmatpush.bf16.xpose.msra.mxu0 0
        %1292 = vmatpush.bf16.xpose.msra.mxu0 0
        %1293 = vmatpush.bf16.xpose.msra.mxu0 0
        %1294 = vmatpush.bf16.xpose.msra.mxu0 0
        %1295 = vmatpush.bf16.xpose.msra.mxu0 0
        %1296 = vmatpush.bf16.xpose.msra.mxu0 0
        %1297 = vmatpush.bf16.xpose.msra.mxu0 %v1288
        %1298 = vmatmul.bf16.gmra.mxu0 %v1285
        %v1299 = vpop.f32.mrf.mxu0
        %v1300 = vadd.f32 0.0, %v1299
        %v1301 = vpop.f32.mrf.mxu0
        %v1302 = vadd.f32 0.0, %v1301
        %1303 = vdwg.mxu0
        %v1304 = vunpack.c.l.b16 %v1227
        %v1305 = vunpack.c.l.b16 %v1229
        %v1306 = vpack.c.b16 %v1305, %v1304
        %v1307 = vunpack.c.l.b16 %v1247
        %v1308 = vunpack.c.l.b16 %v1248
        %v1309 = vpack.c.b16 %v1308, %v1307
        %v1311 = vsel %vm1257, %v1306, 0
        %v1314 = vsel %vm1257, %v1309, 0
        %1316 = vmatpush.bf16.xpose.msra.mxu0 0
        %1317 = vmatpush.bf16.xpose.msra.mxu0 0
        %1318 = vmatpush.bf16.xpose.msra.mxu0 0
        %1319 = vmatpush.bf16.xpose.msra.mxu0 0
        %1320 = vmatpush.bf16.xpose.msra.mxu0 0
        %1321 = vmatpush.bf16.xpose.msra.mxu0 0
        %1322 = vmatpush.bf16.xpose.msra.mxu0 0
        %1323 = vmatpush.bf16.xpose.msra.mxu0 %v1314
        %1324 = vmatmul.bf16.gmra.mxu0 %v1311
        %v1325 = vpop.f32.mrf.mxu0
        %v1326 = vadd.f32 0.0, %v1325
        %v1327 = vpop.f32.mrf.mxu0
        %v1328 = vadd.f32 0.0, %v1327
        %1329 = vdwg.mxu0
        %v1330 = vunpack.c.l.b16 %v1231
        %v1331 = vunpack.c.l.b16 %v1233
        %v1332 = vpack.c.b16 %v1331, %v1330
        %v1333 = vunpack.c.l.b16 %v1249
        %v1334 = vunpack.c.l.b16 %v1250
        %v1335 = vpack.c.b16 %v1334, %v1333
        %v1337 = vsel %vm1257, %v1332, 0
        %v1340 = vsel %vm1257, %v1335, 0
        %1342 = vmatpush.bf16.xpose.msra.mxu0 0
        %1343 = vmatpush.bf16.xpose.msra.mxu0 0
        %1344 = vmatpush.bf16.xpose.msra.mxu0 0
        %1345 = vmatpush.bf16.xpose.msra.mxu0 0
        %1346 = vmatpush.bf16.xpose.msra.mxu0 0
        %1347 = vmatpush.bf16.xpose.msra.mxu0 0
        %1348 = vmatpush.bf16.xpose.msra.mxu0 0
        %1349 = vmatpush.bf16.xpose.msra.mxu0 %v1340
        %1350 = vmatmul.bf16.gmra.mxu0 %v1337
        %v1351 = vpop.f32.mrf.mxu0
        %v1352 = vadd.f32 0.0, %v1351
        %v1353 = vpop.f32.mrf.mxu0
        %v1354 = vadd.f32 0.0, %v1353
        %1355 = vdwg.mxu0
        %v1356 = vmul.f32 %v1274, 0.17677669
        %v1357 = vmul.f32 %v1276, 0.17677669
        %v1358 = vmul.f32 %v1300, 0.17677669
        %v1359 = vmul.f32 %v1302, 0.17677669
        %v1360 = vmul.f32 %v1326, 0.17677669
        %v1361 = vmul.f32 %v1328, 0.17677669
        %v1362 = vmul.f32 %v1352, 0.17677669
        %v1363 = vmul.f32 %v1354, 0.17677669
        %v1368 = vperm.slane %v765, 0
        %v1369 = vperm.slane %v766, 0
        %v1370 = vperm.slane %v767, 0
        %v1371 = vperm.slane %v768, 0
        %v1376 = vadd.f32 %v1356, %v1368
        %v1377 = vadd.f32 %v1357, %v1368
        %v1378 = vadd.f32 %v1358, %v1369
        %v1379 = vadd.f32 %v1359, %v1369
        %v1380 = vadd.f32 %v1360, %v1370
        %v1381 = vadd.f32 %v1361, %v1370
        %v1382 = vadd.f32 %v1362, %v1371
        %v1383 = vadd.f32 %v1363, %v1371
        %vm1384 = vcmask 130048
        %v1385 = vsel %vm1384, %v1376, -inf
        %1386 = vmax.xlane.f32.xlu0 %v1385
        %v1387 = vpop.xlane.xlu0 %1386
        %v1388 = vsel %vm1384, %v1377, -inf
        %1389 = vmax.xlane.f32.xlu0 %v1388
        %v1390 = vpop.xlane.xlu0 %1389
        %v1391 = vsel %vm1384, %v1378, -inf
        %1392 = vmax.xlane.f32.xlu0 %v1391
        %v1393 = vpop.xlane.xlu0 %1392
        %v1394 = vsel %vm1384, %v1379, -inf
        %1395 = vmax.xlane.f32.xlu0 %v1394
        %v1396 = vpop.xlane.xlu0 %1395
        %v1397 = vsel %vm1384, %v1380, -inf
        %1398 = vmax.xlane.f32.xlu0 %v1397
        %v1399 = vpop.xlane.xlu0 %1398
        %v1400 = vsel %vm1384, %v1381, -inf
        %1401 = vmax.xlane.f32.xlu0 %v1400
        %v1402 = vpop.xlane.xlu0 %1401
        %v1403 = vsel %vm1384, %v1382, -inf
        %1404 = vmax.xlane.f32.xlu0 %v1403
        %v1405 = vpop.xlane.xlu0 %1404
        %v1406 = vsel %vm1384, %v1383, -inf
        %1407 = vmax.xlane.f32.xlu0 %v1406
        %v1408 = vpop.xlane.xlu0 %1407
        %v1409 = vsub.f32 %v1376, %v1387
        %v1410 = vsub.f32 %v1377, %v1390
        %v1411 = vsub.f32 %v1378, %v1393
        %v1412 = vsub.f32 %v1379, %v1396
        %v1413 = vsub.f32 %v1380, %v1399
        %v1414 = vsub.f32 %v1381, %v1402
        %v1415 = vsub.f32 %v1382, %v1405
        %v1416 = vsub.f32 %v1383, %v1408
        %v1417 = vmul.f32 %v1409, 1.442695
        %v1418 = vpow.pop %v1417
        %v1419 = vmul.f32 %v1410, 1.442695
        %v1420 = vpow.pop %v1419
        %v1421 = vmul.f32 %v1411, 1.442695
        %v1422 = vpow.pop %v1421
        %v1423 = vmul.f32 %v1412, 1.442695
        %v1424 = vpow.pop %v1423
        %v1425 = vmul.f32 %v1413, 1.442695
        %v1426 = vpow.pop %v1425
        %v1427 = vmul.f32 %v1414, 1.442695
        %v1428 = vpow.pop %v1427
        %v1429 = vmul.f32 %v1415, 1.442695
        %v1430 = vpow.pop %v1429
        %v1431 = vmul.f32 %v1416, 1.442695
        %v1432 = vpow.pop %v1431
        %v1433 = vsel %vm1384, %v1418, 0.0
        %1434 = vadd.xlane.f32.xlu0 %v1433
        %v1435 = vpop.xlane.xlu0 %1434
        %v1436 = vsel %vm1384, %v1420, 0.0
        %1437 = vadd.xlane.f32.xlu0 %v1436
        %v1438 = vpop.xlane.xlu0 %1437
        %v1439 = vsel %vm1384, %v1422, 0.0
        %1440 = vadd.xlane.f32.xlu0 %v1439
        %v1441 = vpop.xlane.xlu0 %1440
        %v1442 = vsel %vm1384, %v1424, 0.0
        %1443 = vadd.xlane.f32.xlu0 %v1442
        %v1444 = vpop.xlane.xlu0 %1443
        %v1445 = vsel %vm1384, %v1426, 0.0
        %1446 = vadd.xlane.f32.xlu0 %v1445
        %v1447 = vpop.xlane.xlu0 %1446
        %v1448 = vsel %vm1384, %v1428, 0.0
        %1449 = vadd.xlane.f32.xlu0 %v1448
        %v1450 = vpop.xlane.xlu0 %1449
        %v1451 = vsel %vm1384, %v1430, 0.0
        %1452 = vadd.xlane.f32.xlu0 %v1451
        %v1453 = vpop.xlane.xlu0 %1452
        %v1454 = vsel %vm1384, %v1432, 0.0
        %1455 = vadd.xlane.f32.xlu0 %v1454
        %v1456 = vpop.xlane.xlu0 %1455
        %v1457 = vrcp.pop %v1435
        %v1458 = vrcp.pop %v1438
        %v1459 = vrcp.pop %v1441
        %v1460 = vrcp.pop %v1444
        %v1461 = vrcp.pop %v1447
        %v1462 = vrcp.pop %v1450
        %v1463 = vrcp.pop %v1453
        %v1464 = vrcp.pop %v1456
        %v1465 = vmul.f32 %v1418, %v1457
        %v1466 = vmul.f32 %v1420, %v1458
        %v1467 = vmul.f32 %v1422, %v1459
        %v1468 = vmul.f32 %v1424, %v1460
        %v1469 = vmul.f32 %v1426, %v1461
        %v1470 = vmul.f32 %v1428, %v1462
        %v1471 = vmul.f32 %v1430, %v1463
        %v1472 = vmul.f32 %v1432, %v1464
        %v1473 = vpack.c.bf16 %v1465, %v1465
        %v1474 = vpack.c.bf16 %v1466, %v1466
        %v1475 = vpack.c.bf16 %v1467, %v1467
        %v1476 = vpack.c.bf16 %v1468, %v1468
        %v1477 = vpack.c.bf16 %v1469, %v1469
        %v1478 = vpack.c.bf16 %v1470, %v1470
        %v1479 = vpack.c.bf16 %v1471, %v1471
        %v1480 = vpack.c.bf16 %v1472, %v1472
        %v1483 = vunpack.c.l.b16 %v1473
        %v1484 = vunpack.c.l.b16 %v1474
        %v1485 = vpack.c.b16 %v1484, %v1483
        %v1488 = vunpack.c.l.b16 %v1220
        %v1489 = vunpack.c.l.b16 %v1222
        %v1490 = vpack.c.b16 %v1489, %v1488
        %v1493 = vsel %vm1384, %v1485, 0
        %1495 = vmatpush.bf16.msra.mxu0 0
        %1496 = vmatpush.bf16.msra.mxu0 0
        %1497 = vmatpush.bf16.msra.mxu0 0
        %1498 = vmatpush.bf16.msra.mxu0 0
        %1499 = vmatpush.bf16.msra.mxu0 0
        %1500 = vmatpush.bf16.msra.mxu0 0
        %1501 = vmatpush.bf16.msra.mxu0 0
        %1502 = vmatpush.bf16.msra.mxu0 %v1490
        %1503 = vmatmul.bf16.gmra.mxu0 %v1493
        %v1504 = vpop.f32.mrf.mxu0
        %v1505 = vadd.f32 0.0, %v1504
        %v1506 = vpop.f32.mrf.mxu0
        %v1507 = vadd.f32 0.0, %v1506
        %1508 = vdwg.mxu0
        %v1511 = vunpack.c.l.b16 %v1475
        %v1512 = vunpack.c.l.b16 %v1476
        %v1513 = vpack.c.b16 %v1512, %v1511
        %v1516 = vunpack.c.l.b16 %v1224
        %v1517 = vunpack.c.l.b16 %v1226
        %v1518 = vpack.c.b16 %v1517, %v1516
        %v1521 = vsel %vm1384, %v1513, 0
        %1523 = vmatpush.bf16.msra.mxu0 0
        %1524 = vmatpush.bf16.msra.mxu0 0
        %1525 = vmatpush.bf16.msra.mxu0 0
        %1526 = vmatpush.bf16.msra.mxu0 0
        %1527 = vmatpush.bf16.msra.mxu0 0
        %1528 = vmatpush.bf16.msra.mxu0 0
        %1529 = vmatpush.bf16.msra.mxu0 0
        %1530 = vmatpush.bf16.msra.mxu0 %v1518
        %1531 = vmatmul.bf16.gmra.mxu0 %v1521
        %v1532 = vpop.f32.mrf.mxu0
        %v1533 = vadd.f32 0.0, %v1532
        %v1534 = vpop.f32.mrf.mxu0
        %v1535 = vadd.f32 0.0, %v1534
        %1536 = vdwg.mxu0
        %v1539 = vunpack.c.l.b16 %v1477
        %v1540 = vunpack.c.l.b16 %v1478
        %v1541 = vpack.c.b16 %v1540, %v1539
        %v1544 = vunpack.c.l.b16 %v1228
        %v1545 = vunpack.c.l.b16 %v1230
        %v1546 = vpack.c.b16 %v1545, %v1544
        %v1549 = vsel %vm1384, %v1541, 0
        %1551 = vmatpush.bf16.msra.mxu0 0
        %1552 = vmatpush.bf16.msra.mxu0 0
        %1553 = vmatpush.bf16.msra.mxu0 0
        %1554 = vmatpush.bf16.msra.mxu0 0
        %1555 = vmatpush.bf16.msra.mxu0 0
        %1556 = vmatpush.bf16.msra.mxu0 0
        %1557 = vmatpush.bf16.msra.mxu0 0
        %1558 = vmatpush.bf16.msra.mxu0 %v1546
        %1559 = vmatmul.bf16.gmra.mxu0 %v1549
        %v1560 = vpop.f32.mrf.mxu0
        %v1561 = vadd.f32 0.0, %v1560
        %v1562 = vpop.f32.mrf.mxu0
        %v1563 = vadd.f32 0.0, %v1562
        %1564 = vdwg.mxu0
        %v1567 = vunpack.c.l.b16 %v1479
        %v1568 = vunpack.c.l.b16 %v1480
        %v1569 = vpack.c.b16 %v1568, %v1567
        %v1572 = vunpack.c.l.b16 %v1232
        %v1573 = vunpack.c.l.b16 %v1234
        %v1574 = vpack.c.b16 %v1573, %v1572
        %v1577 = vsel %vm1384, %v1569, 0
        %1579 = vmatpush.bf16.msra.mxu0 0
        %1580 = vmatpush.bf16.msra.mxu0 0
        %1581 = vmatpush.bf16.msra.mxu0 0
        %1582 = vmatpush.bf16.msra.mxu0 0
        %1583 = vmatpush.bf16.msra.mxu0 0
        %1584 = vmatpush.bf16.msra.mxu0 0
        %1585 = vmatpush.bf16.msra.mxu0 0
        %1586 = vmatpush.bf16.msra.mxu0 %v1574
        %1587 = vmatmul.bf16.gmra.mxu0 %v1577
        %v1588 = vpop.f32.mrf.mxu0
        %v1589 = vadd.f32 0.0, %v1588
        %v1590 = vpop.f32.mrf.mxu0
        %v1591 = vadd.f32 0.0, %v1590
        %1592 = vdwg.mxu0
        %1593 = vrot.lane.b32.xlu0 %v1219, 96
        %v1594 = vpop.permute.xlu0 %1593
        %1595 = vrot.lane.b32.xlu0 %v1221, 96
        %v1596 = vpop.permute.xlu0 %1595
        %1597 = vrot.lane.b32.xlu0 %v1223, 96
        %v1598 = vpop.permute.xlu0 %1597
        %1599 = vrot.lane.b32.xlu0 %v1225, 96
        %v1600 = vpop.permute.xlu0 %1599
        %1601 = vrot.lane.b32.xlu0 %v1227, 96
        %v1602 = vpop.permute.xlu0 %1601
        %1603 = vrot.lane.b32.xlu0 %v1229, 96
        %v1604 = vpop.permute.xlu0 %1603
        %1605 = vrot.lane.b32.xlu0 %v1231, 96
        %v1606 = vpop.permute.xlu0 %1605
        %1607 = vrot.lane.b32.xlu0 %v1233, 96
        %v1608 = vpop.permute.xlu0 %1607
        %v1609 = vrot.slane %v1594, 4
        %v1610 = vrot.slane %v1596, 4
        %v1611 = vrot.slane %v1598, 4
        %v1612 = vrot.slane %v1600, 4
        %v1613 = vrot.slane %v1602, 4
        %v1614 = vrot.slane %v1604, 4
        %v1615 = vrot.slane %v1606, 4
        %v1616 = vrot.slane %v1608, 4
        %1617 = vrot.lane.b32.xlu0 %v1253, 96
        %v1618 = vpop.permute.xlu0 %1617
        %v1619 = vunpack.c.l.b16 %v1609
        %v1620 = vunpack.c.l.b16 %v1610
        %v1621 = vpack.c.b16 %v1620, %v1619
        %v1623 = vsel %vm1257, %v1618, 0
        %v1626 = vsel %vm1257, %v1621, 0
        %1628 = vmatpush.bf16.xpose.msra.mxu0 0
        %1629 = vmatpush.bf16.xpose.msra.mxu0 0
        %1630 = vmatpush.bf16.xpose.msra.mxu0 0
        %1631 = vmatpush.bf16.xpose.msra.mxu0 0
        %1632 = vmatpush.bf16.xpose.msra.mxu0 0
        %1633 = vmatpush.bf16.xpose.msra.mxu0 0
        %1634 = vmatpush.bf16.xpose.msra.mxu0 0
        %1635 = vmatpush.bf16.xpose.msra.mxu0 %v1626
        %1636 = vmatmul.bf16.gmra.mxu0 %v1623
        %v1637 = vpop.f32.mrf.mxu0
        %v1638 = vadd.f32 0.0, %v1637
        %v1639 = vpop.f32.mrf.mxu0
        %v1640 = vadd.f32 0.0, %v1639
        %1641 = vdwg.mxu0
        %1642 = vrot.lane.b32.xlu0 %v1280, 96
        %v1643 = vpop.permute.xlu0 %1642
        %v1644 = vunpack.c.l.b16 %v1611
        %v1645 = vunpack.c.l.b16 %v1612
        %v1646 = vpack.c.b16 %v1645, %v1644
        %v1648 = vsel %vm1257, %v1643, 0
        %v1651 = vsel %vm1257, %v1646, 0
        %1653 = vmatpush.bf16.xpose.msra.mxu0 0
        %1654 = vmatpush.bf16.xpose.msra.mxu0 0
        %1655 = vmatpush.bf16.xpose.msra.mxu0 0
        %1656 = vmatpush.bf16.xpose.msra.mxu0 0
        %1657 = vmatpush.bf16.xpose.msra.mxu0 0
        %1658 = vmatpush.bf16.xpose.msra.mxu0 0
        %1659 = vmatpush.bf16.xpose.msra.mxu0 0
        %1660 = vmatpush.bf16.xpose.msra.mxu0 %v1651
        %1661 = vmatmul.bf16.gmra.mxu0 %v1648
        %v1662 = vpop.f32.mrf.mxu0
        %v1663 = vadd.f32 0.0, %v1662
        %v1664 = vpop.f32.mrf.mxu0
        %v1665 = vadd.f32 0.0, %v1664
        %1666 = vdwg.mxu0
        %1667 = vrot.lane.b32.xlu0 %v1306, 96
        %v1668 = vpop.permute.xlu0 %1667
        %v1669 = vunpack.c.l.b16 %v1613
        %v1670 = vunpack.c.l.b16 %v1614
        %v1671 = vpack.c.b16 %v1670, %v1669
        %v1673 = vsel %vm1257, %v1668, 0
        %v1676 = vsel %vm1257, %v1671, 0
        %1678 = vmatpush.bf16.xpose.msra.mxu0 0
        %1679 = vmatpush.bf16.xpose.msra.mxu0 0
        %1680 = vmatpush.bf16.xpose.msra.mxu0 0
        %1681 = vmatpush.bf16.xpose.msra.mxu0 0
        %1682 = vmatpush.bf16.xpose.msra.mxu0 0
        %1683 = vmatpush.bf16.xpose.msra.mxu0 0
        %1684 = vmatpush.bf16.xpose.msra.mxu0 0
        %1685 = vmatpush.bf16.xpose.msra.mxu0 %v1676
        %1686 = vmatmul.bf16.gmra.mxu0 %v1673
        %v1687 = vpop.f32.mrf.mxu0
        %v1688 = vadd.f32 0.0, %v1687
        %v1689 = vpop.f32.mrf.mxu0
        %v1690 = vadd.f32 0.0, %v1689
        %1691 = vdwg.mxu0
        %1692 = vrot.lane.b32.xlu0 %v1332, 96
        %v1693 = vpop.permute.xlu0 %1692
        %v1694 = vunpack.c.l.b16 %v1615
        %v1695 = vunpack.c.l.b16 %v1616
        %v1696 = vpack.c.b16 %v1695, %v1694
        %v1698 = vsel %vm1257, %v1693, 0
        %v1701 = vsel %vm1257, %v1696, 0
        %1703 = vmatpush.bf16.xpose.msra.mxu0 0
        %1704 = vmatpush.bf16.xpose.msra.mxu0 0
        %1705 = vmatpush.bf16.xpose.msra.mxu0 0
        %1706 = vmatpush.bf16.xpose.msra.mxu0 0
        %1707 = vmatpush.bf16.xpose.msra.mxu0 0
        %1708 = vmatpush.bf16.xpose.msra.mxu0 0
        %1709 = vmatpush.bf16.xpose.msra.mxu0 0
        %1710 = vmatpush.bf16.xpose.msra.mxu0 %v1701
        %1711 = vmatmul.bf16.gmra.mxu0 %v1698
        %v1712 = vpop.f32.mrf.mxu0
        %v1713 = vadd.f32 0.0, %v1712
        %v1714 = vpop.f32.mrf.mxu0
        %v1715 = vadd.f32 0.0, %v1714
        %1716 = vdwg.mxu0
        %v1717 = vmul.f32 %v1638, 0.17677669
        %v1718 = vmul.f32 %v1640, 0.17677669
        %v1719 = vmul.f32 %v1663, 0.17677669
        %v1720 = vmul.f32 %v1665, 0.17677669
        %v1721 = vmul.f32 %v1688, 0.17677669
        %v1722 = vmul.f32 %v1690, 0.17677669
        %v1723 = vmul.f32 %v1713, 0.17677669
        %v1724 = vmul.f32 %v1715, 0.17677669
        %v1725 = vadd.f32 %v1717, %v1368
        %v1726 = vadd.f32 %v1718, %v1368
        %v1727 = vadd.f32 %v1719, %v1369
        %v1728 = vadd.f32 %v1720, %v1369
        %v1729 = vadd.f32 %v1721, %v1370
        %v1730 = vadd.f32 %v1722, %v1370
        %v1731 = vadd.f32 %v1723, %v1371
        %v1732 = vadd.f32 %v1724, %v1371
        %v1733 = vsel %vm1384, %v1725, -inf
        %1734 = vmax.xlane.f32.xlu0 %v1733
        %v1735 = vpop.xlane.xlu0 %1734
        %v1736 = vsel %vm1384, %v1726, -inf
        %1737 = vmax.xlane.f32.xlu0 %v1736
        %v1738 = vpop.xlane.xlu0 %1737
        %v1739 = vsel %vm1384, %v1727, -inf
        %1740 = vmax.xlane.f32.xlu0 %v1739
        %v1741 = vpop.xlane.xlu0 %1740
        %v1742 = vsel %vm1384, %v1728, -inf
        %1743 = vmax.xlane.f32.xlu0 %v1742
        %v1744 = vpop.xlane.xlu0 %1743
        %v1745 = vsel %vm1384, %v1729, -inf
        %1746 = vmax.xlane.f32.xlu0 %v1745
        %v1747 = vpop.xlane.xlu0 %1746
        %v1748 = vsel %vm1384, %v1730, -inf
        %1749 = vmax.xlane.f32.xlu0 %v1748
        %v1750 = vpop.xlane.xlu0 %1749
        %v1751 = vsel %vm1384, %v1731, -inf
        %1752 = vmax.xlane.f32.xlu0 %v1751
        %v1753 = vpop.xlane.xlu0 %1752
        %v1754 = vsel %vm1384, %v1732, -inf
        %1755 = vmax.xlane.f32.xlu0 %v1754
        %v1756 = vpop.xlane.xlu0 %1755
        %v1757 = vsub.f32 %v1725, %v1735
        %v1758 = vsub.f32 %v1726, %v1738
        %v1759 = vsub.f32 %v1727, %v1741
        %v1760 = vsub.f32 %v1728, %v1744
        %v1761 = vsub.f32 %v1729, %v1747
        %v1762 = vsub.f32 %v1730, %v1750
        %v1763 = vsub.f32 %v1731, %v1753
        %v1764 = vsub.f32 %v1732, %v1756
        %v1765 = vmul.f32 %v1757, 1.442695
        %v1766 = vpow.pop %v1765
        %v1767 = vmul.f32 %v1758, 1.442695
        %v1768 = vpow.pop %v1767
        %v1769 = vmul.f32 %v1759, 1.442695
        %v1770 = vpow.pop %v1769
        %v1771 = vmul.f32 %v1760, 1.442695
        %v1772 = vpow.pop %v1771
        %v1773 = vmul.f32 %v1761, 1.442695
        %v1774 = vpow.pop %v1773
        %v1775 = vmul.f32 %v1762, 1.442695
        %v1776 = vpow.pop %v1775
        %v1777 = vmul.f32 %v1763, 1.442695
        %v1778 = vpow.pop %v1777
        %v1779 = vmul.f32 %v1764, 1.442695
        %v1780 = vpow.pop %v1779
        %v1781 = vsel %vm1384, %v1766, 0.0
        %1782 = vadd.xlane.f32.xlu0 %v1781
        %v1783 = vpop.xlane.xlu0 %1782
        %v1784 = vsel %vm1384, %v1768, 0.0
        %1785 = vadd.xlane.f32.xlu0 %v1784
        %v1786 = vpop.xlane.xlu0 %1785
        %v1787 = vsel %vm1384, %v1770, 0.0
        %1788 = vadd.xlane.f32.xlu0 %v1787
        %v1789 = vpop.xlane.xlu0 %1788
        %v1790 = vsel %vm1384, %v1772, 0.0
        %1791 = vadd.xlane.f32.xlu0 %v1790
        %v1792 = vpop.xlane.xlu0 %1791
        %v1793 = vsel %vm1384, %v1774, 0.0
        %1794 = vadd.xlane.f32.xlu0 %v1793
        %v1795 = vpop.xlane.xlu0 %1794
        %v1796 = vsel %vm1384, %v1776, 0.0
        %1797 = vadd.xlane.f32.xlu0 %v1796
        %v1798 = vpop.xlane.xlu0 %1797
        %v1799 = vsel %vm1384, %v1778, 0.0
        %1800 = vadd.xlane.f32.xlu0 %v1799
        %v1801 = vpop.xlane.xlu0 %1800
        %v1802 = vsel %vm1384, %v1780, 0.0
        %1803 = vadd.xlane.f32.xlu0 %v1802
        %v1804 = vpop.xlane.xlu0 %1803
        %v1805 = vrcp.pop %v1783
        %v1806 = vrcp.pop %v1786
        %v1807 = vrcp.pop %v1789
        %v1808 = vrcp.pop %v1792
        %v1809 = vrcp.pop %v1795
        %v1810 = vrcp.pop %v1798
        %v1811 = vrcp.pop %v1801
        %v1812 = vrcp.pop %v1804
        %v1813 = vmul.f32 %v1766, %v1805
        %v1814 = vmul.f32 %v1768, %v1806
        %v1815 = vmul.f32 %v1770, %v1807
        %v1816 = vmul.f32 %v1772, %v1808
        %v1817 = vmul.f32 %v1774, %v1809
        %v1818 = vmul.f32 %v1776, %v1810
        %v1819 = vmul.f32 %v1778, %v1811
        %v1820 = vmul.f32 %v1780, %v1812
        %v1821 = vpack.c.bf16 %v1813, %v1813
        %v1822 = vpack.c.bf16 %v1814, %v1814
        %v1823 = vpack.c.bf16 %v1815, %v1815
        %v1824 = vpack.c.bf16 %v1816, %v1816
        %v1825 = vpack.c.bf16 %v1817, %v1817
        %v1826 = vpack.c.bf16 %v1818, %v1818
        %v1827 = vpack.c.bf16 %v1819, %v1819
        %v1828 = vpack.c.bf16 %v1820, %v1820
        %v1831 = vunpack.c.l.b16 %v1821
        %v1832 = vunpack.c.l.b16 %v1822
        %v1833 = vpack.c.b16 %v1832, %v1831
        %1834 = vrot.lane.b32.xlu0 %v1490, 96
        %v1835 = vpop.permute.xlu0 %1834
        %v1838 = vsel %vm1384, %v1833, 0
        %1840 = vmatpush.bf16.msra.mxu0 0
        %1841 = vmatpush.bf16.msra.mxu0 0
        %1842 = vmatpush.bf16.msra.mxu0 0
        %1843 = vmatpush.bf16.msra.mxu0 0
        %1844 = vmatpush.bf16.msra.mxu0 0
        %1845 = vmatpush.bf16.msra.mxu0 0
        %1846 = vmatpush.bf16.msra.mxu0 0
        %1847 = vmatpush.bf16.msra.mxu0 %v1835
        %1848 = vmatmul.bf16.gmra.mxu0 %v1838
        %v1849 = vpop.f32.mrf.mxu0
        %v1850 = vadd.f32 0.0, %v1849
        %v1851 = vpop.f32.mrf.mxu0
        %v1852 = vadd.f32 0.0, %v1851
        %1853 = vdwg.mxu0
        %v1856 = vunpack.c.l.b16 %v1823
        %v1857 = vunpack.c.l.b16 %v1824
        %v1858 = vpack.c.b16 %v1857, %v1856
        %1859 = vrot.lane.b32.xlu0 %v1518, 96
        %v1860 = vpop.permute.xlu0 %1859
        %v1863 = vsel %vm1384, %v1858, 0
        %1865 = vmatpush.bf16.msra.mxu0 0
        %1866 = vmatpush.bf16.msra.mxu0 0
        %1867 = vmatpush.bf16.msra.mxu0 0
        %1868 = vmatpush.bf16.msra.mxu0 0
        %1869 = vmatpush.bf16.msra.mxu0 0
        %1870 = vmatpush.bf16.msra.mxu0 0
        %1871 = vmatpush.bf16.msra.mxu0 0
        %1872 = vmatpush.bf16.msra.mxu0 %v1860
        %1873 = vmatmul.bf16.gmra.mxu0 %v1863
        %v1874 = vpop.f32.mrf.mxu0
        %v1875 = vadd.f32 0.0, %v1874
        %v1876 = vpop.f32.mrf.mxu0
        %v1877 = vadd.f32 0.0, %v1876
        %1878 = vdwg.mxu0
        %v1881 = vunpack.c.l.b16 %v1825
        %v1882 = vunpack.c.l.b16 %v1826
        %v1883 = vpack.c.b16 %v1882, %v1881
        %1884 = vrot.lane.b32.xlu0 %v1546, 96
        %v1885 = vpop.permute.xlu0 %1884
        %v1888 = vsel %vm1384, %v1883, 0
        %1890 = vmatpush.bf16.msra.mxu0 0
        %1891 = vmatpush.bf16.msra.mxu0 0
        %1892 = vmatpush.bf16.msra.mxu0 0
        %1893 = vmatpush.bf16.msra.mxu0 0
        %1894 = vmatpush.bf16.msra.mxu0 0
        %1895 = vmatpush.bf16.msra.mxu0 0
        %1896 = vmatpush.bf16.msra.mxu0 0
        %1897 = vmatpush.bf16.msra.mxu0 %v1885
        %1898 = vmatmul.bf16.gmra.mxu0 %v1888
        %v1899 = vpop.f32.mrf.mxu0
        %v1900 = vadd.f32 0.0, %v1899
        %v1901 = vpop.f32.mrf.mxu0
        %v1902 = vadd.f32 0.0, %v1901
        %1903 = vdwg.mxu0
        %v1906 = vunpack.c.l.b16 %v1827
        %v1907 = vunpack.c.l.b16 %v1828
        %v1908 = vpack.c.b16 %v1907, %v1906
        %1909 = vrot.lane.b32.xlu0 %v1574, 96
        %v1910 = vpop.permute.xlu0 %1909
        %v1913 = vsel %vm1384, %v1908, 0
        %1915 = vmatpush.bf16.msra.mxu0 0
        %1916 = vmatpush.bf16.msra.mxu0 0
        %1917 = vmatpush.bf16.msra.mxu0 0
        %1918 = vmatpush.bf16.msra.mxu0 0
        %1919 = vmatpush.bf16.msra.mxu0 0
        %1920 = vmatpush.bf16.msra.mxu0 0
        %1921 = vmatpush.bf16.msra.mxu0 0
        %1922 = vmatpush.bf16.msra.mxu0 %v1910
        %1923 = vmatmul.bf16.gmra.mxu0 %v1913
        %v1924 = vpop.f32.mrf.mxu0
        %v1925 = vadd.f32 0.0, %v1924
        %v1926 = vpop.f32.mrf.mxu0
        %v1927 = vadd.f32 0.0, %v1926
        %1928 = vdwg.mxu0
        %1929 = vrot.lane.b32.xlu0 %v1219, 64
        %v1930 = vpop.permute.xlu0 %1929
        %1931 = vrot.lane.b32.xlu0 %v1221, 64
        %v1932 = vpop.permute.xlu0 %1931
        %1933 = vrot.lane.b32.xlu0 %v1223, 64
        %v1934 = vpop.permute.xlu0 %1933
        %1935 = vrot.lane.b32.xlu0 %v1225, 64
        %v1936 = vpop.permute.xlu0 %1935
        %1937 = vrot.lane.b32.xlu0 %v1227, 64
        %v1938 = vpop.permute.xlu0 %1937
        %1939 = vrot.lane.b32.xlu0 %v1229, 64
        %v1940 = vpop.permute.xlu0 %1939
        %1941 = vrot.lane.b32.xlu0 %v1231, 64
        %v1942 = vpop.permute.xlu0 %1941
        %1943 = vrot.lane.b32.xlu0 %v1233, 64
        %v1944 = vpop.permute.xlu0 %1943
        %v1945 = vrot.slane %v1930, 4
        %v1946 = vrot.slane %v1932, 4
        %v1947 = vrot.slane %v1934, 4
        %v1948 = vrot.slane %v1936, 4
        %v1949 = vrot.slane %v1938, 4
        %v1950 = vrot.slane %v1940, 4
        %v1951 = vrot.slane %v1942, 4
        %v1952 = vrot.slane %v1944, 4
        %1953 = vrot.lane.b32.xlu0 %v1253, 64
        %v1954 = vpop.permute.xlu0 %1953
        %v1955 = vunpack.c.l.b16 %v1945
        %v1956 = vunpack.c.l.b16 %v1946
        %v1957 = vpack.c.b16 %v1956, %v1955
        %v1959 = vsel %vm1257, %v1954, 0
        %v1962 = vsel %vm1257, %v1957, 0
        %1964 = vmatpush.bf16.xpose.msra.mxu0 0
        %1965 = vmatpush.bf16.xpose.msra.mxu0 0
        %1966 = vmatpush.bf16.xpose.msra.mxu0 0
        %1967 = vmatpush.bf16.xpose.msra.mxu0 0
        %1968 = vmatpush.bf16.xpose.msra.mxu0 0
        %1969 = vmatpush.bf16.xpose.msra.mxu0 0
        %1970 = vmatpush.bf16.xpose.msra.mxu0 0
        %1971 = vmatpush.bf16.xpose.msra.mxu0 %v1962
        %1972 = vmatmul.bf16.gmra.mxu0 %v1959
        %v1973 = vpop.f32.mrf.mxu0
        %v1974 = vadd.f32 0.0, %v1973
        %v1975 = vpop.f32.mrf.mxu0
        %v1976 = vadd.f32 0.0, %v1975
        %1977 = vdwg.mxu0
        %1978 = vrot.lane.b32.xlu0 %v1280, 64
        %v1979 = vpop.permute.xlu0 %1978
        %v1980 = vunpack.c.l.b16 %v1947
        %v1981 = vunpack.c.l.b16 %v1948
        %v1982 = vpack.c.b16 %v1981, %v1980
        %v1984 = vsel %vm1257, %v1979, 0
        %v1987 = vsel %vm1257, %v1982, 0
        %1989 = vmatpush.bf16.xpose.msra.mxu0 0
        %1990 = vmatpush.bf16.xpose.msra.mxu0 0
        %1991 = vmatpush.bf16.xpose.msra.mxu0 0
        %1992 = vmatpush.bf16.xpose.msra.mxu0 0
        %1993 = vmatpush.bf16.xpose.msra.mxu0 0
        %1994 = vmatpush.bf16.xpose.msra.mxu0 0
        %1995 = vmatpush.bf16.xpose.msra.mxu0 0
        %1996 = vmatpush.bf16.xpose.msra.mxu0 %v1987
        %1997 = vmatmul.bf16.gmra.mxu0 %v1984
        %v1998 = vpop.f32.mrf.mxu0
        %v1999 = vadd.f32 0.0, %v1998
        %v2000 = vpop.f32.mrf.mxu0
        %v2001 = vadd.f32 0.0, %v2000
        %2002 = vdwg.mxu0
        %2003 = vrot.lane.b32.xlu0 %v1306, 64
        %v2004 = vpop.permute.xlu0 %2003
        %v2005 = vunpack.c.l.b16 %v1949
        %v2006 = vunpack.c.l.b16 %v1950
        %v2007 = vpack.c.b16 %v2006, %v2005
        %v2009 = vsel %vm1257, %v2004, 0
        %v2012 = vsel %vm1257, %v2007, 0
        %2014 = vmatpush.bf16.xpose.msra.mxu0 0
        %2015 = vmatpush.bf16.xpose.msra.mxu0 0
        %2016 = vmatpush.bf16.xpose.msra.mxu0 0
        %2017 = vmatpush.bf16.xpose.msra.mxu0 0
        %2018 = vmatpush.bf16.xpose.msra.mxu0 0
        %2019 = vmatpush.bf16.xpose.msra.mxu0 0
        %2020 = vmatpush.bf16.xpose.msra.mxu0 0
        %2021 = vmatpush.bf16.xpose.msra.mxu0 %v2012
        %2022 = vmatmul.bf16.gmra.mxu0 %v2009
        %v2023 = vpop.f32.mrf.mxu0
        %v2024 = vadd.f32 0.0, %v2023
        %v2025 = vpop.f32.mrf.mxu0
        %v2026 = vadd.f32 0.0, %v2025
        %2027 = vdwg.mxu0
        %2028 = vrot.lane.b32.xlu0 %v1332, 64
        %v2029 = vpop.permute.xlu0 %2028
        %v2030 = vunpack.c.l.b16 %v1951
        %v2031 = vunpack.c.l.b16 %v1952
        %v2032 = vpack.c.b16 %v2031, %v2030
        %v2034 = vsel %vm1257, %v2029, 0
        %v2037 = vsel %vm1257, %v2032, 0
        %2039 = vmatpush.bf16.xpose.msra.mxu0 0
        %2040 = vmatpush.bf16.xpose.msra.mxu0 0
        %2041 = vmatpush.bf16.xpose.msra.mxu0 0
        %2042 = vmatpush.bf16.xpose.msra.mxu0 0
        %2043 = vmatpush.bf16.xpose.msra.mxu0 0
        %2044 = vmatpush.bf16.xpose.msra.mxu0 0
        %2045 = vmatpush.bf16.xpose.msra.mxu0 0
        %2046 = vmatpush.bf16.xpose.msra.mxu0 %v2037
        %2047 = vmatmul.bf16.gmra.mxu0 %v2034
        %v2048 = vpop.f32.mrf.mxu0
        %v2049 = vadd.f32 0.0, %v2048
        %v2050 = vpop.f32.mrf.mxu0
        %v2051 = vadd.f32 0.0, %v2050
        %2052 = vdwg.mxu0
        %v2053 = vmul.f32 %v1974, 0.17677669
        %v2054 = vmul.f32 %v1976, 0.17677669
        %v2055 = vmul.f32 %v1999, 0.17677669
        %v2056 = vmul.f32 %v2001, 0.17677669
        %v2057 = vmul.f32 %v2024, 0.17677669
        %v2058 = vmul.f32 %v2026, 0.17677669
        %v2059 = vmul.f32 %v2049, 0.17677669
        %v2060 = vmul.f32 %v2051, 0.17677669
        %v2061 = vadd.f32 %v2053, %v1368
        %v2062 = vadd.f32 %v2054, %v1368
        %v2063 = vadd.f32 %v2055, %v1369
        %v2064 = vadd.f32 %v2056, %v1369
        %v2065 = vadd.f32 %v2057, %v1370
        %v2066 = vadd.f32 %v2058, %v1370
        %v2067 = vadd.f32 %v2059, %v1371
        %v2068 = vadd.f32 %v2060, %v1371
        %v2069 = vsel %vm1384, %v2061, -inf
        %2070 = vmax.xlane.f32.xlu0 %v2069
        %v2071 = vpop.xlane.xlu0 %2070
        %v2072 = vsel %vm1384, %v2062, -inf
        %2073 = vmax.xlane.f32.xlu0 %v2072
        %v2074 = vpop.xlane.xlu0 %2073
        %v2075 = vsel %vm1384, %v2063, -inf
        %2076 = vmax.xlane.f32.xlu0 %v2075
        %v2077 = vpop.xlane.xlu0 %2076
        %v2078 = vsel %vm1384, %v2064, -inf
        %2079 = vmax.xlane.f32.xlu0 %v2078
        %v2080 = vpop.xlane.xlu0 %2079
        %v2081 = vsel %vm1384, %v2065, -inf
        %2082 = vmax.xlane.f32.xlu0 %v2081
        %v2083 = vpop.xlane.xlu0 %2082
        %v2084 = vsel %vm1384, %v2066, -inf
        %2085 = vmax.xlane.f32.xlu0 %v2084
        %v2086 = vpop.xlane.xlu0 %2085
        %v2087 = vsel %vm1384, %v2067, -inf
        %2088 = vmax.xlane.f32.xlu0 %v2087
        %v2089 = vpop.xlane.xlu0 %2088
        %v2090 = vsel %vm1384, %v2068, -inf
        %2091 = vmax.xlane.f32.xlu0 %v2090
        %v2092 = vpop.xlane.xlu0 %2091
        %v2093 = vsub.f32 %v2061, %v2071
        %v2094 = vsub.f32 %v2062, %v2074
        %v2095 = vsub.f32 %v2063, %v2077
        %v2096 = vsub.f32 %v2064, %v2080
        %v2097 = vsub.f32 %v2065, %v2083
        %v2098 = vsub.f32 %v2066, %v2086
        %v2099 = vsub.f32 %v2067, %v2089
        %v2100 = vsub.f32 %v2068, %v2092
        %v2101 = vmul.f32 %v2093, 1.442695
        %v2102 = vpow.pop %v2101
        %v2103 = vmul.f32 %v2094, 1.442695
        %v2104 = vpow.pop %v2103
        %v2105 = vmul.f32 %v2095, 1.442695
        %v2106 = vpow.pop %v2105
        %v2107 = vmul.f32 %v2096, 1.442695
        %v2108 = vpow.pop %v2107
        %v2109 = vmul.f32 %v2097, 1.442695
        %v2110 = vpow.pop %v2109
        %v2111 = vmul.f32 %v2098, 1.442695
        %v2112 = vpow.pop %v2111
        %v2113 = vmul.f32 %v2099, 1.442695
        %v2114 = vpow.pop %v2113
        %v2115 = vmul.f32 %v2100, 1.442695
        %v2116 = vpow.pop %v2115
        %v2117 = vsel %vm1384, %v2102, 0.0
        %2118 = vadd.xlane.f32.xlu0 %v2117
        %v2119 = vpop.xlane.xlu0 %2118
        %v2120 = vsel %vm1384, %v2104, 0.0
        %2121 = vadd.xlane.f32.xlu0 %v2120
        %v2122 = vpop.xlane.xlu0 %2121
        %v2123 = vsel %vm1384, %v2106, 0.0
        %2124 = vadd.xlane.f32.xlu0 %v2123
        %v2125 = vpop.xlane.xlu0 %2124
        %v2126 = vsel %vm1384, %v2108, 0.0
        %2127 = vadd.xlane.f32.xlu0 %v2126
        %v2128 = vpop.xlane.xlu0 %2127
        %v2129 = vsel %vm1384, %v2110, 0.0
        %2130 = vadd.xlane.f32.xlu0 %v2129
        %v2131 = vpop.xlane.xlu0 %2130
        %v2132 = vsel %vm1384, %v2112, 0.0
        %2133 = vadd.xlane.f32.xlu0 %v2132
        %v2134 = vpop.xlane.xlu0 %2133
        %v2135 = vsel %vm1384, %v2114, 0.0
        %2136 = vadd.xlane.f32.xlu0 %v2135
        %v2137 = vpop.xlane.xlu0 %2136
        %v2138 = vsel %vm1384, %v2116, 0.0
        %2139 = vadd.xlane.f32.xlu0 %v2138
        %v2140 = vpop.xlane.xlu0 %2139
        %v2141 = vrcp.pop %v2119
        %v2142 = vrcp.pop %v2122
        %v2143 = vrcp.pop %v2125
        %v2144 = vrcp.pop %v2128
        %v2145 = vrcp.pop %v2131
        %v2146 = vrcp.pop %v2134
        %v2147 = vrcp.pop %v2137
        %v2148 = vrcp.pop %v2140
        %v2149 = vmul.f32 %v2102, %v2141
        %v2150 = vmul.f32 %v2104, %v2142
        %v2151 = vmul.f32 %v2106, %v2143
        %v2152 = vmul.f32 %v2108, %v2144
        %v2153 = vmul.f32 %v2110, %v2145
        %v2154 = vmul.f32 %v2112, %v2146
        %v2155 = vmul.f32 %v2114, %v2147
        %v2156 = vmul.f32 %v2116, %v2148
        %v2157 = vpack.c.bf16 %v2149, %v2149
        %v2158 = vpack.c.bf16 %v2150, %v2150
        %v2159 = vpack.c.bf16 %v2151, %v2151
        %v2160 = vpack.c.bf16 %v2152, %v2152
        %v2161 = vpack.c.bf16 %v2153, %v2153
        %v2162 = vpack.c.bf16 %v2154, %v2154
        %v2163 = vpack.c.bf16 %v2155, %v2155
        %v2164 = vpack.c.bf16 %v2156, %v2156
        %v2167 = vunpack.c.l.b16 %v2157
        %v2168 = vunpack.c.l.b16 %v2158
        %v2169 = vpack.c.b16 %v2168, %v2167
        %2170 = vrot.lane.b32.xlu0 %v1490, 64
        %v2171 = vpop.permute.xlu0 %2170
        %v2174 = vsel %vm1384, %v2169, 0
        %2176 = vmatpush.bf16.msra.mxu0 0
        %2177 = vmatpush.bf16.msra.mxu0 0
        %2178 = vmatpush.bf16.msra.mxu0 0
        %2179 = vmatpush.bf16.msra.mxu0 0
        %2180 = vmatpush.bf16.msra.mxu0 0
        %2181 = vmatpush.bf16.msra.mxu0 0
        %2182 = vmatpush.bf16.msra.mxu0 0
        %2183 = vmatpush.bf16.msra.mxu0 %v2171
        %2184 = vmatmul.bf16.gmra.mxu0 %v2174
        %v2185 = vpop.f32.mrf.mxu0
        %v2186 = vadd.f32 0.0, %v2185
        %v2187 = vpop.f32.mrf.mxu0
        %v2188 = vadd.f32 0.0, %v2187
        %2189 = vdwg.mxu0
        %v2192 = vunpack.c.l.b16 %v2159
        %v2193 = vunpack.c.l.b16 %v2160
        %v2194 = vpack.c.b16 %v2193, %v2192
        %2195 = vrot.lane.b32.xlu0 %v1518, 64
        %v2196 = vpop.permute.xlu0 %2195
        %v2199 = vsel %vm1384, %v2194, 0
        %2201 = vmatpush.bf16.msra.mxu0 0
        %2202 = vmatpush.bf16.msra.mxu0 0
        %2203 = vmatpush.bf16.msra.mxu0 0
        %2204 = vmatpush.bf16.msra.mxu0 0
        %2205 = vmatpush.bf16.msra.mxu0 0
        %2206 = vmatpush.bf16.msra.mxu0 0
        %2207 = vmatpush.bf16.msra.mxu0 0
        %2208 = vmatpush.bf16.msra.mxu0 %v2196
        %2209 = vmatmul.bf16.gmra.mxu0 %v2199
        %v2210 = vpop.f32.mrf.mxu0
        %v2211 = vadd.f32 0.0, %v2210
        %v2212 = vpop.f32.mrf.mxu0
        %v2213 = vadd.f32 0.0, %v2212
        %2214 = vdwg.mxu0
        %v2217 = vunpack.c.l.b16 %v2161
        %v2218 = vunpack.c.l.b16 %v2162
        %v2219 = vpack.c.b16 %v2218, %v2217
        %2220 = vrot.lane.b32.xlu0 %v1546, 64
        %v2221 = vpop.permute.xlu0 %2220
        %v2224 = vsel %vm1384, %v2219, 0
        %2226 = vmatpush.bf16.msra.mxu0 0
        %2227 = vmatpush.bf16.msra.mxu0 0
        %2228 = vmatpush.bf16.msra.mxu0 0
        %2229 = vmatpush.bf16.msra.mxu0 0
        %2230 = vmatpush.bf16.msra.mxu0 0
        %2231 = vmatpush.bf16.msra.mxu0 0
        %2232 = vmatpush.bf16.msra.mxu0 0
        %2233 = vmatpush.bf16.msra.mxu0 %v2221
        %2234 = vmatmul.bf16.gmra.mxu0 %v2224
        %v2235 = vpop.f32.mrf.mxu0
        %v2236 = vadd.f32 0.0, %v2235
        %v2237 = vpop.f32.mrf.mxu0
        %v2238 = vadd.f32 0.0, %v2237
        %2239 = vdwg.mxu0
        %v2242 = vunpack.c.l.b16 %v2163
        %v2243 = vunpack.c.l.b16 %v2164
        %v2244 = vpack.c.b16 %v2243, %v2242
        %2245 = vrot.lane.b32.xlu0 %v1574, 64
        %v2246 = vpop.permute.xlu0 %2245
        %v2249 = vsel %vm1384, %v2244, 0
        %2251 = vmatpush.bf16.msra.mxu0 0
        %2252 = vmatpush.bf16.msra.mxu0 0
        %2253 = vmatpush.bf16.msra.mxu0 0
        %2254 = vmatpush.bf16.msra.mxu0 0
        %2255 = vmatpush.bf16.msra.mxu0 0
        %2256 = vmatpush.bf16.msra.mxu0 0
        %2257 = vmatpush.bf16.msra.mxu0 0
        %2258 = vmatpush.bf16.msra.mxu0 %v2246
        %2259 = vmatmul.bf16.gmra.mxu0 %v2249
        %v2260 = vpop.f32.mrf.mxu0
        %v2261 = vadd.f32 0.0, %v2260
        %v2262 = vpop.f32.mrf.mxu0
        %v2263 = vadd.f32 0.0, %v2262
        %2264 = vdwg.mxu0
        %2265 = vrot.lane.b32.xlu0 %v1219, 32
        %v2266 = vpop.permute.xlu0 %2265
        %2267 = vrot.lane.b32.xlu0 %v1221, 32
        %v2268 = vpop.permute.xlu0 %2267
        %2269 = vrot.lane.b32.xlu0 %v1223, 32
        %v2270 = vpop.permute.xlu0 %2269
        %2271 = vrot.lane.b32.xlu0 %v1225, 32
        %v2272 = vpop.permute.xlu0 %2271
        %2273 = vrot.lane.b32.xlu0 %v1227, 32
        %v2274 = vpop.permute.xlu0 %2273
        %2275 = vrot.lane.b32.xlu0 %v1229, 32
        %v2276 = vpop.permute.xlu0 %2275
        %2277 = vrot.lane.b32.xlu0 %v1231, 32
        %v2278 = vpop.permute.xlu0 %2277
        %2279 = vrot.lane.b32.xlu0 %v1233, 32
        %v2280 = vpop.permute.xlu0 %2279
        %v2281 = vrot.slane %v2266, 4
        %v2282 = vrot.slane %v2268, 4
        %v2283 = vrot.slane %v2270, 4
        %v2284 = vrot.slane %v2272, 4
        %v2285 = vrot.slane %v2274, 4
        %v2286 = vrot.slane %v2276, 4
        %v2287 = vrot.slane %v2278, 4
        %v2288 = vrot.slane %v2280, 4
        %2289 = vrot.lane.b32.xlu0 %v1253, 32
        %v2290 = vpop.permute.xlu0 %2289
        %v2291 = vunpack.c.l.b16 %v2281
        %v2292 = vunpack.c.l.b16 %v2282
        %v2293 = vpack.c.b16 %v2292, %v2291
        %v2295 = vsel %vm1257, %v2290, 0
        %v2298 = vsel %vm1257, %v2293, 0
        %2300 = vmatpush.bf16.xpose.msra.mxu0 0
        %2301 = vmatpush.bf16.xpose.msra.mxu0 0
        %2302 = vmatpush.bf16.xpose.msra.mxu0 0
        %2303 = vmatpush.bf16.xpose.msra.mxu0 0
        %2304 = vmatpush.bf16.xpose.msra.mxu0 0
        %2305 = vmatpush.bf16.xpose.msra.mxu0 0
        %2306 = vmatpush.bf16.xpose.msra.mxu0 0
        %2307 = vmatpush.bf16.xpose.msra.mxu0 %v2298
        %2308 = vmatmul.bf16.gmra.mxu0 %v2295
        %v2309 = vpop.f32.mrf.mxu0
        %v2310 = vadd.f32 0.0, %v2309
        %v2311 = vpop.f32.mrf.mxu0
        %v2312 = vadd.f32 0.0, %v2311
        %2313 = vdwg.mxu0
        %2314 = vrot.lane.b32.xlu0 %v1280, 32
        %v2315 = vpop.permute.xlu0 %2314
        %v2316 = vunpack.c.l.b16 %v2283
        %v2317 = vunpack.c.l.b16 %v2284
        %v2318 = vpack.c.b16 %v2317, %v2316
        %v2320 = vsel %vm1257, %v2315, 0
        %v2323 = vsel %vm1257, %v2318, 0
        %2325 = vmatpush.bf16.xpose.msra.mxu0 0
        %2326 = vmatpush.bf16.xpose.msra.mxu0 0
        %2327 = vmatpush.bf16.xpose.msra.mxu0 0
        %2328 = vmatpush.bf16.xpose.msra.mxu0 0
        %2329 = vmatpush.bf16.xpose.msra.mxu0 0
        %2330 = vmatpush.bf16.xpose.msra.mxu0 0
        %2331 = vmatpush.bf16.xpose.msra.mxu0 0
        %2332 = vmatpush.bf16.xpose.msra.mxu0 %v2323
        %2333 = vmatmul.bf16.gmra.mxu0 %v2320
        %v2334 = vpop.f32.mrf.mxu0
        %v2335 = vadd.f32 0.0, %v2334
        %v2336 = vpop.f32.mrf.mxu0
        %v2337 = vadd.f32 0.0, %v2336
        %2338 = vdwg.mxu0
        %2339 = vrot.lane.b32.xlu0 %v1306, 32
        %v2340 = vpop.permute.xlu0 %2339
        %v2341 = vunpack.c.l.b16 %v2285
        %v2342 = vunpack.c.l.b16 %v2286
        %v2343 = vpack.c.b16 %v2342, %v2341
        %v2345 = vsel %vm1257, %v2340, 0
        %v2348 = vsel %vm1257, %v2343, 0
        %2350 = vmatpush.bf16.xpose.msra.mxu0 0
        %2351 = vmatpush.bf16.xpose.msra.mxu0 0
        %2352 = vmatpush.bf16.xpose.msra.mxu0 0
        %2353 = vmatpush.bf16.xpose.msra.mxu0 0
        %2354 = vmatpush.bf16.xpose.msra.mxu0 0
        %2355 = vmatpush.bf16.xpose.msra.mxu0 0
        %2356 = vmatpush.bf16.xpose.msra.mxu0 0
        %2357 = vmatpush.bf16.xpose.msra.mxu0 %v2348
        %2358 = vmatmul.bf16.gmra.mxu0 %v2345
        %v2359 = vpop.f32.mrf.mxu0
        %v2360 = vadd.f32 0.0, %v2359
        %v2361 = vpop.f32.mrf.mxu0
        %v2362 = vadd.f32 0.0, %v2361
        %2363 = vdwg.mxu0
        %2364 = vrot.lane.b32.xlu0 %v1332, 32
        %v2365 = vpop.permute.xlu0 %2364
        %v2366 = vunpack.c.l.b16 %v2287
        %v2367 = vunpack.c.l.b16 %v2288
        %v2368 = vpack.c.b16 %v2367, %v2366
        %v2370 = vsel %vm1257, %v2365, 0
        %v2373 = vsel %vm1257, %v2368, 0
        %2375 = vmatpush.bf16.xpose.msra.mxu0 0
        %2376 = vmatpush.bf16.xpose.msra.mxu0 0
        %2377 = vmatpush.bf16.xpose.msra.mxu0 0
        %2378 = vmatpush.bf16.xpose.msra.mxu0 0
        %2379 = vmatpush.bf16.xpose.msra.mxu0 0
        %2380 = vmatpush.bf16.xpose.msra.mxu0 0
        %2381 = vmatpush.bf16.xpose.msra.mxu0 0
        %2382 = vmatpush.bf16.xpose.msra.mxu0 %v2373
        %2383 = vmatmul.bf16.gmra.mxu0 %v2370
        %v2384 = vpop.f32.mrf.mxu0
        %v2385 = vadd.f32 0.0, %v2384
        %v2386 = vpop.f32.mrf.mxu0
        %v2387 = vadd.f32 0.0, %v2386
        %2388 = vdwg.mxu0
        %v2389 = vmul.f32 %v2310, 0.17677669
        %v2390 = vmul.f32 %v2312, 0.17677669
        %v2391 = vmul.f32 %v2335, 0.17677669
        %v2392 = vmul.f32 %v2337, 0.17677669
        %v2393 = vmul.f32 %v2360, 0.17677669
        %v2394 = vmul.f32 %v2362, 0.17677669
        %v2395 = vmul.f32 %v2385, 0.17677669
        %v2396 = vmul.f32 %v2387, 0.17677669
        %v2397 = vadd.f32 %v2389, %v1368
        %v2398 = vadd.f32 %v2390, %v1368
        %v2399 = vadd.f32 %v2391, %v1369
        %v2400 = vadd.f32 %v2392, %v1369
        %v2401 = vadd.f32 %v2393, %v1370
        %v2402 = vadd.f32 %v2394, %v1370
        %v2403 = vadd.f32 %v2395, %v1371
        %v2404 = vadd.f32 %v2396, %v1371
        %v2405 = vsel %vm1384, %v2397, -inf
        %2406 = vmax.xlane.f32.xlu0 %v2405
        %v2407 = vpop.xlane.xlu0 %2406
        %v2408 = vsel %vm1384, %v2398, -inf
        %2409 = vmax.xlane.f32.xlu0 %v2408
        %v2410 = vpop.xlane.xlu0 %2409
        %v2411 = vsel %vm1384, %v2399, -inf
        %2412 = vmax.xlane.f32.xlu0 %v2411
        %v2413 = vpop.xlane.xlu0 %2412
        %v2414 = vsel %vm1384, %v2400, -inf
        %2415 = vmax.xlane.f32.xlu0 %v2414
        %v2416 = vpop.xlane.xlu0 %2415
        %v2417 = vsel %vm1384, %v2401, -inf
        %2418 = vmax.xlane.f32.xlu0 %v2417
        %v2419 = vpop.xlane.xlu0 %2418
        %v2420 = vsel %vm1384, %v2402, -inf
        %2421 = vmax.xlane.f32.xlu0 %v2420
        %v2422 = vpop.xlane.xlu0 %2421
        %v2423 = vsel %vm1384, %v2403, -inf
        %2424 = vmax.xlane.f32.xlu0 %v2423
        %v2425 = vpop.xlane.xlu0 %2424
        %v2426 = vsel %vm1384, %v2404, -inf
        %2427 = vmax.xlane.f32.xlu0 %v2426
        %v2428 = vpop.xlane.xlu0 %2427
        %v2429 = vsub.f32 %v2397, %v2407
        %v2430 = vsub.f32 %v2398, %v2410
        %v2431 = vsub.f32 %v2399, %v2413
        %v2432 = vsub.f32 %v2400, %v2416
        %v2433 = vsub.f32 %v2401, %v2419
        %v2434 = vsub.f32 %v2402, %v2422
        %v2435 = vsub.f32 %v2403, %v2425
        %v2436 = vsub.f32 %v2404, %v2428
        %v2437 = vmul.f32 %v2429, 1.442695
        %v2438 = vpow.pop %v2437
        %v2439 = vmul.f32 %v2430, 1.442695
        %v2440 = vpow.pop %v2439
        %v2441 = vmul.f32 %v2431, 1.442695
        %v2442 = vpow.pop %v2441
        %v2443 = vmul.f32 %v2432, 1.442695
        %v2444 = vpow.pop %v2443
        %v2445 = vmul.f32 %v2433, 1.442695
        %v2446 = vpow.pop %v2445
        %v2447 = vmul.f32 %v2434, 1.442695
        %v2448 = vpow.pop %v2447
        %v2449 = vmul.f32 %v2435, 1.442695
        %v2450 = vpow.pop %v2449
        %v2451 = vmul.f32 %v2436, 1.442695
        %v2452 = vpow.pop %v2451
        %v2453 = vsel %vm1384, %v2438, 0.0
        %2454 = vadd.xlane.f32.xlu0 %v2453
        %v2455 = vpop.xlane.xlu0 %2454
        %v2456 = vsel %vm1384, %v2440, 0.0
        %2457 = vadd.xlane.f32.xlu0 %v2456
        %v2458 = vpop.xlane.xlu0 %2457
        %v2459 = vsel %vm1384, %v2442, 0.0
        %2460 = vadd.xlane.f32.xlu0 %v2459
        %v2461 = vpop.xlane.xlu0 %2460
        %v2462 = vsel %vm1384, %v2444, 0.0
        %2463 = vadd.xlane.f32.xlu0 %v2462
        %v2464 = vpop.xlane.xlu0 %2463
        %v2465 = vsel %vm1384, %v2446, 0.0
        %2466 = vadd.xlane.f32.xlu0 %v2465
        %v2467 = vpop.xlane.xlu0 %2466
        %v2468 = vsel %vm1384, %v2448, 0.0
        %2469 = vadd.xlane.f32.xlu0 %v2468
        %v2470 = vpop.xlane.xlu0 %2469
        %v2471 = vsel %vm1384, %v2450, 0.0
        %2472 = vadd.xlane.f32.xlu0 %v2471
        %v2473 = vpop.xlane.xlu0 %2472
        %v2474 = vsel %vm1384, %v2452, 0.0
        %2475 = vadd.xlane.f32.xlu0 %v2474
        %v2476 = vpop.xlane.xlu0 %2475
        %v2477 = vrcp.pop %v2455
        %v2478 = vrcp.pop %v2458
        %v2479 = vrcp.pop %v2461
        %v2480 = vrcp.pop %v2464
        %v2481 = vrcp.pop %v2467
        %v2482 = vrcp.pop %v2470
        %v2483 = vrcp.pop %v2473
        %v2484 = vrcp.pop %v2476
        %v2485 = vmul.f32 %v2438, %v2477
        %v2486 = vmul.f32 %v2440, %v2478
        %v2487 = vmul.f32 %v2442, %v2479
        %v2488 = vmul.f32 %v2444, %v2480
        %v2489 = vmul.f32 %v2446, %v2481
        %v2490 = vmul.f32 %v2448, %v2482
        %v2491 = vmul.f32 %v2450, %v2483
        %v2492 = vmul.f32 %v2452, %v2484
        %v2493 = vpack.c.bf16 %v2485, %v2485
        %v2494 = vpack.c.bf16 %v2486, %v2486
        %v2495 = vpack.c.bf16 %v2487, %v2487
        %v2496 = vpack.c.bf16 %v2488, %v2488
        %v2497 = vpack.c.bf16 %v2489, %v2489
        %v2498 = vpack.c.bf16 %v2490, %v2490
        %v2499 = vpack.c.bf16 %v2491, %v2491
        %v2500 = vpack.c.bf16 %v2492, %v2492
        %v2503 = vunpack.c.l.b16 %v2493
        %v2504 = vunpack.c.l.b16 %v2494
        %v2505 = vpack.c.b16 %v2504, %v2503
        %2506 = vrot.lane.b32.xlu0 %v1490, 32
        %v2507 = vpop.permute.xlu0 %2506
        %v2510 = vsel %vm1384, %v2505, 0
        %2512 = vmatpush.bf16.msra.mxu0 0
        %2513 = vmatpush.bf16.msra.mxu0 0
        %2514 = vmatpush.bf16.msra.mxu0 0
        %2515 = vmatpush.bf16.msra.mxu0 0
        %2516 = vmatpush.bf16.msra.mxu0 0
        %2517 = vmatpush.bf16.msra.mxu0 0
        %2518 = vmatpush.bf16.msra.mxu0 0
        %2519 = vmatpush.bf16.msra.mxu0 %v2507
        %2520 = vmatmul.bf16.gmra.mxu0 %v2510
        %v2521 = vpop.f32.mrf.mxu0
        %v2522 = vadd.f32 0.0, %v2521
        %v2523 = vpop.f32.mrf.mxu0
        %v2524 = vadd.f32 0.0, %v2523
        %2525 = vdwg.mxu0
        %v2528 = vunpack.c.l.b16 %v2495
        %v2529 = vunpack.c.l.b16 %v2496
        %v2530 = vpack.c.b16 %v2529, %v2528
        %2531 = vrot.lane.b32.xlu0 %v1518, 32
        %v2532 = vpop.permute.xlu0 %2531
        %v2535 = vsel %vm1384, %v2530, 0
        %2537 = vmatpush.bf16.msra.mxu0 0
        %2538 = vmatpush.bf16.msra.mxu0 0
        %2539 = vmatpush.bf16.msra.mxu0 0
        %2540 = vmatpush.bf16.msra.mxu0 0
        %2541 = vmatpush.bf16.msra.mxu0 0
        %2542 = vmatpush.bf16.msra.mxu0 0
        %2543 = vmatpush.bf16.msra.mxu0 0
        %2544 = vmatpush.bf16.msra.mxu0 %v2532
        %2545 = vmatmul.bf16.gmra.mxu0 %v2535
        %v2546 = vpop.f32.mrf.mxu0
        %v2547 = vadd.f32 0.0, %v2546
        %v2548 = vpop.f32.mrf.mxu0
        %v2549 = vadd.f32 0.0, %v2548
        %2550 = vdwg.mxu0
        %v2553 = vunpack.c.l.b16 %v2497
        %v2554 = vunpack.c.l.b16 %v2498
        %v2555 = vpack.c.b16 %v2554, %v2553
        %2556 = vrot.lane.b32.xlu0 %v1546, 32
        %v2557 = vpop.permute.xlu0 %2556
        %v2560 = vsel %vm1384, %v2555, 0
        %2562 = vmatpush.bf16.msra.mxu0 0
        %2563 = vmatpush.bf16.msra.mxu0 0
        %2564 = vmatpush.bf16.msra.mxu0 0
        %2565 = vmatpush.bf16.msra.mxu0 0
        %2566 = vmatpush.bf16.msra.mxu0 0
        %2567 = vmatpush.bf16.msra.mxu0 0
        %2568 = vmatpush.bf16.msra.mxu0 0
        %2569 = vmatpush.bf16.msra.mxu0 %v2557
        %2570 = vmatmul.bf16.gmra.mxu0 %v2560
        %v2571 = vpop.f32.mrf.mxu0
        %v2572 = vadd.f32 0.0, %v2571
        %v2573 = vpop.f32.mrf.mxu0
        %v2574 = vadd.f32 0.0, %v2573
        %2575 = vdwg.mxu0
        %v2578 = vunpack.c.l.b16 %v2499
        %v2579 = vunpack.c.l.b16 %v2500
        %v2580 = vpack.c.b16 %v2579, %v2578
        %2581 = vrot.lane.b32.xlu0 %v1574, 32
        %v2582 = vpop.permute.xlu0 %2581
        %v2585 = vsel %vm1384, %v2580, 0
        %2587 = vmatpush.bf16.msra.mxu0 0
        %2588 = vmatpush.bf16.msra.mxu0 0
        %2589 = vmatpush.bf16.msra.mxu0 0
        %2590 = vmatpush.bf16.msra.mxu0 0
        %2591 = vmatpush.bf16.msra.mxu0 0
        %2592 = vmatpush.bf16.msra.mxu0 0
        %2593 = vmatpush.bf16.msra.mxu0 0
        %2594 = vmatpush.bf16.msra.mxu0 %v2582
        %2595 = vmatmul.bf16.gmra.mxu0 %v2585
        %v2596 = vpop.f32.mrf.mxu0
        %v2597 = vadd.f32 0.0, %v2596
        %v2598 = vpop.f32.mrf.mxu0
        %v2599 = vadd.f32 0.0, %v2598
        %2600 = vdwg.mxu0
        %2609 = vrot.lane.b32.xlu0 %v1850, 32
        %v2610 = vpop.permute.xlu0 %2609
        %2611 = vrot.lane.b32.xlu0 %v1852, 32
        %v2612 = vpop.permute.xlu0 %2611
        %2613 = vrot.lane.b32.xlu0 %v1875, 32
        %v2614 = vpop.permute.xlu0 %2613
        %2615 = vrot.lane.b32.xlu0 %v1877, 32
        %v2616 = vpop.permute.xlu0 %2615
        %2617 = vrot.lane.b32.xlu0 %v1900, 32
        %v2618 = vpop.permute.xlu0 %2617
        %2619 = vrot.lane.b32.xlu0 %v1902, 32
        %v2620 = vpop.permute.xlu0 %2619
        %2621 = vrot.lane.b32.xlu0 %v1925, 32
        %v2622 = vpop.permute.xlu0 %2621
        %2623 = vrot.lane.b32.xlu0 %v1927, 32
        %v2624 = vpop.permute.xlu0 %2623
        %2641 = vrot.lane.b32.xlu0 %v2186, 64
        %v2642 = vpop.permute.xlu0 %2641
        %2643 = vrot.lane.b32.xlu0 %v2188, 64
        %v2644 = vpop.permute.xlu0 %2643
        %2645 = vrot.lane.b32.xlu0 %v2211, 64
        %v2646 = vpop.permute.xlu0 %2645
        %2647 = vrot.lane.b32.xlu0 %v2213, 64
        %v2648 = vpop.permute.xlu0 %2647
        %2649 = vrot.lane.b32.xlu0 %v2236, 64
        %v2650 = vpop.permute.xlu0 %2649
        %2651 = vrot.lane.b32.xlu0 %v2238, 64
        %v2652 = vpop.permute.xlu0 %2651
        %2653 = vrot.lane.b32.xlu0 %v2261, 64
        %v2654 = vpop.permute.xlu0 %2653
        %2655 = vrot.lane.b32.xlu0 %v2263, 64
        %v2656 = vpop.permute.xlu0 %2655
        %2673 = vrot.lane.b32.xlu0 %v2522, 96
        %v2674 = vpop.permute.xlu0 %2673
        %2675 = vrot.lane.b32.xlu0 %v2524, 96
        %v2676 = vpop.permute.xlu0 %2675
        %2677 = vrot.lane.b32.xlu0 %v2547, 96
        %v2678 = vpop.permute.xlu0 %2677
        %2679 = vrot.lane.b32.xlu0 %v2549, 96
        %v2680 = vpop.permute.xlu0 %2679
        %2681 = vrot.lane.b32.xlu0 %v2572, 96
        %v2682 = vpop.permute.xlu0 %2681
        %2683 = vrot.lane.b32.xlu0 %v2574, 96
        %v2684 = vpop.permute.xlu0 %2683
        %2685 = vrot.lane.b32.xlu0 %v2597, 96
        %v2686 = vpop.permute.xlu0 %2685
        %2687 = vrot.lane.b32.xlu0 %v2599, 96
        %v2688 = vpop.permute.xlu0 %2687
        %v2697 = vsel %vm1257, %v1505, %v2610
        %v2698 = vsel %vm1257, %v1507, %v2612
        %v2699 = vsel %vm1257, %v1533, %v2614
        %v2700 = vsel %vm1257, %v1535, %v2616
        %v2701 = vsel %vm1257, %v1561, %v2618
        %v2702 = vsel %vm1257, %v1563, %v2620
        %v2703 = vsel %vm1257, %v1589, %v2622
        %v2704 = vsel %vm1257, %v1591, %v2624
        %vm2705 = vcmask 523264
        %v2706 = vsel %vm2705, %v2697, %v2642
        %v2707 = vsel %vm2705, %v2698, %v2644
        %v2708 = vsel %vm2705, %v2699, %v2646
        %v2709 = vsel %vm2705, %v2700, %v2648
        %v2710 = vsel %vm2705, %v2701, %v2650
        %v2711 = vsel %vm2705, %v2702, %v2652
        %v2712 = vsel %vm2705, %v2703, %v2654
        %v2713 = vsel %vm2705, %v2704, %v2656
        %vm2714 = vcmask 785408
        %v2715 = vsel %vm2714, %v2706, %v2674
        %v2716 = vsel %vm2714, %v2707, %v2676
        %v2717 = vsel %vm2714, %v2708, %v2678
        %v2718 = vsel %vm2714, %v2709, %v2680
        %v2719 = vsel %vm2714, %v2710, %v2682
        %v2720 = vsel %vm2714, %v2711, %v2684
        %v2721 = vsel %vm2714, %v2712, %v2686
        %v2722 = vsel %vm2714, %v2713, %v2688
        %v2723 = vld [vmem:[%s6] sm:$0xf]
        %v2724 = vld [vmem:[%s6 + $0x4] sm:$0xf]
        %v2725 = vld [vmem:[%s6 + $0x8] sm:$0xf]
        %v2726 = vld [vmem:[%s6 + $0xc] sm:$0xf]
        %v2727 = vld [vmem:[%s6 + $0x10] sm:$0xf]
        %v2728 = vld [vmem:[%s6 + $0x14] sm:$0xf]
        %v2729 = vld [vmem:[%s6 + $0x18] sm:$0xf]
        %v2730 = vld [vmem:[%s6 + $0x1c] sm:$0xf]
        %v2731 = vld [vmem:[%s6 + $0x20] sm:$0xf]
        %v2732 = vld [vmem:[%s6 + $0x24] sm:$0xf]
        %v2733 = vld [vmem:[%s6 + $0x28] sm:$0xf]
        %v2734 = vld [vmem:[%s6 + $0x2c] sm:$0xf]
        %v2735 = vld [vmem:[%s6 + $0x30] sm:$0xf]
        %v2736 = vld [vmem:[%s6 + $0x34] sm:$0xf]
        %v2737 = vld [vmem:[%s6 + $0x38] sm:$0xf]
        %v2738 = vld [vmem:[%s6 + $0x3c] sm:$0xf]
        %v2739 = vpack.c.bf16 %v2716, %v2715
        %v2740 = vpack.c.bf16 %v2718, %v2717
        %v2741 = vpack.c.bf16 %v2720, %v2719
        %v2742 = vpack.c.bf16 %v2722, %v2721
        %v2743 = vld [vmem:[%s7] sm:$0x1]
        %v2745 = vperm.slane %v2743, 0
        %v2763 = vunpack.c.l.b16 %v2723
        %v2764 = vunpack.c.l.b16 %v2724
        %v2765 = vunpack.c.l.b16 %v2725
        %v2766 = vunpack.c.l.b16 %v2726
        %v2767 = vunpack.c.l.b16 %v2727
        %v2768 = vunpack.c.l.b16 %v2728
        %v2769 = vunpack.c.l.b16 %v2729
        %v2770 = vunpack.c.l.b16 %v2730
        %v2771 = vunpack.c.l.b16 %v2731
        %v2772 = vunpack.c.l.b16 %v2732
        %v2773 = vunpack.c.l.b16 %v2733
        %v2774 = vunpack.c.l.b16 %v2734
        %v2775 = vunpack.c.l.b16 %v2735
        %v2776 = vunpack.c.l.b16 %v2736
        %v2777 = vunpack.c.l.b16 %v2737
        %v2778 = vunpack.c.l.b16 %v2738
        %v2779 = vpack.c.b16 %v2764, %v2763
        %v2780 = vpack.c.b16 %v2766, %v2765
        %v2781 = vpack.c.b16 %v2768, %v2767
        %v2782 = vpack.c.b16 %v2770, %v2769
        %v2783 = vpack.c.b16 %v2772, %v2771
        %v2784 = vpack.c.b16 %v2774, %v2773
        %v2785 = vpack.c.b16 %v2776, %v2775
        %v2786 = vpack.c.b16 %v2778, %v2777
        %2795 = vmatpush.bf16.msra.mxu0 %v2786
        %2796 = vmatpush.bf16.msra.mxu0 %v2785
        %2797 = vmatpush.bf16.msra.mxu0 %v2784
        %2798 = vmatpush.bf16.msra.mxu0 %v2783
        %2799 = vmatpush.bf16.msra.mxu0 %v2782
        %2800 = vmatpush.bf16.msra.mxu0 %v2781
        %2801 = vmatpush.bf16.msra.mxu0 %v2780
        %2802 = vmatpush.bf16.msra.mxu0 %v2779
        %2803 = vmatmul.bf16.gmra.mxu0 %v2739
        %v2804 = vpop.f32.mrf.mxu0
        %v2805 = vadd.f32 %v2745, %v2804
        %v2806 = vpop.f32.mrf.mxu0
        %v2807 = vadd.f32 %v2745, %v2806
        %2808 = vmatmul.bf16.gmra.mxu0 %v2740
        %v2809 = vpop.f32.mrf.mxu0
        %v2810 = vadd.f32 %v2745, %v2809
        %v2811 = vpop.f32.mrf.mxu0
        %v2812 = vadd.f32 %v2745, %v2811
        %2813 = vmatmul.bf16.gmra.mxu0 %v2741
        %v2814 = vpop.f32.mrf.mxu0
        %v2815 = vadd.f32 %v2745, %v2814
        %v2816 = vpop.f32.mrf.mxu0
        %v2817 = vadd.f32 %v2745, %v2816
        %2818 = vmatmul.bf16.gmra.mxu0 %v2742
        %v2819 = vpop.f32.mrf.mxu0
        %v2820 = vadd.f32 %v2745, %v2819
        %v2821 = vpop.f32.mrf.mxu0
        %v2822 = vadd.f32 %v2745, %v2821
        %2823 = vdwg.mxu0
        %v2824 = vadd.f32 %v2805, %v952
        %v2825 = vadd.f32 %v2807, %v953
        %v2826 = vadd.f32 %v2810, %v954
        %v2827 = vadd.f32 %v2812, %v955
        %v2828 = vadd.f32 %v2815, %v956
        %v2829 = vadd.f32 %v2817, %v957
        %v2830 = vadd.f32 %v2820, %v958
        %v2831 = vadd.f32 %v2822, %v959
        %v2832 = vld [vmem:[%s8] sm:$0x1]
        %v2833 = vld [vmem:[%s9] sm:$0x1]
        %2834 = vadd.xlane.f32.xlu0 %v2824
        %v2835 = vpop.xlane.xlu0 %2834
        %2836 = vadd.xlane.f32.xlu0 %v2825
        %v2837 = vpop.xlane.xlu0 %2836
        %2838 = vadd.xlane.f32.xlu0 %v2826
        %v2839 = vpop.xlane.xlu0 %2838
        %2840 = vadd.xlane.f32.xlu0 %v2827
        %v2841 = vpop.xlane.xlu0 %2840
        %2842 = vadd.xlane.f32.xlu0 %v2828
        %v2843 = vpop.xlane.xlu0 %2842
        %2844 = vadd.xlane.f32.xlu0 %v2829
        %v2845 = vpop.xlane.xlu0 %2844
        %2846 = vadd.xlane.f32.xlu0 %v2830
        %v2847 = vpop.xlane.xlu0 %2846
        %2848 = vadd.xlane.f32.xlu0 %v2831
        %v2849 = vpop.xlane.xlu0 %2848
        %v2850 = vmul.f32 %v2835, %v793
        %v2851 = vmul.f32 %v2837, %v793
        %v2852 = vmul.f32 %v2839, %v793
        %v2853 = vmul.f32 %v2841, %v793
        %v2854 = vmul.f32 %v2843, %v793
        %v2855 = vmul.f32 %v2845, %v793
        %v2856 = vmul.f32 %v2847, %v793
        %v2857 = vmul.f32 %v2849, %v793
        %v2858 = vsub.f32 %v2824, %v2850
        %v2859 = vsub.f32 %v2825, %v2851
        %v2860 = vsub.f32 %v2826, %v2852
        %v2861 = vsub.f32 %v2827, %v2853
        %v2862 = vsub.f32 %v2828, %v2854
        %v2863 = vsub.f32 %v2829, %v2855
        %v2864 = vsub.f32 %v2830, %v2856
        %v2865 = vsub.f32 %v2831, %v2857
        %v2866 = vmul.f32 %v2858, %v2858
        %v2867 = vmul.f32 %v2859, %v2859
        %v2868 = vmul.f32 %v2860, %v2860
        %v2869 = vmul.f32 %v2861, %v2861
        %v2870 = vmul.f32 %v2862, %v2862
        %v2871 = vmul.f32 %v2863, %v2863
        %v2872 = vmul.f32 %v2864, %v2864
        %v2873 = vmul.f32 %v2865, %v2865
        %2874 = vadd.xlane.f32.xlu0 %v2866
        %v2875 = vpop.xlane.xlu0 %2874
        %2876 = vadd.xlane.f32.xlu0 %v2867
        %v2877 = vpop.xlane.xlu0 %2876
        %2878 = vadd.xlane.f32.xlu0 %v2868
        %v2879 = vpop.xlane.xlu0 %2878
        %2880 = vadd.xlane.f32.xlu0 %v2869
        %v2881 = vpop.xlane.xlu0 %2880
        %2882 = vadd.xlane.f32.xlu0 %v2870
        %v2883 = vpop.xlane.xlu0 %2882
        %2884 = vadd.xlane.f32.xlu0 %v2871
        %v2885 = vpop.xlane.xlu0 %2884
        %2886 = vadd.xlane.f32.xlu0 %v2872
        %v2887 = vpop.xlane.xlu0 %2886
        %2888 = vadd.xlane.f32.xlu0 %v2873
        %v2889 = vpop.xlane.xlu0 %2888
        %v2890 = vmul.f32 %v2875, %v793
        %v2891 = vmul.f32 %v2877, %v793
        %v2892 = vmul.f32 %v2879, %v793
        %v2893 = vmul.f32 %v2881, %v793
        %v2894 = vmul.f32 %v2883, %v793
        %v2895 = vmul.f32 %v2885, %v793
        %v2896 = vmul.f32 %v2887, %v793
        %v2897 = vmul.f32 %v2889, %v793
        %v2898 = vadd.f32 %v2890, 1e-12
        %v2899 = vadd.f32 %v2891, 1e-12
        %v2900 = vadd.f32 %v2892, 1e-12
        %v2901 = vadd.f32 %v2893, 1e-12
        %v2902 = vadd.f32 %v2894, 1e-12
        %v2903 = vadd.f32 %v2895, 1e-12
        %v2904 = vadd.f32 %v2896, 1e-12
        %v2905 = vadd.f32 %v2897, 1e-12
        %v2906 = vrsqrt.pop %v2898
        %v2907 = vmul.f32 %v2906, %v2898
        %v2908 = vmul.f32 %v2907, %v2906
        %v2909 = vmul.f32 0.5, %v2908
        %v2910 = vsub.f32 1.5, %v2909
        %v2911 = vmul.f32 %v2906, %v2910
        %vm2912 = vweird.f32 %v2898
        %vm2913 = vweird.f32 %v2906
        %vm2914 = vmor %vm2912, %vm2913
        %v2915 = vsel %vm2914, %v2906, %v2911
        %v2916 = vrsqrt.pop %v2899
        %v2917 = vmul.f32 %v2916, %v2899
        %v2918 = vmul.f32 %v2917, %v2916
        %v2919 = vmul.f32 0.5, %v2918
        %v2920 = vsub.f32 1.5, %v2919
        %v2921 = vmul.f32 %v2916, %v2920
        %vm2922 = vweird.f32 %v2899
        %vm2923 = vweird.f32 %v2916
        %vm2924 = vmor %vm2922, %vm2923
        %v2925 = vsel %vm2924, %v2916, %v2921
        %v2926 = vrsqrt.pop %v2900
        %v2927 = vmul.f32 %v2926, %v2900
        %v2928 = vmul.f32 %v2927, %v2926
        %v2929 = vmul.f32 0.5, %v2928
        %v2930 = vsub.f32 1.5, %v2929
        %v2931 = vmul.f32 %v2926, %v2930
        %vm2932 = vweird.f32 %v2900
        %vm2933 = vweird.f32 %v2926
        %vm2934 = vmor %vm2932, %vm2933
        %v2935 = vsel %vm2934, %v2926, %v2931
        %v2936 = vrsqrt.pop %v2901
        %v2937 = vmul.f32 %v2936, %v2901
        %v2938 = vmul.f32 %v2937, %v2936
        %v2939 = vmul.f32 0.5, %v2938
        %v2940 = vsub.f32 1.5, %v2939
        %v2941 = vmul.f32 %v2936, %v2940
        %vm2942 = vweird.f32 %v2901
        %vm2943 = vweird.f32 %v2936
        %vm2944 = vmor %vm2942, %vm2943
        %v2945 = vsel %vm2944, %v2936, %v2941
        %v2946 = vrsqrt.pop %v2902
        %v2947 = vmul.f32 %v2946, %v2902
        %v2948 = vmul.f32 %v2947, %v2946
        %v2949 = vmul.f32 0.5, %v2948
        %v2950 = vsub.f32 1.5, %v2949
        %v2951 = vmul.f32 %v2946, %v2950
        %vm2952 = vweird.f32 %v2902
        %vm2953 = vweird.f32 %v2946
        %vm2954 = vmor %vm2952, %vm2953
        %v2955 = vsel %vm2954, %v2946, %v2951
        %v2956 = vrsqrt.pop %v2903
        %v2957 = vmul.f32 %v2956, %v2903
        %v2958 = vmul.f32 %v2957, %v2956
        %v2959 = vmul.f32 0.5, %v2958
        %v2960 = vsub.f32 1.5, %v2959
        %v2961 = vmul.f32 %v2956, %v2960
        %vm2962 = vweird.f32 %v2903
        %vm2963 = vweird.f32 %v2956
        %vm2964 = vmor %vm2962, %vm2963
        %v2965 = vsel %vm2964, %v2956, %v2961
        %v2966 = vrsqrt.pop %v2904
        %v2967 = vmul.f32 %v2966, %v2904
        %v2968 = vmul.f32 %v2967, %v2966
        %v2969 = vmul.f32 0.5, %v2968
        %v2970 = vsub.f32 1.5, %v2969
        %v2971 = vmul.f32 %v2966, %v2970
        %vm2972 = vweird.f32 %v2904
        %vm2973 = vweird.f32 %v2966
        %vm2974 = vmor %vm2972, %vm2973
        %v2975 = vsel %vm2974, %v2966, %v2971
        %v2976 = vrsqrt.pop %v2905
        %v2977 = vmul.f32 %v2976, %v2905
        %v2978 = vmul.f32 %v2977, %v2976
        %v2979 = vmul.f32 0.5, %v2978
        %v2980 = vsub.f32 1.5, %v2979
        %v2981 = vmul.f32 %v2976, %v2980
        %vm2982 = vweird.f32 %v2905
        %vm2983 = vweird.f32 %v2976
        %vm2984 = vmor %vm2982, %vm2983
        %v2985 = vsel %vm2984, %v2976, %v2981
        %v2986 = vmul.f32 %v2858, %v2915
        %v2987 = vmul.f32 %v2859, %v2925
        %v2988 = vmul.f32 %v2860, %v2935
        %v2989 = vmul.f32 %v2861, %v2945
        %v2990 = vmul.f32 %v2862, %v2955
        %v2991 = vmul.f32 %v2863, %v2965
        %v2992 = vmul.f32 %v2864, %v2975
        %v2993 = vmul.f32 %v2865, %v2985
        %v2995 = vperm.slane %v2832, 0
        %v2997 = vmul.f32 %v2986, %v2995
        %v2998 = vmul.f32 %v2987, %v2995
        %v2999 = vmul.f32 %v2988, %v2995
        %v3000 = vmul.f32 %v2989, %v2995
        %v3001 = vmul.f32 %v2990, %v2995
        %v3002 = vmul.f32 %v2991, %v2995
        %v3003 = vmul.f32 %v2992, %v2995
        %v3004 = vmul.f32 %v2993, %v2995
        %v3006 = vperm.slane %v2833, 0
        %v3008 = vadd.f32 %v2997, %v3006
        %v3009 = vadd.f32 %v2998, %v3006
        %v3010 = vadd.f32 %v2999, %v3006
        %v3011 = vadd.f32 %v3000, %v3006
        %v3012 = vadd.f32 %v3001, %v3006
        %v3013 = vadd.f32 %v3002, %v3006
        %v3014 = vadd.f32 %v3003, %v3006
        %v3015 = vadd.f32 %v3004, %v3006
        %v3016 = vld [vmem:[%s10] sm:$0xff]
        %v3017 = vld [vmem:[%s10 + $0x8] sm:$0xff]
        %v3018 = vld [vmem:[%s10 + $0x10] sm:$0xff]
        %v3019 = vld [vmem:[%s10 + $0x18] sm:$0xff]
        %v3020 = vld [vmem:[%s10 + $0x20] sm:$0xff]
        %v3021 = vld [vmem:[%s10 + $0x28] sm:$0xff]
        %v3022 = vld [vmem:[%s10 + $0x30] sm:$0xff]
        %v3023 = vld [vmem:[%s10 + $0x38] sm:$0xff]
        %v3024 = vld [vmem:[%s10 + $0x40] sm:$0xff]
        %v3025 = vld [vmem:[%s10 + $0x48] sm:$0xff]
        %v3026 = vld [vmem:[%s10 + $0x50] sm:$0xff]
        %v3027 = vld [vmem:[%s10 + $0x58] sm:$0xff]
        %v3028 = vld [vmem:[%s10 + $0x60] sm:$0xff]
        %v3029 = vld [vmem:[%s10 + $0x68] sm:$0xff]
        %v3030 = vld [vmem:[%s10 + $0x70] sm:$0xff]
        %v3031 = vld [vmem:[%s10 + $0x78] sm:$0xff]
        %v3032 = vld [vmem:[%s10 + $0x80] sm:$0xff]
        %v3033 = vld [vmem:[%s10 + $0x88] sm:$0xff]
        %v3034 = vld [vmem:[%s10 + $0x90] sm:$0xff]
        %v3035 = vld [vmem:[%s10 + $0x98] sm:$0xff]
        %v3036 = vld [vmem:[%s10 + $0xa0] sm:$0xff]
        %v3037 = vld [vmem:[%s10 + $0xa8] sm:$0xff]
        %v3038 = vld [vmem:[%s10 + $0xb0] sm:$0xff]
        %v3039 = vld [vmem:[%s10 + $0xb8] sm:$0xff]
        %v3040 = vld [vmem:[%s10 + $0xc0] sm:$0xff]
        %v3041 = vld [vmem:[%s10 + $0xc8] sm:$0xff]
        %v3042 = vld [vmem:[%s10 + $0xd0] sm:$0xff]
        %v3043 = vld [vmem:[%s10 + $0xd8] sm:$0xff]
        %v3044 = vld [vmem:[%s10 + $0xe0] sm:$0xff]
        %v3045 = vld [vmem:[%s10 + $0xe8] sm:$0xff]
        %v3046 = vld [vmem:[%s10 + $0xf0] sm:$0xff]
        %v3047 = vld [vmem:[%s10 + $0xf8] sm:$0xff]
        %v3048 = vpack.c.bf16 %v3009, %v3008
        %v3049 = vpack.c.bf16 %v3011, %v3010
        %v3050 = vpack.c.bf16 %v3013, %v3012
        %v3051 = vpack.c.bf16 %v3015, %v3014
        %v3052 = vld [vmem:[%s11] sm:$0xf]
        %v3054 = vperm.slane %v3052, 0
        %v3055 = vperm.slane %v3052, 1
        %v3056 = vperm.slane %v3052, 2
        %v3057 = vperm.slane %v3052, 3
        %v3094 = vunpack.c.l.b16 %v3016
        %v3095 = vunpack.c.h.b16 %v3016
        %v3096 = vunpack.c.l.b16 %v3017
        %v3097 = vunpack.c.h.b16 %v3017
        %v3098 = vunpack.c.l.b16 %v3018
        %v3099 = vunpack.c.h.b16 %v3018
        %v3100 = vunpack.c.l.b16 %v3019
        %v3101 = vunpack.c.h.b16 %v3019
        %v3102 = vunpack.c.l.b16 %v3020
        %v3103 = vunpack.c.h.b16 %v3020
        %v3104 = vunpack.c.l.b16 %v3021
        %v3105 = vunpack.c.h.b16 %v3021
        %v3106 = vunpack.c.l.b16 %v3022
        %v3107 = vunpack.c.h.b16 %v3022
        %v3108 = vunpack.c.l.b16 %v3023
        %v3109 = vunpack.c.h.b16 %v3023
        %v3110 = vunpack.c.l.b16 %v3024
        %v3111 = vunpack.c.h.b16 %v3024
        %v3112 = vunpack.c.l.b16 %v3025
        %v3113 = vunpack.c.h.b16 %v3025
        %v3114 = vunpack.c.l.b16 %v3026
        %v3115 = vunpack.c.h.b16 %v3026
        %v3116 = vunpack.c.l.b16 %v3027
        %v3117 = vunpack.c.h.b16 %v3027
        %v3118 = vunpack.c.l.b16 %v3028
        %v3119 = vunpack.c.h.b16 %v3028
        %v3120 = vunpack.c.l.b16 %v3029
        %v3121 = vunpack.c.h.b16 %v3029
        %v3122 = vunpack.c.l.b16 %v3030
        %v3123 = vunpack.c.h.b16 %v3030
        %v3124 = vunpack.c.l.b16 %v3031
        %v3125 = vunpack.c.h.b16 %v3031
        %v3126 = vunpack.c.l.b16 %v3032
        %v3127 = vunpack.c.h.b16 %v3032
        %v3128 = vunpack.c.l.b16 %v3033
        %v3129 = vunpack.c.h.b16 %v3033
        %v3130 = vunpack.c.l.b16 %v3034
        %v3131 = vunpack.c.h.b16 %v3034
        %v3132 = vunpack.c.l.b16 %v3035
        %v3133 = vunpack.c.h.b16 %v3035
        %v3134 = vunpack.c.l.b16 %v3036
        %v3135 = vunpack.c.h.b16 %v3036
        %v3136 = vunpack.c.l.b16 %v3037
        %v3137 = vunpack.c.h.b16 %v3037
        %v3138 = vunpack.c.l.b16 %v3038
        %v3139 = vunpack.c.h.b16 %v3038
        %v3140 = vunpack.c.l.b16 %v3039
        %v3141 = vunpack.c.h.b16 %v3039
        %v3142 = vunpack.c.l.b16 %v3040
        %v3143 = vunpack.c.h.b16 %v3040
        %v3144 = vunpack.c.l.b16 %v3041
        %v3145 = vunpack.c.h.b16 %v3041
        %v3146 = vunpack.c.l.b16 %v3042
        %v3147 = vunpack.c.h.b16 %v3042
        %v3148 = vunpack.c.l.b16 %v3043
        %v3149 = vunpack.c.h.b16 %v3043
        %v3150 = vunpack.c.l.b16 %v3044
        %v3151 = vunpack.c.h.b16 %v3044
        %v3152 = vunpack.c.l.b16 %v3045
        %v3153 = vunpack.c.h.b16 %v3045
        %v3154 = vunpack.c.l.b16 %v3046
        %v3155 = vunpack.c.h.b16 %v3046
        %v3156 = vunpack.c.l.b16 %v3047
        %v3157 = vunpack.c.h.b16 %v3047
        %v3158 = vpack.c.b16 %v3098, %v3094
        %v3159 = vpack.c.b16 %v3099, %v3095
        %v3160 = vpack.c.b16 %v3100, %v3096
        %v3161 = vpack.c.b16 %v3101, %v3097
        %v3162 = vpack.c.b16 %v3106, %v3102
        %v3163 = vpack.c.b16 %v3107, %v3103
        %v3164 = vpack.c.b16 %v3108, %v3104
        %v3165 = vpack.c.b16 %v3109, %v3105
        %v3166 = vpack.c.b16 %v3114, %v3110
        %v3167 = vpack.c.b16 %v3115, %v3111
        %v3168 = vpack.c.b16 %v3116, %v3112
        %v3169 = vpack.c.b16 %v3117, %v3113
        %v3170 = vpack.c.b16 %v3122, %v3118
        %v3171 = vpack.c.b16 %v3123, %v3119
        %v3172 = vpack.c.b16 %v3124, %v3120
        %v3173 = vpack.c.b16 %v3125, %v3121
        %v3174 = vpack.c.b16 %v3130, %v3126
        %v3175 = vpack.c.b16 %v3131, %v3127
        %v3176 = vpack.c.b16 %v3132, %v3128
        %v3177 = vpack.c.b16 %v3133, %v3129
        %v3178 = vpack.c.b16 %v3138, %v3134
        %v3179 = vpack.c.b16 %v3139, %v3135
        %v3180 = vpack.c.b16 %v3140, %v3136
        %v3181 = vpack.c.b16 %v3141, %v3137
        %v3182 = vpack.c.b16 %v3146, %v3142
        %v3183 = vpack.c.b16 %v3147, %v3143
        %v3184 = vpack.c.b16 %v3148, %v3144
        %v3185 = vpack.c.b16 %v3149, %v3145
        %v3186 = vpack.c.b16 %v3154, %v3150
        %v3187 = vpack.c.b16 %v3155, %v3151
        %v3188 = vpack.c.b16 %v3156, %v3152
        %v3189 = vpack.c.b16 %v3157, %v3153
        %3222 = vmatpush.bf16.msra.mxu0 %v3186
        %3223 = vmatpush.bf16.msra.mxu0 %v3182
        %3224 = vmatpush.bf16.msra.mxu0 %v3178
        %3225 = vmatpush.bf16.msra.mxu0 %v3174
        %3226 = vmatpush.bf16.msra.mxu0 %v3170
        %3227 = vmatpush.bf16.msra.mxu0 %v3166
        %3228 = vmatpush.bf16.msra.mxu0 %v3162
        %3229 = vmatpush.bf16.msra.mxu0 %v3158
        %3230 = vmatmul.bf16.gmra.mxu0 %v3048
        %v3231 = vpop.f32.mrf.mxu0
        %v3232 = vadd.f32 %v3054, %v3231
        %v3233 = vpop.f32.mrf.mxu0
        %v3234 = vadd.f32 %v3054, %v3233
        %3235 = vmatmul.bf16.gmra.mxu0 %v3049
        %v3236 = vpop.f32.mrf.mxu0
        %v3237 = vadd.f32 %v3054, %v3236
        %v3238 = vpop.f32.mrf.mxu0
        %v3239 = vadd.f32 %v3054, %v3238
        %3240 = vmatmul.bf16.gmra.mxu0 %v3050
        %v3241 = vpop.f32.mrf.mxu0
        %v3242 = vadd.f32 %v3054, %v3241
        %v3243 = vpop.f32.mrf.mxu0
        %v3244 = vadd.f32 %v3054, %v3243
        %3245 = vmatmul.bf16.gmra.mxu0 %v3051
        %v3246 = vpop.f32.mrf.mxu0
        %v3247 = vadd.f32 %v3054, %v3246
        %v3248 = vpop.f32.mrf.mxu0
        %v3249 = vadd.f32 %v3054, %v3248
        %3250 = vdwg.mxu0
        %3251 = vmatpush.bf16.msra.mxu0 %v3187
        %3252 = vmatpush.bf16.msra.mxu0 %v3183
        %3253 = vmatpush.bf16.msra.mxu0 %v3179
        %3254 = vmatpush.bf16.msra.mxu0 %v3175
        %3255 = vmatpush.bf16.msra.mxu0 %v3171
        %3256 = vmatpush.bf16.msra.mxu0 %v3167
        %3257 = vmatpush.bf16.msra.mxu0 %v3163
        %3258 = vmatpush.bf16.msra.mxu0 %v3159
        %3259 = vmatmul.bf16.gmra.mxu0 %v3048
        %v3260 = vpop.f32.mrf.mxu0
        %v3261 = vadd.f32 %v3055, %v3260
        %v3262 = vpop.f32.mrf.mxu0
        %v3263 = vadd.f32 %v3055, %v3262
        %3264 = vmatmul.bf16.gmra.mxu0 %v3049
        %v3265 = vpop.f32.mrf.mxu0
        %v3266 = vadd.f32 %v3055, %v3265
        %v3267 = vpop.f32.mrf.mxu0
        %v3268 = vadd.f32 %v3055, %v3267
        %3269 = vmatmul.bf16.gmra.mxu0 %v3050
        %v3270 = vpop.f32.mrf.mxu0
        %v3271 = vadd.f32 %v3055, %v3270
        %v3272 = vpop.f32.mrf.mxu0
        %v3273 = vadd.f32 %v3055, %v3272
        %3274 = vmatmul.bf16.gmra.mxu0 %v3051
        %v3275 = vpop.f32.mrf.mxu0
        %v3276 = vadd.f32 %v3055, %v3275
        %v3277 = vpop.f32.mrf.mxu0
        %v3278 = vadd.f32 %v3055, %v3277
        %3279 = vdwg.mxu0
        %3280 = vmatpush.bf16.msra.mxu0 %v3188
        %3281 = vmatpush.bf16.msra.mxu0 %v3184
        %3282 = vmatpush.bf16.msra.mxu0 %v3180
        %3283 = vmatpush.bf16.msra.mxu0 %v3176
        %3284 = vmatpush.bf16.msra.mxu0 %v3172
        %3285 = vmatpush.bf16.msra.mxu0 %v3168
        %3286 = vmatpush.bf16.msra.mxu0 %v3164
        %3287 = vmatpush.bf16.msra.mxu0 %v3160
        %3288 = vmatmul.bf16.gmra.mxu0 %v3048
        %v3289 = vpop.f32.mrf.mxu0
        %v3290 = vadd.f32 %v3056, %v3289
        %v3291 = vpop.f32.mrf.mxu0
        %v3292 = vadd.f32 %v3056, %v3291
        %3293 = vmatmul.bf16.gmra.mxu0 %v3049
        %v3294 = vpop.f32.mrf.mxu0
        %v3295 = vadd.f32 %v3056, %v3294
        %v3296 = vpop.f32.mrf.mxu0
        %v3297 = vadd.f32 %v3056, %v3296
        %3298 = vmatmul.bf16.gmra.mxu0 %v3050
        %v3299 = vpop.f32.mrf.mxu0
        %v3300 = vadd.f32 %v3056, %v3299
        %v3301 = vpop.f32.mrf.mxu0
        %v3302 = vadd.f32 %v3056, %v3301
        %3303 = vmatmul.bf16.gmra.mxu0 %v3051
        %v3304 = vpop.f32.mrf.mxu0
        %v3305 = vadd.f32 %v3056, %v3304
        %v3306 = vpop.f32.mrf.mxu0
        %v3307 = vadd.f32 %v3056, %v3306
        %3308 = vdwg.mxu0
        %3309 = vmatpush.bf16.msra.mxu0 %v3189
        %3310 = vmatpush.bf16.msra.mxu0 %v3185
        %3311 = vmatpush.bf16.msra.mxu0 %v3181
        %3312 = vmatpush.bf16.msra.mxu0 %v3177
        %3313 = vmatpush.bf16.msra.mxu0 %v3173
        %3314 = vmatpush.bf16.msra.mxu0 %v3169
        %3315 = vmatpush.bf16.msra.mxu0 %v3165
        %3316 = vmatpush.bf16.msra.mxu0 %v3161
        %3317 = vmatmul.bf16.gmra.mxu0 %v3048
        %v3318 = vpop.f32.mrf.mxu0
        %v3319 = vadd.f32 %v3057, %v3318
        %v3320 = vpop.f32.mrf.mxu0
        %v3321 = vadd.f32 %v3057, %v3320
        %3322 = vmatmul.bf16.gmra.mxu0 %v3049
        %v3323 = vpop.f32.mrf.mxu0
        %v3324 = vadd.f32 %v3057, %v3323
        %v3325 = vpop.f32.mrf.mxu0
        %v3326 = vadd.f32 %v3057, %v3325
        %3327 = vmatmul.bf16.gmra.mxu0 %v3050
        %v3328 = vpop.f32.mrf.mxu0
        %v3329 = vadd.f32 %v3057, %v3328
        %v3330 = vpop.f32.mrf.mxu0
        %v3331 = vadd.f32 %v3057, %v3330
        %3332 = vmatmul.bf16.gmra.mxu0 %v3051
        %v3333 = vpop.f32.mrf.mxu0
        %v3334 = vadd.f32 %v3057, %v3333
        %v3335 = vpop.f32.mrf.mxu0
        %v3336 = vadd.f32 %v3057, %v3335
        %3337 = vdwg.mxu0
        %v3338 = vmul.f32 %v3232, 0.5
        %v3339 = vmul.f32 %v3261, 0.5
        %v3340 = vmul.f32 %v3290, 0.5
        %v3341 = vmul.f32 %v3319, 0.5
        %v3342 = vmul.f32 %v3234, 0.5
        %v3343 = vmul.f32 %v3263, 0.5
        %v3344 = vmul.f32 %v3292, 0.5
        %v3345 = vmul.f32 %v3321, 0.5
        %v3346 = vmul.f32 %v3237, 0.5
        %v3347 = vmul.f32 %v3266, 0.5
        %v3348 = vmul.f32 %v3295, 0.5
        %v3349 = vmul.f32 %v3324, 0.5
        %v3350 = vmul.f32 %v3239, 0.5
        %v3351 = vmul.f32 %v3268, 0.5
        %v3352 = vmul.f32 %v3297, 0.5
        %v3353 = vmul.f32 %v3326, 0.5
        %v3354 = vmul.f32 %v3242, 0.5
        %v3355 = vmul.f32 %v3271, 0.5
        %v3356 = vmul.f32 %v3300, 0.5
        %v3357 = vmul.f32 %v3329, 0.5
        %v3358 = vmul.f32 %v3244, 0.5
        %v3359 = vmul.f32 %v3273, 0.5
        %v3360 = vmul.f32 %v3302, 0.5
        %v3361 = vmul.f32 %v3331, 0.5
        %v3362 = vmul.f32 %v3247, 0.5
        %v3363 = vmul.f32 %v3276, 0.5
        %v3364 = vmul.f32 %v3305, 0.5
        %v3365 = vmul.f32 %v3334, 0.5
        %v3366 = vmul.f32 %v3249, 0.5
        %v3367 = vmul.f32 %v3278, 0.5
        %v3368 = vmul.f32 %v3307, 0.5
        %v3369 = vmul.f32 %v3336, 0.5
        %v3370 = vmul.f32 %v3232, 0.044715
        %v3371 = vmul.f32 %v3261, 0.044715
        %v3372 = vmul.f32 %v3290, 0.044715
        %v3373 = vmul.f32 %v3319, 0.044715
        %v3374 = vmul.f32 %v3234, 0.044715
        %v3375 = vmul.f32 %v3263, 0.044715
        %v3376 = vmul.f32 %v3292, 0.044715
        %v3377 = vmul.f32 %v3321, 0.044715
        %v3378 = vmul.f32 %v3237, 0.044715
        %v3379 = vmul.f32 %v3266, 0.044715
        %v3380 = vmul.f32 %v3295, 0.044715
        %v3381 = vmul.f32 %v3324, 0.044715
        %v3382 = vmul.f32 %v3239, 0.044715
        %v3383 = vmul.f32 %v3268, 0.044715
        %v3384 = vmul.f32 %v3297, 0.044715
        %v3385 = vmul.f32 %v3326, 0.044715
        %v3386 = vmul.f32 %v3242, 0.044715
        %v3387 = vmul.f32 %v3271, 0.044715
        %v3388 = vmul.f32 %v3300, 0.044715
        %v3389 = vmul.f32 %v3329, 0.044715
        %v3390 = vmul.f32 %v3244, 0.044715
        %v3391 = vmul.f32 %v3273, 0.044715
        %v3392 = vmul.f32 %v3302, 0.044715
        %v3393 = vmul.f32 %v3331, 0.044715
        %v3394 = vmul.f32 %v3247, 0.044715
        %v3395 = vmul.f32 %v3276, 0.044715
        %v3396 = vmul.f32 %v3305, 0.044715
        %v3397 = vmul.f32 %v3334, 0.044715
        %v3398 = vmul.f32 %v3249, 0.044715
        %v3399 = vmul.f32 %v3278, 0.044715
        %v3400 = vmul.f32 %v3307, 0.044715
        %v3401 = vmul.f32 %v3336, 0.044715
        %v3402 = vmul.f32 %v3370, %v3232
        %v3403 = vmul.f32 %v3371, %v3261
        %v3404 = vmul.f32 %v3372, %v3290
        %v3405 = vmul.f32 %v3373, %v3319
        %v3406 = vmul.f32 %v3374, %v3234
        %v3407 = vmul.f32 %v3375, %v3263
        %v3408 = vmul.f32 %v3376, %v3292
        %v3409 = vmul.f32 %v3377, %v3321
        %v3410 = vmul.f32 %v3378, %v3237
        %v3411 = vmul.f32 %v3379, %v3266
        %v3412 = vmul.f32 %v3380, %v3295
        %v3413 = vmul.f32 %v3381, %v3324
        %v3414 = vmul.f32 %v3382, %v3239
        %v3415 = vmul.f32 %v3383, %v3268
        %v3416 = vmul.f32 %v3384, %v3297
        %v3417 = vmul.f32 %v3385, %v3326
        %v3418 = vmul.f32 %v3386, %v3242
        %v3419 = vmul.f32 %v3387, %v3271
        %v3420 = vmul.f32 %v3388, %v3300
        %v3421 = vmul.f32 %v3389, %v3329
        %v3422 = vmul.f32 %v3390, %v3244
        %v3423 = vmul.f32 %v3391, %v3273
        %v3424 = vmul.f32 %v3392, %v3302
        %v3425 = vmul.f32 %v3393, %v3331
        %v3426 = vmul.f32 %v3394, %v3247
        %v3427 = vmul.f32 %v3395, %v3276
        %v3428 = vmul.f32 %v3396, %v3305
        %v3429 = vmul.f32 %v3397, %v3334
        %v3430 = vmul.f32 %v3398, %v3249
        %v3431 = vmul.f32 %v3399, %v3278
        %v3432 = vmul.f32 %v3400, %v3307
        %v3433 = vmul.f32 %v3401, %v3336
        %v3434 = vmul.f32 %v3402, %v3232
        %v3435 = vmul.f32 %v3403, %v3261
        %v3436 = vmul.f32 %v3404, %v3290
        %v3437 = vmul.f32 %v3405, %v3319
        %v3438 = vmul.f32 %v3406, %v3234
        %v3439 = vmul.f32 %v3407, %v3263
        %v3440 = vmul.f32 %v3408, %v3292
        %v3441 = vmul.f32 %v3409, %v3321
        %v3442 = vmul.f32 %v3410, %v3237
        %v3443 = vmul.f32 %v3411, %v3266
        %v3444 = vmul.f32 %v3412, %v3295
        %v3445 = vmul.f32 %v3413, %v3324
        %v3446 = vmul.f32 %v3414, %v3239
        %v3447 = vmul.f32 %v3415, %v3268
        %v3448 = vmul.f32 %v3416, %v3297
        %v3449 = vmul.f32 %v3417, %v3326
        %v3450 = vmul.f32 %v3418, %v3242
        %v3451 = vmul.f32 %v3419, %v3271
        %v3452 = vmul.f32 %v3420, %v3300
        %v3453 = vmul.f32 %v3421, %v3329
        %v3454 = vmul.f32 %v3422, %v3244
        %v3455 = vmul.f32 %v3423, %v3273
        %v3456 = vmul.f32 %v3424, %v3302
        %v3457 = vmul.f32 %v3425, %v3331
        %v3458 = vmul.f32 %v3426, %v3247
        %v3459 = vmul.f32 %v3427, %v3276
        %v3460 = vmul.f32 %v3428, %v3305
        %v3461 = vmul.f32 %v3429, %v3334
        %v3462 = vmul.f32 %v3430, %v3249
        %v3463 = vmul.f32 %v3431, %v3278
        %v3464 = vmul.f32 %v3432, %v3307
        %v3465 = vmul.f32 %v3433, %v3336
        %v3466 = vadd.f32 %v3232, %v3434
        %v3467 = vadd.f32 %v3261, %v3435
        %v3468 = vadd.f32 %v3290, %v3436
        %v3469 = vadd.f32 %v3319, %v3437
        %v3470 = vadd.f32 %v3234, %v3438
        %v3471 = vadd.f32 %v3263, %v3439
        %v3472 = vadd.f32 %v3292, %v3440
        %v3473 = vadd.f32 %v3321, %v3441
        %v3474 = vadd.f32 %v3237, %v3442
        %v3475 = vadd.f32 %v3266, %v3443
        %v3476 = vadd.f32 %v3295, %v3444
        %v3477 = vadd.f32 %v3324, %v3445
        %v3478 = vadd.f32 %v3239, %v3446
        %v3479 = vadd.f32 %v3268, %v3447
        %v3480 = vadd.f32 %v3297, %v3448
        %v3481 = vadd.f32 %v3326, %v3449
        %v3482 = vadd.f32 %v3242, %v3450
        %v3483 = vadd.f32 %v3271, %v3451
        %v3484 = vadd.f32 %v3300, %v3452
        %v3485 = vadd.f32 %v3329, %v3453
        %v3486 = vadd.f32 %v3244, %v3454
        %v3487 = vadd.f32 %v3273, %v3455
        %v3488 = vadd.f32 %v3302, %v3456
        %v3489 = vadd.f32 %v3331, %v3457
        %v3490 = vadd.f32 %v3247, %v3458
        %v3491 = vadd.f32 %v3276, %v3459
        %v3492 = vadd.f32 %v3305, %v3460
        %v3493 = vadd.f32 %v3334, %v3461
        %v3494 = vadd.f32 %v3249, %v3462
        %v3495 = vadd.f32 %v3278, %v3463
        %v3496 = vadd.f32 %v3307, %v3464
        %v3497 = vadd.f32 %v3336, %v3465
        %v3498 = vmul.f32 %v3466, 0.7978846
        %v3499 = vmul.f32 %v3467, 0.7978846
        %v3500 = vmul.f32 %v3468, 0.7978846
        %v3501 = vmul.f32 %v3469, 0.7978846
        %v3502 = vmul.f32 %v3470, 0.7978846
        %v3503 = vmul.f32 %v3471, 0.7978846
        %v3504 = vmul.f32 %v3472, 0.7978846
        %v3505 = vmul.f32 %v3473, 0.7978846
        %v3506 = vmul.f32 %v3474, 0.7978846
        %v3507 = vmul.f32 %v3475, 0.7978846
        %v3508 = vmul.f32 %v3476, 0.7978846
        %v3509 = vmul.f32 %v3477, 0.7978846
        %v3510 = vmul.f32 %v3478, 0.7978846
        %v3511 = vmul.f32 %v3479, 0.7978846
        %v3512 = vmul.f32 %v3480, 0.7978846
        %v3513 = vmul.f32 %v3481, 0.7978846
        %v3514 = vmul.f32 %v3482, 0.7978846
        %v3515 = vmul.f32 %v3483, 0.7978846
        %v3516 = vmul.f32 %v3484, 0.7978846
        %v3517 = vmul.f32 %v3485, 0.7978846
        %v3518 = vmul.f32 %v3486, 0.7978846
        %v3519 = vmul.f32 %v3487, 0.7978846
        %v3520 = vmul.f32 %v3488, 0.7978846
        %v3521 = vmul.f32 %v3489, 0.7978846
        %v3522 = vmul.f32 %v3490, 0.7978846
        %v3523 = vmul.f32 %v3491, 0.7978846
        %v3524 = vmul.f32 %v3492, 0.7978846
        %v3525 = vmul.f32 %v3493, 0.7978846
        %v3526 = vmul.f32 %v3494, 0.7978846
        %v3527 = vmul.f32 %v3495, 0.7978846
        %v3528 = vmul.f32 %v3496, 0.7978846
        %v3529 = vmul.f32 %v3497, 0.7978846
        %v3530 = vtanh.pop %v3498
        %v3531 = vtanh.pop %v3499
        %v3532 = vtanh.pop %v3500
        %v3533 = vtanh.pop %v3501
        %v3534 = vtanh.pop %v3502
        %v3535 = vtanh.pop %v3503
        %v3536 = vtanh.pop %v3504
        %v3537 = vtanh.pop %v3505
        %v3538 = vtanh.pop %v3506
        %v3539 = vtanh.pop %v3507
        %v3540 = vtanh.pop %v3508
        %v3541 = vtanh.pop %v3509
        %v3542 = vtanh.pop %v3510
        %v3543 = vtanh.pop %v3511
        %v3544 = vtanh.pop %v3512
        %v3545 = vtanh.pop %v3513
        %v3546 = vtanh.pop %v3514
        %v3547 = vtanh.pop %v3515
        %v3548 = vtanh.pop %v3516
        %v3549 = vtanh.pop %v3517
        %v3550 = vtanh.pop %v3518
        %v3551 = vtanh.pop %v3519
        %v3552 = vtanh.pop %v3520
        %v3553 = vtanh.pop %v3521
        %v3554 = vtanh.pop %v3522
        %v3555 = vtanh.pop %v3523
        %v3556 = vtanh.pop %v3524
        %v3557 = vtanh.pop %v3525
        %v3558 = vtanh.pop %v3526
        %v3559 = vtanh.pop %v3527
        %v3560 = vtanh.pop %v3528
        %v3561 = vtanh.pop %v3529
        %v3562 = vadd.f32 %v3530, 1.0
        %v3563 = vadd.f32 %v3531, 1.0
        %v3564 = vadd.f32 %v3532, 1.0
        %v3565 = vadd.f32 %v3533, 1.0
        %v3566 = vadd.f32 %v3534, 1.0
        %v3567 = vadd.f32 %v3535, 1.0
        %v3568 = vadd.f32 %v3536, 1.0
        %v3569 = vadd.f32 %v3537, 1.0
        %v3570 = vadd.f32 %v3538, 1.0
        %v3571 = vadd.f32 %v3539, 1.0
        %v3572 = vadd.f32 %v3540, 1.0
        %v3573 = vadd.f32 %v3541, 1.0
        %v3574 = vadd.f32 %v3542, 1.0
        %v3575 = vadd.f32 %v3543, 1.0
        %v3576 = vadd.f32 %v3544, 1.0
        %v3577 = vadd.f32 %v3545, 1.0
        %v3578 = vadd.f32 %v3546, 1.0
        %v3579 = vadd.f32 %v3547, 1.0
        %v3580 = vadd.f32 %v3548, 1.0
        %v3581 = vadd.f32 %v3549, 1.0
        %v3582 = vadd.f32 %v3550, 1.0
        %v3583 = vadd.f32 %v3551, 1.0
        %v3584 = vadd.f32 %v3552, 1.0
        %v3585 = vadd.f32 %v3553, 1.0
        %v3586 = vadd.f32 %v3554, 1.0
        %v3587 = vadd.f32 %v3555, 1.0
        %v3588 = vadd.f32 %v3556, 1.0
        %v3589 = vadd.f32 %v3557, 1.0
        %v3590 = vadd.f32 %v3558, 1.0
        %v3591 = vadd.f32 %v3559, 1.0
        %v3592 = vadd.f32 %v3560, 1.0
        %v3593 = vadd.f32 %v3561, 1.0
        %v3594 = vmul.f32 %v3338, %v3562
        %v3595 = vmul.f32 %v3339, %v3563
        %v3596 = vmul.f32 %v3340, %v3564
        %v3597 = vmul.f32 %v3341, %v3565
        %v3598 = vmul.f32 %v3342, %v3566
        %v3599 = vmul.f32 %v3343, %v3567
        %v3600 = vmul.f32 %v3344, %v3568
        %v3601 = vmul.f32 %v3345, %v3569
        %v3602 = vmul.f32 %v3346, %v3570
        %v3603 = vmul.f32 %v3347, %v3571
        %v3604 = vmul.f32 %v3348, %v3572
        %v3605 = vmul.f32 %v3349, %v3573
        %v3606 = vmul.f32 %v3350, %v3574
        %v3607 = vmul.f32 %v3351, %v3575
        %v3608 = vmul.f32 %v3352, %v3576
        %v3609 = vmul.f32 %v3353, %v3577
        %v3610 = vmul.f32 %v3354, %v3578
        %v3611 = vmul.f32 %v3355, %v3579
        %v3612 = vmul.f32 %v3356, %v3580
        %v3613 = vmul.f32 %v3357, %v3581
        %v3614 = vmul.f32 %v3358, %v3582
        %v3615 = vmul.f32 %v3359, %v3583
        %v3616 = vmul.f32 %v3360, %v3584
        %v3617 = vmul.f32 %v3361, %v3585
        %v3618 = vmul.f32 %v3362, %v3586
        %v3619 = vmul.f32 %v3363, %v3587
        %v3620 = vmul.f32 %v3364, %v3588
        %v3621 = vmul.f32 %v3365, %v3589
        %v3622 = vmul.f32 %v3366, %v3590
        %v3623 = vmul.f32 %v3367, %v3591
        %v3624 = vmul.f32 %v3368, %v3592
        %v3625 = vmul.f32 %v3369, %v3593
        %v3626 = vld [vmem:[%s12] sm:$0xf]
        %v3627 = vld [vmem:[%s12 + $0x4] sm:$0xf]
        %v3628 = vld [vmem:[%s12 + $0x8] sm:$0xf]
        %v3629 = vld [vmem:[%s12 + $0xc] sm:$0xf]
        %v3630 = vld [vmem:[%s12 + $0x10] sm:$0xf]
        %v3631 = vld [vmem:[%s12 + $0x14] sm:$0xf]
        %v3632 = vld [vmem:[%s12 + $0x18] sm:$0xf]
        %v3633 = vld [vmem:[%s12 + $0x1c] sm:$0xf]
        %v3634 = vld [vmem:[%s12 + $0x20] sm:$0xf]
        %v3635 = vld [vmem:[%s12 + $0x24] sm:$0xf]
        %v3636 = vld [vmem:[%s12 + $0x28] sm:$0xf]
        %v3637 = vld [vmem:[%s12 + $0x2c] sm:$0xf]
        %v3638 = vld [vmem:[%s12 + $0x30] sm:$0xf]
        %v3639 = vld [vmem:[%s12 + $0x34] sm:$0xf]
        %v3640 = vld [vmem:[%s12 + $0x38] sm:$0xf]
        %v3641 = vld [vmem:[%s12 + $0x3c] sm:$0xf]
        %v3642 = vld [vmem:[%s12 + $0x40] sm:$0xf]
        %v3643 = vld [vmem:[%s12 + $0x44] sm:$0xf]
        %v3644 = vld [vmem:[%s12 + $0x48] sm:$0xf]
        %v3645 = vld [vmem:[%s12 + $0x4c] sm:$0xf]
        %v3646 = vld [vmem:[%s12 + $0x50] sm:$0xf]
        %v3647 = vld [vmem:[%s12 + $0x54] sm:$0xf]
        %v3648 = vld [vmem:[%s12 + $0x58] sm:$0xf]
        %v3649 = vld [vmem:[%s12 + $0x5c] sm:$0xf]
        %v3650 = vld [vmem:[%s12 + $0x60] sm:$0xf]
        %v3651 = vld [vmem:[%s12 + $0x64] sm:$0xf]
        %v3652 = vld [vmem:[%s12 + $0x68] sm:$0xf]
        %v3653 = vld [vmem:[%s12 + $0x6c] sm:$0xf]
        %v3654 = vld [vmem:[%s12 + $0x70] sm:$0xf]
        %v3655 = vld [vmem:[%s12 + $0x74] sm:$0xf]
        %v3656 = vld [vmem:[%s12 + $0x78] sm:$0xf]
        %v3657 = vld [vmem:[%s12 + $0x7c] sm:$0xf]
        %v3658 = vld [vmem:[%s12 + $0x80] sm:$0xf]
        %v3659 = vld [vmem:[%s12 + $0x84] sm:$0xf]
        %v3660 = vld [vmem:[%s12 + $0x88] sm:$0xf]
        %v3661 = vld [vmem:[%s12 + $0x8c] sm:$0xf]
        %v3662 = vld [vmem:[%s12 + $0x90] sm:$0xf]
        %v3663 = vld [vmem:[%s12 + $0x94] sm:$0xf]
        %v3664 = vld [vmem:[%s12 + $0x98] sm:$0xf]
        %v3665 = vld [vmem:[%s12 + $0x9c] sm:$0xf]
        %v3666 = vld [vmem:[%s12 + $0xa0] sm:$0xf]
        %v3667 = vld [vmem:[%s12 + $0xa4] sm:$0xf]
        %v3668 = vld [vmem:[%s12 + $0xa8] sm:$0xf]
        %v3669 = vld [vmem:[%s12 + $0xac] sm:$0xf]
        %v3670 = vld [vmem:[%s12 + $0xb0] sm:$0xf]
        %v3671 = vld [vmem:[%s12 + $0xb4] sm:$0xf]
        %v3672 = vld [vmem:[%s12 + $0xb8] sm:$0xf]
        %v3673 = vld [vmem:[%s12 + $0xbc] sm:$0xf]
        %v3674 = vld [vmem:[%s12 + $0xc0] sm:$0xf]
        %v3675 = vld [vmem:[%s12 + $0xc4] sm:$0xf]
        %v3676 = vld [vmem:[%s12 + $0xc8] sm:$0xf]
        %v3677 = vld [vmem:[%s12 + $0xcc] sm:$0xf]
        %v3678 = vld [vmem:[%s12 + $0xd0] sm:$0xf]
        %v3679 = vld [vmem:[%s12 + $0xd4] sm:$0xf]
        %v3680 = vld [vmem:[%s12 + $0xd8] sm:$0xf]
        %v3681 = vld [vmem:[%s12 + $0xdc] sm:$0xf]
        %v3682 = vld [vmem:[%s12 + $0xe0] sm:$0xf]
        %v3683 = vld [vmem:[%s12 + $0xe4] sm:$0xf]
        %v3684 = vld [vmem:[%s12 + $0xe8] sm:$0xf]
        %v3685 = vld [vmem:[%s12 + $0xec] sm:$0xf]
        %v3686 = vld [vmem:[%s12 + $0xf0] sm:$0xf]
        %v3687 = vld [vmem:[%s12 + $0xf4] sm:$0xf]
        %v3688 = vld [vmem:[%s12 + $0xf8] sm:$0xf]
        %v3689 = vld [vmem:[%s12 + $0xfc] sm:$0xf]
        %v3690 = vpack.c.bf16 %v3598, %v3594
        %v3691 = vpack.c.bf16 %v3599, %v3595
        %v3692 = vpack.c.bf16 %v3600, %v3596
        %v3693 = vpack.c.bf16 %v3601, %v3597
        %v3694 = vpack.c.bf16 %v3606, %v3602
        %v3695 = vpack.c.bf16 %v3607, %v3603
        %v3696 = vpack.c.bf16 %v3608, %v3604
        %v3697 = vpack.c.bf16 %v3609, %v3605
        %v3698 = vpack.c.bf16 %v3614, %v3610
        %v3699 = vpack.c.bf16 %v3615, %v3611
        %v3700 = vpack.c.bf16 %v3616, %v3612
        %v3701 = vpack.c.bf16 %v3617, %v3613
        %v3702 = vpack.c.bf16 %v3622, %v3618
        %v3703 = vpack.c.bf16 %v3623, %v3619
        %v3704 = vpack.c.bf16 %v3624, %v3620
        %v3705 = vpack.c.bf16 %v3625, %v3621
        %v3706 = vld [vmem:[%s13] sm:$0x1]
        %v3708 = vperm.slane %v3706, 0
        %v3774 = vunpack.c.l.b16 %v3626
        %v3775 = vunpack.c.l.b16 %v3627
        %v3776 = vunpack.c.l.b16 %v3628
        %v3777 = vunpack.c.l.b16 %v3629
        %v3778 = vunpack.c.l.b16 %v3630
        %v3779 = vunpack.c.l.b16 %v3631
        %v3780 = vunpack.c.l.b16 %v3632
        %v3781 = vunpack.c.l.b16 %v3633
        %v3782 = vunpack.c.l.b16 %v3634
        %v3783 = vunpack.c.l.b16 %v3635
        %v3784 = vunpack.c.l.b16 %v3636
        %v3785 = vunpack.c.l.b16 %v3637
        %v3786 = vunpack.c.l.b16 %v3638
        %v3787 = vunpack.c.l.b16 %v3639
        %v3788 = vunpack.c.l.b16 %v3640
        %v3789 = vunpack.c.l.b16 %v3641
        %v3790 = vunpack.c.l.b16 %v3642
        %v3791 = vunpack.c.l.b16 %v3643
        %v3792 = vunpack.c.l.b16 %v3644
        %v3793 = vunpack.c.l.b16 %v3645
        %v3794 = vunpack.c.l.b16 %v3646
        %v3795 = vunpack.c.l.b16 %v3647
        %v3796 = vunpack.c.l.b16 %v3648
        %v3797 = vunpack.c.l.b16 %v3649
        %v3798 = vunpack.c.l.b16 %v3650
        %v3799 = vunpack.c.l.b16 %v3651
        %v3800 = vunpack.c.l.b16 %v3652
        %v3801 = vunpack.c.l.b16 %v3653
        %v3802 = vunpack.c.l.b16 %v3654
        %v3803 = vunpack.c.l.b16 %v3655
        %v3804 = vunpack.c.l.b16 %v3656
        %v3805 = vunpack.c.l.b16 %v3657
        %v3806 = vunpack.c.l.b16 %v3658
        %v3807 = vunpack.c.l.b16 %v3659
        %v3808 = vunpack.c.l.b16 %v3660
        %v3809 = vunpack.c.l.b16 %v3661
        %v3810 = vunpack.c.l.b16 %v3662
        %v3811 = vunpack.c.l.b16 %v3663
        %v3812 = vunpack.c.l.b16 %v3664
        %v3813 = vunpack.c.l.b16 %v3665
        %v3814 = vunpack.c.l.b16 %v3666
        %v3815 = vunpack.c.l.b16 %v3667
        %v3816 = vunpack.c.l.b16 %v3668
        %v3817 = vunpack.c.l.b16 %v3669
        %v3818 = vunpack.c.l.b16 %v3670
        %v3819 = vunpack.c.l.b16 %v3671
        %v3820 = vunpack.c.l.b16 %v3672
        %v3821 = vunpack.c.l.b16 %v3673
        %v3822 = vunpack.c.l.b16 %v3674
        %v3823 = vunpack.c.l.b16 %v3675
        %v3824 = vunpack.c.l.b16 %v3676
        %v3825 = vunpack.c.l.b16 %v3677
        %v3826 = vunpack.c.l.b16 %v3678
        %v3827 = vunpack.c.l.b16 %v3679
        %v3828 = vunpack.c.l.b16 %v3680
        %v3829 = vunpack.c.l.b16 %v3681
        %v3830 = vunpack.c.l.b16 %v3682
        %v3831 = vunpack.c.l.b16 %v3683
        %v3832 = vunpack.c.l.b16 %v3684
        %v3833 = vunpack.c.l.b16 %v3685
        %v3834 = vunpack.c.l.b16 %v3686
        %v3835 = vunpack.c.l.b16 %v3687
        %v3836 = vunpack.c.l.b16 %v3688
        %v3837 = vunpack.c.l.b16 %v3689
        %v3838 = vpack.c.b16 %v3775, %v3774
        %v3839 = vpack.c.b16 %v3777, %v3776
        %v3840 = vpack.c.b16 %v3779, %v3778
        %v3841 = vpack.c.b16 %v3781, %v3780
        %v3842 = vpack.c.b16 %v3783, %v3782
        %v3843 = vpack.c.b16 %v3785, %v3784
        %v3844 = vpack.c.b16 %v3787, %v3786
        %v3845 = vpack.c.b16 %v3789, %v3788
        %v3846 = vpack.c.b16 %v3791, %v3790
        %v3847 = vpack.c.b16 %v3793, %v3792
        %v3848 = vpack.c.b16 %v3795, %v3794
        %v3849 = vpack.c.b16 %v3797, %v3796
        %v3850 = vpack.c.b16 %v3799, %v3798
        %v3851 = vpack.c.b16 %v3801, %v3800
        %v3852 = vpack.c.b16 %v3803, %v3802
        %v3853 = vpack.c.b16 %v3805, %v3804
        %v3854 = vpack.c.b16 %v3807, %v3806
        %v3855 = vpack.c.b16 %v3809, %v3808
        %v3856 = vpack.c.b16 %v3811, %v3810
        %v3857 = vpack.c.b16 %v3813, %v3812
        %v3858 = vpack.c.b16 %v3815, %v3814
        %v3859 = vpack.c.b16 %v3817, %v3816
        %v3860 = vpack.c.b16 %v3819, %v3818
        %v3861 = vpack.c.b16 %v3821, %v3820
        %v3862 = vpack.c.b16 %v3823, %v3822
        %v3863 = vpack.c.b16 %v3825, %v3824
        %v3864 = vpack.c.b16 %v3827, %v3826
        %v3865 = vpack.c.b16 %v3829, %v3828
        %v3866 = vpack.c.b16 %v3831, %v3830
        %v3867 = vpack.c.b16 %v3833, %v3832
        %v3868 = vpack.c.b16 %v3835, %v3834
        %v3869 = vpack.c.b16 %v3837, %v3836
        %3902 = vmatpush.bf16.msra.mxu0 %v3845
        %3903 = vmatpush.bf16.msra.mxu0 %v3844
        %3904 = vmatpush.bf16.msra.mxu0 %v3843
        %3905 = vmatpush.bf16.msra.mxu0 %v3842
        %3906 = vmatpush.bf16.msra.mxu0 %v3841
        %3907 = vmatpush.bf16.msra.mxu0 %v3840
        %3908 = vmatpush.bf16.msra.mxu0 %v3839
        %3909 = vmatpush.bf16.msra.mxu0 %v3838
        %3910 = vmatmul.bf16.gmra.mxu0 %v3690
        %v3911 = vpop.f32.mrf.mxu0
        %v3912 = vadd.f32 %v3708, %v3911
        %v3913 = vpop.f32.mrf.mxu0
        %v3914 = vadd.f32 %v3708, %v3913
        %3915 = vmatmul.bf16.gmra.mxu0 %v3694
        %v3916 = vpop.f32.mrf.mxu0
        %v3917 = vadd.f32 %v3708, %v3916
        %v3918 = vpop.f32.mrf.mxu0
        %v3919 = vadd.f32 %v3708, %v3918
        %3920 = vmatmul.bf16.gmra.mxu0 %v3698
        %v3921 = vpop.f32.mrf.mxu0
        %v3922 = vadd.f32 %v3708, %v3921
        %v3923 = vpop.f32.mrf.mxu0
        %v3924 = vadd.f32 %v3708, %v3923
        %3925 = vmatmul.bf16.gmra.mxu0 %v3702
        %v3926 = vpop.f32.mrf.mxu0
        %v3927 = vadd.f32 %v3708, %v3926
        %v3928 = vpop.f32.mrf.mxu0
        %v3929 = vadd.f32 %v3708, %v3928
        %3930 = vdwg.mxu0
        %3931 = vmatpush.bf16.msra.mxu0 %v3853
        %3932 = vmatpush.bf16.msra.mxu0 %v3852
        %3933 = vmatpush.bf16.msra.mxu0 %v3851
        %3934 = vmatpush.bf16.msra.mxu0 %v3850
        %3935 = vmatpush.bf16.msra.mxu0 %v3849
        %3936 = vmatpush.bf16.msra.mxu0 %v3848
        %3937 = vmatpush.bf16.msra.mxu0 %v3847
        %3938 = vmatpush.bf16.msra.mxu0 %v3846
        %3939 = vmatmul.bf16.gmra.mxu0 %v3691
        %v3940 = vpop.f32.mrf.mxu0
        %v3941 = vadd.f32 %v3912, %v3940
        %v3942 = vpop.f32.mrf.mxu0
        %v3943 = vadd.f32 %v3914, %v3942
        %3944 = vmatmul.bf16.gmra.mxu0 %v3695
        %v3945 = vpop.f32.mrf.mxu0
        %v3946 = vadd.f32 %v3917, %v3945
        %v3947 = vpop.f32.mrf.mxu0
        %v3948 = vadd.f32 %v3919, %v3947
        %3949 = vmatmul.bf16.gmra.mxu0 %v3699
        %v3950 = vpop.f32.mrf.mxu0
        %v3951 = vadd.f32 %v3922, %v3950
        %v3952 = vpop.f32.mrf.mxu0
        %v3953 = vadd.f32 %v3924, %v3952
        %3954 = vmatmul.bf16.gmra.mxu0 %v3703
        %v3955 = vpop.f32.mrf.mxu0
        %v3956 = vadd.f32 %v3927, %v3955
        %v3957 = vpop.f32.mrf.mxu0
        %v3958 = vadd.f32 %v3929, %v3957
        %3959 = vdwg.mxu0
        %3960 = vmatpush.bf16.msra.mxu0 %v3861
        %3961 = vmatpush.bf16.msra.mxu0 %v3860
        %3962 = vmatpush.bf16.msra.mxu0 %v3859
        %3963 = vmatpush.bf16.msra.mxu0 %v3858
        %3964 = vmatpush.bf16.msra.mxu0 %v3857
        %3965 = vmatpush.bf16.msra.mxu0 %v3856
        %3966 = vmatpush.bf16.msra.mxu0 %v3855
        %3967 = vmatpush.bf16.msra.mxu0 %v3854
        %3968 = vmatmul.bf16.gmra.mxu0 %v3692
        %v3969 = vpop.f32.mrf.mxu0
        %v3970 = vadd.f32 %v3941, %v3969
        %v3971 = vpop.f32.mrf.mxu0
        %v3972 = vadd.f32 %v3943, %v3971
        %3973 = vmatmul.bf16.gmra.mxu0 %v3696
        %v3974 = vpop.f32.mrf.mxu0
        %v3975 = vadd.f32 %v3946, %v3974
        %v3976 = vpop.f32.mrf.mxu0
        %v3977 = vadd.f32 %v3948, %v3976
        %3978 = vmatmul.bf16.gmra.mxu0 %v3700
        %v3979 = vpop.f32.mrf.mxu0
        %v3980 = vadd.f32 %v3951, %v3979
        %v3981 = vpop.f32.mrf.mxu0
        %v3982 = vadd.f32 %v3953, %v3981
        %3983 = vmatmul.bf16.gmra.mxu0 %v3704
        %v3984 = vpop.f32.mrf.mxu0
        %v3985 = vadd.f32 %v3956, %v3984
        %v3986 = vpop.f32.mrf.mxu0
        %v3987 = vadd.f32 %v3958, %v3986
        %3988 = vdwg.mxu0
        %3989 = vmatpush.bf16.msra.mxu0 %v3869
        %3990 = vmatpush.bf16.msra.mxu0 %v3868
        %3991 = vmatpush.bf16.msra.mxu0 %v3867
        %3992 = vmatpush.bf16.msra.mxu0 %v3866
        %3993 = vmatpush.bf16.msra.mxu0 %v3865
        %3994 = vmatpush.bf16.msra.mxu0 %v3864
        %3995 = vmatpush.bf16.msra.mxu0 %v3863
        %3996 = vmatpush.bf16.msra.mxu0 %v3862
        %3997 = vmatmul.bf16.gmra.mxu0 %v3693
        %v3998 = vpop.f32.mrf.mxu0
        %v3999 = vadd.f32 %v3970, %v3998
        %v4000 = vpop.f32.mrf.mxu0
        %v4001 = vadd.f32 %v3972, %v4000
        %4002 = vmatmul.bf16.gmra.mxu0 %v3697
        %v4003 = vpop.f32.mrf.mxu0
        %v4004 = vadd.f32 %v3975, %v4003
        %v4005 = vpop.f32.mrf.mxu0
        %v4006 = vadd.f32 %v3977, %v4005
        %4007 = vmatmul.bf16.gmra.mxu0 %v3701
        %v4008 = vpop.f32.mrf.mxu0
        %v4009 = vadd.f32 %v3980, %v4008
        %v4010 = vpop.f32.mrf.mxu0
        %v4011 = vadd.f32 %v3982, %v4010
        %4012 = vmatmul.bf16.gmra.mxu0 %v3705
        %v4013 = vpop.f32.mrf.mxu0
        %v4014 = vadd.f32 %v3985, %v4013
        %v4015 = vpop.f32.mrf.mxu0
        %v4016 = vadd.f32 %v3987, %v4015
        %4017 = vdwg.mxu0
        %v4018 = vadd.f32 %v3999, %v3008
        %v4019 = vadd.f32 %v4001, %v3009
        %v4020 = vadd.f32 %v4004, %v3010
        %v4021 = vadd.f32 %v4006, %v3011
        %v4022 = vadd.f32 %v4009, %v3012
        %v4023 = vadd.f32 %v4011, %v3013
        %v4024 = vadd.f32 %v4014, %v3014
        %v4025 = vadd.f32 %v4016, %v3015
        %v4026 = vld [vmem:[%s14] sm:$0x1]
        %v4027 = vld [vmem:[%s15] sm:$0x1]
        %4028 = vadd.xlane.f32.xlu0 %v4018
        %v4029 = vpop.xlane.xlu0 %4028
        %4030 = vadd.xlane.f32.xlu0 %v4019
        %v4031 = vpop.xlane.xlu0 %4030
        %4032 = vadd.xlane.f32.xlu0 %v4020
        %v4033 = vpop.xlane.xlu0 %4032
        %4034 = vadd.xlane.f32.xlu0 %v4021
        %v4035 = vpop.xlane.xlu0 %4034
        %4036 = vadd.xlane.f32.xlu0 %v4022
        %v4037 = vpop.xlane.xlu0 %4036
        %4038 = vadd.xlane.f32.xlu0 %v4023
        %v4039 = vpop.xlane.xlu0 %4038
        %4040 = vadd.xlane.f32.xlu0 %v4024
        %v4041 = vpop.xlane.xlu0 %4040
        %4042 = vadd.xlane.f32.xlu0 %v4025
        %v4043 = vpop.xlane.xlu0 %4042
        %v4044 = vmul.f32 %v4029, %v793
        %v4045 = vmul.f32 %v4031, %v793
        %v4046 = vmul.f32 %v4033, %v793
        %v4047 = vmul.f32 %v4035, %v793
        %v4048 = vmul.f32 %v4037, %v793
        %v4049 = vmul.f32 %v4039, %v793
        %v4050 = vmul.f32 %v4041, %v793
        %v4051 = vmul.f32 %v4043, %v793
        %v4052 = vsub.f32 %v4018, %v4044
        %v4053 = vsub.f32 %v4019, %v4045
        %v4054 = vsub.f32 %v4020, %v4046
        %v4055 = vsub.f32 %v4021, %v4047
        %v4056 = vsub.f32 %v4022, %v4048
        %v4057 = vsub.f32 %v4023, %v4049
        %v4058 = vsub.f32 %v4024, %v4050
        %v4059 = vsub.f32 %v4025, %v4051
        %v4060 = vmul.f32 %v4052, %v4052
        %v4061 = vmul.f32 %v4053, %v4053
        %v4062 = vmul.f32 %v4054, %v4054
        %v4063 = vmul.f32 %v4055, %v4055
        %v4064 = vmul.f32 %v4056, %v4056
        %v4065 = vmul.f32 %v4057, %v4057
        %v4066 = vmul.f32 %v4058, %v4058
        %v4067 = vmul.f32 %v4059, %v4059
        %4068 = vadd.xlane.f32.xlu0 %v4060
        %v4069 = vpop.xlane.xlu0 %4068
        %4070 = vadd.xlane.f32.xlu0 %v4061
        %v4071 = vpop.xlane.xlu0 %4070
        %4072 = vadd.xlane.f32.xlu0 %v4062
        %v4073 = vpop.xlane.xlu0 %4072
        %4074 = vadd.xlane.f32.xlu0 %v4063
        %v4075 = vpop.xlane.xlu0 %4074
        %4076 = vadd.xlane.f32.xlu0 %v4064
        %v4077 = vpop.xlane.xlu0 %4076
        %4078 = vadd.xlane.f32.xlu0 %v4065
        %v4079 = vpop.xlane.xlu0 %4078
        %4080 = vadd.xlane.f32.xlu0 %v4066
        %v4081 = vpop.xlane.xlu0 %4080
        %4082 = vadd.xlane.f32.xlu0 %v4067
        %v4083 = vpop.xlane.xlu0 %4082
        %v4084 = vmul.f32 %v4069, %v793
        %v4085 = vmul.f32 %v4071, %v793
        %v4086 = vmul.f32 %v4073, %v793
        %v4087 = vmul.f32 %v4075, %v793
        %v4088 = vmul.f32 %v4077, %v793
        %v4089 = vmul.f32 %v4079, %v793
        %v4090 = vmul.f32 %v4081, %v793
        %v4091 = vmul.f32 %v4083, %v793
        %v4092 = vadd.f32 %v4084, 1e-12
        %v4093 = vadd.f32 %v4085, 1e-12
        %v4094 = vadd.f32 %v4086, 1e-12
        %v4095 = vadd.f32 %v4087, 1e-12
        %v4096 = vadd.f32 %v4088, 1e-12
        %v4097 = vadd.f32 %v4089, 1e-12
        %v4098 = vadd.f32 %v4090, 1e-12
        %v4099 = vadd.f32 %v4091, 1e-12
        %v4100 = vrsqrt.pop %v4092
        %v4101 = vmul.f32 %v4100, %v4092
        %v4102 = vmul.f32 %v4101, %v4100
        %v4103 = vmul.f32 0.5, %v4102
        %v4104 = vsub.f32 1.5, %v4103
        %v4105 = vmul.f32 %v4100, %v4104
        %vm4106 = vweird.f32 %v4092
        %vm4107 = vweird.f32 %v4100
        %vm4108 = vmor %vm4106, %vm4107
        %v4109 = vsel %vm4108, %v4100, %v4105
        %v4110 = vrsqrt.pop %v4093
        %v4111 = vmul.f32 %v4110, %v4093
        %v4112 = vmul.f32 %v4111, %v4110
        %v4113 = vmul.f32 0.5, %v4112
        %v4114 = vsub.f32 1.5, %v4113
        %v4115 = vmul.f32 %v4110, %v4114
        %vm4116 = vweird.f32 %v4093
        %vm4117 = vweird.f32 %v4110
        %vm4118 = vmor %vm4116, %vm4117
        %v4119 = vsel %vm4118, %v4110, %v4115
        %v4120 = vrsqrt.pop %v4094
        %v4121 = vmul.f32 %v4120, %v4094
        %v4122 = vmul.f32 %v4121, %v4120
        %v4123 = vmul.f32 0.5, %v4122
        %v4124 = vsub.f32 1.5, %v4123
        %v4125 = vmul.f32 %v4120, %v4124
        %vm4126 = vweird.f32 %v4094
        %vm4127 = vweird.f32 %v4120
        %vm4128 = vmor %vm4126, %vm4127
        %v4129 = vsel %vm4128, %v4120, %v4125
        %v4130 = vrsqrt.pop %v4095
        %v4131 = vmul.f32 %v4130, %v4095
        %v4132 = vmul.f32 %v4131, %v4130
        %v4133 = vmul.f32 0.5, %v4132
        %v4134 = vsub.f32 1.5, %v4133
        %v4135 = vmul.f32 %v4130, %v4134
        %vm4136 = vweird.f32 %v4095
        %vm4137 = vweird.f32 %v4130
        %vm4138 = vmor %vm4136, %vm4137
        %v4139 = vsel %vm4138, %v4130, %v4135
        %v4140 = vrsqrt.pop %v4096
        %v4141 = vmul.f32 %v4140, %v4096
        %v4142 = vmul.f32 %v4141, %v4140
        %v4143 = vmul.f32 0.5, %v4142
        %v4144 = vsub.f32 1.5, %v4143
        %v4145 = vmul.f32 %v4140, %v4144
        %vm4146 = vweird.f32 %v4096
        %vm4147 = vweird.f32 %v4140
        %vm4148 = vmor %vm4146, %vm4147
        %v4149 = vsel %vm4148, %v4140, %v4145
        %v4150 = vrsqrt.pop %v4097
        %v4151 = vmul.f32 %v4150, %v4097
        %v4152 = vmul.f32 %v4151, %v4150
        %v4153 = vmul.f32 0.5, %v4152
        %v4154 = vsub.f32 1.5, %v4153
        %v4155 = vmul.f32 %v4150, %v4154
        %vm4156 = vweird.f32 %v4097
        %vm4157 = vweird.f32 %v4150
        %vm4158 = vmor %vm4156, %vm4157
        %v4159 = vsel %vm4158, %v4150, %v4155
        %v4160 = vrsqrt.pop %v4098
        %v4161 = vmul.f32 %v4160, %v4098
        %v4162 = vmul.f32 %v4161, %v4160
        %v4163 = vmul.f32 0.5, %v4162
        %v4164 = vsub.f32 1.5, %v4163
        %v4165 = vmul.f32 %v4160, %v4164
        %vm4166 = vweird.f32 %v4098
        %vm4167 = vweird.f32 %v4160
        %vm4168 = vmor %vm4166, %vm4167
        %v4169 = vsel %vm4168, %v4160, %v4165
        %v4170 = vrsqrt.pop %v4099
        %v4171 = vmul.f32 %v4170, %v4099
        %v4172 = vmul.f32 %v4171, %v4170
        %v4173 = vmul.f32 0.5, %v4172
        %v4174 = vsub.f32 1.5, %v4173
        %v4175 = vmul.f32 %v4170, %v4174
        %vm4176 = vweird.f32 %v4099
        %vm4177 = vweird.f32 %v4170
        %vm4178 = vmor %vm4176, %vm4177
        %v4179 = vsel %vm4178, %v4170, %v4175
        %v4180 = vmul.f32 %v4052, %v4109
        %v4181 = vmul.f32 %v4053, %v4119
        %v4182 = vmul.f32 %v4054, %v4129
        %v4183 = vmul.f32 %v4055, %v4139
        %v4184 = vmul.f32 %v4056, %v4149
        %v4185 = vmul.f32 %v4057, %v4159
        %v4186 = vmul.f32 %v4058, %v4169
        %v4187 = vmul.f32 %v4059, %v4179
        %v4189 = vperm.slane %v4026, 0
        %v4191 = vmul.f32 %v4180, %v4189
        %v4192 = vmul.f32 %v4181, %v4189
        %v4193 = vmul.f32 %v4182, %v4189
        %v4194 = vmul.f32 %v4183, %v4189
        %v4195 = vmul.f32 %v4184, %v4189
        %v4196 = vmul.f32 %v4185, %v4189
        %v4197 = vmul.f32 %v4186, %v4189
        %v4198 = vmul.f32 %v4187, %v4189
        %v4200 = vperm.slane %v4027, 0
        %v4202 = vadd.f32 %v4191, %v4200
        %v4203 = vadd.f32 %v4192, %v4200
        %v4204 = vadd.f32 %v4193, %v4200
        %v4205 = vadd.f32 %v4194, %v4200
        %v4206 = vadd.f32 %v4195, %v4200
        %v4207 = vadd.f32 %v4196, %v4200
        %v4208 = vadd.f32 %v4197, %v4200
        %v4209 = vadd.f32 %v4198, %v4200
        %s4210 = scalar_lea.vmem %s4, 192
        %v4211 = vld [vmem:[%s4210] sm:$0xff]
        %v4212 = vld [vmem:[%s4210 + $0x8] sm:$0xf]
        %v4213 = vld [vmem:[%s4210 + $0xc] sm:$0xff]
        %v4214 = vld [vmem:[%s4210 + $0x14] sm:$0xf]
        %v4215 = vld [vmem:[%s4210 + $0x18] sm:$0xff]
        %v4216 = vld [vmem:[%s4210 + $0x20] sm:$0xf]
        %v4217 = vld [vmem:[%s4210 + $0x24] sm:$0xff]
        %v4218 = vld [vmem:[%s4210 + $0x2c] sm:$0xf]
        %v4219 = vld [vmem:[%s4210 + $0x30] sm:$0xff]
        %v4220 = vld [vmem:[%s4210 + $0x38] sm:$0xf]
        %v4221 = vld [vmem:[%s4210 + $0x3c] sm:$0xff]
        %v4222 = vld [vmem:[%s4210 + $0x44] sm:$0xf]
        %v4223 = vld [vmem:[%s4210 + $0x48] sm:$0xff]
        %v4224 = vld [vmem:[%s4210 + $0x50] sm:$0xf]
        %v4225 = vld [vmem:[%s4210 + $0x54] sm:$0xff]
        %v4226 = vld [vmem:[%s4210 + $0x5c] sm:$0xf]
        %v4227 = vld [vmem:[%s4210 + $0x60] sm:$0xff]
        %v4228 = vld [vmem:[%s4210 + $0x68] sm:$0xf]
        %v4229 = vld [vmem:[%s4210 + $0x6c] sm:$0xff]
        %v4230 = vld [vmem:[%s4210 + $0x74] sm:$0xf]
        %v4231 = vld [vmem:[%s4210 + $0x78] sm:$0xff]
        %v4232 = vld [vmem:[%s4210 + $0x80] sm:$0xf]
        %v4233 = vld [vmem:[%s4210 + $0x84] sm:$0xff]
        %v4234 = vld [vmem:[%s4210 + $0x8c] sm:$0xf]
        %v4235 = vld [vmem:[%s4210 + $0x90] sm:$0xff]
        %v4236 = vld [vmem:[%s4210 + $0x98] sm:$0xf]
        %v4237 = vld [vmem:[%s4210 + $0x9c] sm:$0xff]
        %v4238 = vld [vmem:[%s4210 + $0xa4] sm:$0xf]
        %v4239 = vld [vmem:[%s4210 + $0xa8] sm:$0xff]
        %v4240 = vld [vmem:[%s4210 + $0xb0] sm:$0xf]
        %v4241 = vld [vmem:[%s4210 + $0xb4] sm:$0xff]
        %v4242 = vld [vmem:[%s4210 + $0xbc] sm:$0xf]
        %v4243 = vpack.c.bf16 %v4203, %v4202
        %v4244 = vpack.c.bf16 %v4205, %v4204
        %v4245 = vpack.c.bf16 %v4207, %v4206
        %v4246 = vpack.c.bf16 %v4209, %v4208
        %s4247 = scalar_lea.vmem %s5, 3
        %v4248 = vld [vmem:[%s4247] sm:$0x7]
        %v4250 = vperm.slane %v4248, 0
        %v4251 = vperm.slane %v4248, 1
        %v4252 = vperm.slane %v4248, 2
        %v4288 = vunpack.c.l.b16 %v4211
        %v4289 = vunpack.c.h.b16 %v4211
        %v4290 = vunpack.c.l.b16 %v4212
        %v4291 = vunpack.c.l.b16 %v4213
        %v4292 = vunpack.c.h.b16 %v4213
        %v4293 = vunpack.c.l.b16 %v4214
        %v4294 = vunpack.c.l.b16 %v4215
        %v4295 = vunpack.c.h.b16 %v4215
        %v4296 = vunpack.c.l.b16 %v4216
        %v4297 = vunpack.c.l.b16 %v4217
        %v4298 = vunpack.c.h.b16 %v4217
        %v4299 = vunpack.c.l.b16 %v4218
        %v4300 = vunpack.c.l.b16 %v4219
        %v4301 = vunpack.c.h.b16 %v4219
        %v4302 = vunpack.c.l.b16 %v4220
        %v4303 = vunpack.c.l.b16 %v4221
        %v4304 = vunpack.c.h.b16 %v4221
        %v4305 = vunpack.c.l.b16 %v4222
        %v4306 = vunpack.c.l.b16 %v4223
        %v4307 = vunpack.c.h.b16 %v4223
        %v4308 = vunpack.c.l.b16 %v4224
        %v4309 = vunpack.c.l.b16 %v4225
        %v4310 = vunpack.c.h.b16 %v4225
        %v4311 = vunpack.c.l.b16 %v4226
        %v4312 = vunpack.c.l.b16 %v4227
        %v4313 = vunpack.c.h.b16 %v4227
        %v4314 = vunpack.c.l.b16 %v4228
        %v4315 = vunpack.c.l.b16 %v4229
        %v4316 = vunpack.c.h.b16 %v4229
        %v4317 = vunpack.c.l.b16 %v4230
        %v4318 = vunpack.c.l.b16 %v4231
        %v4319 = vunpack.c.h.b16 %v4231
        %v4320 = vunpack.c.l.b16 %v4232
        %v4321 = vunpack.c.l.b16 %v4233
        %v4322 = vunpack.c.h.b16 %v4233
        %v4323 = vunpack.c.l.b16 %v4234
        %v4324 = vunpack.c.l.b16 %v4235
        %v4325 = vunpack.c.h.b16 %v4235
        %v4326 = vunpack.c.l.b16 %v4236
        %v4327 = vunpack.c.l.b16 %v4237
        %v4328 = vunpack.c.h.b16 %v4237
        %v4329 = vunpack.c.l.b16 %v4238
        %v4330 = vunpack.c.l.b16 %v4239
        %v4331 = vunpack.c.h.b16 %v4239
        %v4332 = vunpack.c.l.b16 %v4240
        %v4333 = vunpack.c.l.b16 %v4241
        %v4334 = vunpack.c.h.b16 %v4241
        %v4335 = vunpack.c.l.b16 %v4242
        %v4336 = vpack.c.b16 %v4291, %v4288
        %v4337 = vpack.c.b16 %v4292, %v4289
        %v4338 = vpack.c.b16 %v4293, %v4290
        %v4339 = vpack.c.b16 %v4297, %v4294
        %v4340 = vpack.c.b16 %v4298, %v4295
        %v4341 = vpack.c.b16 %v4299, %v4296
        %v4342 = vpack.c.b16 %v4303, %v4300
        %v4343 = vpack.c.b16 %v4304, %v4301
        %v4344 = vpack.c.b16 %v4305, %v4302
        %v4345 = vpack.c.b16 %v4309, %v4306
        %v4346 = vpack.c.b16 %v4310, %v4307
        %v4347 = vpack.c.b16 %v4311, %v4308
        %v4348 = vpack.c.b16 %v4315, %v4312
        %v4349 = vpack.c.b16 %v4316, %v4313
        %v4350 = vpack.c.b16 %v4317, %v4314
        %v4351 = vpack.c.b16 %v4321, %v4318
        %v4352 = vpack.c.b16 %v4322, %v4319
        %v4353 = vpack.c.b16 %v4323, %v4320
        %v4354 = vpack.c.b16 %v4327, %v4324
        %v4355 = vpack.c.b16 %v4328, %v4325
        %v4356 = vpack.c.b16 %v4329, %v4326
        %v4357 = vpack.c.b16 %v4333, %v4330
        %v4358 = vpack.c.b16 %v4334, %v4331
        %v4359 = vpack.c.b16 %v4335, %v4332
        %4384 = vmatpush.bf16.msra.mxu0 %v4357
        %4385 = vmatpush.bf16.msra.mxu0 %v4354
        %4386 = vmatpush.bf16.msra.mxu0 %v4351
        %4387 = vmatpush.bf16.msra.mxu0 %v4348
        %4388 = vmatpush.bf16.msra.mxu0 %v4345
        %4389 = vmatpush.bf16.msra.mxu0 %v4342
        %4390 = vmatpush.bf16.msra.mxu0 %v4339
        %4391 = vmatpush.bf16.msra.mxu0 %v4336
        %4392 = vmatmul.bf16.gmra.mxu0 %v4243
        %v4393 = vpop.f32.mrf.mxu0
        %v4394 = vadd.f32 %v4250, %v4393
        %v4395 = vpop.f32.mrf.mxu0
        %v4396 = vadd.f32 %v4250, %v4395
        %4397 = vmatmul.bf16.gmra.mxu0 %v4244
        %v4398 = vpop.f32.mrf.mxu0
        %v4399 = vadd.f32 %v4250, %v4398
        %v4400 = vpop.f32.mrf.mxu0
        %v4401 = vadd.f32 %v4250, %v4400
        %4402 = vmatmul.bf16.gmra.mxu0 %v4245
        %v4403 = vpop.f32.mrf.mxu0
        %v4404 = vadd.f32 %v4250, %v4403
        %v4405 = vpop.f32.mrf.mxu0
        %v4406 = vadd.f32 %v4250, %v4405
        %4407 = vmatmul.bf16.gmra.mxu0 %v4246
        %v4408 = vpop.f32.mrf.mxu0
        %v4409 = vadd.f32 %v4250, %v4408
        %v4410 = vpop.f32.mrf.mxu0
        %v4411 = vadd.f32 %v4250, %v4410
        %4412 = vdwg.mxu0
        %4413 = vmatpush.bf16.msra.mxu0 %v4358
        %4414 = vmatpush.bf16.msra.mxu0 %v4355
        %4415 = vmatpush.bf16.msra.mxu0 %v4352
        %4416 = vmatpush.bf16.msra.mxu0 %v4349
        %4417 = vmatpush.bf16.msra.mxu0 %v4346
        %4418 = vmatpush.bf16.msra.mxu0 %v4343
        %4419 = vmatpush.bf16.msra.mxu0 %v4340
        %4420 = vmatpush.bf16.msra.mxu0 %v4337
        %4421 = vmatmul.bf16.gmra.mxu0 %v4243
        %v4422 = vpop.f32.mrf.mxu0
        %v4423 = vadd.f32 %v4251, %v4422
        %v4424 = vpop.f32.mrf.mxu0
        %v4425 = vadd.f32 %v4251, %v4424
        %4426 = vmatmul.bf16.gmra.mxu0 %v4244
        %v4427 = vpop.f32.mrf.mxu0
        %v4428 = vadd.f32 %v4251, %v4427
        %v4429 = vpop.f32.mrf.mxu0
        %v4430 = vadd.f32 %v4251, %v4429
        %4431 = vmatmul.bf16.gmra.mxu0 %v4245
        %v4432 = vpop.f32.mrf.mxu0
        %v4433 = vadd.f32 %v4251, %v4432
        %v4434 = vpop.f32.mrf.mxu0
        %v4435 = vadd.f32 %v4251, %v4434
        %4436 = vmatmul.bf16.gmra.mxu0 %v4246
        %v4437 = vpop.f32.mrf.mxu0
        %v4438 = vadd.f32 %v4251, %v4437
        %v4439 = vpop.f32.mrf.mxu0
        %v4440 = vadd.f32 %v4251, %v4439
        %4441 = vdwg.mxu0
        %4442 = vmatpush.bf16.msra.mxu0 %v4359
        %4443 = vmatpush.bf16.msra.mxu0 %v4356
        %4444 = vmatpush.bf16.msra.mxu0 %v4353
        %4445 = vmatpush.bf16.msra.mxu0 %v4350
        %4446 = vmatpush.bf16.msra.mxu0 %v4347
        %4447 = vmatpush.bf16.msra.mxu0 %v4344
        %4448 = vmatpush.bf16.msra.mxu0 %v4341
        %4449 = vmatpush.bf16.msra.mxu0 %v4338
        %4450 = vmatmul.bf16.gmra.mxu0 %v4243
        %v4451 = vpop.f32.mrf.mxu0
        %v4452 = vadd.f32 %v4252, %v4451
        %v4453 = vpop.f32.mrf.mxu0
        %v4454 = vadd.f32 %v4252, %v4453
        %4455 = vmatmul.bf16.gmra.mxu0 %v4244
        %v4456 = vpop.f32.mrf.mxu0
        %v4457 = vadd.f32 %v4252, %v4456
        %v4458 = vpop.f32.mrf.mxu0
        %v4459 = vadd.f32 %v4252, %v4458
        %4460 = vmatmul.bf16.gmra.mxu0 %v4245
        %v4461 = vpop.f32.mrf.mxu0
        %v4462 = vadd.f32 %v4252, %v4461
        %v4463 = vpop.f32.mrf.mxu0
        %v4464 = vadd.f32 %v4252, %v4463
        %4465 = vmatmul.bf16.gmra.mxu0 %v4246
        %v4466 = vpop.f32.mrf.mxu0
        %v4467 = vadd.f32 %v4252, %v4466
        %v4468 = vpop.f32.mrf.mxu0
        %v4469 = vadd.f32 %v4252, %v4468
        %4470 = vdwg.mxu0
        %v4471 = vpack.c.bf16 %v4423, %v4394
        %v4472 = vpack.c.bf16 %v4452, %v4452
        %v4473 = vpack.c.bf16 %v4425, %v4396
        %v4474 = vpack.c.bf16 %v4454, %v4454
        %v4475 = vpack.c.bf16 %v4428, %v4399
        %v4476 = vpack.c.bf16 %v4457, %v4457
        %v4477 = vpack.c.bf16 %v4430, %v4401
        %v4478 = vpack.c.bf16 %v4459, %v4459
        %v4479 = vpack.c.bf16 %v4433, %v4404
        %v4480 = vpack.c.bf16 %v4462, %v4462
        %v4481 = vpack.c.bf16 %v4435, %v4406
        %v4482 = vpack.c.bf16 %v4464, %v4464
        %v4483 = vpack.c.bf16 %v4438, %v4409
        %v4484 = vpack.c.bf16 %v4467, %v4467
        %v4485 = vpack.c.bf16 %v4440, %v4411
        %v4486 = vpack.c.bf16 %v4469, %v4469
        %v4495 = vrot.slane %v4471, 4
        %v4496 = vrot.slane %v4473, 4
        %v4497 = vrot.slane %v4475, 4
        %v4498 = vrot.slane %v4477, 4
        %v4499 = vrot.slane %v4479, 4
        %v4500 = vrot.slane %v4481, 4
        %v4501 = vrot.slane %v4483, 4
        %v4502 = vrot.slane %v4485, 4
        %v4503 = vunpack.c.l.b16 %v4471
        %v4504 = vunpack.c.l.b16 %v4473
        %v4505 = vpack.c.b16 %v4504, %v4503
        %v4506 = vunpack.c.l.b16 %v4495
        %v4507 = vunpack.c.l.b16 %v4496
        %v4508 = vpack.c.b16 %v4507, %v4506
        %v4510 = vsel %vm1257, %v4505, 0
        %v4513 = vsel %vm1257, %v4508, 0
        %4515 = vmatpush.bf16.xpose.msra.mxu0 0
        %4516 = vmatpush.bf16.xpose.msra.mxu0 0
        %4517 = vmatpush.bf16.xpose.msra.mxu0 0
        %4518 = vmatpush.bf16.xpose.msra.mxu0 0
        %4519 = vmatpush.bf16.xpose.msra.mxu0 0
        %4520 = vmatpush.bf16.xpose.msra.mxu0 0
        %4521 = vmatpush.bf16.xpose.msra.mxu0 0
        %4522 = vmatpush.bf16.xpose.msra.mxu0 %v4513
        %4523 = vmatmul.bf16.gmra.mxu0 %v4510
        %v4524 = vpop.f32.mrf.mxu0
        %v4525 = vadd.f32 0.0, %v4524
        %v4526 = vpop.f32.mrf.mxu0
        %v4527 = vadd.f32 0.0, %v4526
        %4528 = vdwg.mxu0
        %v4529 = vunpack.c.l.b16 %v4475
        %v4530 = vunpack.c.l.b16 %v4477
        %v4531 = vpack.c.b16 %v4530, %v4529
        %v4532 = vunpack.c.l.b16 %v4497
        %v4533 = vunpack.c.l.b16 %v4498
        %v4534 = vpack.c.b16 %v4533, %v4532
        %v4536 = vsel %vm1257, %v4531, 0
        %v4539 = vsel %vm1257, %v4534, 0
        %4541 = vmatpush.bf16.xpose.msra.mxu0 0
        %4542 = vmatpush.bf16.xpose.msra.mxu0 0
        %4543 = vmatpush.bf16.xpose.msra.mxu0 0
        %4544 = vmatpush.bf16.xpose.msra.mxu0 0
        %4545 = vmatpush.bf16.xpose.msra.mxu0 0
        %4546 = vmatpush.bf16.xpose.msra.mxu0 0
        %4547 = vmatpush.bf16.xpose.msra.mxu0 0
        %4548 = vmatpush.bf16.xpose.msra.mxu0 %v4539
        %4549 = vmatmul.bf16.gmra.mxu0 %v4536
        %v4550 = vpop.f32.mrf.mxu0
        %v4551 = vadd.f32 0.0, %v4550
        %v4552 = vpop.f32.mrf.mxu0
        %v4553 = vadd.f32 0.0, %v4552
        %4554 = vdwg.mxu0
        %v4555 = vunpack.c.l.b16 %v4479
        %v4556 = vunpack.c.l.b16 %v4481
        %v4557 = vpack.c.b16 %v4556, %v4555
        %v4558 = vunpack.c.l.b16 %v4499
        %v4559 = vunpack.c.l.b16 %v4500
        %v4560 = vpack.c.b16 %v4559, %v4558
        %v4562 = vsel %vm1257, %v4557, 0
        %v4565 = vsel %vm1257, %v4560, 0
        %4567 = vmatpush.bf16.xpose.msra.mxu0 0
        %4568 = vmatpush.bf16.xpose.msra.mxu0 0
        %4569 = vmatpush.bf16.xpose.msra.mxu0 0
        %4570 = vmatpush.bf16.xpose.msra.mxu0 0
        %4571 = vmatpush.bf16.xpose.msra.mxu0 0
        %4572 = vmatpush.bf16.xpose.msra.mxu0 0
        %4573 = vmatpush.bf16.xpose.msra.mxu0 0
        %4574 = vmatpush.bf16.xpose.msra.mxu0 %v4565
        %4575 = vmatmul.bf16.gmra.mxu0 %v4562
        %v4576 = vpop.f32.mrf.mxu0
        %v4577 = vadd.f32 0.0, %v4576
        %v4578 = vpop.f32.mrf.mxu0
        %v4579 = vadd.f32 0.0, %v4578
        %4580 = vdwg.mxu0
        %v4581 = vunpack.c.l.b16 %v4483
        %v4582 = vunpack.c.l.b16 %v4485
        %v4583 = vpack.c.b16 %v4582, %v4581
        %v4584 = vunpack.c.l.b16 %v4501
        %v4585 = vunpack.c.l.b16 %v4502
        %v4586 = vpack.c.b16 %v4585, %v4584
        %v4588 = vsel %vm1257, %v4583, 0
        %v4591 = vsel %vm1257, %v4586, 0
        %4593 = vmatpush.bf16.xpose.msra.mxu0 0
        %4594 = vmatpush.bf16.xpose.msra.mxu0 0
        %4595 = vmatpush.bf16.xpose.msra.mxu0 0
        %4596 = vmatpush.bf16.xpose.msra.mxu0 0
        %4597 = vmatpush.bf16.xpose.msra.mxu0 0
        %4598 = vmatpush.bf16.xpose.msra.mxu0 0
        %4599 = vmatpush.bf16.xpose.msra.mxu0 0
        %4600 = vmatpush.bf16.xpose.msra.mxu0 %v4591
        %4601 = vmatmul.bf16.gmra.mxu0 %v4588
        %v4602 = vpop.f32.mrf.mxu0
        %v4603 = vadd.f32 0.0, %v4602
        %v4604 = vpop.f32.mrf.mxu0
        %v4605 = vadd.f32 0.0, %v4604
        %4606 = vdwg.mxu0
        %v4607 = vmul.f32 %v4525, 0.17677669
        %v4608 = vmul.f32 %v4527, 0.17677669
        %v4609 = vmul.f32 %v4551, 0.17677669
        %v4610 = vmul.f32 %v4553, 0.17677669
        %v4611 = vmul.f32 %v4577, 0.17677669
        %v4612 = vmul.f32 %v4579, 0.17677669
        %v4613 = vmul.f32 %v4603, 0.17677669
        %v4614 = vmul.f32 %v4605, 0.17677669
        %v4615 = vadd.f32 %v4607, %v1368
        %v4616 = vadd.f32 %v4608, %v1368
        %v4617 = vadd.f32 %v4609, %v1369
        %v4618 = vadd.f32 %v4610, %v1369
        %v4619 = vadd.f32 %v4611, %v1370
        %v4620 = vadd.f32 %v4612, %v1370
        %v4621 = vadd.f32 %v4613, %v1371
        %v4622 = vadd.f32 %v4614, %v1371
        %v4623 = vsel %vm1384, %v4615, -inf
        %4624 = vmax.xlane.f32.xlu0 %v4623
        %v4625 = vpop.xlane.xlu0 %4624
        %v4626 = vsel %vm1384, %v4616, -inf
        %4627 = vmax.xlane.f32.xlu0 %v4626
        %v4628 = vpop.xlane.xlu0 %4627
        %v4629 = vsel %vm1384, %v4617, -inf
        %4630 = vmax.xlane.f32.xlu0 %v4629
        %v4631 = vpop.xlane.xlu0 %4630
        %v4632 = vsel %vm1384, %v4618, -inf
        %4633 = vmax.xlane.f32.xlu0 %v4632
        %v4634 = vpop.xlane.xlu0 %4633
        %v4635 = vsel %vm1384, %v4619, -inf
        %4636 = vmax.xlane.f32.xlu0 %v4635
        %v4637 = vpop.xlane.xlu0 %4636
        %v4638 = vsel %vm1384, %v4620, -inf
        %4639 = vmax.xlane.f32.xlu0 %v4638
        %v4640 = vpop.xlane.xlu0 %4639
        %v4641 = vsel %vm1384, %v4621, -inf
        %4642 = vmax.xlane.f32.xlu0 %v4641
        %v4643 = vpop.xlane.xlu0 %4642
        %v4644 = vsel %vm1384, %v4622, -inf
        %4645 = vmax.xlane.f32.xlu0 %v4644
        %v4646 = vpop.xlane.xlu0 %4645
        %v4647 = vsub.f32 %v4615, %v4625
        %v4648 = vsub.f32 %v4616, %v4628
        %v4649 = vsub.f32 %v4617, %v4631
        %v4650 = vsub.f32 %v4618, %v4634
        %v4651 = vsub.f32 %v4619, %v4637
        %v4652 = vsub.f32 %v4620, %v4640
        %v4653 = vsub.f32 %v4621, %v4643
        %v4654 = vsub.f32 %v4622, %v4646
        %v4655 = vmul.f32 %v4647, 1.442695
        %v4656 = vpow.pop %v4655
        %v4657 = vmul.f32 %v4648, 1.442695
        %v4658 = vpow.pop %v4657
        %v4659 = vmul.f32 %v4649, 1.442695
        %v4660 = vpow.pop %v4659
        %v4661 = vmul.f32 %v4650, 1.442695
        %v4662 = vpow.pop %v4661
        %v4663 = vmul.f32 %v4651, 1.442695
        %v4664 = vpow.pop %v4663
        %v4665 = vmul.f32 %v4652, 1.442695
        %v4666 = vpow.pop %v4665
        %v4667 = vmul.f32 %v4653, 1.442695
        %v4668 = vpow.pop %v4667
        %v4669 = vmul.f32 %v4654, 1.442695
        %v4670 = vpow.pop %v4669
        %v4671 = vsel %vm1384, %v4656, 0.0
        %4672 = vadd.xlane.f32.xlu0 %v4671
        %v4673 = vpop.xlane.xlu0 %4672
        %v4674 = vsel %vm1384, %v4658, 0.0
        %4675 = vadd.xlane.f32.xlu0 %v4674
        %v4676 = vpop.xlane.xlu0 %4675
        %v4677 = vsel %vm1384, %v4660, 0.0
        %4678 = vadd.xlane.f32.xlu0 %v4677
        %v4679 = vpop.xlane.xlu0 %4678
        %v4680 = vsel %vm1384, %v4662, 0.0
        %4681 = vadd.xlane.f32.xlu0 %v4680
        %v4682 = vpop.xlane.xlu0 %4681
        %v4683 = vsel %vm1384, %v4664, 0.0
        %4684 = vadd.xlane.f32.xlu0 %v4683
        %v4685 = vpop.xlane.xlu0 %4684
        %v4686 = vsel %vm1384, %v4666, 0.0
        %4687 = vadd.xlane.f32.xlu0 %v4686
        %v4688 = vpop.xlane.xlu0 %4687
        %v4689 = vsel %vm1384, %v4668, 0.0
        %4690 = vadd.xlane.f32.xlu0 %v4689
        %v4691 = vpop.xlane.xlu0 %4690
        %v4692 = vsel %vm1384, %v4670, 0.0
        %4693 = vadd.xlane.f32.xlu0 %v4692
        %v4694 = vpop.xlane.xlu0 %4693
        %v4695 = vrcp.pop %v4673
        %v4696 = vrcp.pop %v4676
        %v4697 = vrcp.pop %v4679
        %v4698 = vrcp.pop %v4682
        %v4699 = vrcp.pop %v4685
        %v4700 = vrcp.pop %v4688
        %v4701 = vrcp.pop %v4691
        %v4702 = vrcp.pop %v4694
        %v4703 = vmul.f32 %v4656, %v4695
        %v4704 = vmul.f32 %v4658, %v4696
        %v4705 = vmul.f32 %v4660, %v4697
        %v4706 = vmul.f32 %v4662, %v4698
        %v4707 = vmul.f32 %v4664, %v4699
        %v4708 = vmul.f32 %v4666, %v4700
        %v4709 = vmul.f32 %v4668, %v4701
        %v4710 = vmul.f32 %v4670, %v4702
        %v4711 = vpack.c.bf16 %v4703, %v4703
        %v4712 = vpack.c.bf16 %v4704, %v4704
        %v4713 = vpack.c.bf16 %v4705, %v4705
        %v4714 = vpack.c.bf16 %v4706, %v4706
        %v4715 = vpack.c.bf16 %v4707, %v4707
        %v4716 = vpack.c.bf16 %v4708, %v4708
        %v4717 = vpack.c.bf16 %v4709, %v4709
        %v4718 = vpack.c.bf16 %v4710, %v4710
        %v4721 = vunpack.c.l.b16 %v4711
        %v4722 = vunpack.c.l.b16 %v4712
        %v4723 = vpack.c.b16 %v4722, %v4721
        %v4726 = vunpack.c.l.b16 %v4472
        %v4727 = vunpack.c.l.b16 %v4474
        %v4728 = vpack.c.b16 %v4727, %v4726
        %v4731 = vsel %vm1384, %v4723, 0
        %4733 = vmatpush.bf16.msra.mxu0 0
        %4734 = vmatpush.bf16.msra.mxu0 0
        %4735 = vmatpush.bf16.msra.mxu0 0
        %4736 = vmatpush.bf16.msra.mxu0 0
        %4737 = vmatpush.bf16.msra.mxu0 0
        %4738 = vmatpush.bf16.msra.mxu0 0
        %4739 = vmatpush.bf16.msra.mxu0 0
        %4740 = vmatpush.bf16.msra.mxu0 %v4728
        %4741 = vmatmul.bf16.gmra.mxu0 %v4731
        %v4742 = vpop.f32.mrf.mxu0
        %v4743 = vadd.f32 0.0, %v4742
        %v4744 = vpop.f32.mrf.mxu0
        %v4745 = vadd.f32 0.0, %v4744
        %4746 = vdwg.mxu0
        %v4749 = vunpack.c.l.b16 %v4713
        %v4750 = vunpack.c.l.b16 %v4714
        %v4751 = vpack.c.b16 %v4750, %v4749
        %v4754 = vunpack.c.l.b16 %v4476
        %v4755 = vunpack.c.l.b16 %v4478
        %v4756 = vpack.c.b16 %v4755, %v4754
        %v4759 = vsel %vm1384, %v4751, 0
        %4761 = vmatpush.bf16.msra.mxu0 0
        %4762 = vmatpush.bf16.msra.mxu0 0
        %4763 = vmatpush.bf16.msra.mxu0 0
        %4764 = vmatpush.bf16.msra.mxu0 0
        %4765 = vmatpush.bf16.msra.mxu0 0
        %4766 = vmatpush.bf16.msra.mxu0 0
        %4767 = vmatpush.bf16.msra.mxu0 0
        %4768 = vmatpush.bf16.msra.mxu0 %v4756
        %4769 = vmatmul.bf16.gmra.mxu0 %v4759
        %v4770 = vpop.f32.mrf.mxu0
        %v4771 = vadd.f32 0.0, %v4770
        %v4772 = vpop.f32.mrf.mxu0
        %v4773 = vadd.f32 0.0, %v4772
        %4774 = vdwg.mxu0
        %v4777 = vunpack.c.l.b16 %v4715
        %v4778 = vunpack.c.l.b16 %v4716
        %v4779 = vpack.c.b16 %v4778, %v4777
        %v4782 = vunpack.c.l.b16 %v4480
        %v4783 = vunpack.c.l.b16 %v4482
        %v4784 = vpack.c.b16 %v4783, %v4782
        %v4787 = vsel %vm1384, %v4779, 0
        %4789 = vmatpush.bf16.msra.mxu0 0
        %4790 = vmatpush.bf16.msra.mxu0 0
        %4791 = vmatpush.bf16.msra.mxu0 0
        %4792 = vmatpush.bf16.msra.mxu0 0
        %4793 = vmatpush.bf16.msra.mxu0 0
        %4794 = vmatpush.bf16.msra.mxu0 0
        %4795 = vmatpush.bf16.msra.mxu0 0
        %4796 = vmatpush.bf16.msra.mxu0 %v4784
        %4797 = vmatmul.bf16.gmra.mxu0 %v4787
        %v4798 = vpop.f32.mrf.mxu0
        %v4799 = vadd.f32 0.0, %v4798
        %v4800 = vpop.f32.mrf.mxu0
        %v4801 = vadd.f32 0.0, %v4800
        %4802 = vdwg.mxu0
        %v4805 = vunpack.c.l.b16 %v4717
        %v4806 = vunpack.c.l.b16 %v4718
        %v4807 = vpack.c.b16 %v4806, %v4805
        %v4810 = vunpack.c.l.b16 %v4484
        %v4811 = vunpack.c.l.b16 %v4486
        %v4812 = vpack.c.b16 %v4811, %v4810
        %v4815 = vsel %vm1384, %v4807, 0
        %4817 = vmatpush.bf16.msra.mxu0 0
        %4818 = vmatpush.bf16.msra.mxu0 0
        %4819 = vmatpush.bf16.msra.mxu0 0
        %4820 = vmatpush.bf16.msra.mxu0 0
        %4821 = vmatpush.bf16.msra.mxu0 0
        %4822 = vmatpush.bf16.msra.mxu0 0
        %4823 = vmatpush.bf16.msra.mxu0 0
        %4824 = vmatpush.bf16.msra.mxu0 %v4812
        %4825 = vmatmul.bf16.gmra.mxu0 %v4815
        %v4826 = vpop.f32.mrf.mxu0
        %v4827 = vadd.f32 0.0, %v4826
        %v4828 = vpop.f32.mrf.mxu0
        %v4829 = vadd.f32 0.0, %v4828
        %4830 = vdwg.mxu0
        %4831 = vrot.lane.b32.xlu0 %v4471, 96
        %v4832 = vpop.permute.xlu0 %4831
        %4833 = vrot.lane.b32.xlu0 %v4473, 96
        %v4834 = vpop.permute.xlu0 %4833
        %4835 = vrot.lane.b32.xlu0 %v4475, 96
        %v4836 = vpop.permute.xlu0 %4835
        %4837 = vrot.lane.b32.xlu0 %v4477, 96
        %v4838 = vpop.permute.xlu0 %4837
        %4839 = vrot.lane.b32.xlu0 %v4479, 96
        %v4840 = vpop.permute.xlu0 %4839
        %4841 = vrot.lane.b32.xlu0 %v4481, 96
        %v4842 = vpop.permute.xlu0 %4841
        %4843 = vrot.lane.b32.xlu0 %v4483, 96
        %v4844 = vpop.permute.xlu0 %4843
        %4845 = vrot.lane.b32.xlu0 %v4485, 96
        %v4846 = vpop.permute.xlu0 %4845
        %v4847 = vrot.slane %v4832, 4
        %v4848 = vrot.slane %v4834, 4
        %v4849 = vrot.slane %v4836, 4
        %v4850 = vrot.slane %v4838, 4
        %v4851 = vrot.slane %v4840, 4
        %v4852 = vrot.slane %v4842, 4
        %v4853 = vrot.slane %v4844, 4
        %v4854 = vrot.slane %v4846, 4
        %4855 = vrot.lane.b32.xlu0 %v4505, 96
        %v4856 = vpop.permute.xlu0 %4855
        %v4857 = vunpack.c.l.b16 %v4847
        %v4858 = vunpack.c.l.b16 %v4848
        %v4859 = vpack.c.b16 %v4858, %v4857
        %v4861 = vsel %vm1257, %v4856, 0
        %v4864 = vsel %vm1257, %v4859, 0
        %4866 = vmatpush.bf16.xpose.msra.mxu0 0
        %4867 = vmatpush.bf16.xpose.msra.mxu0 0
        %4868 = vmatpush.bf16.xpose.msra.mxu0 0
        %4869 = vmatpush.bf16.xpose.msra.mxu0 0
        %4870 = vmatpush.bf16.xpose.msra.mxu0 0
        %4871 = vmatpush.bf16.xpose.msra.mxu0 0
        %4872 = vmatpush.bf16.xpose.msra.mxu0 0
        %4873 = vmatpush.bf16.xpose.msra.mxu0 %v4864
        %4874 = vmatmul.bf16.gmra.mxu0 %v4861
        %v4875 = vpop.f32.mrf.mxu0
        %v4876 = vadd.f32 0.0, %v4875
        %v4877 = vpop.f32.mrf.mxu0
        %v4878 = vadd.f32 0.0, %v4877
        %4879 = vdwg.mxu0
        %4880 = vrot.lane.b32.xlu0 %v4531, 96
        %v4881 = vpop.permute.xlu0 %4880
        %v4882 = vunpack.c.l.b16 %v4849
        %v4883 = vunpack.c.l.b16 %v4850
        %v4884 = vpack.c.b16 %v4883, %v4882
        %v4886 = vsel %vm1257, %v4881, 0
        %v4889 = vsel %vm1257, %v4884, 0
        %4891 = vmatpush.bf16.xpose.msra.mxu0 0
        %4892 = vmatpush.bf16.xpose.msra.mxu0 0
        %4893 = vmatpush.bf16.xpose.msra.mxu0 0
        %4894 = vmatpush.bf16.xpose.msra.mxu0 0
        %4895 = vmatpush.bf16.xpose.msra.mxu0 0
        %4896 = vmatpush.bf16.xpose.msra.mxu0 0
        %4897 = vmatpush.bf16.xpose.msra.mxu0 0
        %4898 = vmatpush.bf16.xpose.msra.mxu0 %v4889
        %4899 = vmatmul.bf16.gmra.mxu0 %v4886
        %v4900 = vpop.f32.mrf.mxu0
        %v4901 = vadd.f32 0.0, %v4900
        %v4902 = vpop.f32.mrf.mxu0
        %v4903 = vadd.f32 0.0, %v4902
        %4904 = vdwg.mxu0
        %4905 = vrot.lane.b32.xlu0 %v4557, 96
        %v4906 = vpop.permute.xlu0 %4905
        %v4907 = vunpack.c.l.b16 %v4851
        %v4908 = vunpack.c.l.b16 %v4852
        %v4909 = vpack.c.b16 %v4908, %v4907
        %v4911 = vsel %vm1257, %v4906, 0
        %v4914 = vsel %vm1257, %v4909, 0
        %4916 = vmatpush.bf16.xpose.msra.mxu0 0
        %4917 = vmatpush.bf16.xpose.msra.mxu0 0
        %4918 = vmatpush.bf16.xpose.msra.mxu0 0
        %4919 = vmatpush.bf16.xpose.msra.mxu0 0
        %4920 = vmatpush.bf16.xpose.msra.mxu0 0
        %4921 = vmatpush.bf16.xpose.msra.mxu0 0
        %4922 = vmatpush.bf16.xpose.msra.mxu0 0
        %4923 = vmatpush.bf16.xpose.msra.mxu0 %v4914
        %4924 = vmatmul.bf16.gmra.mxu0 %v4911
        %v4925 = vpop.f32.mrf.mxu0
        %v4926 = vadd.f32 0.0, %v4925
        %v4927 = vpop.f32.mrf.mxu0
        %v4928 = vadd.f32 0.0, %v4927
        %4929 = vdwg.mxu0
        %4930 = vrot.lane.b32.xlu0 %v4583, 96
        %v4931 = vpop.permute.xlu0 %4930
        %v4932 = vunpack.c.l.b16 %v4853
        %v4933 = vunpack.c.l.b16 %v4854
        %v4934 = vpack.c.b16 %v4933, %v4932
        %v4936 = vsel %vm1257, %v4931, 0
        %v4939 = vsel %vm1257, %v4934, 0
        %4941 = vmatpush.bf16.xpose.msra.mxu0 0
        %4942 = vmatpush.bf16.xpose.msra.mxu0 0
        %4943 = vmatpush.bf16.xpose.msra.mxu0 0
        %4944 = vmatpush.bf16.xpose.msra.mxu0 0
        %4945 = vmatpush.bf16.xpose.msra.mxu0 0
        %4946 = vmatpush.bf16.xpose.msra.mxu0 0
        %4947 = vmatpush.bf16.xpose.msra.mxu0 0
        %4948 = vmatpush.bf16.xpose.msra.mxu0 %v4939
        %4949 = vmatmul.bf16.gmra.mxu0 %v4936
        %v4950 = vpop.f32.mrf.mxu0
        %v4951 = vadd.f32 0.0, %v4950
        %v4952 = vpop.f32.mrf.mxu0
        %v4953 = vadd.f32 0.0, %v4952
        %4954 = vdwg.mxu0
        %v4955 = vmul.f32 %v4876, 0.17677669
        %v4956 = vmul.f32 %v4878, 0.17677669
        %v4957 = vmul.f32 %v4901, 0.17677669
        %v4958 = vmul.f32 %v4903, 0.17677669
        %v4959 = vmul.f32 %v4926, 0.17677669
        %v4960 = vmul.f32 %v4928, 0.17677669
        %v4961 = vmul.f32 %v4951, 0.17677669
        %v4962 = vmul.f32 %v4953, 0.17677669
        %v4963 = vadd.f32 %v4955, %v1368
        %v4964 = vadd.f32 %v4956, %v1368
        %v4965 = vadd.f32 %v4957, %v1369
        %v4966 = vadd.f32 %v4958, %v1369
        %v4967 = vadd.f32 %v4959, %v1370
        %v4968 = vadd.f32 %v4960, %v1370
        %v4969 = vadd.f32 %v4961, %v1371
        %v4970 = vadd.f32 %v4962, %v1371
        %v4971 = vsel %vm1384, %v4963, -inf
        %4972 = vmax.xlane.f32.xlu0 %v4971
        %v4973 = vpop.xlane.xlu0 %4972
        %v4974 = vsel %vm1384, %v4964, -inf
        %4975 = vmax.xlane.f32.xlu0 %v4974
        %v4976 = vpop.xlane.xlu0 %4975
        %v4977 = vsel %vm1384, %v4965, -inf
        %4978 = vmax.xlane.f32.xlu0 %v4977
        %v4979 = vpop.xlane.xlu0 %4978
        %v4980 = vsel %vm1384, %v4966, -inf
        %4981 = vmax.xlane.f32.xlu0 %v4980
        %v4982 = vpop.xlane.xlu0 %4981
        %v4983 = vsel %vm1384, %v4967, -inf
        %4984 = vmax.xlane.f32.xlu0 %v4983
        %v4985 = vpop.xlane.xlu0 %4984
        %v4986 = vsel %vm1384, %v4968, -inf
        %4987 = vmax.xlane.f32.xlu0 %v4986
        %v4988 = vpop.xlane.xlu0 %4987
        %v4989 = vsel %vm1384, %v4969, -inf
        %4990 = vmax.xlane.f32.xlu0 %v4989
        %v4991 = vpop.xlane.xlu0 %4990
        %v4992 = vsel %vm1384, %v4970, -inf
        %4993 = vmax.xlane.f32.xlu0 %v4992
        %v4994 = vpop.xlane.xlu0 %4993
        %v4995 = vsub.f32 %v4963, %v4973
        %v4996 = vsub.f32 %v4964, %v4976
        %v4997 = vsub.f32 %v4965, %v4979
        %v4998 = vsub.f32 %v4966, %v4982
        %v4999 = vsub.f32 %v4967, %v4985
        %v5000 = vsub.f32 %v4968, %v4988
        %v5001 = vsub.f32 %v4969, %v4991
        %v5002 = vsub.f32 %v4970, %v4994
        %v5003 = vmul.f32 %v4995, 1.442695
        %v5004 = vpow.pop %v5003
        %v5005 = vmul.f32 %v4996, 1.442695
        %v5006 = vpow.pop %v5005
        %v5007 = vmul.f32 %v4997, 1.442695
        %v5008 = vpow.pop %v5007
        %v5009 = vmul.f32 %v4998, 1.442695
        %v5010 = vpow.pop %v5009
        %v5011 = vmul.f32 %v4999, 1.442695
        %v5012 = vpow.pop %v5011
        %v5013 = vmul.f32 %v5000, 1.442695
        %v5014 = vpow.pop %v5013
        %v5015 = vmul.f32 %v5001, 1.442695
        %v5016 = vpow.pop %v5015
        %v5017 = vmul.f32 %v5002, 1.442695
        %v5018 = vpow.pop %v5017
        %v5019 = vsel %vm1384, %v5004, 0.0
        %5020 = vadd.xlane.f32.xlu0 %v5019
        %v5021 = vpop.xlane.xlu0 %5020
        %v5022 = vsel %vm1384, %v5006, 0.0
        %5023 = vadd.xlane.f32.xlu0 %v5022
        %v5024 = vpop.xlane.xlu0 %5023
        %v5025 = vsel %vm1384, %v5008, 0.0
        %5026 = vadd.xlane.f32.xlu0 %v5025
        %v5027 = vpop.xlane.xlu0 %5026
        %v5028 = vsel %vm1384, %v5010, 0.0
        %5029 = vadd.xlane.f32.xlu0 %v5028
        %v5030 = vpop.xlane.xlu0 %5029
        %v5031 = vsel %vm1384, %v5012, 0.0
        %5032 = vadd.xlane.f32.xlu0 %v5031
        %v5033 = vpop.xlane.xlu0 %5032
        %v5034 = vsel %vm1384, %v5014, 0.0
        %5035 = vadd.xlane.f32.xlu0 %v5034
        %v5036 = vpop.xlane.xlu0 %5035
        %v5037 = vsel %vm1384, %v5016, 0.0
        %5038 = vadd.xlane.f32.xlu0 %v5037
        %v5039 = vpop.xlane.xlu0 %5038
        %v5040 = vsel %vm1384, %v5018, 0.0
        %5041 = vadd.xlane.f32.xlu0 %v5040
        %v5042 = vpop.xlane.xlu0 %5041
        %v5043 = vrcp.pop %v5021
        %v5044 = vrcp.pop %v5024
        %v5045 = vrcp.pop %v5027
        %v5046 = vrcp.pop %v5030
        %v5047 = vrcp.pop %v5033
        %v5048 = vrcp.pop %v5036
        %v5049 = vrcp.pop %v5039
        %v5050 = vrcp.pop %v5042
        %v5051 = vmul.f32 %v5004, %v5043
        %v5052 = vmul.f32 %v5006, %v5044
        %v5053 = vmul.f32 %v5008, %v5045
        %v5054 = vmul.f32 %v5010, %v5046
        %v5055 = vmul.f32 %v5012, %v5047
        %v5056 = vmul.f32 %v5014, %v5048
        %v5057 = vmul.f32 %v5016, %v5049
        %v5058 = vmul.f32 %v5018, %v5050
        %v5059 = vpack.c.bf16 %v5051, %v5051
        %v5060 = vpack.c.bf16 %v5052, %v5052
        %v5061 = vpack.c.bf16 %v5053, %v5053
        %v5062 = vpack.c.bf16 %v5054, %v5054
        %v5063 = vpack.c.bf16 %v5055, %v5055
        %v5064 = vpack.c.bf16 %v5056, %v5056
        %v5065 = vpack.c.bf16 %v5057, %v5057
        %v5066 = vpack.c.bf16 %v5058, %v5058
        %v5069 = vunpack.c.l.b16 %v5059
        %v5070 = vunpack.c.l.b16 %v5060
        %v5071 = vpack.c.b16 %v5070, %v5069
        %5072 = vrot.lane.b32.xlu0 %v4728, 96
        %v5073 = vpop.permute.xlu0 %5072
        %v5076 = vsel %vm1384, %v5071, 0
        %5078 = vmatpush.bf16.msra.mxu0 0
        %5079 = vmatpush.bf16.msra.mxu0 0
        %5080 = vmatpush.bf16.msra.mxu0 0
        %5081 = vmatpush.bf16.msra.mxu0 0
        %5082 = vmatpush.bf16.msra.mxu0 0
        %5083 = vmatpush.bf16.msra.mxu0 0
        %5084 = vmatpush.bf16.msra.mxu0 0
        %5085 = vmatpush.bf16.msra.mxu0 %v5073
        %5086 = vmatmul.bf16.gmra.mxu0 %v5076
        %v5087 = vpop.f32.mrf.mxu0
        %v5088 = vadd.f32 0.0, %v5087
        %v5089 = vpop.f32.mrf.mxu0
        %v5090 = vadd.f32 0.0, %v5089
        %5091 = vdwg.mxu0
        %v5094 = vunpack.c.l.b16 %v5061
        %v5095 = vunpack.c.l.b16 %v5062
        %v5096 = vpack.c.b16 %v5095, %v5094
        %5097 = vrot.lane.b32.xlu0 %v4756, 96
        %v5098 = vpop.permute.xlu0 %5097
        %v5101 = vsel %vm1384, %v5096, 0
        %5103 = vmatpush.bf16.msra.mxu0 0
        %5104 = vmatpush.bf16.msra.mxu0 0
        %5105 = vmatpush.bf16.msra.mxu0 0
        %5106 = vmatpush.bf16.msra.mxu0 0
        %5107 = vmatpush.bf16.msra.mxu0 0
        %5108 = vmatpush.bf16.msra.mxu0 0
        %5109 = vmatpush.bf16.msra.mxu0 0
        %5110 = vmatpush.bf16.msra.mxu0 %v5098
        %5111 = vmatmul.bf16.gmra.mxu0 %v5101
        %v5112 = vpop.f32.mrf.mxu0
        %v5113 = vadd.f32 0.0, %v5112
        %v5114 = vpop.f32.mrf.mxu0
        %v5115 = vadd.f32 0.0, %v5114
        %5116 = vdwg.mxu0
        %v5119 = vunpack.c.l.b16 %v5063
        %v5120 = vunpack.c.l.b16 %v5064
        %v5121 = vpack.c.b16 %v5120, %v5119
        %5122 = vrot.lane.b32.xlu0 %v4784, 96
        %v5123 = vpop.permute.xlu0 %5122
        %v5126 = vsel %vm1384, %v5121, 0
        %5128 = vmatpush.bf16.msra.mxu0 0
        %5129 = vmatpush.bf16.msra.mxu0 0
        %5130 = vmatpush.bf16.msra.mxu0 0
        %5131 = vmatpush.bf16.msra.mxu0 0
        %5132 = vmatpush.bf16.msra.mxu0 0
        %5133 = vmatpush.bf16.msra.mxu0 0
        %5134 = vmatpush.bf16.msra.mxu0 0
        %5135 = vmatpush.bf16.msra.mxu0 %v5123
        %5136 = vmatmul.bf16.gmra.mxu0 %v5126
        %v5137 = vpop.f32.mrf.mxu0
        %v5138 = vadd.f32 0.0, %v5137
        %v5139 = vpop.f32.mrf.mxu0
        %v5140 = vadd.f32 0.0, %v5139
        %5141 = vdwg.mxu0
        %v5144 = vunpack.c.l.b16 %v5065
        %v5145 = vunpack.c.l.b16 %v5066
        %v5146 = vpack.c.b16 %v5145, %v5144
        %5147 = vrot.lane.b32.xlu0 %v4812, 96
        %v5148 = vpop.permute.xlu0 %5147
        %v5151 = vsel %vm1384, %v5146, 0
        %5153 = vmatpush.bf16.msra.mxu0 0
        %5154 = vmatpush.bf16.msra.mxu0 0
        %5155 = vmatpush.bf16.msra.mxu0 0
        %5156 = vmatpush.bf16.msra.mxu0 0
        %5157 = vmatpush.bf16.msra.mxu0 0
        %5158 = vmatpush.bf16.msra.mxu0 0
        %5159 = vmatpush.bf16.msra.mxu0 0
        %5160 = vmatpush.bf16.msra.mxu0 %v5148
        %5161 = vmatmul.bf16.gmra.mxu0 %v5151
        %v5162 = vpop.f32.mrf.mxu0
        %v5163 = vadd.f32 0.0, %v5162
        %v5164 = vpop.f32.mrf.mxu0
        %v5165 = vadd.f32 0.0, %v5164
        %5166 = vdwg.mxu0
        %5167 = vrot.lane.b32.xlu0 %v4471, 64
        %v5168 = vpop.permute.xlu0 %5167
        %5169 = vrot.lane.b32.xlu0 %v4473, 64
        %v5170 = vpop.permute.xlu0 %5169
        %5171 = vrot.lane.b32.xlu0 %v4475, 64
        %v5172 = vpop.permute.xlu0 %5171
        %5173 = vrot.lane.b32.xlu0 %v4477, 64
        %v5174 = vpop.permute.xlu0 %5173
        %5175 = vrot.lane.b32.xlu0 %v4479, 64
        %v5176 = vpop.permute.xlu0 %5175
        %5177 = vrot.lane.b32.xlu0 %v4481, 64
        %v5178 = vpop.permute.xlu0 %5177
        %5179 = vrot.lane.b32.xlu0 %v4483, 64
        %v5180 = vpop.permute.xlu0 %5179
        %5181 = vrot.lane.b32.xlu0 %v4485, 64
        %v5182 = vpop.permute.xlu0 %5181
        %v5183 = vrot.slane %v5168, 4
        %v5184 = vrot.slane %v5170, 4
        %v5185 = vrot.slane %v5172, 4
        %v5186 = vrot.slane %v5174, 4
        %v5187 = vrot.slane %v5176, 4
        %v5188 = vrot.slane %v5178, 4
        %v5189 = vrot.slane %v5180, 4
        %v5190 = vrot.slane %v5182, 4
        %5191 = vrot.lane.b32.xlu0 %v4505, 64
        %v5192 = vpop.permute.xlu0 %5191
        %v5193 = vunpack.c.l.b16 %v5183
        %v5194 = vunpack.c.l.b16 %v5184
        %v5195 = vpack.c.b16 %v5194, %v5193
        %v5197 = vsel %vm1257, %v5192, 0
        %v5200 = vsel %vm1257, %v5195, 0
        %5202 = vmatpush.bf16.xpose.msra.mxu0 0
        %5203 = vmatpush.bf16.xpose.msra.mxu0 0
        %5204 = vmatpush.bf16.xpose.msra.mxu0 0
        %5205 = vmatpush.bf16.xpose.msra.mxu0 0
        %5206 = vmatpush.bf16.xpose.msra.mxu0 0
        %5207 = vmatpush.bf16.xpose.msra.mxu0 0
        %5208 = vmatpush.bf16.xpose.msra.mxu0 0
        %5209 = vmatpush.bf16.xpose.msra.mxu0 %v5200
        %5210 = vmatmul.bf16.gmra.mxu0 %v5197
        %v5211 = vpop.f32.mrf.mxu0
        %v5212 = vadd.f32 0.0, %v5211
        %v5213 = vpop.f32.mrf.mxu0
        %v5214 = vadd.f32 0.0, %v5213
        %5215 = vdwg.mxu0
        %5216 = vrot.lane.b32.xlu0 %v4531, 64
        %v5217 = vpop.permute.xlu0 %5216
        %v5218 = vunpack.c.l.b16 %v5185
        %v5219 = vunpack.c.l.b16 %v5186
        %v5220 = vpack.c.b16 %v5219, %v5218
        %v5222 = vsel %vm1257, %v5217, 0
        %v5225 = vsel %vm1257, %v5220, 0
        %5227 = vmatpush.bf16.xpose.msra.mxu0 0
        %5228 = vmatpush.bf16.xpose.msra.mxu0 0
        %5229 = vmatpush.bf16.xpose.msra.mxu0 0
        %5230 = vmatpush.bf16.xpose.msra.mxu0 0
        %5231 = vmatpush.bf16.xpose.msra.mxu0 0
        %5232 = vmatpush.bf16.xpose.msra.mxu0 0
        %5233 = vmatpush.bf16.xpose.msra.mxu0 0
        %5234 = vmatpush.bf16.xpose.msra.mxu0 %v5225
        %5235 = vmatmul.bf16.gmra.mxu0 %v5222
        %v5236 = vpop.f32.mrf.mxu0
        %v5237 = vadd.f32 0.0, %v5236
        %v5238 = vpop.f32.mrf.mxu0
        %v5239 = vadd.f32 0.0, %v5238
        %5240 = vdwg.mxu0
        %5241 = vrot.lane.b32.xlu0 %v4557, 64
        %v5242 = vpop.permute.xlu0 %5241
        %v5243 = vunpack.c.l.b16 %v5187
        %v5244 = vunpack.c.l.b16 %v5188
        %v5245 = vpack.c.b16 %v5244, %v5243
        %v5247 = vsel %vm1257, %v5242, 0
        %v5250 = vsel %vm1257, %v5245, 0
        %5252 = vmatpush.bf16.xpose.msra.mxu0 0
        %5253 = vmatpush.bf16.xpose.msra.mxu0 0
        %5254 = vmatpush.bf16.xpose.msra.mxu0 0
        %5255 = vmatpush.bf16.xpose.msra.mxu0 0
        %5256 = vmatpush.bf16.xpose.msra.mxu0 0
        %5257 = vmatpush.bf16.xpose.msra.mxu0 0
        %5258 = vmatpush.bf16.xpose.msra.mxu0 0
        %5259 = vmatpush.bf16.xpose.msra.mxu0 %v5250
        %5260 = vmatmul.bf16.gmra.mxu0 %v5247
        %v5261 = vpop.f32.mrf.mxu0
        %v5262 = vadd.f32 0.0, %v5261
        %v5263 = vpop.f32.mrf.mxu0
        %v5264 = vadd.f32 0.0, %v5263
        %5265 = vdwg.mxu0
        %5266 = vrot.lane.b32.xlu0 %v4583, 64
        %v5267 = vpop.permute.xlu0 %5266
        %v5268 = vunpack.c.l.b16 %v5189
        %v5269 = vunpack.c.l.b16 %v5190
        %v5270 = vpack.c.b16 %v5269, %v5268
        %v5272 = vsel %vm1257, %v5267, 0
        %v5275 = vsel %vm1257, %v5270, 0
        %5277 = vmatpush.bf16.xpose.msra.mxu0 0
        %5278 = vmatpush.bf16.xpose.msra.mxu0 0
        %5279 = vmatpush.bf16.xpose.msra.mxu0 0
        %5280 = vmatpush.bf16.xpose.msra.mxu0 0
        %5281 = vmatpush.bf16.xpose.msra.mxu0 0
        %5282 = vmatpush.bf16.xpose.msra.mxu0 0
        %5283 = vmatpush.bf16.xpose.msra.mxu0 0
        %5284 = vmatpush.bf16.xpose.msra.mxu0 %v5275
        %5285 = vmatmul.bf16.gmra.mxu0 %v5272
        %v5286 = vpop.f32.mrf.mxu0
        %v5287 = vadd.f32 0.0, %v5286
        %v5288 = vpop.f32.mrf.mxu0
        %v5289 = vadd.f32 0.0, %v5288
        %5290 = vdwg.mxu0
        %v5291 = vmul.f32 %v5212, 0.17677669
        %v5292 = vmul.f32 %v5214, 0.17677669
        %v5293 = vmul.f32 %v5237, 0.17677669
        %v5294 = vmul.f32 %v5239, 0.17677669
        %v5295 = vmul.f32 %v5262, 0.17677669
        %v5296 = vmul.f32 %v5264, 0.17677669
        %v5297 = vmul.f32 %v5287, 0.17677669
        %v5298 = vmul.f32 %v5289, 0.17677669
        %v5299 = vadd.f32 %v5291, %v1368
        %v5300 = vadd.f32 %v5292, %v1368
        %v5301 = vadd.f32 %v5293, %v1369
        %v5302 = vadd.f32 %v5294, %v1369
        %v5303 = vadd.f32 %v5295, %v1370
        %v5304 = vadd.f32 %v5296, %v1370
        %v5305 = vadd.f32 %v5297, %v1371
        %v5306 = vadd.f32 %v5298, %v1371
        %v5307 = vsel %vm1384, %v5299, -inf
        %5308 = vmax.xlane.f32.xlu0 %v5307
        %v5309 = vpop.xlane.xlu0 %5308
        %v5310 = vsel %vm1384, %v5300, -inf
        %5311 = vmax.xlane.f32.xlu0 %v5310
        %v5312 = vpop.xlane.xlu0 %5311
        %v5313 = vsel %vm1384, %v5301, -inf
        %5314 = vmax.xlane.f32.xlu0 %v5313
        %v5315 = vpop.xlane.xlu0 %5314
        %v5316 = vsel %vm1384, %v5302, -inf
        %5317 = vmax.xlane.f32.xlu0 %v5316
        %v5318 = vpop.xlane.xlu0 %5317
        %v5319 = vsel %vm1384, %v5303, -inf
        %5320 = vmax.xlane.f32.xlu0 %v5319
        %v5321 = vpop.xlane.xlu0 %5320
        %v5322 = vsel %vm1384, %v5304, -inf
        %5323 = vmax.xlane.f32.xlu0 %v5322
        %v5324 = vpop.xlane.xlu0 %5323
        %v5325 = vsel %vm1384, %v5305, -inf
        %5326 = vmax.xlane.f32.xlu0 %v5325
        %v5327 = vpop.xlane.xlu0 %5326
        %v5328 = vsel %vm1384, %v5306, -inf
        %5329 = vmax.xlane.f32.xlu0 %v5328
        %v5330 = vpop.xlane.xlu0 %5329
        %v5331 = vsub.f32 %v5299, %v5309
        %v5332 = vsub.f32 %v5300, %v5312
        %v5333 = vsub.f32 %v5301, %v5315
        %v5334 = vsub.f32 %v5302, %v5318
        %v5335 = vsub.f32 %v5303, %v5321
        %v5336 = vsub.f32 %v5304, %v5324
        %v5337 = vsub.f32 %v5305, %v5327
        %v5338 = vsub.f32 %v5306, %v5330
        %v5339 = vmul.f32 %v5331, 1.442695
        %v5340 = vpow.pop %v5339
        %v5341 = vmul.f32 %v5332, 1.442695
        %v5342 = vpow.pop %v5341
        %v5343 = vmul.f32 %v5333, 1.442695
        %v5344 = vpow.pop %v5343
        %v5345 = vmul.f32 %v5334, 1.442695
        %v5346 = vpow.pop %v5345
        %v5347 = vmul.f32 %v5335, 1.442695
        %v5348 = vpow.pop %v5347
        %v5349 = vmul.f32 %v5336, 1.442695
        %v5350 = vpow.pop %v5349
        %v5351 = vmul.f32 %v5337, 1.442695
        %v5352 = vpow.pop %v5351
        %v5353 = vmul.f32 %v5338, 1.442695
        %v5354 = vpow.pop %v5353
        %v5355 = vsel %vm1384, %v5340, 0.0
        %5356 = vadd.xlane.f32.xlu0 %v5355
        %v5357 = vpop.xlane.xlu0 %5356
        %v5358 = vsel %vm1384, %v5342, 0.0
        %5359 = vadd.xlane.f32.xlu0 %v5358
        %v5360 = vpop.xlane.xlu0 %5359
        %v5361 = vsel %vm1384, %v5344, 0.0
        %5362 = vadd.xlane.f32.xlu0 %v5361
        %v5363 = vpop.xlane.xlu0 %5362
        %v5364 = vsel %vm1384, %v5346, 0.0
        %5365 = vadd.xlane.f32.xlu0 %v5364
        %v5366 = vpop.xlane.xlu0 %5365
        %v5367 = vsel %vm1384, %v5348, 0.0
        %5368 = vadd.xlane.f32.xlu0 %v5367
        %v5369 = vpop.xlane.xlu0 %5368
        %v5370 = vsel %vm1384, %v5350, 0.0
        %5371 = vadd.xlane.f32.xlu0 %v5370
        %v5372 = vpop.xlane.xlu0 %5371
        %v5373 = vsel %vm1384, %v5352, 0.0
        %5374 = vadd.xlane.f32.xlu0 %v5373
        %v5375 = vpop.xlane.xlu0 %5374
        %v5376 = vsel %vm1384, %v5354, 0.0
        %5377 = vadd.xlane.f32.xlu0 %v5376
        %v5378 = vpop.xlane.xlu0 %5377
        %v5379 = vrcp.pop %v5357
        %v5380 = vrcp.pop %v5360
        %v5381 = vrcp.pop %v5363
        %v5382 = vrcp.pop %v5366
        %v5383 = vrcp.pop %v5369
        %v5384 = vrcp.pop %v5372
        %v5385 = vrcp.pop %v5375
        %v5386 = vrcp.pop %v5378
        %v5387 = vmul.f32 %v5340, %v5379
        %v5388 = vmul.f32 %v5342, %v5380
        %v5389 = vmul.f32 %v5344, %v5381
        %v5390 = vmul.f32 %v5346, %v5382
        %v5391 = vmul.f32 %v5348, %v5383
        %v5392 = vmul.f32 %v5350, %v5384
        %v5393 = vmul.f32 %v5352, %v5385
        %v5394 = vmul.f32 %v5354, %v5386
        %v5395 = vpack.c.bf16 %v5387, %v5387
        %v5396 = vpack.c.bf16 %v5388, %v5388
        %v5397 = vpack.c.bf16 %v5389, %v5389
        %v5398 = vpack.c.bf16 %v5390, %v5390
        %v5399 = vpack.c.bf16 %v5391, %v5391
        %v5400 = vpack.c.bf16 %v5392, %v5392
        %v5401 = vpack.c.bf16 %v5393, %v5393
        %v5402 = vpack.c.bf16 %v5394, %v5394
        %v5405 = vunpack.c.l.b16 %v5395
        %v5406 = vunpack.c.l.b16 %v5396
        %v5407 = vpack.c.b16 %v5406, %v5405
        %5408 = vrot.lane.b32.xlu0 %v4728, 64
        %v5409 = vpop.permute.xlu0 %5408
        %v5412 = vsel %vm1384, %v5407, 0
        %5414 = vmatpush.bf16.msra.mxu0 0
        %5415 = vmatpush.bf16.msra.mxu0 0
        %5416 = vmatpush.bf16.msra.mxu0 0
        %5417 = vmatpush.bf16.msra.mxu0 0
        %5418 = vmatpush.bf16.msra.mxu0 0
        %5419 = vmatpush.bf16.msra.mxu0 0
        %5420 = vmatpush.bf16.msra.mxu0 0
        %5421 = vmatpush.bf16.msra.mxu0 %v5409
        %5422 = vmatmul.bf16.gmra.mxu0 %v5412
        %v5423 = vpop.f32.mrf.mxu0
        %v5424 = vadd.f32 0.0, %v5423
        %v5425 = vpop.f32.mrf.mxu0
        %v5426 = vadd.f32 0.0, %v5425
        %5427 = vdwg.mxu0
        %v5430 = vunpack.c.l.b16 %v5397
        %v5431 = vunpack.c.l.b16 %v5398
        %v5432 = vpack.c.b16 %v5431, %v5430
        %5433 = vrot.lane.b32.xlu0 %v4756, 64
        %v5434 = vpop.permute.xlu0 %5433
        %v5437 = vsel %vm1384, %v5432, 0
        %5439 = vmatpush.bf16.msra.mxu0 0
        %5440 = vmatpush.bf16.msra.mxu0 0
        %5441 = vmatpush.bf16.msra.mxu0 0
        %5442 = vmatpush.bf16.msra.mxu0 0
        %5443 = vmatpush.bf16.msra.mxu0 0
        %5444 = vmatpush.bf16.msra.mxu0 0
        %5445 = vmatpush.bf16.msra.mxu0 0
        %5446 = vmatpush.bf16.msra.mxu0 %v5434
        %5447 = vmatmul.bf16.gmra.mxu0 %v5437
        %v5448 = vpop.f32.mrf.mxu0
        %v5449 = vadd.f32 0.0, %v5448
        %v5450 = vpop.f32.mrf.mxu0
        %v5451 = vadd.f32 0.0, %v5450
        %5452 = vdwg.mxu0
        %v5455 = vunpack.c.l.b16 %v5399
        %v5456 = vunpack.c.l.b16 %v5400
        %v5457 = vpack.c.b16 %v5456, %v5455
        %5458 = vrot.lane.b32.xlu0 %v4784, 64
        %v5459 = vpop.permute.xlu0 %5458
        %v5462 = vsel %vm1384, %v5457, 0
        %5464 = vmatpush.bf16.msra.mxu0 0
        %5465 = vmatpush.bf16.msra.mxu0 0
        %5466 = vmatpush.bf16.msra.mxu0 0
        %5467 = vmatpush.bf16.msra.mxu0 0
        %5468 = vmatpush.bf16.msra.mxu0 0
        %5469 = vmatpush.bf16.msra.mxu0 0
        %5470 = vmatpush.bf16.msra.mxu0 0
        %5471 = vmatpush.bf16.msra.mxu0 %v5459
        %5472 = vmatmul.bf16.gmra.mxu0 %v5462
        %v5473 = vpop.f32.mrf.mxu0
        %v5474 = vadd.f32 0.0, %v5473
        %v5475 = vpop.f32.mrf.mxu0
        %v5476 = vadd.f32 0.0, %v5475
        %5477 = vdwg.mxu0
        %v5480 = vunpack.c.l.b16 %v5401
        %v5481 = vunpack.c.l.b16 %v5402
        %v5482 = vpack.c.b16 %v5481, %v5480
        %5483 = vrot.lane.b32.xlu0 %v4812, 64
        %v5484 = vpop.permute.xlu0 %5483
        %v5487 = vsel %vm1384, %v5482, 0
        %5489 = vmatpush.bf16.msra.mxu0 0
        %5490 = vmatpush.bf16.msra.mxu0 0
        %5491 = vmatpush.bf16.msra.mxu0 0
        %5492 = vmatpush.bf16.msra.mxu0 0
        %5493 = vmatpush.bf16.msra.mxu0 0
        %5494 = vmatpush.bf16.msra.mxu0 0
        %5495 = vmatpush.bf16.msra.mxu0 0
        %5496 = vmatpush.bf16.msra.mxu0 %v5484
        %5497 = vmatmul.bf16.gmra.mxu0 %v5487
        %v5498 = vpop.f32.mrf.mxu0
        %v5499 = vadd.f32 0.0, %v5498
        %v5500 = vpop.f32.mrf.mxu0
        %v5501 = vadd.f32 0.0, %v5500
        %5502 = vdwg.mxu0
        %5503 = vrot.lane.b32.xlu0 %v4471, 32
        %v5504 = vpop.permute.xlu0 %5503
        %5505 = vrot.lane.b32.xlu0 %v4473, 32
        %v5506 = vpop.permute.xlu0 %5505
        %5507 = vrot.lane.b32.xlu0 %v4475, 32
        %v5508 = vpop.permute.xlu0 %5507
        %5509 = vrot.lane.b32.xlu0 %v4477, 32
        %v5510 = vpop.permute.xlu0 %5509
        %5511 = vrot.lane.b32.xlu0 %v4479, 32
        %v5512 = vpop.permute.xlu0 %5511
        %5513 = vrot.lane.b32.xlu0 %v4481, 32
        %v5514 = vpop.permute.xlu0 %5513
        %5515 = vrot.lane.b32.xlu0 %v4483, 32
        %v5516 = vpop.permute.xlu0 %5515
        %5517 = vrot.lane.b32.xlu0 %v4485, 32
        %v5518 = vpop.permute.xlu0 %5517
        %v5519 = vrot.slane %v5504, 4
        %v5520 = vrot.slane %v5506, 4
        %v5521 = vrot.slane %v5508, 4
        %v5522 = vrot.slane %v5510, 4
        %v5523 = vrot.slane %v5512, 4
        %v5524 = vrot.slane %v5514, 4
        %v5525 = vrot.slane %v5516, 4
        %v5526 = vrot.slane %v5518, 4
        %5527 = vrot.lane.b32.xlu0 %v4505, 32
        %v5528 = vpop.permute.xlu0 %5527
        %v5529 = vunpack.c.l.b16 %v5519
        %v5530 = vunpack.c.l.b16 %v5520
        %v5531 = vpack.c.b16 %v5530, %v5529
        %v5533 = vsel %vm1257, %v5528, 0
        %v5536 = vsel %vm1257, %v5531, 0
        %5538 = vmatpush.bf16.xpose.msra.mxu0 0
        %5539 = vmatpush.bf16.xpose.msra.mxu0 0
        %5540 = vmatpush.bf16.xpose.msra.mxu0 0
        %5541 = vmatpush.bf16.xpose.msra.mxu0 0
        %5542 = vmatpush.bf16.xpose.msra.mxu0 0
        %5543 = vmatpush.bf16.xpose.msra.mxu0 0
        %5544 = vmatpush.bf16.xpose.msra.mxu0 0
        %5545 = vmatpush.bf16.xpose.msra.mxu0 %v5536
        %5546 = vmatmul.bf16.gmra.mxu0 %v5533
        %v5547 = vpop.f32.mrf.mxu0
        %v5548 = vadd.f32 0.0, %v5547
        %v5549 = vpop.f32.mrf.mxu0
        %v5550 = vadd.f32 0.0, %v5549
        %5551 = vdwg.mxu0
        %5552 = vrot.lane.b32.xlu0 %v4531, 32
        %v5553 = vpop.permute.xlu0 %5552
        %v5554 = vunpack.c.l.b16 %v5521
        %v5555 = vunpack.c.l.b16 %v5522
        %v5556 = vpack.c.b16 %v5555, %v5554
        %v5558 = vsel %vm1257, %v5553, 0
        %v5561 = vsel %vm1257, %v5556, 0
        %5563 = vmatpush.bf16.xpose.msra.mxu0 0
        %5564 = vmatpush.bf16.xpose.msra.mxu0 0
        %5565 = vmatpush.bf16.xpose.msra.mxu0 0
        %5566 = vmatpush.bf16.xpose.msra.mxu0 0
        %5567 = vmatpush.bf16.xpose.msra.mxu0 0
        %5568 = vmatpush.bf16.xpose.msra.mxu0 0
        %5569 = vmatpush.bf16.xpose.msra.mxu0 0
        %5570 = vmatpush.bf16.xpose.msra.mxu0 %v5561
        %5571 = vmatmul.bf16.gmra.mxu0 %v5558
        %v5572 = vpop.f32.mrf.mxu0
        %v5573 = vadd.f32 0.0, %v5572
        %v5574 = vpop.f32.mrf.mxu0
        %v5575 = vadd.f32 0.0, %v5574
        %5576 = vdwg.mxu0
        %5577 = vrot.lane.b32.xlu0 %v4557, 32
        %v5578 = vpop.permute.xlu0 %5577
        %v5579 = vunpack.c.l.b16 %v5523
        %v5580 = vunpack.c.l.b16 %v5524
        %v5581 = vpack.c.b16 %v5580, %v5579
        %v5583 = vsel %vm1257, %v5578, 0
        %v5586 = vsel %vm1257, %v5581, 0
        %5588 = vmatpush.bf16.xpose.msra.mxu0 0
        %5589 = vmatpush.bf16.xpose.msra.mxu0 0
        %5590 = vmatpush.bf16.xpose.msra.mxu0 0
        %5591 = vmatpush.bf16.xpose.msra.mxu0 0
        %5592 = vmatpush.bf16.xpose.msra.mxu0 0
        %5593 = vmatpush.bf16.xpose.msra.mxu0 0
        %5594 = vmatpush.bf16.xpose.msra.mxu0 0
        %5595 = vmatpush.bf16.xpose.msra.mxu0 %v5586
        %5596 = vmatmul.bf16.gmra.mxu0 %v5583
        %v5597 = vpop.f32.mrf.mxu0
        %v5598 = vadd.f32 0.0, %v5597
        %v5599 = vpop.f32.mrf.mxu0
        %v5600 = vadd.f32 0.0, %v5599
        %5601 = vdwg.mxu0
        %5602 = vrot.lane.b32.xlu0 %v4583, 32
        %v5603 = vpop.permute.xlu0 %5602
        %v5604 = vunpack.c.l.b16 %v5525
        %v5605 = vunpack.c.l.b16 %v5526
        %v5606 = vpack.c.b16 %v5605, %v5604
        %v5608 = vsel %vm1257, %v5603, 0
        %v5611 = vsel %vm1257, %v5606, 0
        %5613 = vmatpush.bf16.xpose.msra.mxu0 0
        %5614 = vmatpush.bf16.xpose.msra.mxu0 0
        %5615 = vmatpush.bf16.xpose.msra.mxu0 0
        %5616 = vmatpush.bf16.xpose.msra.mxu0 0
        %5617 = vmatpush.bf16.xpose.msra.mxu0 0
        %5618 = vmatpush.bf16.xpose.msra.mxu0 0
        %5619 = vmatpush.bf16.xpose.msra.mxu0 0
        %5620 = vmatpush.bf16.xpose.msra.mxu0 %v5611
        %5621 = vmatmul.bf16.gmra.mxu0 %v5608
        %v5622 = vpop.f32.mrf.mxu0
        %v5623 = vadd.f32 0.0, %v5622
        %v5624 = vpop.f32.mrf.mxu0
        %v5625 = vadd.f32 0.0, %v5624
        %5626 = vdwg.mxu0
        %v5627 = vmul.f32 %v5548, 0.17677669
        %v5628 = vmul.f32 %v5550, 0.17677669
        %v5629 = vmul.f32 %v5573, 0.17677669
        %v5630 = vmul.f32 %v5575, 0.17677669
        %v5631 = vmul.f32 %v5598, 0.17677669
        %v5632 = vmul.f32 %v5600, 0.17677669
        %v5633 = vmul.f32 %v5623, 0.17677669
        %v5634 = vmul.f32 %v5625, 0.17677669
        %v5635 = vadd.f32 %v5627, %v1368
        %v5636 = vadd.f32 %v5628, %v1368
        %v5637 = vadd.f32 %v5629, %v1369
        %v5638 = vadd.f32 %v5630, %v1369
        %v5639 = vadd.f32 %v5631, %v1370
        %v5640 = vadd.f32 %v5632, %v1370
        %v5641 = vadd.f32 %v5633, %v1371
        %v5642 = vadd.f32 %v5634, %v1371
        %v5643 = vsel %vm1384, %v5635, -inf
        %5644 = vmax.xlane.f32.xlu0 %v5643
        %v5645 = vpop.xlane.xlu0 %5644
        %v5646 = vsel %vm1384, %v5636, -inf
        %5647 = vmax.xlane.f32.xlu0 %v5646
        %v5648 = vpop.xlane.xlu0 %5647
        %v5649 = vsel %vm1384, %v5637, -inf
        %5650 = vmax.xlane.f32.xlu0 %v5649
        %v5651 = vpop.xlane.xlu0 %5650
        %v5652 = vsel %vm1384, %v5638, -inf
        %5653 = vmax.xlane.f32.xlu0 %v5652
        %v5654 = vpop.xlane.xlu0 %5653
        %v5655 = vsel %vm1384, %v5639, -inf
        %5656 = vmax.xlane.f32.xlu0 %v5655
        %v5657 = vpop.xlane.xlu0 %5656
        %v5658 = vsel %vm1384, %v5640, -inf
        %5659 = vmax.xlane.f32.xlu0 %v5658
        %v5660 = vpop.xlane.xlu0 %5659
        %v5661 = vsel %vm1384, %v5641, -inf
        %5662 = vmax.xlane.f32.xlu0 %v5661
        %v5663 = vpop.xlane.xlu0 %5662
        %v5664 = vsel %vm1384, %v5642, -inf
        %5665 = vmax.xlane.f32.xlu0 %v5664
        %v5666 = vpop.xlane.xlu0 %5665
        %v5667 = vsub.f32 %v5635, %v5645
        %v5668 = vsub.f32 %v5636, %v5648
        %v5669 = vsub.f32 %v5637, %v5651
        %v5670 = vsub.f32 %v5638, %v5654
        %v5671 = vsub.f32 %v5639, %v5657
        %v5672 = vsub.f32 %v5640, %v5660
        %v5673 = vsub.f32 %v5641, %v5663
        %v5674 = vsub.f32 %v5642, %v5666
        %v5675 = vmul.f32 %v5667, 1.442695
        %v5676 = vpow.pop %v5675
        %v5677 = vmul.f32 %v5668, 1.442695
        %v5678 = vpow.pop %v5677
        %v5679 = vmul.f32 %v5669, 1.442695
        %v5680 = vpow.pop %v5679
        %v5681 = vmul.f32 %v5670, 1.442695
        %v5682 = vpow.pop %v5681
        %v5683 = vmul.f32 %v5671, 1.442695
        %v5684 = vpow.pop %v5683
        %v5685 = vmul.f32 %v5672, 1.442695
        %v5686 = vpow.pop %v5685
        %v5687 = vmul.f32 %v5673, 1.442695
        %v5688 = vpow.pop %v5687
        %v5689 = vmul.f32 %v5674, 1.442695
        %v5690 = vpow.pop %v5689
        %v5691 = vsel %vm1384, %v5676, 0.0
        %5692 = vadd.xlane.f32.xlu0 %v5691
        %v5693 = vpop.xlane.xlu0 %5692
        %v5694 = vsel %vm1384, %v5678, 0.0
        %5695 = vadd.xlane.f32.xlu0 %v5694
        %v5696 = vpop.xlane.xlu0 %5695
        %v5697 = vsel %vm1384, %v5680, 0.0
        %5698 = vadd.xlane.f32.xlu0 %v5697
        %v5699 = vpop.xlane.xlu0 %5698
        %v5700 = vsel %vm1384, %v5682, 0.0
        %5701 = vadd.xlane.f32.xlu0 %v5700
        %v5702 = vpop.xlane.xlu0 %5701
        %v5703 = vsel %vm1384, %v5684, 0.0
        %5704 = vadd.xlane.f32.xlu0 %v5703
        %v5705 = vpop.xlane.xlu0 %5704
        %v5706 = vsel %vm1384, %v5686, 0.0
        %5707 = vadd.xlane.f32.xlu0 %v5706
        %v5708 = vpop.xlane.xlu0 %5707
        %v5709 = vsel %vm1384, %v5688, 0.0
        %5710 = vadd.xlane.f32.xlu0 %v5709
        %v5711 = vpop.xlane.xlu0 %5710
        %v5712 = vsel %vm1384, %v5690, 0.0
        %5713 = vadd.xlane.f32.xlu0 %v5712
        %v5714 = vpop.xlane.xlu0 %5713
        %v5715 = vrcp.pop %v5693
        %v5716 = vrcp.pop %v5696
        %v5717 = vrcp.pop %v5699
        %v5718 = vrcp.pop %v5702
        %v5719 = vrcp.pop %v5705
        %v5720 = vrcp.pop %v5708
        %v5721 = vrcp.pop %v5711
        %v5722 = vrcp.pop %v5714
        %v5723 = vmul.f32 %v5676, %v5715
        %v5724 = vmul.f32 %v5678, %v5716
        %v5725 = vmul.f32 %v5680, %v5717
        %v5726 = vmul.f32 %v5682, %v5718
        %v5727 = vmul.f32 %v5684, %v5719
        %v5728 = vmul.f32 %v5686, %v5720
        %v5729 = vmul.f32 %v5688, %v5721
        %v5730 = vmul.f32 %v5690, %v5722
        %v5731 = vpack.c.bf16 %v5723, %v5723
        %v5732 = vpack.c.bf16 %v5724, %v5724
        %v5733 = vpack.c.bf16 %v5725, %v5725
        %v5734 = vpack.c.bf16 %v5726, %v5726
        %v5735 = vpack.c.bf16 %v5727, %v5727
        %v5736 = vpack.c.bf16 %v5728, %v5728
        %v5737 = vpack.c.bf16 %v5729, %v5729
        %v5738 = vpack.c.bf16 %v5730, %v5730
        %v5741 = vunpack.c.l.b16 %v5731
        %v5742 = vunpack.c.l.b16 %v5732
        %v5743 = vpack.c.b16 %v5742, %v5741
        %5744 = vrot.lane.b32.xlu0 %v4728, 32
        %v5745 = vpop.permute.xlu0 %5744
        %v5748 = vsel %vm1384, %v5743, 0
        %5750 = vmatpush.bf16.msra.mxu0 0
        %5751 = vmatpush.bf16.msra.mxu0 0
        %5752 = vmatpush.bf16.msra.mxu0 0
        %5753 = vmatpush.bf16.msra.mxu0 0
        %5754 = vmatpush.bf16.msra.mxu0 0
        %5755 = vmatpush.bf16.msra.mxu0 0
        %5756 = vmatpush.bf16.msra.mxu0 0
        %5757 = vmatpush.bf16.msra.mxu0 %v5745
        %5758 = vmatmul.bf16.gmra.mxu0 %v5748
        %v5759 = vpop.f32.mrf.mxu0
        %v5760 = vadd.f32 0.0, %v5759
        %v5761 = vpop.f32.mrf.mxu0
        %v5762 = vadd.f32 0.0, %v5761
        %5763 = vdwg.mxu0
        %v5766 = vunpack.c.l.b16 %v5733
        %v5767 = vunpack.c.l.b16 %v5734
        %v5768 = vpack.c.b16 %v5767, %v5766
        %5769 = vrot.lane.b32.xlu0 %v4756, 32
        %v5770 = vpop.permute.xlu0 %5769
        %v5773 = vsel %vm1384, %v5768, 0
        %5775 = vmatpush.bf16.msra.mxu0 0
        %5776 = vmatpush.bf16.msra.mxu0 0
        %5777 = vmatpush.bf16.msra.mxu0 0
        %5778 = vmatpush.bf16.msra.mxu0 0
        %5779 = vmatpush.bf16.msra.mxu0 0
        %5780 = vmatpush.bf16.msra.mxu0 0
        %5781 = vmatpush.bf16.msra.mxu0 0
        %5782 = vmatpush.bf16.msra.mxu0 %v5770
        %5783 = vmatmul.bf16.gmra.mxu0 %v5773
        %v5784 = vpop.f32.mrf.mxu0
        %v5785 = vadd.f32 0.0, %v5784
        %v5786 = vpop.f32.mrf.mxu0
        %v5787 = vadd.f32 0.0, %v5786
        %5788 = vdwg.mxu0
        %v5791 = vunpack.c.l.b16 %v5735
        %v5792 = vunpack.c.l.b16 %v5736
        %v5793 = vpack.c.b16 %v5792, %v5791
        %5794 = vrot.lane.b32.xlu0 %v4784, 32
        %v5795 = vpop.permute.xlu0 %5794
        %v5798 = vsel %vm1384, %v5793, 0
        %5800 = vmatpush.bf16.msra.mxu0 0
        %5801 = vmatpush.bf16.msra.mxu0 0
        %5802 = vmatpush.bf16.msra.mxu0 0
        %5803 = vmatpush.bf16.msra.mxu0 0
        %5804 = vmatpush.bf16.msra.mxu0 0
        %5805 = vmatpush.bf16.msra.mxu0 0
        %5806 = vmatpush.bf16.msra.mxu0 0
        %5807 = vmatpush.bf16.msra.mxu0 %v5795
        %5808 = vmatmul.bf16.gmra.mxu0 %v5798
        %v5809 = vpop.f32.mrf.mxu0
        %v5810 = vadd.f32 0.0, %v5809
        %v5811 = vpop.f32.mrf.mxu0
        %v5812 = vadd.f32 0.0, %v5811
        %5813 = vdwg.mxu0
        %v5816 = vunpack.c.l.b16 %v5737
        %v5817 = vunpack.c.l.b16 %v5738
        %v5818 = vpack.c.b16 %v5817, %v5816
        %5819 = vrot.lane.b32.xlu0 %v4812, 32
        %v5820 = vpop.permute.xlu0 %5819
        %v5823 = vsel %vm1384, %v5818, 0
        %5825 = vmatpush.bf16.msra.mxu0 0
        %5826 = vmatpush.bf16.msra.mxu0 0
        %5827 = vmatpush.bf16.msra.mxu0 0
        %5828 = vmatpush.bf16.msra.mxu0 0
        %5829 = vmatpush.bf16.msra.mxu0 0
        %5830 = vmatpush.bf16.msra.mxu0 0
        %5831 = vmatpush.bf16.msra.mxu0 0
        %5832 = vmatpush.bf16.msra.mxu0 %v5820
        %5833 = vmatmul.bf16.gmra.mxu0 %v5823
        %v5834 = vpop.f32.mrf.mxu0
        %v5835 = vadd.f32 0.0, %v5834
        %v5836 = vpop.f32.mrf.mxu0
        %v5837 = vadd.f32 0.0, %v5836
        %5838 = vdwg.mxu0
        %5847 = vrot.lane.b32.xlu0 %v5088, 32
        %v5848 = vpop.permute.xlu0 %5847
        %5849 = vrot.lane.b32.xlu0 %v5090, 32
        %v5850 = vpop.permute.xlu0 %5849
        %5851 = vrot.lane.b32.xlu0 %v5113, 32
        %v5852 = vpop.permute.xlu0 %5851
        %5853 = vrot.lane.b32.xlu0 %v5115, 32
        %v5854 = vpop.permute.xlu0 %5853
        %5855 = vrot.lane.b32.xlu0 %v5138, 32
        %v5856 = vpop.permute.xlu0 %5855
        %5857 = vrot.lane.b32.xlu0 %v5140, 32
        %v5858 = vpop.permute.xlu0 %5857
        %5859 = vrot.lane.b32.xlu0 %v5163, 32
        %v5860 = vpop.permute.xlu0 %5859
        %5861 = vrot.lane.b32.xlu0 %v5165, 32
        %v5862 = vpop.permute.xlu0 %5861
        %5879 = vrot.lane.b32.xlu0 %v5424, 64
        %v5880 = vpop.permute.xlu0 %5879
        %5881 = vrot.lane.b32.xlu0 %v5426, 64
        %v5882 = vpop.permute.xlu0 %5881
        %5883 = vrot.lane.b32.xlu0 %v5449, 64
        %v5884 = vpop.permute.xlu0 %5883
        %5885 = vrot.lane.b32.xlu0 %v5451, 64
        %v5886 = vpop.permute.xlu0 %5885
        %5887 = vrot.lane.b32.xlu0 %v5474, 64
        %v5888 = vpop.permute.xlu0 %5887
        %5889 = vrot.lane.b32.xlu0 %v5476, 64
        %v5890 = vpop.permute.xlu0 %5889
        %5891 = vrot.lane.b32.xlu0 %v5499, 64
        %v5892 = vpop.permute.xlu0 %5891
        %5893 = vrot.lane.b32.xlu0 %v5501, 64
        %v5894 = vpop.permute.xlu0 %5893
        %5911 = vrot.lane.b32.xlu0 %v5760, 96
        %v5912 = vpop.permute.xlu0 %5911
        %5913 = vrot.lane.b32.xlu0 %v5762, 96
        %v5914 = vpop.permute.xlu0 %5913
        %5915 = vrot.lane.b32.xlu0 %v5785, 96
        %v5916 = vpop.permute.xlu0 %5915
        %5917 = vrot.lane.b32.xlu0 %v5787, 96
        %v5918 = vpop.permute.xlu0 %5917
        %5919 = vrot.lane.b32.xlu0 %v5810, 96
        %v5920 = vpop.permute.xlu0 %5919
        %5921 = vrot.lane.b32.xlu0 %v5812, 96
        %v5922 = vpop.permute.xlu0 %5921
        %5923 = vrot.lane.b32.xlu0 %v5835, 96
        %v5924 = vpop.permute.xlu0 %5923
        %5925 = vrot.lane.b32.xlu0 %v5837, 96
        %v5926 = vpop.permute.xlu0 %5925
        %v5935 = vsel %vm1257, %v4743, %v5848
        %v5936 = vsel %vm1257, %v4745, %v5850
        %v5937 = vsel %vm1257, %v4771, %v5852
        %v5938 = vsel %vm1257, %v4773, %v5854
        %v5939 = vsel %vm1257, %v4799, %v5856
        %v5940 = vsel %vm1257, %v4801, %v5858
        %v5941 = vsel %vm1257, %v4827, %v5860
        %v5942 = vsel %vm1257, %v4829, %v5862
        %v5943 = vsel %vm2705, %v5935, %v5880
        %v5944 = vsel %vm2705, %v5936, %v5882
        %v5945 = vsel %vm2705, %v5937, %v5884
        %v5946 = vsel %vm2705, %v5938, %v5886
        %v5947 = vsel %vm2705, %v5939, %v5888
        %v5948 = vsel %vm2705, %v5940, %v5890
        %v5949 = vsel %vm2705, %v5941, %v5892
        %v5950 = vsel %vm2705, %v5942, %v5894
        %v5951 = vsel %vm2714, %v5943, %v5912
        %v5952 = vsel %vm2714, %v5944, %v5914
        %v5953 = vsel %vm2714, %v5945, %v5916
        %v5954 = vsel %vm2714, %v5946, %v5918
        %v5955 = vsel %vm2714, %v5947, %v5920
        %v5956 = vsel %vm2714, %v5948, %v5922
        %v5957 = vsel %vm2714, %v5949, %v5924
        %v5958 = vsel %vm2714, %v5950, %v5926
        %s5959 = scalar_lea.vmem %s6, 64
        %v5960 = vld [vmem:[%s5959] sm:$0xf]
        %v5961 = vld [vmem:[%s5959 + $0x4] sm:$0xf]
        %v5962 = vld [vmem:[%s5959 + $0x8] sm:$0xf]
        %v5963 = vld [vmem:[%s5959 + $0xc] sm:$0xf]
        %v5964 = vld [vmem:[%s5959 + $0x10] sm:$0xf]
        %v5965 = vld [vmem:[%s5959 + $0x14] sm:$0xf]
        %v5966 = vld [vmem:[%s5959 + $0x18] sm:$0xf]
        %v5967 = vld [vmem:[%s5959 + $0x1c] sm:$0xf]
        %v5968 = vld [vmem:[%s5959 + $0x20] sm:$0xf]
        %v5969 = vld [vmem:[%s5959 + $0x24] sm:$0xf]
        %v5970 = vld [vmem:[%s5959 + $0x28] sm:$0xf]
        %v5971 = vld [vmem:[%s5959 + $0x2c] sm:$0xf]
        %v5972 = vld [vmem:[%s5959 + $0x30] sm:$0xf]
        %v5973 = vld [vmem:[%s5959 + $0x34] sm:$0xf]
        %v5974 = vld [vmem:[%s5959 + $0x38] sm:$0xf]
        %v5975 = vld [vmem:[%s5959 + $0x3c] sm:$0xf]
        %v5976 = vpack.c.bf16 %v5952, %v5951
        %v5977 = vpack.c.bf16 %v5954, %v5953
        %v5978 = vpack.c.bf16 %v5956, %v5955
        %v5979 = vpack.c.bf16 %v5958, %v5957
        %s5980 = scalar_lea.vmem %s7, 1
        %v5981 = vld [vmem:[%s5980] sm:$0x1]
        %v5983 = vperm.slane %v5981, 0
        %v6001 = vunpack.c.l.b16 %v5960
        %v6002 = vunpack.c.l.b16 %v5961
        %v6003 = vunpack.c.l.b16 %v5962
        %v6004 = vunpack.c.l.b16 %v5963
        %v6005 = vunpack.c.l.b16 %v5964
        %v6006 = vunpack.c.l.b16 %v5965
        %v6007 = vunpack.c.l.b16 %v5966
        %v6008 = vunpack.c.l.b16 %v5967
        %v6009 = vunpack.c.l.b16 %v5968
        %v6010 = vunpack.c.l.b16 %v5969
        %v6011 = vunpack.c.l.b16 %v5970
        %v6012 = vunpack.c.l.b16 %v5971
        %v6013 = vunpack.c.l.b16 %v5972
        %v6014 = vunpack.c.l.b16 %v5973
        %v6015 = vunpack.c.l.b16 %v5974
        %v6016 = vunpack.c.l.b16 %v5975
        %v6017 = vpack.c.b16 %v6002, %v6001
        %v6018 = vpack.c.b16 %v6004, %v6003
        %v6019 = vpack.c.b16 %v6006, %v6005
        %v6020 = vpack.c.b16 %v6008, %v6007
        %v6021 = vpack.c.b16 %v6010, %v6009
        %v6022 = vpack.c.b16 %v6012, %v6011
        %v6023 = vpack.c.b16 %v6014, %v6013
        %v6024 = vpack.c.b16 %v6016, %v6015
        %6033 = vmatpush.bf16.msra.mxu0 %v6024
        %6034 = vmatpush.bf16.msra.mxu0 %v6023
        %6035 = vmatpush.bf16.msra.mxu0 %v6022
        %6036 = vmatpush.bf16.msra.mxu0 %v6021
        %6037 = vmatpush.bf16.msra.mxu0 %v6020
        %6038 = vmatpush.bf16.msra.mxu0 %v6019
        %6039 = vmatpush.bf16.msra.mxu0 %v6018
        %6040 = vmatpush.bf16.msra.mxu0 %v6017
        %6041 = vmatmul.bf16.gmra.mxu0 %v5976
        %v6042 = vpop.f32.mrf.mxu0
        %v6043 = vadd.f32 %v5983, %v6042
        %v6044 = vpop.f32.mrf.mxu0
        %v6045 = vadd.f32 %v5983, %v6044
        %6046 = vmatmul.bf16.gmra.mxu0 %v5977
        %v6047 = vpop.f32.mrf.mxu0
        %v6048 = vadd.f32 %v5983, %v6047
        %v6049 = vpop.f32.mrf.mxu0
        %v6050 = vadd.f32 %v5983, %v6049
        %6051 = vmatmul.bf16.gmra.mxu0 %v5978
        %v6052 = vpop.f32.mrf.mxu0
        %v6053 = vadd.f32 %v5983, %v6052
        %v6054 = vpop.f32.mrf.mxu0
        %v6055 = vadd.f32 %v5983, %v6054
        %6056 = vmatmul.bf16.gmra.mxu0 %v5979
        %v6057 = vpop.f32.mrf.mxu0
        %v6058 = vadd.f32 %v5983, %v6057
        %v6059 = vpop.f32.mrf.mxu0
        %v6060 = vadd.f32 %v5983, %v6059
        %6061 = vdwg.mxu0
        %v6062 = vadd.f32 %v6043, %v4202
        %v6063 = vadd.f32 %v6045, %v4203
        %v6064 = vadd.f32 %v6048, %v4204
        %v6065 = vadd.f32 %v6050, %v4205
        %v6066 = vadd.f32 %v6053, %v4206
        %v6067 = vadd.f32 %v6055, %v4207
        %v6068 = vadd.f32 %v6058, %v4208
        %v6069 = vadd.f32 %v6060, %v4209
        %s6070 = scalar_lea.vmem %s8, 1
        %v6071 = vld [vmem:[%s6070] sm:$0x1]
        %s6072 = scalar_lea.vmem %s9, 1
        %v6073 = vld [vmem:[%s6072] sm:$0x1]
        %6074 = vadd.xlane.f32.xlu0 %v6062
        %v6075 = vpop.xlane.xlu0 %6074
        %6076 = vadd.xlane.f32.xlu0 %v6063
        %v6077 = vpop.xlane.xlu0 %6076
        %6078 = vadd.xlane.f32.xlu0 %v6064
        %v6079 = vpop.xlane.xlu0 %6078
        %6080 = vadd.xlane.f32.xlu0 %v6065
        %v6081 = vpop.xlane.xlu0 %6080
        %6082 = vadd.xlane.f32.xlu0 %v6066
        %v6083 = vpop.xlane.xlu0 %6082
        %6084 = vadd.xlane.f32.xlu0 %v6067
        %v6085 = vpop.xlane.xlu0 %6084
        %6086 = vadd.xlane.f32.xlu0 %v6068
        %v6087 = vpop.xlane.xlu0 %6086
        %6088 = vadd.xlane.f32.xlu0 %v6069
        %v6089 = vpop.xlane.xlu0 %6088
        %v6090 = vmul.f32 %v6075, %v793
        %v6091 = vmul.f32 %v6077, %v793
        %v6092 = vmul.f32 %v6079, %v793
        %v6093 = vmul.f32 %v6081, %v793
        %v6094 = vmul.f32 %v6083, %v793
        %v6095 = vmul.f32 %v6085, %v793
        %v6096 = vmul.f32 %v6087, %v793
        %v6097 = vmul.f32 %v6089, %v793
        %v6098 = vsub.f32 %v6062, %v6090
        %v6099 = vsub.f32 %v6063, %v6091
        %v6100 = vsub.f32 %v6064, %v6092
        %v6101 = vsub.f32 %v6065, %v6093
        %v6102 = vsub.f32 %v6066, %v6094
        %v6103 = vsub.f32 %v6067, %v6095
        %v6104 = vsub.f32 %v6068, %v6096
        %v6105 = vsub.f32 %v6069, %v6097
        %v6106 = vmul.f32 %v6098, %v6098
        %v6107 = vmul.f32 %v6099, %v6099
        %v6108 = vmul.f32 %v6100, %v6100
        %v6109 = vmul.f32 %v6101, %v6101
        %v6110 = vmul.f32 %v6102, %v6102
        %v6111 = vmul.f32 %v6103, %v6103
        %v6112 = vmul.f32 %v6104, %v6104
        %v6113 = vmul.f32 %v6105, %v6105
        %6114 = vadd.xlane.f32.xlu0 %v6106
        %v6115 = vpop.xlane.xlu0 %6114
        %6116 = vadd.xlane.f32.xlu0 %v6107
        %v6117 = vpop.xlane.xlu0 %6116
        %6118 = vadd.xlane.f32.xlu0 %v6108
        %v6119 = vpop.xlane.xlu0 %6118
        %6120 = vadd.xlane.f32.xlu0 %v6109
        %v6121 = vpop.xlane.xlu0 %6120
        %6122 = vadd.xlane.f32.xlu0 %v6110
        %v6123 = vpop.xlane.xlu0 %6122
        %6124 = vadd.xlane.f32.xlu0 %v6111
        %v6125 = vpop.xlane.xlu0 %6124
        %6126 = vadd.xlane.f32.xlu0 %v6112
        %v6127 = vpop.xlane.xlu0 %6126
        %6128 = vadd.xlane.f32.xlu0 %v6113
        %v6129 = vpop.xlane.xlu0 %6128
        %v6130 = vmul.f32 %v6115, %v793
        %v6131 = vmul.f32 %v6117, %v793
        %v6132 = vmul.f32 %v6119, %v793
        %v6133 = vmul.f32 %v6121, %v793
        %v6134 = vmul.f32 %v6123, %v793
        %v6135 = vmul.f32 %v6125, %v793
        %v6136 = vmul.f32 %v6127, %v793
        %v6137 = vmul.f32 %v6129, %v793
        %v6138 = vadd.f32 %v6130, 1e-12
        %v6139 = vadd.f32 %v6131, 1e-12
        %v6140 = vadd.f32 %v6132, 1e-12
        %v6141 = vadd.f32 %v6133, 1e-12
        %v6142 = vadd.f32 %v6134, 1e-12
        %v6143 = vadd.f32 %v6135, 1e-12
        %v6144 = vadd.f32 %v6136, 1e-12
        %v6145 = vadd.f32 %v6137, 1e-12
        %v6146 = vrsqrt.pop %v6138
        %v6147 = vmul.f32 %v6146, %v6138
        %v6148 = vmul.f32 %v6147, %v6146
        %v6149 = vmul.f32 0.5, %v6148
        %v6150 = vsub.f32 1.5, %v6149
        %v6151 = vmul.f32 %v6146, %v6150
        %vm6152 = vweird.f32 %v6138
        %vm6153 = vweird.f32 %v6146
        %vm6154 = vmor %vm6152, %vm6153
        %v6155 = vsel %vm6154, %v6146, %v6151
        %v6156 = vrsqrt.pop %v6139
        %v6157 = vmul.f32 %v6156, %v6139
        %v6158 = vmul.f32 %v6157, %v6156
        %v6159 = vmul.f32 0.5, %v6158
        %v6160 = vsub.f32 1.5, %v6159
        %v6161 = vmul.f32 %v6156, %v6160
        %vm6162 = vweird.f32 %v6139
        %vm6163 = vweird.f32 %v6156
        %vm6164 = vmor %vm6162, %vm6163
        %v6165 = vsel %vm6164, %v6156, %v6161
        %v6166 = vrsqrt.pop %v6140
        %v6167 = vmul.f32 %v6166, %v6140
        %v6168 = vmul.f32 %v6167, %v6166
        %v6169 = vmul.f32 0.5, %v6168
        %v6170 = vsub.f32 1.5, %v6169
        %v6171 = vmul.f32 %v6166, %v6170
        %vm6172 = vweird.f32 %v6140
        %vm6173 = vweird.f32 %v6166
        %vm6174 = vmor %vm6172, %vm6173
        %v6175 = vsel %vm6174, %v6166, %v6171
        %v6176 = vrsqrt.pop %v6141
        %v6177 = vmul.f32 %v6176, %v6141
        %v6178 = vmul.f32 %v6177, %v6176
        %v6179 = vmul.f32 0.5, %v6178
        %v6180 = vsub.f32 1.5, %v6179
        %v6181 = vmul.f32 %v6176, %v6180
        %vm6182 = vweird.f32 %v6141
        %vm6183 = vweird.f32 %v6176
        %vm6184 = vmor %vm6182, %vm6183
        %v6185 = vsel %vm6184, %v6176, %v6181
        %v6186 = vrsqrt.pop %v6142
        %v6187 = vmul.f32 %v6186, %v6142
        %v6188 = vmul.f32 %v6187, %v6186
        %v6189 = vmul.f32 0.5, %v6188
        %v6190 = vsub.f32 1.5, %v6189
        %v6191 = vmul.f32 %v6186, %v6190
        %vm6192 = vweird.f32 %v6142
        %vm6193 = vweird.f32 %v6186
        %vm6194 = vmor %vm6192, %vm6193
        %v6195 = vsel %vm6194, %v6186, %v6191
        %v6196 = vrsqrt.pop %v6143
        %v6197 = vmul.f32 %v6196, %v6143
        %v6198 = vmul.f32 %v6197, %v6196
        %v6199 = vmul.f32 0.5, %v6198
        %v6200 = vsub.f32 1.5, %v6199
        %v6201 = vmul.f32 %v6196, %v6200
        %vm6202 = vweird.f32 %v6143
        %vm6203 = vweird.f32 %v6196
        %vm6204 = vmor %vm6202, %vm6203
        %v6205 = vsel %vm6204, %v6196, %v6201
        %v6206 = vrsqrt.pop %v6144
        %v6207 = vmul.f32 %v6206, %v6144
        %v6208 = vmul.f32 %v6207, %v6206
        %v6209 = vmul.f32 0.5, %v6208
        %v6210 = vsub.f32 1.5, %v6209
        %v6211 = vmul.f32 %v6206, %v6210
        %vm6212 = vweird.f32 %v6144
        %vm6213 = vweird.f32 %v6206
        %vm6214 = vmor %vm6212, %vm6213
        %v6215 = vsel %vm6214, %v6206, %v6211
        %v6216 = vrsqrt.pop %v6145
        %v6217 = vmul.f32 %v6216, %v6145
        %v6218 = vmul.f32 %v6217, %v6216
        %v6219 = vmul.f32 0.5, %v6218
        %v6220 = vsub.f32 1.5, %v6219
        %v6221 = vmul.f32 %v6216, %v6220
        %vm6222 = vweird.f32 %v6145
        %vm6223 = vweird.f32 %v6216
        %vm6224 = vmor %vm6222, %vm6223
        %v6225 = vsel %vm6224, %v6216, %v6221
        %v6226 = vmul.f32 %v6098, %v6155
        %v6227 = vmul.f32 %v6099, %v6165
        %v6228 = vmul.f32 %v6100, %v6175
        %v6229 = vmul.f32 %v6101, %v6185
        %v6230 = vmul.f32 %v6102, %v6195
        %v6231 = vmul.f32 %v6103, %v6205
        %v6232 = vmul.f32 %v6104, %v6215
        %v6233 = vmul.f32 %v6105, %v6225
        %v6235 = vperm.slane %v6071, 0
        %v6237 = vmul.f32 %v6226, %v6235
        %v6238 = vmul.f32 %v6227, %v6235
        %v6239 = vmul.f32 %v6228, %v6235
        %v6240 = vmul.f32 %v6229, %v6235
        %v6241 = vmul.f32 %v6230, %v6235
        %v6242 = vmul.f32 %v6231, %v6235
        %v6243 = vmul.f32 %v6232, %v6235
        %v6244 = vmul.f32 %v6233, %v6235
        %v6246 = vperm.slane %v6073, 0
        %v6248 = vadd.f32 %v6237, %v6246
        %v6249 = vadd.f32 %v6238, %v6246
        %v6250 = vadd.f32 %v6239, %v6246
        %v6251 = vadd.f32 %v6240, %v6246
        %v6252 = vadd.f32 %v6241, %v6246
        %v6253 = vadd.f32 %v6242, %v6246
        %v6254 = vadd.f32 %v6243, %v6246
        %v6255 = vadd.f32 %v6244, %v6246
        %s6256 = scalar_lea.vmem %s10, 256
        %v6257 = vld [vmem:[%s6256] sm:$0xff]
        %v6258 = vld [vmem:[%s6256 + $0x8] sm:$0xff]
        %v6259 = vld [vmem:[%s6256 + $0x10] sm:$0xff]
        %v6260 = vld [vmem:[%s6256 + $0x18] sm:$0xff]
        %v6261 = vld [vmem:[%s6256 + $0x20] sm:$0xff]
        %v6262 = vld [vmem:[%s6256 + $0x28] sm:$0xff]
        %v6263 = vld [vmem:[%s6256 + $0x30] sm:$0xff]
        %v6264 = vld [vmem:[%s6256 + $0x38] sm:$0xff]
        %v6265 = vld [vmem:[%s6256 + $0x40] sm:$0xff]
        %v6266 = vld [vmem:[%s6256 + $0x48] sm:$0xff]
        %v6267 = vld [vmem:[%s6256 + $0x50] sm:$0xff]
        %v6268 = vld [vmem:[%s6256 + $0x58] sm:$0xff]
        %v6269 = vld [vmem:[%s6256 + $0x60] sm:$0xff]
        %v6270 = vld [vmem:[%s6256 + $0x68] sm:$0xff]
        %v6271 = vld [vmem:[%s6256 + $0x70] sm:$0xff]
        %v6272 = vld [vmem:[%s6256 + $0x78] sm:$0xff]
        %v6273 = vld [vmem:[%s6256 + $0x80] sm:$0xff]
        %v6274 = vld [vmem:[%s6256 + $0x88] sm:$0xff]
        %v6275 = vld [vmem:[%s6256 + $0x90] sm:$0xff]
        %v6276 = vld [vmem:[%s6256 + $0x98] sm:$0xff]
        %v6277 = vld [vmem:[%s6256 + $0xa0] sm:$0xff]
        %v6278 = vld [vmem:[%s6256 + $0xa8] sm:$0xff]
        %v6279 = vld [vmem:[%s6256 + $0xb0] sm:$0xff]
        %v6280 = vld [vmem:[%s6256 + $0xb8] sm:$0xff]
        %v6281 = vld [vmem:[%s6256 + $0xc0] sm:$0xff]
        %v6282 = vld [vmem:[%s6256 + $0xc8] sm:$0xff]
        %v6283 = vld [vmem:[%s6256 + $0xd0] sm:$0xff]
        %v6284 = vld [vmem:[%s6256 + $0xd8] sm:$0xff]
        %v6285 = vld [vmem:[%s6256 + $0xe0] sm:$0xff]
        %v6286 = vld [vmem:[%s6256 + $0xe8] sm:$0xff]
        %v6287 = vld [vmem:[%s6256 + $0xf0] sm:$0xff]
        %v6288 = vld [vmem:[%s6256 + $0xf8] sm:$0xff]
        %v6289 = vpack.c.bf16 %v6249, %v6248
        %v6290 = vpack.c.bf16 %v6251, %v6250
        %v6291 = vpack.c.bf16 %v6253, %v6252
        %v6292 = vpack.c.bf16 %v6255, %v6254
        %s6293 = scalar_lea.vmem %s11, 4
        %v6294 = vld [vmem:[%s6293] sm:$0xf]
        %v6296 = vperm.slane %v6294, 0
        %v6297 = vperm.slane %v6294, 1
        %v6298 = vperm.slane %v6294, 2
        %v6299 = vperm.slane %v6294, 3
        %v6336 = vunpack.c.l.b16 %v6257
        %v6337 = vunpack.c.h.b16 %v6257
        %v6338 = vunpack.c.l.b16 %v6258
        %v6339 = vunpack.c.h.b16 %v6258
        %v6340 = vunpack.c.l.b16 %v6259
        %v6341 = vunpack.c.h.b16 %v6259
        %v6342 = vunpack.c.l.b16 %v6260
        %v6343 = vunpack.c.h.b16 %v6260
        %v6344 = vunpack.c.l.b16 %v6261
        %v6345 = vunpack.c.h.b16 %v6261
        %v6346 = vunpack.c.l.b16 %v6262
        %v6347 = vunpack.c.h.b16 %v6262
        %v6348 = vunpack.c.l.b16 %v6263
        %v6349 = vunpack.c.h.b16 %v6263
        %v6350 = vunpack.c.l.b16 %v6264
        %v6351 = vunpack.c.h.b16 %v6264
        %v6352 = vunpack.c.l.b16 %v6265
        %v6353 = vunpack.c.h.b16 %v6265
        %v6354 = vunpack.c.l.b16 %v6266
        %v6355 = vunpack.c.h.b16 %v6266
        %v6356 = vunpack.c.l.b16 %v6267
        %v6357 = vunpack.c.h.b16 %v6267
        %v6358 = vunpack.c.l.b16 %v6268
        %v6359 = vunpack.c.h.b16 %v6268
        %v6360 = vunpack.c.l.b16 %v6269
        %v6361 = vunpack.c.h.b16 %v6269
        %v6362 = vunpack.c.l.b16 %v6270
        %v6363 = vunpack.c.h.b16 %v6270
        %v6364 = vunpack.c.l.b16 %v6271
        %v6365 = vunpack.c.h.b16 %v6271
        %v6366 = vunpack.c.l.b16 %v6272
        %v6367 = vunpack.c.h.b16 %v6272
        %v6368 = vunpack.c.l.b16 %v6273
        %v6369 = vunpack.c.h.b16 %v6273
        %v6370 = vunpack.c.l.b16 %v6274
        %v6371 = vunpack.c.h.b16 %v6274
        %v6372 = vunpack.c.l.b16 %v6275
        %v6373 = vunpack.c.h.b16 %v6275
        %v6374 = vunpack.c.l.b16 %v6276
        %v6375 = vunpack.c.h.b16 %v6276
        %v6376 = vunpack.c.l.b16 %v6277
        %v6377 = vunpack.c.h.b16 %v6277
        %v6378 = vunpack.c.l.b16 %v6278
        %v6379 = vunpack.c.h.b16 %v6278
        %v6380 = vunpack.c.l.b16 %v6279
        %v6381 = vunpack.c.h.b16 %v6279
        %v6382 = vunpack.c.l.b16 %v6280
        %v6383 = vunpack.c.h.b16 %v6280
        %v6384 = vunpack.c.l.b16 %v6281
        %v6385 = vunpack.c.h.b16 %v6281
        %v6386 = vunpack.c.l.b16 %v6282
        %v6387 = vunpack.c.h.b16 %v6282
        %v6388 = vunpack.c.l.b16 %v6283
        %v6389 = vunpack.c.h.b16 %v6283
        %v6390 = vunpack.c.l.b16 %v6284
        %v6391 = vunpack.c.h.b16 %v6284
        %v6392 = vunpack.c.l.b16 %v6285
        %v6393 = vunpack.c.h.b16 %v6285
        %v6394 = vunpack.c.l.b16 %v6286
        %v6395 = vunpack.c.h.b16 %v6286
        %v6396 = vunpack.c.l.b16 %v6287
        %v6397 = vunpack.c.h.b16 %v6287
        %v6398 = vunpack.c.l.b16 %v6288
        %v6399 = vunpack.c.h.b16 %v6288
        %v6400 = vpack.c.b16 %v6340, %v6336
        %v6401 = vpack.c.b16 %v6341, %v6337
        %v6402 = vpack.c.b16 %v6342, %v6338
        %v6403 = vpack.c.b16 %v6343, %v6339
        %v6404 = vpack.c.b16 %v6348, %v6344
        %v6405 = vpack.c.b16 %v6349, %v6345
        %v6406 = vpack.c.b16 %v6350, %v6346
        %v6407 = vpack.c.b16 %v6351, %v6347
        %v6408 = vpack.c.b16 %v6356, %v6352
        %v6409 = vpack.c.b16 %v6357, %v6353
        %v6410 = vpack.c.b16 %v6358, %v6354
        %v6411 = vpack.c.b16 %v6359, %v6355
        %v6412 = vpack.c.b16 %v6364, %v6360
        %v6413 = vpack.c.b16 %v6365, %v6361
        %v6414 = vpack.c.b16 %v6366, %v6362
        %v6415 = vpack.c.b16 %v6367, %v6363
        %v6416 = vpack.c.b16 %v6372, %v6368
        %v6417 = vpack.c.b16 %v6373, %v6369
        %v6418 = vpack.c.b16 %v6374, %v6370
        %v6419 = vpack.c.b16 %v6375, %v6371
        %v6420 = vpack.c.b16 %v6380, %v6376
        %v6421 = vpack.c.b16 %v6381, %v6377
        %v6422 = vpack.c.b16 %v6382, %v6378
        %v6423 = vpack.c.b16 %v6383, %v6379
        %v6424 = vpack.c.b16 %v6388, %v6384
        %v6425 = vpack.c.b16 %v6389, %v6385
        %v6426 = vpack.c.b16 %v6390, %v6386
        %v6427 = vpack.c.b16 %v6391, %v6387
        %v6428 = vpack.c.b16 %v6396, %v6392
        %v6429 = vpack.c.b16 %v6397, %v6393
        %v6430 = vpack.c.b16 %v6398, %v6394
        %v6431 = vpack.c.b16 %v6399, %v6395
        %6464 = vmatpush.bf16.msra.mxu0 %v6428
        %6465 = vmatpush.bf16.msra.mxu0 %v6424
        %6466 = vmatpush.bf16.msra.mxu0 %v6420
        %6467 = vmatpush.bf16.msra.mxu0 %v6416
        %6468 = vmatpush.bf16.msra.mxu0 %v6412
        %6469 = vmatpush.bf16.msra.mxu0 %v6408
        %6470 = vmatpush.bf16.msra.mxu0 %v6404
        %6471 = vmatpush.bf16.msra.mxu0 %v6400
        %6472 = vmatmul.bf16.gmra.mxu0 %v6289
        %v6473 = vpop.f32.mrf.mxu0
        %v6474 = vadd.f32 %v6296, %v6473
        %v6475 = vpop.f32.mrf.mxu0
        %v6476 = vadd.f32 %v6296, %v6475
        %6477 = vmatmul.bf16.gmra.mxu0 %v6290
        %v6478 = vpop.f32.mrf.mxu0
        %v6479 = vadd.f32 %v6296, %v6478
        %v6480 = vpop.f32.mrf.mxu0
        %v6481 = vadd.f32 %v6296, %v6480
        %6482 = vmatmul.bf16.gmra.mxu0 %v6291
        %v6483 = vpop.f32.mrf.mxu0
        %v6484 = vadd.f32 %v6296, %v6483
        %v6485 = vpop.f32.mrf.mxu0
        %v6486 = vadd.f32 %v6296, %v6485
        %6487 = vmatmul.bf16.gmra.mxu0 %v6292
        %v6488 = vpop.f32.mrf.mxu0
        %v6489 = vadd.f32 %v6296, %v6488
        %v6490 = vpop.f32.mrf.mxu0
        %v6491 = vadd.f32 %v6296, %v6490
        %6492 = vdwg.mxu0
        %6493 = vmatpush.bf16.msra.mxu0 %v6429
        %6494 = vmatpush.bf16.msra.mxu0 %v6425
        %6495 = vmatpush.bf16.msra.mxu0 %v6421
        %6496 = vmatpush.bf16.msra.mxu0 %v6417
        %6497 = vmatpush.bf16.msra.mxu0 %v6413
        %6498 = vmatpush.bf16.msra.mxu0 %v6409
        %6499 = vmatpush.bf16.msra.mxu0 %v6405
        %6500 = vmatpush.bf16.msra.mxu0 %v6401
        %6501 = vmatmul.bf16.gmra.mxu0 %v6289
        %v6502 = vpop.f32.mrf.mxu0
        %v6503 = vadd.f32 %v6297, %v6502
        %v6504 = vpop.f32.mrf.mxu0
        %v6505 = vadd.f32 %v6297, %v6504
        %6506 = vmatmul.bf16.gmra.mxu0 %v6290
        %v6507 = vpop.f32.mrf.mxu0
        %v6508 = vadd.f32 %v6297, %v6507
        %v6509 = vpop.f32.mrf.mxu0
        %v6510 = vadd.f32 %v6297, %v6509
        %6511 = vmatmul.bf16.gmra.mxu0 %v6291
        %v6512 = vpop.f32.mrf.mxu0
        %v6513 = vadd.f32 %v6297, %v6512
        %v6514 = vpop.f32.mrf.mxu0
        %v6515 = vadd.f32 %v6297, %v6514
        %6516 = vmatmul.bf16.gmra.mxu0 %v6292
        %v6517 = vpop.f32.mrf.mxu0
        %v6518 = vadd.f32 %v6297, %v6517
        %v6519 = vpop.f32.mrf.mxu0
        %v6520 = vadd.f32 %v6297, %v6519
        %6521 = vdwg.mxu0
        %6522 = vmatpush.bf16.msra.mxu0 %v6430
        %6523 = vmatpush.bf16.msra.mxu0 %v6426
        %6524 = vmatpush.bf16.msra.mxu0 %v6422
        %6525 = vmatpush.bf16.msra.mxu0 %v6418
        %6526 = vmatpush.bf16.msra.mxu0 %v6414
        %6527 = vmatpush.bf16.msra.mxu0 %v6410
        %6528 = vmatpush.bf16.msra.mxu0 %v6406
        %6529 = vmatpush.bf16.msra.mxu0 %v6402
        %6530 = vmatmul.bf16.gmra.mxu0 %v6289
        %v6531 = vpop.f32.mrf.mxu0
        %v6532 = vadd.f32 %v6298, %v6531
        %v6533 = vpop.f32.mrf.mxu0
        %v6534 = vadd.f32 %v6298, %v6533
        %6535 = vmatmul.bf16.gmra.mxu0 %v6290
        %v6536 = vpop.f32.mrf.mxu0
        %v6537 = vadd.f32 %v6298, %v6536
        %v6538 = vpop.f32.mrf.mxu0
        %v6539 = vadd.f32 %v6298, %v6538
        %6540 = vmatmul.bf16.gmra.mxu0 %v6291
        %v6541 = vpop.f32.mrf.mxu0
        %v6542 = vadd.f32 %v6298, %v6541
        %v6543 = vpop.f32.mrf.mxu0
        %v6544 = vadd.f32 %v6298, %v6543
        %6545 = vmatmul.bf16.gmra.mxu0 %v6292
        %v6546 = vpop.f32.mrf.mxu0
        %v6547 = vadd.f32 %v6298, %v6546
        %v6548 = vpop.f32.mrf.mxu0
        %v6549 = vadd.f32 %v6298, %v6548
        %6550 = vdwg.mxu0
        %6551 = vmatpush.bf16.msra.mxu0 %v6431
        %6552 = vmatpush.bf16.msra.mxu0 %v6427
        %6553 = vmatpush.bf16.msra.mxu0 %v6423
        %6554 = vmatpush.bf16.msra.mxu0 %v6419
        %6555 = vmatpush.bf16.msra.mxu0 %v6415
        %6556 = vmatpush.bf16.msra.mxu0 %v6411
        %6557 = vmatpush.bf16.msra.mxu0 %v6407
        %6558 = vmatpush.bf16.msra.mxu0 %v6403
        %6559 = vmatmul.bf16.gmra.mxu0 %v6289
        %v6560 = vpop.f32.mrf.mxu0
        %v6561 = vadd.f32 %v6299, %v6560
        %v6562 = vpop.f32.mrf.mxu0
        %v6563 = vadd.f32 %v6299, %v6562
        %6564 = vmatmul.bf16.gmra.mxu0 %v6290
        %v6565 = vpop.f32.mrf.mxu0
        %v6566 = vadd.f32 %v6299, %v6565
        %v6567 = vpop.f32.mrf.mxu0
        %v6568 = vadd.f32 %v6299, %v6567
        %6569 = vmatmul.bf16.gmra.mxu0 %v6291
        %v6570 = vpop.f32.mrf.mxu0
        %v6571 = vadd.f32 %v6299, %v6570
        %v6572 = vpop.f32.mrf.mxu0
        %v6573 = vadd.f32 %v6299, %v6572
        %6574 = vmatmul.bf16.gmra.mxu0 %v6292
        %v6575 = vpop.f32.mrf.mxu0
        %v6576 = vadd.f32 %v6299, %v6575
        %v6577 = vpop.f32.mrf.mxu0
        %v6578 = vadd.f32 %v6299, %v6577
        %6579 = vdwg.mxu0
        %v6580 = vmul.f32 %v6474, 0.5
        %v6581 = vmul.f32 %v6503, 0.5
        %v6582 = vmul.f32 %v6532, 0.5
        %v6583 = vmul.f32 %v6561, 0.5
        %v6584 = vmul.f32 %v6476, 0.5
        %v6585 = vmul.f32 %v6505, 0.5
        %v6586 = vmul.f32 %v6534, 0.5
        %v6587 = vmul.f32 %v6563, 0.5
        %v6588 = vmul.f32 %v6479, 0.5
        %v6589 = vmul.f32 %v6508, 0.5
        %v6590 = vmul.f32 %v6537, 0.5
        %v6591 = vmul.f32 %v6566, 0.5
        %v6592 = vmul.f32 %v6481, 0.5
        %v6593 = vmul.f32 %v6510, 0.5
        %v6594 = vmul.f32 %v6539, 0.5
        %v6595 = vmul.f32 %v6568, 0.5
        %v6596 = vmul.f32 %v6484, 0.5
        %v6597 = vmul.f32 %v6513, 0.5
        %v6598 = vmul.f32 %v6542, 0.5
        %v6599 = vmul.f32 %v6571, 0.5
        %v6600 = vmul.f32 %v6486, 0.5
        %v6601 = vmul.f32 %v6515, 0.5
        %v6602 = vmul.f32 %v6544, 0.5
        %v6603 = vmul.f32 %v6573, 0.5
        %v6604 = vmul.f32 %v6489, 0.5
        %v6605 = vmul.f32 %v6518, 0.5
        %v6606 = vmul.f32 %v6547, 0.5
        %v6607 = vmul.f32 %v6576, 0.5
        %v6608 = vmul.f32 %v6491, 0.5
        %v6609 = vmul.f32 %v6520, 0.5
        %v6610 = vmul.f32 %v6549, 0.5
        %v6611 = vmul.f32 %v6578, 0.5
        %v6612 = vmul.f32 %v6474, 0.044715
        %v6613 = vmul.f32 %v6503, 0.044715
        %v6614 = vmul.f32 %v6532, 0.044715
        %v6615 = vmul.f32 %v6561, 0.044715
        %v6616 = vmul.f32 %v6476, 0.044715
        %v6617 = vmul.f32 %v6505, 0.044715
        %v6618 = vmul.f32 %v6534, 0.044715
        %v6619 = vmul.f32 %v6563, 0.044715
        %v6620 = vmul.f32 %v6479, 0.044715
        %v6621 = vmul.f32 %v6508, 0.044715
        %v6622 = vmul.f32 %v6537, 0.044715
        %v6623 = vmul.f32 %v6566, 0.044715
        %v6624 = vmul.f32 %v6481, 0.044715
        %v6625 = vmul.f32 %v6510, 0.044715
        %v6626 = vmul.f32 %v6539, 0.044715
        %v6627 = vmul.f32 %v6568, 0.044715
        %v6628 = vmul.f32 %v6484, 0.044715
        %v6629 = vmul.f32 %v6513, 0.044715
        %v6630 = vmul.f32 %v6542, 0.044715
        %v6631 = vmul.f32 %v6571, 0.044715
        %v6632 = vmul.f32 %v6486, 0.044715
        %v6633 = vmul.f32 %v6515, 0.044715
        %v6634 = vmul.f32 %v6544, 0.044715
        %v6635 = vmul.f32 %v6573, 0.044715
        %v6636 = vmul.f32 %v6489, 0.044715
        %v6637 = vmul.f32 %v6518, 0.044715
        %v6638 = vmul.f32 %v6547, 0.044715
        %v6639 = vmul.f32 %v6576, 0.044715
        %v6640 = vmul.f32 %v6491, 0.044715
        %v6641 = vmul.f32 %v6520, 0.044715
        %v6642 = vmul.f32 %v6549, 0.044715
        %v6643 = vmul.f32 %v6578, 0.044715
        %v6644 = vmul.f32 %v6612, %v6474
        %v6645 = vmul.f32 %v6613, %v6503
        %v6646 = vmul.f32 %v6614, %v6532
        %v6647 = vmul.f32 %v6615, %v6561
        %v6648 = vmul.f32 %v6616, %v6476
        %v6649 = vmul.f32 %v6617, %v6505
        %v6650 = vmul.f32 %v6618, %v6534
        %v6651 = vmul.f32 %v6619, %v6563
        %v6652 = vmul.f32 %v6620, %v6479
        %v6653 = vmul.f32 %v6621, %v6508
        %v6654 = vmul.f32 %v6622, %v6537
        %v6655 = vmul.f32 %v6623, %v6566
        %v6656 = vmul.f32 %v6624, %v6481
        %v6657 = vmul.f32 %v6625, %v6510
        %v6658 = vmul.f32 %v6626, %v6539
        %v6659 = vmul.f32 %v6627, %v6568
        %v6660 = vmul.f32 %v6628, %v6484
        %v6661 = vmul.f32 %v6629, %v6513
        %v6662 = vmul.f32 %v6630, %v6542
        %v6663 = vmul.f32 %v6631, %v6571
        %v6664 = vmul.f32 %v6632, %v6486
        %v6665 = vmul.f32 %v6633, %v6515
        %v6666 = vmul.f32 %v6634, %v6544
        %v6667 = vmul.f32 %v6635, %v6573
        %v6668 = vmul.f32 %v6636, %v6489
        %v6669 = vmul.f32 %v6637, %v6518
        %v6670 = vmul.f32 %v6638, %v6547
        %v6671 = vmul.f32 %v6639, %v6576
        %v6672 = vmul.f32 %v6640, %v6491
        %v6673 = vmul.f32 %v6641, %v6520
        %v6674 = vmul.f32 %v6642, %v6549
        %v6675 = vmul.f32 %v6643, %v6578
        %v6676 = vmul.f32 %v6644, %v6474
        %v6677 = vmul.f32 %v6645, %v6503
        %v6678 = vmul.f32 %v6646, %v6532
        %v6679 = vmul.f32 %v6647, %v6561
        %v6680 = vmul.f32 %v6648, %v6476
        %v6681 = vmul.f32 %v6649, %v6505
        %v6682 = vmul.f32 %v6650, %v6534
        %v6683 = vmul.f32 %v6651, %v6563
        %v6684 = vmul.f32 %v6652, %v6479
        %v6685 = vmul.f32 %v6653, %v6508
        %v6686 = vmul.f32 %v6654, %v6537
        %v6687 = vmul.f32 %v6655, %v6566
        %v6688 = vmul.f32 %v6656, %v6481
        %v6689 = vmul.f32 %v6657, %v6510
        %v6690 = vmul.f32 %v6658, %v6539
        %v6691 = vmul.f32 %v6659, %v6568
        %v6692 = vmul.f32 %v6660, %v6484
        %v6693 = vmul.f32 %v6661, %v6513
        %v6694 = vmul.f32 %v6662, %v6542
        %v6695 = vmul.f32 %v6663, %v6571
        %v6696 = vmul.f32 %v6664, %v6486
        %v6697 = vmul.f32 %v6665, %v6515
        %v6698 = vmul.f32 %v6666, %v6544
        %v6699 = vmul.f32 %v6667, %v6573
        %v6700 = vmul.f32 %v6668, %v6489
        %v6701 = vmul.f32 %v6669, %v6518
        %v6702 = vmul.f32 %v6670, %v6547
        %v6703 = vmul.f32 %v6671, %v6576
        %v6704 = vmul.f32 %v6672, %v6491
        %v6705 = vmul.f32 %v6673, %v6520
        %v6706 = vmul.f32 %v6674, %v6549
        %v6707 = vmul.f32 %v6675, %v6578
        %v6708 = vadd.f32 %v6474, %v6676
        %v6709 = vadd.f32 %v6503, %v6677
        %v6710 = vadd.f32 %v6532, %v6678
        %v6711 = vadd.f32 %v6561, %v6679
        %v6712 = vadd.f32 %v6476, %v6680
        %v6713 = vadd.f32 %v6505, %v6681
        %v6714 = vadd.f32 %v6534, %v6682
        %v6715 = vadd.f32 %v6563, %v6683
        %v6716 = vadd.f32 %v6479, %v6684
        %v6717 = vadd.f32 %v6508, %v6685
        %v6718 = vadd.f32 %v6537, %v6686
        %v6719 = vadd.f32 %v6566, %v6687
        %v6720 = vadd.f32 %v6481, %v6688
        %v6721 = vadd.f32 %v6510, %v6689
        %v6722 = vadd.f32 %v6539, %v6690
        %v6723 = vadd.f32 %v6568, %v6691
        %v6724 = vadd.f32 %v6484, %v6692
        %v6725 = vadd.f32 %v6513, %v6693
        %v6726 = vadd.f32 %v6542, %v6694
        %v6727 = vadd.f32 %v6571, %v6695
        %v6728 = vadd.f32 %v6486, %v6696
        %v6729 = vadd.f32 %v6515, %v6697
        %v6730 = vadd.f32 %v6544, %v6698
        %v6731 = vadd.f32 %v6573, %v6699
        %v6732 = vadd.f32 %v6489, %v6700
        %v6733 = vadd.f32 %v6518, %v6701
        %v6734 = vadd.f32 %v6547, %v6702
        %v6735 = vadd.f32 %v6576, %v6703
        %v6736 = vadd.f32 %v6491, %v6704
        %v6737 = vadd.f32 %v6520, %v6705
        %v6738 = vadd.f32 %v6549, %v6706
        %v6739 = vadd.f32 %v6578, %v6707
        %v6740 = vmul.f32 %v6708, 0.7978846
        %v6741 = vmul.f32 %v6709, 0.7978846
        %v6742 = vmul.f32 %v6710, 0.7978846
        %v6743 = vmul.f32 %v6711, 0.7978846
        %v6744 = vmul.f32 %v6712, 0.7978846
        %v6745 = vmul.f32 %v6713, 0.7978846
        %v6746 = vmul.f32 %v6714, 0.7978846
        %v6747 = vmul.f32 %v6715, 0.7978846
        %v6748 = vmul.f32 %v6716, 0.7978846
        %v6749 = vmul.f32 %v6717, 0.7978846
        %v6750 = vmul.f32 %v6718, 0.7978846
        %v6751 = vmul.f32 %v6719, 0.7978846
        %v6752 = vmul.f32 %v6720, 0.7978846
        %v6753 = vmul.f32 %v6721, 0.7978846
        %v6754 = vmul.f32 %v6722, 0.7978846
        %v6755 = vmul.f32 %v6723, 0.7978846
        %v6756 = vmul.f32 %v6724, 0.7978846
        %v6757 = vmul.f32 %v6725, 0.7978846
        %v6758 = vmul.f32 %v6726, 0.7978846
        %v6759 = vmul.f32 %v6727, 0.7978846
        %v6760 = vmul.f32 %v6728, 0.7978846
        %v6761 = vmul.f32 %v6729, 0.7978846
        %v6762 = vmul.f32 %v6730, 0.7978846
        %v6763 = vmul.f32 %v6731, 0.7978846
        %v6764 = vmul.f32 %v6732, 0.7978846
        %v6765 = vmul.f32 %v6733, 0.7978846
        %v6766 = vmul.f32 %v6734, 0.7978846
        %v6767 = vmul.f32 %v6735, 0.7978846
        %v6768 = vmul.f32 %v6736, 0.7978846
        %v6769 = vmul.f32 %v6737, 0.7978846
        %v6770 = vmul.f32 %v6738, 0.7978846
        %v6771 = vmul.f32 %v6739, 0.7978846
        %v6772 = vtanh.pop %v6740
        %v6773 = vtanh.pop %v6741
        %v6774 = vtanh.pop %v6742
        %v6775 = vtanh.pop %v6743
        %v6776 = vtanh.pop %v6744
        %v6777 = vtanh.pop %v6745
        %v6778 = vtanh.pop %v6746
        %v6779 = vtanh.pop %v6747
        %v6780 = vtanh.pop %v6748
        %v6781 = vtanh.pop %v6749
        %v6782 = vtanh.pop %v6750
        %v6783 = vtanh.pop %v6751
        %v6784 = vtanh.pop %v6752
        %v6785 = vtanh.pop %v6753
        %v6786 = vtanh.pop %v6754
        %v6787 = vtanh.pop %v6755
        %v6788 = vtanh.pop %v6756
        %v6789 = vtanh.pop %v6757
        %v6790 = vtanh.pop %v6758
        %v6791 = vtanh.pop %v6759
        %v6792 = vtanh.pop %v6760
        %v6793 = vtanh.pop %v6761
        %v6794 = vtanh.pop %v6762
        %v6795 = vtanh.pop %v6763
        %v6796 = vtanh.pop %v6764
        %v6797 = vtanh.pop %v6765
        %v6798 = vtanh.pop %v6766
        %v6799 = vtanh.pop %v6767
        %v6800 = vtanh.pop %v6768
        %v6801 = vtanh.pop %v6769
        %v6802 = vtanh.pop %v6770
        %v6803 = vtanh.pop %v6771
        %v6804 = vadd.f32 %v6772, 1.0
        %v6805 = vadd.f32 %v6773, 1.0
        %v6806 = vadd.f32 %v6774, 1.0
        %v6807 = vadd.f32 %v6775, 1.0
        %v6808 = vadd.f32 %v6776, 1.0
        %v6809 = vadd.f32 %v6777, 1.0
        %v6810 = vadd.f32 %v6778, 1.0
        %v6811 = vadd.f32 %v6779, 1.0
        %v6812 = vadd.f32 %v6780, 1.0
        %v6813 = vadd.f32 %v6781, 1.0
        %v6814 = vadd.f32 %v6782, 1.0
        %v6815 = vadd.f32 %v6783, 1.0
        %v6816 = vadd.f32 %v6784, 1.0
        %v6817 = vadd.f32 %v6785, 1.0
        %v6818 = vadd.f32 %v6786, 1.0
        %v6819 = vadd.f32 %v6787, 1.0
        %v6820 = vadd.f32 %v6788, 1.0
        %v6821 = vadd.f32 %v6789, 1.0
        %v6822 = vadd.f32 %v6790, 1.0
        %v6823 = vadd.f32 %v6791, 1.0
        %v6824 = vadd.f32 %v6792, 1.0
        %v6825 = vadd.f32 %v6793, 1.0
        %v6826 = vadd.f32 %v6794, 1.0
        %v6827 = vadd.f32 %v6795, 1.0
        %v6828 = vadd.f32 %v6796, 1.0
        %v6829 = vadd.f32 %v6797, 1.0
        %v6830 = vadd.f32 %v6798, 1.0
        %v6831 = vadd.f32 %v6799, 1.0
        %v6832 = vadd.f32 %v6800, 1.0
        %v6833 = vadd.f32 %v6801, 1.0
        %v6834 = vadd.f32 %v6802, 1.0
        %v6835 = vadd.f32 %v6803, 1.0
        %v6836 = vmul.f32 %v6580, %v6804
        %v6837 = vmul.f32 %v6581, %v6805
        %v6838 = vmul.f32 %v6582, %v6806
        %v6839 = vmul.f32 %v6583, %v6807
        %v6840 = vmul.f32 %v6584, %v6808
        %v6841 = vmul.f32 %v6585, %v6809
        %v6842 = vmul.f32 %v6586, %v6810
        %v6843 = vmul.f32 %v6587, %v6811
        %v6844 = vmul.f32 %v6588, %v6812
        %v6845 = vmul.f32 %v6589, %v6813
        %v6846 = vmul.f32 %v6590, %v6814
        %v6847 = vmul.f32 %v6591, %v6815
        %v6848 = vmul.f32 %v6592, %v6816
        %v6849 = vmul.f32 %v6593, %v6817
        %v6850 = vmul.f32 %v6594, %v6818
        %v6851 = vmul.f32 %v6595, %v6819
        %v6852 = vmul.f32 %v6596, %v6820
        %v6853 = vmul.f32 %v6597, %v6821
        %v6854 = vmul.f32 %v6598, %v6822
        %v6855 = vmul.f32 %v6599, %v6823
        %v6856 = vmul.f32 %v6600, %v6824
        %v6857 = vmul.f32 %v6601, %v6825
        %v6858 = vmul.f32 %v6602, %v6826
        %v6859 = vmul.f32 %v6603, %v6827
        %v6860 = vmul.f32 %v6604, %v6828
        %v6861 = vmul.f32 %v6605, %v6829
        %v6862 = vmul.f32 %v6606, %v6830
        %v6863 = vmul.f32 %v6607, %v6831
        %v6864 = vmul.f32 %v6608, %v6832
        %v6865 = vmul.f32 %v6609, %v6833
        %v6866 = vmul.f32 %v6610, %v6834
        %v6867 = vmul.f32 %v6611, %v6835
        %s6868 = scalar_lea.vmem %s12, 256
        %v6869 = vld [vmem:[%s6868] sm:$0xf]
        %v6870 = vld [vmem:[%s6868 + $0x4] sm:$0xf]
        %v6871 = vld [vmem:[%s6868 + $0x8] sm:$0xf]
        %v6872 = vld [vmem:[%s6868 + $0xc] sm:$0xf]
        %v6873 = vld [vmem:[%s6868 + $0x10] sm:$0xf]
        %v6874 = vld [vmem:[%s6868 + $0x14] sm:$0xf]
        %v6875 = vld [vmem:[%s6868 + $0x18] sm:$0xf]
        %v6876 = vld [vmem:[%s6868 + $0x1c] sm:$0xf]
        %v6877 = vld [vmem:[%s6868 + $0x20] sm:$0xf]
        %v6878 = vld [vmem:[%s6868 + $0x24] sm:$0xf]
        %v6879 = vld [vmem:[%s6868 + $0x28] sm:$0xf]
        %v6880 = vld [vmem:[%s6868 + $0x2c] sm:$0xf]
        %v6881 = vld [vmem:[%s6868 + $0x30] sm:$0xf]
        %v6882 = vld [vmem:[%s6868 + $0x34] sm:$0xf]
        %v6883 = vld [vmem:[%s6868 + $0x38] sm:$0xf]
        %v6884 = vld [vmem:[%s6868 + $0x3c] sm:$0xf]
        %v6885 = vld [vmem:[%s6868 + $0x40] sm:$0xf]
        %v6886 = vld [vmem:[%s6868 + $0x44] sm:$0xf]
        %v6887 = vld [vmem:[%s6868 + $0x48] sm:$0xf]
        %v6888 = vld [vmem:[%s6868 + $0x4c] sm:$0xf]
        %v6889 = vld [vmem:[%s6868 + $0x50] sm:$0xf]
        %v6890 = vld [vmem:[%s6868 + $0x54] sm:$0xf]
        %v6891 = vld [vmem:[%s6868 + $0x58] sm:$0xf]
        %v6892 = vld [vmem:[%s6868 + $0x5c] sm:$0xf]
        %v6893 = vld [vmem:[%s6868 + $0x60] sm:$0xf]
        %v6894 = vld [vmem:[%s6868 + $0x64] sm:$0xf]
        %v6895 = vld [vmem:[%s6868 + $0x68] sm:$0xf]
        %v6896 = vld [vmem:[%s6868 + $0x6c] sm:$0xf]
        %v6897 = vld [vmem:[%s6868 + $0x70] sm:$0xf]
        %v6898 = vld [vmem:[%s6868 + $0x74] sm:$0xf]
        %v6899 = vld [vmem:[%s6868 + $0x78] sm:$0xf]
        %v6900 = vld [vmem:[%s6868 + $0x7c] sm:$0xf]
        %v6901 = vld [vmem:[%s6868 + $0x80] sm:$0xf]
        %v6902 = vld [vmem:[%s6868 + $0x84] sm:$0xf]
        %v6903 = vld [vmem:[%s6868 + $0x88] sm:$0xf]
        %v6904 = vld [vmem:[%s6868 + $0x8c] sm:$0xf]
        %v6905 = vld [vmem:[%s6868 + $0x90] sm:$0xf]
        %v6906 = vld [vmem:[%s6868 + $0x94] sm:$0xf]
        %v6907 = vld [vmem:[%s6868 + $0x98] sm:$0xf]
        %v6908 = vld [vmem:[%s6868 + $0x9c] sm:$0xf]
        %v6909 = vld [vmem:[%s6868 + $0xa0] sm:$0xf]
        %v6910 = vld [vmem:[%s6868 + $0xa4] sm:$0xf]
        %v6911 = vld [vmem:[%s6868 + $0xa8] sm:$0xf]
        %v6912 = vld [vmem:[%s6868 + $0xac] sm:$0xf]
        %v6913 = vld [vmem:[%s6868 + $0xb0] sm:$0xf]
        %v6914 = vld [vmem:[%s6868 + $0xb4] sm:$0xf]
        %v6915 = vld [vmem:[%s6868 + $0xb8] sm:$0xf]
        %v6916 = vld [vmem:[%s6868 + $0xbc] sm:$0xf]
        %v6917 = vld [vmem:[%s6868 + $0xc0] sm:$0xf]
        %v6918 = vld [vmem:[%s6868 + $0xc4] sm:$0xf]
        %v6919 = vld [vmem:[%s6868 + $0xc8] sm:$0xf]
        %v6920 = vld [vmem:[%s6868 + $0xcc] sm:$0xf]
        %v6921 = vld [vmem:[%s6868 + $0xd0] sm:$0xf]
        %v6922 = vld [vmem:[%s6868 + $0xd4] sm:$0xf]
        %v6923 = vld [vmem:[%s6868 + $0xd8] sm:$0xf]
        %v6924 = vld [vmem:[%s6868 + $0xdc] sm:$0xf]
        %v6925 = vld [vmem:[%s6868 + $0xe0] sm:$0xf]
        %v6926 = vld [vmem:[%s6868 + $0xe4] sm:$0xf]
        %v6927 = vld [vmem:[%s6868 + $0xe8] sm:$0xf]
        %v6928 = vld [vmem:[%s6868 + $0xec] sm:$0xf]
        %v6929 = vld [vmem:[%s6868 + $0xf0] sm:$0xf]
        %v6930 = vld [vmem:[%s6868 + $0xf4] sm:$0xf]
        %v6931 = vld [vmem:[%s6868 + $0xf8] sm:$0xf]
        %v6932 = vld [vmem:[%s6868 + $0xfc] sm:$0xf]
        %v6933 = vpack.c.bf16 %v6840, %v6836
        %v6934 = vpack.c.bf16 %v6841, %v6837
        %v6935 = vpack.c.bf16 %v6842, %v6838
        %v6936 = vpack.c.bf16 %v6843, %v6839
        %v6937 = vpack.c.bf16 %v6848, %v6844
        %v6938 = vpack.c.bf16 %v6849, %v6845
        %v6939 = vpack.c.bf16 %v6850, %v6846
        %v6940 = vpack.c.bf16 %v6851, %v6847
        %v6941 = vpack.c.bf16 %v6856, %v6852
        %v6942 = vpack.c.bf16 %v6857, %v6853
        %v6943 = vpack.c.bf16 %v6858, %v6854
        %v6944 = vpack.c.bf16 %v6859, %v6855
        %v6945 = vpack.c.bf16 %v6864, %v6860
        %v6946 = vpack.c.bf16 %v6865, %v6861
        %v6947 = vpack.c.bf16 %v6866, %v6862
        %v6948 = vpack.c.bf16 %v6867, %v6863
        %s6949 = scalar_lea.vmem %s13, 1
        %v6950 = vld [vmem:[%s6949] sm:$0x1]
        %v6952 = vperm.slane %v6950, 0
        %v7018 = vunpack.c.l.b16 %v6869
        %v7019 = vunpack.c.l.b16 %v6870
        %v7020 = vunpack.c.l.b16 %v6871
        %v7021 = vunpack.c.l.b16 %v6872
        %v7022 = vunpack.c.l.b16 %v6873
        %v7023 = vunpack.c.l.b16 %v6874
        %v7024 = vunpack.c.l.b16 %v6875
        %v7025 = vunpack.c.l.b16 %v6876
        %v7026 = vunpack.c.l.b16 %v6877
        %v7027 = vunpack.c.l.b16 %v6878
        %v7028 = vunpack.c.l.b16 %v6879
        %v7029 = vunpack.c.l.b16 %v6880
        %v7030 = vunpack.c.l.b16 %v6881
        %v7031 = vunpack.c.l.b16 %v6882
        %v7032 = vunpack.c.l.b16 %v6883
        %v7033 = vunpack.c.l.b16 %v6884
        %v7034 = vunpack.c.l.b16 %v6885
        %v7035 = vunpack.c.l.b16 %v6886
        %v7036 = vunpack.c.l.b16 %v6887
        %v7037 = vunpack.c.l.b16 %v6888
        %v7038 = vunpack.c.l.b16 %v6889
        %v7039 = vunpack.c.l.b16 %v6890
        %v7040 = vunpack.c.l.b16 %v6891
        %v7041 = vunpack.c.l.b16 %v6892
        %v7042 = vunpack.c.l.b16 %v6893
        %v7043 = vunpack.c.l.b16 %v6894
        %v7044 = vunpack.c.l.b16 %v6895
        %v7045 = vunpack.c.l.b16 %v6896
        %v7046 = vunpack.c.l.b16 %v6897
        %v7047 = vunpack.c.l.b16 %v6898
        %v7048 = vunpack.c.l.b16 %v6899
        %v7049 = vunpack.c.l.b16 %v6900
        %v7050 = vunpack.c.l.b16 %v6901
        %v7051 = vunpack.c.l.b16 %v6902
        %v7052 = vunpack.c.l.b16 %v6903
        %v7053 = vunpack.c.l.b16 %v6904
        %v7054 = vunpack.c.l.b16 %v6905
        %v7055 = vunpack.c.l.b16 %v6906
        %v7056 = vunpack.c.l.b16 %v6907
        %v7057 = vunpack.c.l.b16 %v6908
        %v7058 = vunpack.c.l.b16 %v6909
        %v7059 = vunpack.c.l.b16 %v6910
        %v7060 = vunpack.c.l.b16 %v6911
        %v7061 = vunpack.c.l.b16 %v6912
        %v7062 = vunpack.c.l.b16 %v6913
        %v7063 = vunpack.c.l.b16 %v6914
        %v7064 = vunpack.c.l.b16 %v6915
        %v7065 = vunpack.c.l.b16 %v6916
        %v7066 = vunpack.c.l.b16 %v6917
        %v7067 = vunpack.c.l.b16 %v6918
        %v7068 = vunpack.c.l.b16 %v6919
        %v7069 = vunpack.c.l.b16 %v6920
        %v7070 = vunpack.c.l.b16 %v6921
        %v7071 = vunpack.c.l.b16 %v6922
        %v7072 = vunpack.c.l.b16 %v6923
        %v7073 = vunpack.c.l.b16 %v6924
        %v7074 = vunpack.c.l.b16 %v6925
        %v7075 = vunpack.c.l.b16 %v6926
        %v7076 = vunpack.c.l.b16 %v6927
        %v7077 = vunpack.c.l.b16 %v6928
        %v7078 = vunpack.c.l.b16 %v6929
        %v7079 = vunpack.c.l.b16 %v6930
        %v7080 = vunpack.c.l.b16 %v6931
        %v7081 = vunpack.c.l.b16 %v6932
        %v7082 = vpack.c.b16 %v7019, %v7018
        %v7083 = vpack.c.b16 %v7021, %v7020
        %v7084 = vpack.c.b16 %v7023, %v7022
        %v7085 = vpack.c.b16 %v7025, %v7024
        %v7086 = vpack.c.b16 %v7027, %v7026
        %v7087 = vpack.c.b16 %v7029, %v7028
        %v7088 = vpack.c.b16 %v7031, %v7030
        %v7089 = vpack.c.b16 %v7033, %v7032
        %v7090 = vpack.c.b16 %v7035, %v7034
        %v7091 = vpack.c.b16 %v7037, %v7036
        %v7092 = vpack.c.b16 %v7039, %v7038
        %v7093 = vpack.c.b16 %v7041, %v7040
        %v7094 = vpack.c.b16 %v7043, %v7042
        %v7095 = vpack.c.b16 %v7045, %v7044
        %v7096 = vpack.c.b16 %v7047, %v7046
        %v7097 = vpack.c.b16 %v7049, %v7048
        %v7098 = vpack.c.b16 %v7051, %v7050
        %v7099 = vpack.c.b16 %v7053, %v7052
        %v7100 = vpack.c.b16 %v7055, %v7054
        %v7101 = vpack.c.b16 %v7057, %v7056
        %v7102 = vpack.c.b16 %v7059, %v7058
        %v7103 = vpack.c.b16 %v7061, %v7060
        %v7104 = vpack.c.b16 %v7063, %v7062
        %v7105 = vpack.c.b16 %v7065, %v7064
        %v7106 = vpack.c.b16 %v7067, %v7066
        %v7107 = vpack.c.b16 %v7069, %v7068
        %v7108 = vpack.c.b16 %v7071, %v7070
        %v7109 = vpack.c.b16 %v7073, %v7072
        %v7110 = vpack.c.b16 %v7075, %v7074
        %v7111 = vpack.c.b16 %v7077, %v7076
        %v7112 = vpack.c.b16 %v7079, %v7078
        %v7113 = vpack.c.b16 %v7081, %v7080
        %7146 = vmatpush.bf16.msra.mxu0 %v7089
        %7147 = vmatpush.bf16.msra.mxu0 %v7088
        %7148 = vmatpush.bf16.msra.mxu0 %v7087
        %7149 = vmatpush.bf16.msra.mxu0 %v7086
        %7150 = vmatpush.bf16.msra.mxu0 %v7085
        %7151 = vmatpush.bf16.msra.mxu0 %v7084
        %7152 = vmatpush.bf16.msra.mxu0 %v7083
        %7153 = vmatpush.bf16.msra.mxu0 %v7082
        %7154 = vmatmul.bf16.gmra.mxu0 %v6933
        %v7155 = vpop.f32.mrf.mxu0
        %v7156 = vadd.f32 %v6952, %v7155
        %v7157 = vpop.f32.mrf.mxu0
        %7158 = vmatmul.bf16.gmra.mxu0 %v6937
        %v7159 = vpop.f32.mrf.mxu0
        %v7160 = vadd.f32 %v6952, %v7159
        %v7161 = vpop.f32.mrf.mxu0
        %7162 = vmatmul.bf16.gmra.mxu0 %v6941
        %v7163 = vpop.f32.mrf.mxu0
        %v7164 = vadd.f32 %v6952, %v7163
        %v7165 = vpop.f32.mrf.mxu0
        %7166 = vmatmul.bf16.gmra.mxu0 %v6945
        %v7167 = vpop.f32.mrf.mxu0
        %v7168 = vadd.f32 %v6952, %v7167
        %v7169 = vpop.f32.mrf.mxu0
        %7170 = vdwg.mxu0
        %7171 = vmatpush.bf16.msra.mxu0 %v7097
        %7172 = vmatpush.bf16.msra.mxu0 %v7096
        %7173 = vmatpush.bf16.msra.mxu0 %v7095
        %7174 = vmatpush.bf16.msra.mxu0 %v7094
        %7175 = vmatpush.bf16.msra.mxu0 %v7093
        %7176 = vmatpush.bf16.msra.mxu0 %v7092
        %7177 = vmatpush.bf16.msra.mxu0 %v7091
        %7178 = vmatpush.bf16.msra.mxu0 %v7090
        %7179 = vmatmul.bf16.gmra.mxu0 %v6934
        %v7180 = vpop.f32.mrf.mxu0
        %v7181 = vadd.f32 %v7156, %v7180
        %v7182 = vpop.f32.mrf.mxu0
        %7183 = vmatmul.bf16.gmra.mxu0 %v6938
        %v7184 = vpop.f32.mrf.mxu0
        %v7185 = vadd.f32 %v7160, %v7184
        %v7186 = vpop.f32.mrf.mxu0
        %7187 = vmatmul.bf16.gmra.mxu0 %v6942
        %v7188 = vpop.f32.mrf.mxu0
        %v7189 = vadd.f32 %v7164, %v7188
        %v7190 = vpop.f32.mrf.mxu0
        %7191 = vmatmul.bf16.gmra.mxu0 %v6946
        %v7192 = vpop.f32.mrf.mxu0
        %v7193 = vadd.f32 %v7168, %v7192
        %v7194 = vpop.f32.mrf.mxu0
        %7195 = vdwg.mxu0
        %7196 = vmatpush.bf16.msra.mxu0 %v7105
        %7197 = vmatpush.bf16.msra.mxu0 %v7104
        %7198 = vmatpush.bf16.msra.mxu0 %v7103
        %7199 = vmatpush.bf16.msra.mxu0 %v7102
        %7200 = vmatpush.bf16.msra.mxu0 %v7101
        %7201 = vmatpush.bf16.msra.mxu0 %v7100
        %7202 = vmatpush.bf16.msra.mxu0 %v7099
        %7203 = vmatpush.bf16.msra.mxu0 %v7098
        %7204 = vmatmul.bf16.gmra.mxu0 %v6935
        %v7205 = vpop.f32.mrf.mxu0
        %v7206 = vadd.f32 %v7181, %v7205
        %v7207 = vpop.f32.mrf.mxu0
        %7208 = vmatmul.bf16.gmra.mxu0 %v6939
        %v7209 = vpop.f32.mrf.mxu0
        %v7210 = vadd.f32 %v7185, %v7209
        %v7211 = vpop.f32.mrf.mxu0
        %7212 = vmatmul.bf16.gmra.mxu0 %v6943
        %v7213 = vpop.f32.mrf.mxu0
        %v7214 = vadd.f32 %v7189, %v7213
        %v7215 = vpop.f32.mrf.mxu0
        %7216 = vmatmul.bf16.gmra.mxu0 %v6947
        %v7217 = vpop.f32.mrf.mxu0
        %v7218 = vadd.f32 %v7193, %v7217
        %v7219 = vpop.f32.mrf.mxu0
        %7220 = vdwg.mxu0
        %7221 = vmatpush.bf16.msra.mxu0 %v7113
        %7222 = vmatpush.bf16.msra.mxu0 %v7112
        %7223 = vmatpush.bf16.msra.mxu0 %v7111
        %7224 = vmatpush.bf16.msra.mxu0 %v7110
        %7225 = vmatpush.bf16.msra.mxu0 %v7109
        %7226 = vmatpush.bf16.msra.mxu0 %v7108
        %7227 = vmatpush.bf16.msra.mxu0 %v7107
        %7228 = vmatpush.bf16.msra.mxu0 %v7106
        %7229 = vmatmul.bf16.gmra.mxu0 %v6936
        %v7230 = vpop.f32.mrf.mxu0
        %v7231 = vadd.f32 %v7206, %v7230
        %v7232 = vpop.f32.mrf.mxu0
        %7233 = vmatmul.bf16.gmra.mxu0 %v6940
        %v7234 = vpop.f32.mrf.mxu0
        %v7235 = vadd.f32 %v7210, %v7234
        %v7236 = vpop.f32.mrf.mxu0
        %7237 = vmatmul.bf16.gmra.mxu0 %v6944
        %v7238 = vpop.f32.mrf.mxu0
        %v7239 = vadd.f32 %v7214, %v7238
        %v7240 = vpop.f32.mrf.mxu0
        %7241 = vmatmul.bf16.gmra.mxu0 %v6948
        %v7242 = vpop.f32.mrf.mxu0
        %v7243 = vadd.f32 %v7218, %v7242
        %v7244 = vpop.f32.mrf.mxu0
        %7245 = vdwg.mxu0
        %v7246 = vadd.f32 %v7231, %v6248
        %v7247 = vadd.f32 %v7235, %v6250
        %v7248 = vadd.f32 %v7239, %v6252
        %v7249 = vadd.f32 %v7243, %v6254
        %s7250 = scalar_lea.vmem %s14, 1
        %v7251 = vld [vmem:[%s7250] sm:$0x1]
        %s7252 = scalar_lea.vmem %s15, 1
        %v7253 = vld [vmem:[%s7252] sm:$0x1]
        %7254 = vadd.xlane.f32.xlu0 %v7246
        %v7255 = vpop.xlane.xlu0 %7254
        %7256 = vadd.xlane.f32.xlu0 %v7247
        %v7257 = vpop.xlane.xlu0 %7256
        %7258 = vadd.xlane.f32.xlu0 %v7248
        %v7259 = vpop.xlane.xlu0 %7258
        %7260 = vadd.xlane.f32.xlu0 %v7249
        %v7261 = vpop.xlane.xlu0 %7260
        %v7262 = vmul.f32 %v7255, %v793
        %v7263 = vmul.f32 %v7257, %v793
        %v7264 = vmul.f32 %v7259, %v793
        %v7265 = vmul.f32 %v7261, %v793
        %v7266 = vsub.f32 %v7246, %v7262
        %v7267 = vsub.f32 %v7247, %v7263
        %v7268 = vsub.f32 %v7248, %v7264
        %v7269 = vsub.f32 %v7249, %v7265
        %v7270 = vmul.f32 %v7266, %v7266
        %v7271 = vmul.f32 %v7267, %v7267
        %v7272 = vmul.f32 %v7268, %v7268
        %v7273 = vmul.f32 %v7269, %v7269
        %7274 = vadd.xlane.f32.xlu0 %v7270
        %v7275 = vpop.xlane.xlu0 %7274
        %7276 = vadd.xlane.f32.xlu0 %v7271
        %v7277 = vpop.xlane.xlu0 %7276
        %7278 = vadd.xlane.f32.xlu0 %v7272
        %v7279 = vpop.xlane.xlu0 %7278
        %7280 = vadd.xlane.f32.xlu0 %v7273
        %v7281 = vpop.xlane.xlu0 %7280
        %v7282 = vmul.f32 %v7275, %v793
        %v7283 = vmul.f32 %v7277, %v793
        %v7284 = vmul.f32 %v7279, %v793
        %v7285 = vmul.f32 %v7281, %v793
        %v7286 = vadd.f32 %v7282, 1e-12
        %v7287 = vadd.f32 %v7283, 1e-12
        %v7288 = vadd.f32 %v7284, 1e-12
        %v7289 = vadd.f32 %v7285, 1e-12
        %v7290 = vrsqrt.pop %v7286
        %v7291 = vmul.f32 %v7290, %v7286
        %v7292 = vmul.f32 %v7291, %v7290
        %v7293 = vmul.f32 0.5, %v7292
        %v7294 = vsub.f32 1.5, %v7293
        %v7295 = vmul.f32 %v7290, %v7294
        %vm7296 = vweird.f32 %v7286
        %vm7297 = vweird.f32 %v7290
        %vm7298 = vmor %vm7296, %vm7297
        %v7299 = vsel %vm7298, %v7290, %v7295
        %v7300 = vrsqrt.pop %v7287
        %v7301 = vmul.f32 %v7300, %v7287
        %v7302 = vmul.f32 %v7301, %v7300
        %v7303 = vmul.f32 0.5, %v7302
        %v7304 = vsub.f32 1.5, %v7303
        %v7305 = vmul.f32 %v7300, %v7304
        %vm7306 = vweird.f32 %v7287
        %vm7307 = vweird.f32 %v7300
        %vm7308 = vmor %vm7306, %vm7307
        %v7309 = vsel %vm7308, %v7300, %v7305
        %v7310 = vrsqrt.pop %v7288
        %v7311 = vmul.f32 %v7310, %v7288
        %v7312 = vmul.f32 %v7311, %v7310
        %v7313 = vmul.f32 0.5, %v7312
        %v7314 = vsub.f32 1.5, %v7313
        %v7315 = vmul.f32 %v7310, %v7314
        %vm7316 = vweird.f32 %v7288
        %vm7317 = vweird.f32 %v7310
        %vm7318 = vmor %vm7316, %vm7317
        %v7319 = vsel %vm7318, %v7310, %v7315
        %v7320 = vrsqrt.pop %v7289
        %v7321 = vmul.f32 %v7320, %v7289
        %v7322 = vmul.f32 %v7321, %v7320
        %v7323 = vmul.f32 0.5, %v7322
        %v7324 = vsub.f32 1.5, %v7323
        %v7325 = vmul.f32 %v7320, %v7324
        %vm7326 = vweird.f32 %v7289
        %vm7327 = vweird.f32 %v7320
        %vm7328 = vmor %vm7326, %vm7327
        %v7329 = vsel %vm7328, %v7320, %v7325
        %v7330 = vmul.f32 %v7266, %v7299
        %v7331 = vmul.f32 %v7267, %v7309
        %v7332 = vmul.f32 %v7268, %v7319
        %v7333 = vmul.f32 %v7269, %v7329
        %v7335 = vperm.slane %v7251, 0
        %v7337 = vmul.f32 %v7330, %v7335
        %v7338 = vmul.f32 %v7331, %v7335
        %v7339 = vmul.f32 %v7332, %v7335
        %v7340 = vmul.f32 %v7333, %v7335
        %v7342 = vperm.slane %v7253, 0
        %v7344 = vadd.f32 %v7337, %v7342
        %v7345 = vadd.f32 %v7338, %v7342
        %v7346 = vadd.f32 %v7339, %v7342
        %v7347 = vadd.f32 %v7340, %v7342
        %v7348 = vld [vmem:[#allocation2] sm:$0xf]
        %v7349 = vld [vmem:[#allocation2 + $0x4] sm:$0xf]
        %v7350 = vld [vmem:[#allocation2 + $0x8] sm:$0xf]
        %v7351 = vld [vmem:[#allocation2 + $0xc] sm:$0xf]
        %v7352 = vld [vmem:[#allocation2 + $0x10] sm:$0xf]
        %v7353 = vld [vmem:[#allocation2 + $0x14] sm:$0xf]
        %v7354 = vld [vmem:[#allocation2 + $0x18] sm:$0xf]
        %v7355 = vld [vmem:[#allocation2 + $0x1c] sm:$0xf]
        %v7356 = vld [vmem:[#allocation2 + $0x20] sm:$0xf]
        %v7357 = vld [vmem:[#allocation2 + $0x24] sm:$0xf]
        %v7358 = vld [vmem:[#allocation2 + $0x28] sm:$0xf]
        %v7359 = vld [vmem:[#allocation2 + $0x2c] sm:$0xf]
        %v7360 = vld [vmem:[#allocation2 + $0x30] sm:$0xf]
        %v7361 = vld [vmem:[#allocation2 + $0x34] sm:$0xf]
        %v7362 = vld [vmem:[#allocation2 + $0x38] sm:$0xf]
        %v7363 = vld [vmem:[#allocation2 + $0x3c] sm:$0xf]
        %v7364 = vpack.c.bf16 %v7344, %v7344
        %v7365 = vpack.c.bf16 %v7345, %v7345
        %v7366 = vpack.c.bf16 %v7346, %v7346
        %v7367 = vpack.c.bf16 %v7347, %v7347
        %v7368 = vld [vmem:[%s17] sm:$0x1]
        %v7370 = vperm.slane %v7368, 0
        %v7376 = vunpack.c.l.b16 %v7364
        %v7377 = vunpack.c.l.b16 %v7365
        %v7378 = vunpack.c.l.b16 %v7366
        %v7379 = vunpack.c.l.b16 %v7367
        %v7380 = vrot.slane %v7377, 7
        %vm7381 = vcmask 1041409
        %v7382 = vsel %vm7381, %v7380, %v7376
        %v7383 = vrot.slane %v7378, 6
        %vm7384 = vcmask 1042434
        %v7385 = vsel %vm7384, %v7383, %v7382
        %v7386 = vrot.slane %v7379, 5
        %vm7387 = vcmask 1043459
        %v7388 = vsel %vm7387, %v7386, %v7385
        %v7389 = vpack.c.b16 %v7388, %v7388
        %v7407 = vunpack.c.l.b16 %v7348
        %v7408 = vunpack.c.l.b16 %v7349
        %v7409 = vunpack.c.l.b16 %v7350
        %v7410 = vunpack.c.l.b16 %v7351
        %v7411 = vunpack.c.l.b16 %v7352
        %v7412 = vunpack.c.l.b16 %v7353
        %v7413 = vunpack.c.l.b16 %v7354
        %v7414 = vunpack.c.l.b16 %v7355
        %v7415 = vunpack.c.l.b16 %v7356
        %v7416 = vunpack.c.l.b16 %v7357
        %v7417 = vunpack.c.l.b16 %v7358
        %v7418 = vunpack.c.l.b16 %v7359
        %v7419 = vunpack.c.l.b16 %v7360
        %v7420 = vunpack.c.l.b16 %v7361
        %v7421 = vunpack.c.l.b16 %v7362
        %v7422 = vunpack.c.l.b16 %v7363
        %v7423 = vpack.c.b16 %v7408, %v7407
        %v7424 = vpack.c.b16 %v7410, %v7409
        %v7425 = vpack.c.b16 %v7412, %v7411
        %v7426 = vpack.c.b16 %v7414, %v7413
        %v7427 = vpack.c.b16 %v7416, %v7415
        %v7428 = vpack.c.b16 %v7418, %v7417
        %v7429 = vpack.c.b16 %v7420, %v7419
        %v7430 = vpack.c.b16 %v7422, %v7421
        %7439 = vmatpush.bf16.msra.mxu0 %v7430
        %7440 = vmatpush.bf16.msra.mxu0 %v7429
        %7441 = vmatpush.bf16.msra.mxu0 %v7428
        %7442 = vmatpush.bf16.msra.mxu0 %v7427
        %7443 = vmatpush.bf16.msra.mxu0 %v7426
        %7444 = vmatpush.bf16.msra.mxu0 %v7425
        %7445 = vmatpush.bf16.msra.mxu0 %v7424
        %7446 = vmatpush.bf16.msra.mxu0 %v7423
        %7447 = vmatmul.bf16.gmra.mxu0 %v7389
        %v7448 = vpop.f32.mrf.mxu0
        %v7449 = vadd.f32 %v7370, %v7448
        %v7450 = vpop.f32.mrf.mxu0
        %7451 = vdwg.mxu0
        %v7452 = vtanh.pop %v7449
        %v7453 = vld [vmem:[#allocation5] sm:$0xf]
        %v7454 = vld [vmem:[#allocation5 + $0x4] sm:$0xf]
        %v7455 = vld [vmem:[#allocation5 + $0x8] sm:$0xf]
        %v7456 = vld [vmem:[#allocation5 + $0xc] sm:$0xf]
        %v7457 = vld [vmem:[#allocation5 + $0x10] sm:$0xf]
        %v7458 = vld [vmem:[#allocation5 + $0x14] sm:$0xf]
        %v7459 = vld [vmem:[#allocation5 + $0x18] sm:$0xf]
        %v7460 = vld [vmem:[#allocation5 + $0x1c] sm:$0xf]
        %v7461 = vld [vmem:[#allocation5 + $0x20] sm:$0xf]
        %v7462 = vld [vmem:[#allocation5 + $0x24] sm:$0xf]
        %v7463 = vld [vmem:[#allocation5 + $0x28] sm:$0xf]
        %v7464 = vld [vmem:[#allocation5 + $0x2c] sm:$0xf]
        %v7465 = vld [vmem:[#allocation5 + $0x30] sm:$0xf]
        %v7466 = vld [vmem:[#allocation5 + $0x34] sm:$0xf]
        %v7467 = vld [vmem:[#allocation5 + $0x38] sm:$0xf]
        %v7468 = vld [vmem:[#allocation5 + $0x3c] sm:$0xf]
        %v7469 = vpack.c.bf16 %v7452, %v7452
        %v7470 = vld [vmem:[%s19] sm:$0x1]
        %v7472 = vperm.slane %v7470, 0
        %v7490 = vunpack.c.l.b16 %v7453
        %v7491 = vunpack.c.l.b16 %v7454
        %v7492 = vunpack.c.l.b16 %v7455
        %v7493 = vunpack.c.l.b16 %v7456
        %v7494 = vunpack.c.l.b16 %v7457
        %v7495 = vunpack.c.l.b16 %v7458
        %v7496 = vunpack.c.l.b16 %v7459
        %v7497 = vunpack.c.l.b16 %v7460
        %v7498 = vunpack.c.l.b16 %v7461
        %v7499 = vunpack.c.l.b16 %v7462
        %v7500 = vunpack.c.l.b16 %v7463
        %v7501 = vunpack.c.l.b16 %v7464
        %v7502 = vunpack.c.l.b16 %v7465
        %v7503 = vunpack.c.l.b16 %v7466
        %v7504 = vunpack.c.l.b16 %v7467
        %v7505 = vunpack.c.l.b16 %v7468
        %v7506 = vpack.c.b16 %v7491, %v7490
        %v7507 = vpack.c.b16 %v7493, %v7492
        %v7508 = vpack.c.b16 %v7495, %v7494
        %v7509 = vpack.c.b16 %v7497, %v7496
        %v7510 = vpack.c.b16 %v7499, %v7498
        %v7511 = vpack.c.b16 %v7501, %v7500
        %v7512 = vpack.c.b16 %v7503, %v7502
        %v7513 = vpack.c.b16 %v7505, %v7504
        %7522 = vmatpush.bf16.msra.mxu0 %v7513
        %7523 = vmatpush.bf16.msra.mxu0 %v7512
        %7524 = vmatpush.bf16.msra.mxu0 %v7511
        %7525 = vmatpush.bf16.msra.mxu0 %v7510
        %7526 = vmatpush.bf16.msra.mxu0 %v7509
        %7527 = vmatpush.bf16.msra.mxu0 %v7508
        %7528 = vmatpush.bf16.msra.mxu0 %v7507
        %7529 = vmatpush.bf16.msra.mxu0 %v7506
        %7530 = vmatmul.bf16.gmra.mxu0 %v7469
        %v7531 = vpop.f32.mrf.mxu0
        %v7532 = vadd.f32 %v7472, %v7531
        %v7533 = vpop.f32.mrf.mxu0
        %7534 = vdwg.mxu0
        %v7535 = vtanh.pop %v7532
        %v7536 = vld [vmem:[#allocation7] sm:$0xf]
        %v7537 = vld [vmem:[#allocation7 + $0x4] sm:$0xf]
        %v7538 = vld [vmem:[#allocation7 + $0x8] sm:$0xf]
        %v7539 = vld [vmem:[#allocation7 + $0xc] sm:$0xf]
        %v7540 = vld [vmem:[#allocation7 + $0x10] sm:$0xf]
        %v7541 = vld [vmem:[#allocation7 + $0x14] sm:$0xf]
        %v7542 = vld [vmem:[#allocation7 + $0x18] sm:$0xf]
        %v7543 = vld [vmem:[#allocation7 + $0x1c] sm:$0xf]
        %v7544 = vld [vmem:[#allocation7 + $0x20] sm:$0xf]
        %v7545 = vld [vmem:[#allocation7 + $0x24] sm:$0xf]
        %v7546 = vld [vmem:[#allocation7 + $0x28] sm:$0xf]
        %v7547 = vld [vmem:[#allocation7 + $0x2c] sm:$0xf]
        %v7548 = vld [vmem:[#allocation7 + $0x30] sm:$0xf]
        %v7549 = vld [vmem:[#allocation7 + $0x34] sm:$0xf]
        %v7550 = vld [vmem:[#allocation7 + $0x38] sm:$0xf]
        %v7551 = vld [vmem:[#allocation7 + $0x3c] sm:$0xf]
        %v7552 = vpack.c.bf16 %v7535, %v7535
        %v7553 = vld [vmem:[%s21] sm:$0x1]
        %v7555 = vperm.slane %v7553, 0
        %v7573 = vunpack.c.l.b16 %v7536
        %v7574 = vunpack.c.l.b16 %v7537
        %v7575 = vunpack.c.l.b16 %v7538
        %v7576 = vunpack.c.l.b16 %v7539
        %v7577 = vunpack.c.l.b16 %v7540
        %v7578 = vunpack.c.l.b16 %v7541
        %v7579 = vunpack.c.l.b16 %v7542
        %v7580 = vunpack.c.l.b16 %v7543
        %v7581 = vunpack.c.l.b16 %v7544
        %v7582 = vunpack.c.l.b16 %v7545
        %v7583 = vunpack.c.l.b16 %v7546
        %v7584 = vunpack.c.l.b16 %v7547
        %v7585 = vunpack.c.l.b16 %v7548
        %v7586 = vunpack.c.l.b16 %v7549
        %v7587 = vunpack.c.l.b16 %v7550
        %v7588 = vunpack.c.l.b16 %v7551
        %v7589 = vpack.c.b16 %v7574, %v7573
        %v7590 = vpack.c.b16 %v7576, %v7575
        %v7591 = vpack.c.b16 %v7578, %v7577
        %v7592 = vpack.c.b16 %v7580, %v7579
        %v7593 = vpack.c.b16 %v7582, %v7581
        %v7594 = vpack.c.b16 %v7584, %v7583
        %v7595 = vpack.c.b16 %v7586, %v7585
        %v7596 = vpack.c.b16 %v7588, %v7587
        %7605 = vmatpush.bf16.msra.mxu0 %v7596
        %7606 = vmatpush.bf16.msra.mxu0 %v7595
        %7607 = vmatpush.bf16.msra.mxu0 %v7594
        %7608 = vmatpush.bf16.msra.mxu0 %v7593
        %7609 = vmatpush.bf16.msra.mxu0 %v7592
        %7610 = vmatpush.bf16.msra.mxu0 %v7591
        %7611 = vmatpush.bf16.msra.mxu0 %v7590
        %7612 = vmatpush.bf16.msra.mxu0 %v7589
        %7613 = vmatmul.bf16.gmra.mxu0 %v7552
        %v7614 = vpop.f32.mrf.mxu0
        %v7615 = vadd.f32 %v7555, %v7614
        %v7616 = vpop.f32.mrf.mxu0
        %7617 = vdwg.mxu0
        %7618 = vst [vmem:[%s743] sm:$0xf] %v7615
        %s7619 = sand.u32 %s518, 1
        %s7620 = scalar_lea.sflag [#allocation4], %s7619
        %s7621 = sand.u32 %s518, 1
        %s7622 = smul.addr %s7621, 4
        %s7623 = scalar_lea.vmem [#allocation8], %s7622
        // Predicated region
        $region121: #{bert_classifier_forward.1} parent=107 // pred_check
          %p7624 = pneg %p528
        $region122: #{bert_classifier_forward.1} parent=107 // pred_check_branch
          %7626 = sbr.rel (%p7624) target = $region124
        $region123: #{bert_classifier_forward.1} parent=107 // pred_region
          %7628 = vsyncadd %s7620, 0
          %s7629 = smul.addr %s38, 4
          %s7630 = scalar_lea.hbm %s22, %s7629
          %s7632 = sshll.u32 %s7623, 4
          %s7633 = int_to_ptr.vmem [resolvable:$true] %s7632
          %s7634 = sshll.u32 %s7630, 4
          %s7635 = int_to_ptr.hbm [resolvable:$true] %s7634
          %7637 = dma.vmem_to_hbm [thread:$0]  %s7633, 64, %s7635, %s7620
        $region124: #{bert_classifier_forward.1} parent=107 // pred_fallthru
          _
      $region108: #{bert_classifier_forward.1} parent=5 // pred_fallthru
        _
      %p7638 = scmp.le.s32.totalorder 2, %s33
      // Predicated region
      $region125: #{bert_classifier_forward.1} parent=5 // pred_check
        %p7639 = pneg %p7638
      $region126: #{bert_classifier_forward.1} parent=5 // pred_check_branch
        %7641 = sbr.rel (%p7639) target = $region128
      $region127: #{bert_classifier_forward.1} parent=5 // pred_region
        %s7642 = ssub.s32 %s33, 2
        // Predicated region
        $region129: #{bert_classifier_forward.1} parent=127 // pred_check
          %p7643 = pneg %p534
        $region130: #{bert_classifier_forward.1} parent=127 // pred_check_branch
          %7645 = sbr.rel (%p7643) target = $region132
        $region131: #{bert_classifier_forward.1} parent=127 // pred_region
          %s7646 = sand.u32 %s519, 1
          %s7647 = scalar_lea.sflag [#allocation4], %s7646
          %s7648 = sand.u32 %s519, 1
          %s7649 = smul.addr %s7648, 4
          %s7650 = scalar_lea.vmem [#allocation8], %s7649
          %7652 = dma.done %s7647, 64
        $region132: #{bert_classifier_forward.1} parent=127 // pred_fallthru
          _
      $region128: #{bert_classifier_forward.1} parent=5 // pred_fallthru
        _
    $region6: #{bert_classifier_forward.1} parent=1 // loop_footer
      %s37 = sadd.s32 1, %s33
    $region7: #{bert_classifier_forward.1} parent=1 // loop_footer_branch
      %32 = sbr.rel target = $region3
    $region8: #{bert_classifier_forward.1} parent=1 // loop_exit
      _
    %7653 = vsyncpa [#allocation3], 1
    %s7654 = scalar_lea.sflag [#allocation3], 1
    %7655 = vsyncpa %s7654, 1
    %7656 = vsyncpa [#allocation6], 1
    %7657 = vsyncpa [#allocation4], 1
    %s7658 = scalar_lea.sflag [#allocation4], 1
    %7659 = vsyncpa %s7658, 1

</llo_original>
